<compile_context>
chip_gen: v5e
topology: v5e:2x2
jax: 0.10.0
libtpu: 0.0.40
codegen_flags: <defaults>
</compile_context>

<pallas_src>
import functools

import jax
import jax.numpy as jnp
from jax import lax
from jax.experimental import pallas as pl
from jax.experimental.pallas import tpu as pltpu


def bahdanau_kernel(hidden_ref, enc_ref, w1t_ref, w2t_ref, v_ref,
                    ctx_ref, attn_ref):
    B, S, H = enc_ref.shape

    hidden = hidden_ref[...]          # (B, H)
    enc = enc_ref[...]                # (B, S, H)
    w1t = w1t_ref[...]                # (H, H)  == W1.T
    w2t = w2t_ref[...]                # (H, H)  == W2.T
    v_row = v_ref[...]                # (1, H)  == V weight row

    # ---- additive attention energies -------------------------------------
    # W1 @ hidden : one (B,H)@(H,H) MXU push.  Precision pinned so the in-kernel
    # Mosaic lowering and the XLA reference use the same f32 algorithm.
    w1h = jnp.dot(hidden, w1t, preferred_element_type=jnp.float32,
                  precision=lax.Precision.HIGHEST)                           # (B, H)

    # W2 @ encoder_outputs : ONE (B*S,H)@(H,H) MXU push on the flattened rows.
    # Collapsing the leading dims is layout-free because S is a multiple of 8.
    enc2d = enc.reshape(B * S, H)                                            # (B*S, H)
    w2e = jnp.dot(enc2d, w2t, preferred_element_type=jnp.float32,
                  precision=lax.Precision.HIGHEST)                           # (B*S, H)

    t = jnp.tanh(w2e.reshape(B, S, H) + w1h[:, None, :])                     # (B, S, H) (EUP tanh)

    # scores[b,s] = <tanh(...), v>.  The lane-axis reduce (XLU) directly yields
    # a lane-dense (B, S); routing this through the MXU would produce (B*S, 1)
    # and need a lane<->sublane relayout that costs as much as the reduce.
    scores = jnp.sum(t * v_row[None, :, :], axis=-1)                         # (B, S)

    # ---- softmax over the sequence axis ----------------------------------
    m = jnp.max(scores, axis=1, keepdims=True)
    e = jnp.exp(scores - m)
    denom = jnp.sum(e, axis=1, keepdims=True)
    attn = e * pl.reciprocal(denom, approx=False)       # exact: keep 2e-5 accuracy
    attn_ref[...] = attn.astype(attn_ref.dtype)

    # ---- context vector ----------------------------------------------------
    # ctx[b,:] = sum_s attn[b,s] * enc[b,s,:]
    # VPU lane-broadcast multiply + XLU sublane reduce; the XLU is otherwise
    # idle here and this avoids the old block-diagonal matmul whose MXU rows
    # were only 8/128..8/256 filled and 7/8 zero along K.
    ctx = jnp.sum(attn[:, :, None] * enc, axis=1)                            # (B, H)
    ctx_ref[...] = ctx.astype(ctx_ref.dtype)


def prepare_params(w1, w2, v):
    """Transpose the torch-Linear (out, in) weights ONCE, outside the hot path."""
    return w1.T, w2.T, v.reshape(1, -1)


@functools.partial(jax.jit, static_argnames=("materialize_context",))
def _bahdanau_attention_jit(hidden, encoder_outputs, w1t, w2t, v_row,
                            *, materialize_context=False):
    B, H = hidden.shape
    _, S, _ = encoder_outputs.shape

    vmem = pl.BlockSpec(memory_space=pltpu.MemorySpace.VMEM)
    ctx2, attn = pl.pallas_call(
        bahdanau_kernel,
        out_shape=(jax.ShapeDtypeStruct((B, H), jnp.float32),
                   jax.ShapeDtypeStruct((B, S), jnp.float32)),
        in_specs=[vmem, vmem, vmem, vmem, vmem],
        out_specs=(vmem, vmem),
    )(hidden, encoder_outputs, w1t, w2t, v_row)

    if materialize_context:
        # torch: unsqueeze/transpose/repeat/squeeze/permute -> (B, H, S); this is
        # exactly ctx2 broadcast along the sequence axis (pure layout, no compute).
        context_vector = jnp.broadcast_to(ctx2[:, :, None], (B, H, S))
    else:
        context_vector = None     # skip the redundant (B,H,S) HBM writeback
    return context_vector, ctx2, attn


def bahdanau_attention(hidden, encoder_outputs, w1t, w2t, v_row,
                       materialize_context=False, verbose=False):
    """hidden: (B,H); encoder_outputs: (B,S,H); w1t, w2t: (H,H) pre-transposed
    Linear weights; v_row: (1,H)."""
    if verbose:
        # matches the torch module's print of attention_weights.shape (B, S, 1);
        # guarded and kept outside the jitted hot path.
        print('\n\t attention_weights =',
              (encoder_outputs.shape[0], encoder_outputs.shape[1], 1))
    return _bahdanau_attention_jit(hidden, encoder_outputs, w1t, w2t, v_row,
                                   materialize_context=materialize_context)


def _reference(hidden, encoder_outputs, w1, w2, v):
    """Pure-JAX reference mirroring the torch forward (precision pinned)."""
    hp = lax.Precision.HIGHEST
    h = hidden[:, None, :]                                        # (B,1,H)
    w1h = jnp.matmul(h, w1.T, precision=hp)                       # (B,1,H)
    w2e = jnp.matmul(encoder_outputs, w2.T, precision=hp)         # (B,S,H)
    scores = jnp.matmul(jnp.tanh(w1h + w2e), v.T, precision=hp)   # (B,S,1)
    attn = jax.nn.softmax(scores, axis=1)                         # (B,S,1)
    ctx2 = jnp.sum(attn * encoder_outputs, axis=1)                # (B,H)
    B, S, H = encoder_outputs.shape
    ctx = jnp.broadcast_to(ctx2[:, :, None], (B, H, S))
    return ctx, ctx2, attn[..., 0]


if __name__ == "__main__":
    # Sublane/lane-aligned small shapes: B multiple of 8, S and H multiples of 128,
    # so all in-kernel tiles and output stores are full (8,128) vregs (no masking).
    B, S, H = 8, 128, 128
    key = jax.random.PRNGKey(0)
    k_hid, k_enc, k_w1, k_w2, k_v = jax.random.split(key, 5)

    hidden = jax.random.normal(k_hid, (B, H), dtype=jnp.float32)
    encoder_outputs = jax.random.normal(k_enc, (B, S, H), dtype=jnp.float32)

    # Deterministic parameter init (torch Linear default: U(-1/sqrt(in), 1/sqrt(in)))
    bound = 1.0 / jnp.sqrt(jnp.float32(H))
    w1 = jax.random.uniform(k_w1, (H, H), jnp.float32, -bound, bound)   # W1 weight (out,in)
    w2 = jax.random.uniform(k_w2, (H, H), jnp.float32, -bound, bound)   # W2 weight (out,in)
    v = jax.random.uniform(k_v, (1, H), jnp.float32, -bound, bound)     # V weight (1,H)

    # Pre-transpose once, outside the per-call hot path.
    w1t, w2t, v_row = prepare_params(w1, w2, v)

    # Full torch semantics (materializes the redundant (B,H,S) context) for checking.
    ctx, ctx2, attn = bahdanau_attention(hidden, encoder_outputs, w1t, w2t, v_row,
                                         materialize_context=True)
    jax.block_until_ready((ctx, ctx2, attn))

    # Production fast path: skip the (B,H,S) HBM writeback (roughly halves HBM bytes).
    _, ctx2_fast, attn_fast = bahdanau_attention(hidden, encoder_outputs, w1t, w2t, v_row)
    jax.block_until_ready((ctx2_fast, attn_fast))

    ref_ctx, ref_ctx2, ref_attn = _reference(hidden, encoder_outputs, w1, w2, v)
    assert ctx.shape == (B, H, S) and ctx2.shape == (B, H) and attn.shape == (B, S)
    assert jnp.allclose(ctx, ref_ctx, atol=2e-5, rtol=2e-5)
    assert jnp.allclose(ctx2, ref_ctx2, atol=2e-5, rtol=2e-5)
    assert jnp.allclose(attn, ref_attn, atol=2e-5, rtol=2e-5)
    assert jnp.allclose(ctx2_fast, ref_ctx2, atol=2e-5, rtol=2e-5)
    assert jnp.allclose(attn_fast, ref_attn, atol=2e-5, rtol=2e-5)

    print("KERNEL_OK")
</pallas_src>

<mosaic_0001>
module attributes {stable_mosaic.version = 11 : i64} {
  func.func @bahdanau_kernel(%arg0: memref<8x128xf32, #tpu.memory_space<vmem>>, %arg1: memref<8x128x128xf32, #tpu.memory_space<vmem>>, %arg2: memref<128x128xf32, #tpu.memory_space<vmem>>, %arg3: memref<128x128xf32, #tpu.memory_space<vmem>>, %arg4: memref<1x128xf32, #tpu.memory_space<vmem>>, %arg5: memref<8x128xf32, #tpu.memory_space<vmem>>, %arg6: memref<8x128xf32, #tpu.memory_space<vmem>>) attributes {dimension_semantics = [], scalar_prefetch = 0 : i64, scratch_operands = 0 : i64, tpu.core_type = #tpu.core_type<tc>} {
    %c0 = arith.constant 0 : index
    %c0_0 = arith.constant 0 : index
    %0 = vector.load %arg0[%c0, %c0_0] : memref<8x128xf32, #tpu.memory_space<vmem>>, vector<8x128xf32>
    %c0_1 = arith.constant 0 : index
    %c0_2 = arith.constant 0 : index
    %c0_3 = arith.constant 0 : index
    %1 = vector.load %arg1[%c0_1, %c0_2, %c0_3] : memref<8x128x128xf32, #tpu.memory_space<vmem>>, vector<8x128x128xf32>
    %c0_4 = arith.constant 0 : index
    %c0_5 = arith.constant 0 : index
    %2 = vector.load %arg2[%c0_4, %c0_5] : memref<128x128xf32, #tpu.memory_space<vmem>>, vector<128x128xf32>
    %c0_6 = arith.constant 0 : index
    %c0_7 = arith.constant 0 : index
    %3 = vector.load %arg3[%c0_6, %c0_7] : memref<128x128xf32, #tpu.memory_space<vmem>>, vector<128x128xf32>
    %c0_8 = arith.constant 0 : index
    %c0_9 = arith.constant 0 : index
    %4 = vector.load %arg4[%c0_8, %c0_9] : memref<1x128xf32, #tpu.memory_space<vmem>>, vector<1x128xf32>
    %cst = arith.constant dense<0.000000e+00> : vector<8x128xf32>
    %5 = tpu.matmul %0, %2, %cst {dimension_numbers = #tpu.dot_dimension_numbers<[1], [0], [0], [1], [0, 0, 1, 1], [], []>, precision = #tpu.contract_precision<fp32>} : vector<8x128xf32>, vector<128x128xf32>, vector<8x128xf32> -> vector<8x128xf32>
    %6 = vector.shape_cast %1 : vector<8x128x128xf32> to vector<1024x128xf32>
    %cst_10 = arith.constant dense<0.000000e+00> : vector<1024x128xf32>
    %7 = tpu.matmul %6, %3, %cst_10 {dimension_numbers = #tpu.dot_dimension_numbers<[1], [0], [0], [1], [0, 0, 1, 1], [], []>, precision = #tpu.contract_precision<fp32>} : vector<1024x128xf32>, vector<128x128xf32>, vector<1024x128xf32> -> vector<1024x128xf32>
    %8 = vector.shape_cast %7 : vector<1024x128xf32> to vector<8x128x128xf32>
    %9 = vector.shape_cast %5 : vector<8x128xf32> to vector<8x1x128xf32>
    %10 = vector.broadcast %9 : vector<8x1x128xf32> to vector<8x128x128xf32>
    %11 = arith.addf %8, %10 : vector<8x128x128xf32>
    %12 = math.tanh %11 : vector<8x128x128xf32>
    %13 = vector.shape_cast %4 : vector<1x128xf32> to vector<1x1x128xf32>
    %14 = vector.broadcast %13 : vector<1x1x128xf32> to vector<8x128x128xf32>
    %15 = arith.mulf %12, %14 : vector<8x128x128xf32>
    %cst_11 = arith.constant dense<0.000000e+00> : vector<8x128xf32>
    %16 = vector.multi_reduction <add>, %15, %cst_11 [2] : vector<8x128x128xf32> to vector<8x128xf32>
    %cst_12 = arith.constant dense<0xFF800000> : vector<8xf32>
    %17 = vector.multi_reduction <maximumf>, %16, %cst_12 [1] : vector<8x128xf32> to vector<8xf32>
    %18 = vector.shape_cast %17 : vector<8xf32> to vector<8x1xf32>
    %19 = vector.broadcast %18 : vector<8x1xf32> to vector<8x128xf32>
    %20 = arith.subf %16, %19 : vector<8x128xf32>
    %21 = math.exp %20 : vector<8x128xf32>
    %cst_13 = arith.constant dense<0.000000e+00> : vector<8xf32>
    %22 = vector.multi_reduction <add>, %21, %cst_13 [1] : vector<8x128xf32> to vector<8xf32>
    %23 = vector.shape_cast %22 : vector<8xf32> to vector<8x1xf32>
    %24 = tpu.reciprocal %23 : vector<8x1xf32> -> vector<8x1xf32>
    %25 = vector.broadcast %24 : vector<8x1xf32> to vector<8x128xf32>
    %26 = arith.mulf %21, %25 : vector<8x128xf32>
    %c0_14 = arith.constant 0 : index
    %c0_15 = arith.constant 0 : index
    %27 = vector.load %arg6[%c0_14, %c0_15] : memref<8x128xf32, #tpu.memory_space<vmem>>, vector<8x128xf32>
    tpu.vector_store %arg6[%c0_14, %c0_15], %26 {strides = array<i32>} : memref<8x128xf32, #tpu.memory_space<vmem>>, vector<8x128xf32>,
    %28 = vector.shape_cast %26 : vector<8x128xf32> to vector<8x128x1xf32>
    %29 = vector.broadcast %28 : vector<8x128x1xf32> to vector<8x128x128xf32>
    %30 = arith.mulf %29, %1 : vector<8x128x128xf32>
    %cst_16 = arith.constant dense<0.000000e+00> : vector<8x128xf32>
    %31 = vector.multi_reduction <add>, %30, %cst_16 [1] : vector<8x128x128xf32> to vector<8x128xf32>
    %c0_17 = arith.constant 0 : index
    %c0_18 = arith.constant 0 : index
    %32 = vector.load %arg5[%c0_17, %c0_18] : memref<8x128xf32, #tpu.memory_space<vmem>>, vector<8x128xf32>
    tpu.vector_store %arg5[%c0_17, %c0_18], %31 {strides = array<i32>} : memref<8x128xf32, #tpu.memory_space<vmem>>, vector<8x128xf32>,
    return
  }
}

</mosaic_0001>

<llo_original>
// kernel: _bahdanau_attention_jit.1
$region0: #{_bahdanau_attention_jit.1}
  #allocation0 [shape = 'u32[]', space=smem, size = 0x4, offset = 0x4, fixed_abs, tag = 'smem constant byte address 0x4 - core index']
  #allocation1 [shape = 'u32[72,128]{1,0:T(1,128)}', space=vmem, size = 0x9000, scoped, tag = 'internal scratch']
  %s0 = inlined_call_operand.hbm [shape: f32[8,128], index: 0, kind: input, shape index: {}]
  %s1 = inlined_call_operand.hbm [shape: f32[8,128,128], index: 1, kind: input, shape index: {}]
  %s2 = inlined_call_operand.hbm [shape: f32[128,128], index: 2, kind: input, shape index: {}]
  %s3 = inlined_call_operand.hbm [shape: f32[128,128], index: 3, kind: input, shape index: {}]
  %s4 = inlined_call_operand.vmem [shape: f32[1,128], index: 4, kind: input, shape index: {}]
  %s5 = inlined_call_operand.vmem [shape: f32[8,128], index: 5, kind: output, shape index: {0}]
  %s6 = inlined_call_operand.hbm [shape: f32[8,128], index: 6, kind: output, shape index: {1}]
  %7 = xla_tuple %s5, %s6
  %s8 = sld [smem:[#allocation0]]
  $region54: #{_bahdanau_attention_jit.1} parent=0
    _
  %s10 = ssub.s32 1, %s8
  %s11 = scalar_select 0, %s10, %s8
  $region1: #{_bahdanau_attention_jit.1} parent=0
    #allocation2 [shape = 'u8[4096]{0}', space=vmem, size = 0x1000, scoped, tag = 'input window, operand 0, single buffered']
    #allocation3 [shape = 's32[1]{0}', space=sflag, size = 0x4, scoped, tag = 'scoped memory for _bahdanau_attention_jit.1']
    #allocation4 [shape = 's32[1]{0}', space=sflag, size = 0x4, scoped, tag = 'scoped memory for _bahdanau_attention_jit.1']
    #allocation5 [shape = 'u8[524288]{0}', space=vmem, size = 0x80000, scoped, tag = 'input window, operand 1, single buffered']
    #allocation6 [shape = 's32[1]{0}', space=sflag, size = 0x4, scoped, tag = 'scoped memory for _bahdanau_attention_jit.1']
    #allocation7 [shape = 'u8[65536]{0}', space=vmem, size = 0x10000, scoped, tag = 'input window, operand 2, single buffered']
    #allocation8 [shape = 'u8[65536]{0}', space=vmem, size = 0x10000, scoped, tag = 'input window, operand 3, single buffered']
    #allocation9 [shape = 's32[1]{0}', space=sflag, size = 0x4, scoped, tag = 'scoped memory for _bahdanau_attention_jit.1']
    #allocation10 [shape = 'u8[4096]{0}', space=vmem, size = 0x1000, scoped, tag = 'output window, operand 1, single buffered']
    %12 = vsyncpa [#allocation3], 0
    %13 = vsyncpa [#allocation6], 0
    %14 = vsyncpa [#allocation9], 0
    %15 = vsyncpa [#allocation4], 0
    // Predicated region
    $region2: #{_bahdanau_attention_jit.1} parent=1 // pred_check
      _
    $region3: #{_bahdanau_attention_jit.1} parent=1 // pred_check_branch
      %17 = sbr.rel (0) target = $region5
    $region4: #{_bahdanau_attention_jit.1} parent=1 // pred_region
      %19 = vsyncadd [#allocation3], 0
      %s21 = sshll.u32 %s0, 4
      %s22 = int_to_ptr.hbm [resolvable:$true] %s21
      %s23 = sshll.u32 [#allocation2], 4
      %s24 = int_to_ptr.vmem [resolvable:$true] %s23
      %26 = dma.hbm_to_vmem [thread:$0]  %s22, 128, %s24, [#allocation3]
    $region5: #{_bahdanau_attention_jit.1} parent=1 // pred_fallthru
      _
    // Predicated region
    $region6: #{_bahdanau_attention_jit.1} parent=1 // pred_check
      _
    $region7: #{_bahdanau_attention_jit.1} parent=1 // pred_check_branch
      %28 = sbr.rel (0) target = $region9
    $region8: #{_bahdanau_attention_jit.1} parent=1 // pred_region
      %30 = vsyncadd [#allocation6], 0
      %s31 = sshll.u32 %s1, 4
      %s32 = int_to_ptr.hbm [resolvable:$true] %s31
      %s33 = sshll.u32 [#allocation5], 4
      %s34 = int_to_ptr.vmem [resolvable:$true] %s33
      %39 = dma.hbm_to_vmem [thread:$0]  %s32, 16384, %s34, [#allocation6], 128, 128, 8
    $region9: #{_bahdanau_attention_jit.1} parent=1 // pred_fallthru
      _
    // Predicated region
    $region10: #{_bahdanau_attention_jit.1} parent=1 // pred_check
      _
    $region11: #{_bahdanau_attention_jit.1} parent=1 // pred_check_branch
      %41 = sbr.rel (0) target = $region13
    $region12: #{_bahdanau_attention_jit.1} parent=1 // pred_region
      %43 = vsyncadd [#allocation6], 0
      %s44 = sshll.u32 %s2, 4
      %s45 = int_to_ptr.hbm [resolvable:$true] %s44
      %s46 = sshll.u32 [#allocation7], 4
      %s47 = int_to_ptr.vmem [resolvable:$true] %s46
      %52 = dma.hbm_to_vmem [thread:$0]  %s45, 2048, %s47, [#allocation6], 128, 128, 8
    $region13: #{_bahdanau_attention_jit.1} parent=1 // pred_fallthru
      _
    // Predicated region
    $region14: #{_bahdanau_attention_jit.1} parent=1 // pred_check
      _
    $region15: #{_bahdanau_attention_jit.1} parent=1 // pred_check_branch
      %54 = sbr.rel (0) target = $region17
    $region16: #{_bahdanau_attention_jit.1} parent=1 // pred_region
      %56 = vsyncadd [#allocation9], 0
      %s57 = sshll.u32 %s3, 4
      %s58 = int_to_ptr.hbm [resolvable:$true] %s57
      %s59 = sshll.u32 [#allocation8], 4
      %s60 = int_to_ptr.vmem [resolvable:$true] %s59
      %65 = dma.hbm_to_vmem [thread:$0]  %s58, 2048, %s60, [#allocation9], 128, 128, 8
    $region17: #{_bahdanau_attention_jit.1} parent=1 // pred_fallthru
      _
    // Predicated region
    $region18: #{_bahdanau_attention_jit.1} parent=1 // pred_check
      _
    $region19: #{_bahdanau_attention_jit.1} parent=1 // pred_check_branch
      %67 = sbr.rel (0) target = $region21
    $region20: #{_bahdanau_attention_jit.1} parent=1 // pred_region
      _
    $region21: #{_bahdanau_attention_jit.1} parent=1 // pred_fallthru
      _
    // Predicated region
    $region22: #{_bahdanau_attention_jit.1} parent=1 // pred_check
      _
    $region23: #{_bahdanau_attention_jit.1} parent=1 // pred_check_branch
      %69 = sbr.rel (0) target = $region25
    $region24: #{_bahdanau_attention_jit.1} parent=1 // pred_region
      %71 = dma.done [#allocation3], 128
    $region25: #{_bahdanau_attention_jit.1} parent=1 // pred_fallthru
      _
    // Predicated region
    $region26: #{_bahdanau_attention_jit.1} parent=1 // pred_check
      _
    $region27: #{_bahdanau_attention_jit.1} parent=1 // pred_check_branch
      %73 = sbr.rel (0) target = $region29
    $region28: #{_bahdanau_attention_jit.1} parent=1 // pred_region
      %75 = dma.done [#allocation6], 16384
    $region29: #{_bahdanau_attention_jit.1} parent=1 // pred_fallthru
      _
    // Predicated region
    $region30: #{_bahdanau_attention_jit.1} parent=1 // pred_check
      _
    $region31: #{_bahdanau_attention_jit.1} parent=1 // pred_check_branch
      %77 = sbr.rel (0) target = $region33
    $region32: #{_bahdanau_attention_jit.1} parent=1 // pred_region
      %79 = dma.done [#allocation6], 2048
    $region33: #{_bahdanau_attention_jit.1} parent=1 // pred_fallthru
      _
    // Predicated region
    $region34: #{_bahdanau_attention_jit.1} parent=1 // pred_check
      _
    $region35: #{_bahdanau_attention_jit.1} parent=1 // pred_check_branch
      %81 = sbr.rel (0) target = $region37
    $region36: #{_bahdanau_attention_jit.1} parent=1 // pred_region
      %83 = dma.done [#allocation9], 2048
    $region37: #{_bahdanau_attention_jit.1} parent=1 // pred_fallthru
      _
    %v84 = vld [vmem:[#allocation2] sm:$0xff]
    %v85 = vld [vmem:[#allocation5] sm:$0xff]
    %v86 = vld [vmem:[#allocation5 + $0x8] sm:$0xff]
    %v87 = vld [vmem:[#allocation5 + $0x10] sm:$0xff]
    %v88 = vld [vmem:[#allocation5 + $0x18] sm:$0xff]
    %v89 = vld [vmem:[#allocation5 + $0x20] sm:$0xff]
    %v90 = vld [vmem:[#allocation5 + $0x28] sm:$0xff]
    %v91 = vld [vmem:[#allocation5 + $0x30] sm:$0xff]
    %v92 = vld [vmem:[#allocation5 + $0x38] sm:$0xff]
    %v93 = vld [vmem:[#allocation5 + $0x40] sm:$0xff]
    %v94 = vld [vmem:[#allocation5 + $0x48] sm:$0xff]
    %v95 = vld [vmem:[#allocation5 + $0x50] sm:$0xff]
    %v96 = vld [vmem:[#allocation5 + $0x58] sm:$0xff]
    %v97 = vld [vmem:[#allocation5 + $0x60] sm:$0xff]
    %v98 = vld [vmem:[#allocation5 + $0x68] sm:$0xff]
    %v99 = vld [vmem:[#allocation5 + $0x70] sm:$0xff]
    %v100 = vld [vmem:[#allocation5 + $0x78] sm:$0xff]
    %v101 = vld [vmem:[#allocation5 + $0x80] sm:$0xff]
    %v102 = vld [vmem:[#allocation5 + $0x88] sm:$0xff]
    %v103 = vld [vmem:[#allocation5 + $0x90] sm:$0xff]
    %v104 = vld [vmem:[#allocation5 + $0x98] sm:$0xff]
    %v105 = vld [vmem:[#allocation5 + $0xa0] sm:$0xff]
    %v106 = vld [vmem:[#allocation5 + $0xa8] sm:$0xff]
    %v107 = vld [vmem:[#allocation5 + $0xb0] sm:$0xff]
    %v108 = vld [vmem:[#allocation5 + $0xb8] sm:$0xff]
    %v109 = vld [vmem:[#allocation5 + $0xc0] sm:$0xff]
    %v110 = vld [vmem:[#allocation5 + $0xc8] sm:$0xff]
    %v111 = vld [vmem:[#allocation5 + $0xd0] sm:$0xff]
    %v112 = vld [vmem:[#allocation5 + $0xd8] sm:$0xff]
    %v113 = vld [vmem:[#allocation5 + $0xe0] sm:$0xff]
    %v114 = vld [vmem:[#allocation5 + $0xe8] sm:$0xff]
    %v115 = vld [vmem:[#allocation5 + $0xf0] sm:$0xff]
    %v116 = vld [vmem:[#allocation5 + $0xf8] sm:$0xff]
    %v117 = vld [vmem:[#allocation5 + $0x100] sm:$0xff]
    %v118 = vld [vmem:[#allocation5 + $0x108] sm:$0xff]
    %v119 = vld [vmem:[#allocation5 + $0x110] sm:$0xff]
    %v120 = vld [vmem:[#allocation5 + $0x118] sm:$0xff]
    %v121 = vld [vmem:[#allocation5 + $0x120] sm:$0xff]
    %v122 = vld [vmem:[#allocation5 + $0x128] sm:$0xff]
    %v123 = vld [vmem:[#allocation5 + $0x130] sm:$0xff]
    %v124 = vld [vmem:[#allocation5 + $0x138] sm:$0xff]
    %v125 = vld [vmem:[#allocation5 + $0x140] sm:$0xff]
    %v126 = vld [vmem:[#allocation5 + $0x148] sm:$0xff]
    %v127 = vld [vmem:[#allocation5 + $0x150] sm:$0xff]
    %v128 = vld [vmem:[#allocation5 + $0x158] sm:$0xff]
    %v129 = vld [vmem:[#allocation5 + $0x160] sm:$0xff]
    %v130 = vld [vmem:[#allocation5 + $0x168] sm:$0xff]
    %v131 = vld [vmem:[#allocation5 + $0x170] sm:$0xff]
    %v132 = vld [vmem:[#allocation5 + $0x178] sm:$0xff]
    %v133 = vld [vmem:[#allocation5 + $0x180] sm:$0xff]
    %v134 = vld [vmem:[#allocation5 + $0x188] sm:$0xff]
    %v135 = vld [vmem:[#allocation5 + $0x190] sm:$0xff]
    %v136 = vld [vmem:[#allocation5 + $0x198] sm:$0xff]
    %v137 = vld [vmem:[#allocation5 + $0x1a0] sm:$0xff]
    %v138 = vld [vmem:[#allocation5 + $0x1a8] sm:$0xff]
    %v139 = vld [vmem:[#allocation5 + $0x1b0] sm:$0xff]
    %v140 = vld [vmem:[#allocation5 + $0x1b8] sm:$0xff]
    %v141 = vld [vmem:[#allocation5 + $0x1c0] sm:$0xff]
    %v142 = vld [vmem:[#allocation5 + $0x1c8] sm:$0xff]
    %v143 = vld [vmem:[#allocation5 + $0x1d0] sm:$0xff]
    %v144 = vld [vmem:[#allocation5 + $0x1d8] sm:$0xff]
    %v145 = vld [vmem:[#allocation5 + $0x1e0] sm:$0xff]
    %v146 = vld [vmem:[#allocation5 + $0x1e8] sm:$0xff]
    %v147 = vld [vmem:[#allocation5 + $0x1f0] sm:$0xff]
    %v148 = vld [vmem:[#allocation5 + $0x1f8] sm:$0xff]
    %v149 = vld [vmem:[#allocation5 + $0x200] sm:$0xff]
    %v150 = vld [vmem:[#allocation5 + $0x208] sm:$0xff]
    %v151 = vld [vmem:[#allocation5 + $0x210] sm:$0xff]
    %v152 = vld [vmem:[#allocation5 + $0x218] sm:$0xff]
    %v153 = vld [vmem:[#allocation5 + $0x220] sm:$0xff]
    %v154 = vld [vmem:[#allocation5 + $0x228] sm:$0xff]
    %v155 = vld [vmem:[#allocation5 + $0x230] sm:$0xff]
    %v156 = vld [vmem:[#allocation5 + $0x238] sm:$0xff]
    %v157 = vld [vmem:[#allocation5 + $0x240] sm:$0xff]
    %v158 = vld [vmem:[#allocation5 + $0x248] sm:$0xff]
    %v159 = vld [vmem:[#allocation5 + $0x250] sm:$0xff]
    %v160 = vld [vmem:[#allocation5 + $0x258] sm:$0xff]
    %v161 = vld [vmem:[#allocation5 + $0x260] sm:$0xff]
    %v162 = vld [vmem:[#allocation5 + $0x268] sm:$0xff]
    %v163 = vld [vmem:[#allocation5 + $0x270] sm:$0xff]
    %v164 = vld [vmem:[#allocation5 + $0x278] sm:$0xff]
    %v165 = vld [vmem:[#allocation5 + $0x280] sm:$0xff]
    %v166 = vld [vmem:[#allocation5 + $0x288] sm:$0xff]
    %v167 = vld [vmem:[#allocation5 + $0x290] sm:$0xff]
    %v168 = vld [vmem:[#allocation5 + $0x298] sm:$0xff]
    %v169 = vld [vmem:[#allocation5 + $0x2a0] sm:$0xff]
    %v170 = vld [vmem:[#allocation5 + $0x2a8] sm:$0xff]
    %v171 = vld [vmem:[#allocation5 + $0x2b0] sm:$0xff]
    %v172 = vld [vmem:[#allocation5 + $0x2b8] sm:$0xff]
    %v173 = vld [vmem:[#allocation5 + $0x2c0] sm:$0xff]
    %v174 = vld [vmem:[#allocation5 + $0x2c8] sm:$0xff]
    %v175 = vld [vmem:[#allocation5 + $0x2d0] sm:$0xff]
    %v176 = vld [vmem:[#allocation5 + $0x2d8] sm:$0xff]
    %v177 = vld [vmem:[#allocation5 + $0x2e0] sm:$0xff]
    %v178 = vld [vmem:[#allocation5 + $0x2e8] sm:$0xff]
    %v179 = vld [vmem:[#allocation5 + $0x2f0] sm:$0xff]
    %v180 = vld [vmem:[#allocation5 + $0x2f8] sm:$0xff]
    %v181 = vld [vmem:[#allocation5 + $0x300] sm:$0xff]
    %v182 = vld [vmem:[#allocation5 + $0x308] sm:$0xff]
    %v183 = vld [vmem:[#allocation5 + $0x310] sm:$0xff]
    %v184 = vld [vmem:[#allocation5 + $0x318] sm:$0xff]
    %v185 = vld [vmem:[#allocation5 + $0x320] sm:$0xff]
    %v186 = vld [vmem:[#allocation5 + $0x328] sm:$0xff]
    %v187 = vld [vmem:[#allocation5 + $0x330] sm:$0xff]
    %v188 = vld [vmem:[#allocation5 + $0x338] sm:$0xff]
    %v189 = vld [vmem:[#allocation5 + $0x340] sm:$0xff]
    %v190 = vld [vmem:[#allocation5 + $0x348] sm:$0xff]
    %v191 = vld [vmem:[#allocation5 + $0x350] sm:$0xff]
    %v192 = vld [vmem:[#allocation5 + $0x358] sm:$0xff]
    %v193 = vld [vmem:[#allocation5 + $0x360] sm:$0xff]
    %v194 = vld [vmem:[#allocation5 + $0x368] sm:$0xff]
    %v195 = vld [vmem:[#allocation5 + $0x370] sm:$0xff]
    %v196 = vld [vmem:[#allocation5 + $0x378] sm:$0xff]
    %v197 = vld [vmem:[#allocation5 + $0x380] sm:$0xff]
    %v198 = vld [vmem:[#allocation5 + $0x388] sm:$0xff]
    %v199 = vld [vmem:[#allocation5 + $0x390] sm:$0xff]
    %v200 = vld [vmem:[#allocation5 + $0x398] sm:$0xff]
    %v201 = vld [vmem:[#allocation5 + $0x3a0] sm:$0xff]
    %v202 = vld [vmem:[#allocation5 + $0x3a8] sm:$0xff]
    %v203 = vld [vmem:[#allocation5 + $0x3b0] sm:$0xff]
    %v204 = vld [vmem:[#allocation5 + $0x3b8] sm:$0xff]
    %v205 = vld [vmem:[#allocation5 + $0x3c0] sm:$0xff]
    %v206 = vld [vmem:[#allocation5 + $0x3c8] sm:$0xff]
    %v207 = vld [vmem:[#allocation5 + $0x3d0] sm:$0xff]
    %v208 = vld [vmem:[#allocation5 + $0x3d8] sm:$0xff]
    %v209 = vld [vmem:[#allocation5 + $0x3e0] sm:$0xff]
    %v210 = vld [vmem:[#allocation5 + $0x3e8] sm:$0xff]
    %v211 = vld [vmem:[#allocation5 + $0x3f0] sm:$0xff]
    %v212 = vld [vmem:[#allocation5 + $0x3f8] sm:$0xff]
    %v213 = vld [vmem:[#allocation7] sm:$0xff]
    %v214 = vld [vmem:[#allocation7 + $0x8] sm:$0xff]
    %v215 = vld [vmem:[#allocation7 + $0x10] sm:$0xff]
    %v216 = vld [vmem:[#allocation7 + $0x18] sm:$0xff]
    %v217 = vld [vmem:[#allocation7 + $0x20] sm:$0xff]
    %v218 = vld [vmem:[#allocation7 + $0x28] sm:$0xff]
    %v219 = vld [vmem:[#allocation7 + $0x30] sm:$0xff]
    %v220 = vld [vmem:[#allocation7 + $0x38] sm:$0xff]
    %v221 = vld [vmem:[#allocation7 + $0x40] sm:$0xff]
    %v222 = vld [vmem:[#allocation7 + $0x48] sm:$0xff]
    %v223 = vld [vmem:[#allocation7 + $0x50] sm:$0xff]
    %v224 = vld [vmem:[#allocation7 + $0x58] sm:$0xff]
    %v225 = vld [vmem:[#allocation7 + $0x60] sm:$0xff]
    %v226 = vld [vmem:[#allocation7 + $0x68] sm:$0xff]
    %v227 = vld [vmem:[#allocation7 + $0x70] sm:$0xff]
    %v228 = vld [vmem:[#allocation7 + $0x78] sm:$0xff]
    %v229 = vld [vmem:[#allocation8] sm:$0xff]
    %v230 = vld [vmem:[#allocation8 + $0x8] sm:$0xff]
    %v231 = vld [vmem:[#allocation8 + $0x10] sm:$0xff]
    %v232 = vld [vmem:[#allocation8 + $0x18] sm:$0xff]
    %v233 = vld [vmem:[#allocation8 + $0x20] sm:$0xff]
    %v234 = vld [vmem:[#allocation8 + $0x28] sm:$0xff]
    %v235 = vld [vmem:[#allocation8 + $0x30] sm:$0xff]
    %v236 = vld [vmem:[#allocation8 + $0x38] sm:$0xff]
    %v237 = vld [vmem:[#allocation8 + $0x40] sm:$0xff]
    %v238 = vld [vmem:[#allocation8 + $0x48] sm:$0xff]
    %v239 = vld [vmem:[#allocation8 + $0x50] sm:$0xff]
    %v240 = vld [vmem:[#allocation8 + $0x58] sm:$0xff]
    %v241 = vld [vmem:[#allocation8 + $0x60] sm:$0xff]
    %v242 = vld [vmem:[#allocation8 + $0x68] sm:$0xff]
    %v243 = vld [vmem:[#allocation8 + $0x70] sm:$0xff]
    %v244 = vld [vmem:[#allocation8 + $0x78] sm:$0xff]
    %v245 = vld [vmem:[%s4] sm:$0x1]
    %v246 = vand.u32 %v228, 4294901760
    %247 = vmatpush.msra.mxu0 %v246
    %v248 = vand.u32 %v227, 4294901760
    %249 = vmatpush.msra.mxu0 %v248
    %v250 = vand.u32 %v226, 4294901760
    %251 = vmatpush.msra.mxu0 %v250
    %v252 = vand.u32 %v225, 4294901760
    %253 = vmatpush.msra.mxu0 %v252
    %v254 = vand.u32 %v224, 4294901760
    %255 = vmatpush.msra.mxu0 %v254
    %v256 = vand.u32 %v223, 4294901760
    %257 = vmatpush.msra.mxu0 %v256
    %v258 = vand.u32 %v222, 4294901760
    %259 = vmatpush.msra.mxu0 %v258
    %v260 = vand.u32 %v221, 4294901760
    %261 = vmatpush.msra.mxu0 %v260
    %v262 = vand.u32 %v220, 4294901760
    %263 = vmatpush.msra.mxu0 %v262
    %v264 = vand.u32 %v219, 4294901760
    %265 = vmatpush.msra.mxu0 %v264
    %v266 = vand.u32 %v218, 4294901760
    %267 = vmatpush.msra.mxu0 %v266
    %v268 = vand.u32 %v217, 4294901760
    %269 = vmatpush.msra.mxu0 %v268
    %v270 = vand.u32 %v216, 4294901760
    %271 = vmatpush.msra.mxu0 %v270
    %v272 = vand.u32 %v215, 4294901760
    %273 = vmatpush.msra.mxu0 %v272
    %v274 = vand.u32 %v214, 4294901760
    %275 = vmatpush.msra.mxu0 %v274
    %v276 = vand.u32 %v213, 4294901760
    %277 = vmatpush.msra.mxu0 %v276
    %v278 = vand.u32 %v84, 4294901760
    %v279 = vsub.f32 %v84, %v278
    %v280 = vand.u32 %v279, 4294901760
    %v281 = vsub.f32 %v279, %v280
    %v282 = vand.u32 %v281, 4294901760
    %283 = vmatmul.f32.gmra.mxu0 %v282
    %v284 = vpop.f32.mrf.mxu0
    %v285 = vadd.f32 0.0, %v284
    %286 = vdwg.mxu0
    %v287 = vand.u32 %v228, 4294901760
    %v288 = vsub.f32 %v228, %v287
    %v289 = vand.u32 %v288, 4294901760
    %v290 = vsub.f32 %v288, %v289
    %v291 = vand.u32 %v290, 4294901760
    %292 = vmatpush.msra.mxu0 %v291
    %v293 = vand.u32 %v227, 4294901760
    %v294 = vsub.f32 %v227, %v293
    %v295 = vand.u32 %v294, 4294901760
    %v296 = vsub.f32 %v294, %v295
    %v297 = vand.u32 %v296, 4294901760
    %298 = vmatpush.msra.mxu0 %v297
    %v299 = vand.u32 %v226, 4294901760
    %v300 = vsub.f32 %v226, %v299
    %v301 = vand.u32 %v300, 4294901760
    %v302 = vsub.f32 %v300, %v301
    %v303 = vand.u32 %v302, 4294901760
    %304 = vmatpush.msra.mxu0 %v303
    %v305 = vand.u32 %v225, 4294901760
    %v306 = vsub.f32 %v225, %v305
    %v307 = vand.u32 %v306, 4294901760
    %v308 = vsub.f32 %v306, %v307
    %v309 = vand.u32 %v308, 4294901760
    %310 = vmatpush.msra.mxu0 %v309
    %v311 = vand.u32 %v224, 4294901760
    %v312 = vsub.f32 %v224, %v311
    %v313 = vand.u32 %v312, 4294901760
    %v314 = vsub.f32 %v312, %v313
    %v315 = vand.u32 %v314, 4294901760
    %316 = vmatpush.msra.mxu0 %v315
    %v317 = vand.u32 %v223, 4294901760
    %v318 = vsub.f32 %v223, %v317
    %v319 = vand.u32 %v318, 4294901760
    %v320 = vsub.f32 %v318, %v319
    %v321 = vand.u32 %v320, 4294901760
    %322 = vmatpush.msra.mxu0 %v321
    %v323 = vand.u32 %v222, 4294901760
    %v324 = vsub.f32 %v222, %v323
    %v325 = vand.u32 %v324, 4294901760
    %v326 = vsub.f32 %v324, %v325
    %v327 = vand.u32 %v326, 4294901760
    %328 = vmatpush.msra.mxu0 %v327
    %v329 = vand.u32 %v221, 4294901760
    %v330 = vsub.f32 %v221, %v329
    %v331 = vand.u32 %v330, 4294901760
    %v332 = vsub.f32 %v330, %v331
    %v333 = vand.u32 %v332, 4294901760
    %334 = vmatpush.msra.mxu0 %v333
    %v335 = vand.u32 %v220, 4294901760
    %v336 = vsub.f32 %v220, %v335
    %v337 = vand.u32 %v336, 4294901760
    %v338 = vsub.f32 %v336, %v337
    %v339 = vand.u32 %v338, 4294901760
    %340 = vmatpush.msra.mxu0 %v339
    %v341 = vand.u32 %v219, 4294901760
    %v342 = vsub.f32 %v219, %v341
    %v343 = vand.u32 %v342, 4294901760
    %v344 = vsub.f32 %v342, %v343
    %v345 = vand.u32 %v344, 4294901760
    %346 = vmatpush.msra.mxu0 %v345
    %v347 = vand.u32 %v218, 4294901760
    %v348 = vsub.f32 %v218, %v347
    %v349 = vand.u32 %v348, 4294901760
    %v350 = vsub.f32 %v348, %v349
    %v351 = vand.u32 %v350, 4294901760
    %352 = vmatpush.msra.mxu0 %v351
    %v353 = vand.u32 %v217, 4294901760
    %v354 = vsub.f32 %v217, %v353
    %v355 = vand.u32 %v354, 4294901760
    %v356 = vsub.f32 %v354, %v355
    %v357 = vand.u32 %v356, 4294901760
    %358 = vmatpush.msra.mxu0 %v357
    %v359 = vand.u32 %v216, 4294901760
    %v360 = vsub.f32 %v216, %v359
    %v361 = vand.u32 %v360, 4294901760
    %v362 = vsub.f32 %v360, %v361
    %v363 = vand.u32 %v362, 4294901760
    %364 = vmatpush.msra.mxu0 %v363
    %v365 = vand.u32 %v215, 4294901760
    %v366 = vsub.f32 %v215, %v365
    %v367 = vand.u32 %v366, 4294901760
    %v368 = vsub.f32 %v366, %v367
    %v369 = vand.u32 %v368, 4294901760
    %370 = vmatpush.msra.mxu0 %v369
    %v371 = vand.u32 %v214, 4294901760
    %v372 = vsub.f32 %v214, %v371
    %v373 = vand.u32 %v372, 4294901760
    %v374 = vsub.f32 %v372, %v373
    %v375 = vand.u32 %v374, 4294901760
    %376 = vmatpush.msra.mxu0 %v375
    %v377 = vand.u32 %v213, 4294901760
    %v378 = vsub.f32 %v213, %v377
    %v379 = vand.u32 %v378, 4294901760
    %v380 = vsub.f32 %v378, %v379
    %v381 = vand.u32 %v380, 4294901760
    %382 = vmatpush.msra.mxu0 %v381
    %v383 = vand.u32 %v84, 4294901760
    %384 = vmatmul.f32.gmra.mxu0 %v383
    %v385 = vpop.f32.mrf.mxu0
    %v386 = vadd.f32 %v285, %v385
    %387 = vdwg.mxu0
    %v388 = vand.u32 %v228, 4294901760
    %v389 = vsub.f32 %v228, %v388
    %390 = vmatpush.msra.mxu0 %v389
    %v391 = vand.u32 %v227, 4294901760
    %v392 = vsub.f32 %v227, %v391
    %393 = vmatpush.msra.mxu0 %v392
    %v394 = vand.u32 %v226, 4294901760
    %v395 = vsub.f32 %v226, %v394
    %396 = vmatpush.msra.mxu0 %v395
    %v397 = vand.u32 %v225, 4294901760
    %v398 = vsub.f32 %v225, %v397
    %399 = vmatpush.msra.mxu0 %v398
    %v400 = vand.u32 %v224, 4294901760
    %v401 = vsub.f32 %v224, %v400
    %402 = vmatpush.msra.mxu0 %v401
    %v403 = vand.u32 %v223, 4294901760
    %v404 = vsub.f32 %v223, %v403
    %405 = vmatpush.msra.mxu0 %v404
    %v406 = vand.u32 %v222, 4294901760
    %v407 = vsub.f32 %v222, %v406
    %408 = vmatpush.msra.mxu0 %v407
    %v409 = vand.u32 %v221, 4294901760
    %v410 = vsub.f32 %v221, %v409
    %411 = vmatpush.msra.mxu0 %v410
    %v412 = vand.u32 %v220, 4294901760
    %v413 = vsub.f32 %v220, %v412
    %414 = vmatpush.msra.mxu0 %v413
    %v415 = vand.u32 %v219, 4294901760
    %v416 = vsub.f32 %v219, %v415
    %417 = vmatpush.msra.mxu0 %v416
    %v418 = vand.u32 %v218, 4294901760
    %v419 = vsub.f32 %v218, %v418
    %420 = vmatpush.msra.mxu0 %v419
    %v421 = vand.u32 %v217, 4294901760
    %v422 = vsub.f32 %v217, %v421
    %423 = vmatpush.msra.mxu0 %v422
    %v424 = vand.u32 %v216, 4294901760
    %v425 = vsub.f32 %v216, %v424
    %426 = vmatpush.msra.mxu0 %v425
    %v427 = vand.u32 %v215, 4294901760
    %v428 = vsub.f32 %v215, %v427
    %429 = vmatpush.msra.mxu0 %v428
    %v430 = vand.u32 %v214, 4294901760
    %v431 = vsub.f32 %v214, %v430
    %432 = vmatpush.msra.mxu0 %v431
    %v433 = vand.u32 %v213, 4294901760
    %v434 = vsub.f32 %v213, %v433
    %435 = vmatpush.msra.mxu0 %v434
    %v436 = vand.u32 %v84, 4294901760
    %v437 = vsub.f32 %v84, %v436
    %438 = vmatmul.f32.gmra.mxu0 %v437
    %v439 = vpop.f32.mrf.mxu0
    %v440 = vadd.f32 %v386, %v439
    %441 = vdwg.mxu0
    %v442 = vand.u32 %v228, 4294901760
    %443 = vmatpush.msra.mxu0 %v442
    %v444 = vand.u32 %v227, 4294901760
    %445 = vmatpush.msra.mxu0 %v444
    %v446 = vand.u32 %v226, 4294901760
    %447 = vmatpush.msra.mxu0 %v446
    %v448 = vand.u32 %v225, 4294901760
    %449 = vmatpush.msra.mxu0 %v448
    %v450 = vand.u32 %v224, 4294901760
    %451 = vmatpush.msra.mxu0 %v450
    %v452 = vand.u32 %v223, 4294901760
    %453 = vmatpush.msra.mxu0 %v452
    %v454 = vand.u32 %v222, 4294901760
    %455 = vmatpush.msra.mxu0 %v454
    %v456 = vand.u32 %v221, 4294901760
    %457 = vmatpush.msra.mxu0 %v456
    %v458 = vand.u32 %v220, 4294901760
    %459 = vmatpush.msra.mxu0 %v458
    %v460 = vand.u32 %v219, 4294901760
    %461 = vmatpush.msra.mxu0 %v460
    %v462 = vand.u32 %v218, 4294901760
    %463 = vmatpush.msra.mxu0 %v462
    %v464 = vand.u32 %v217, 4294901760
    %465 = vmatpush.msra.mxu0 %v464
    %v466 = vand.u32 %v216, 4294901760
    %467 = vmatpush.msra.mxu0 %v466
    %v468 = vand.u32 %v215, 4294901760
    %469 = vmatpush.msra.mxu0 %v468
    %v470 = vand.u32 %v214, 4294901760
    %471 = vmatpush.msra.mxu0 %v470
    %v472 = vand.u32 %v213, 4294901760
    %473 = vmatpush.msra.mxu0 %v472
    %v474 = vand.u32 %v84, 4294901760
    %v475 = vsub.f32 %v84, %v474
    %v476 = vand.u32 %v475, 4294901760
    %477 = vmatmul.f32.gmra.mxu0 %v476
    %v478 = vpop.f32.mrf.mxu0
    %v479 = vadd.f32 %v440, %v478
    %480 = vdwg.mxu0
    %v481 = vand.u32 %v228, 4294901760
    %v482 = vsub.f32 %v228, %v481
    %v483 = vand.u32 %v482, 4294901760
    %484 = vmatpush.msra.mxu0 %v483
    %v485 = vand.u32 %v227, 4294901760
    %v486 = vsub.f32 %v227, %v485
    %v487 = vand.u32 %v486, 4294901760
    %488 = vmatpush.msra.mxu0 %v487
    %v489 = vand.u32 %v226, 4294901760
    %v490 = vsub.f32 %v226, %v489
    %v491 = vand.u32 %v490, 4294901760
    %492 = vmatpush.msra.mxu0 %v491
    %v493 = vand.u32 %v225, 4294901760
    %v494 = vsub.f32 %v225, %v493
    %v495 = vand.u32 %v494, 4294901760
    %496 = vmatpush.msra.mxu0 %v495
    %v497 = vand.u32 %v224, 4294901760
    %v498 = vsub.f32 %v224, %v497
    %v499 = vand.u32 %v498, 4294901760
    %500 = vmatpush.msra.mxu0 %v499
    %v501 = vand.u32 %v223, 4294901760
    %v502 = vsub.f32 %v223, %v501
    %v503 = vand.u32 %v502, 4294901760
    %504 = vmatpush.msra.mxu0 %v503
    %v505 = vand.u32 %v222, 4294901760
    %v506 = vsub.f32 %v222, %v505
    %v507 = vand.u32 %v506, 4294901760
    %508 = vmatpush.msra.mxu0 %v507
    %v509 = vand.u32 %v221, 4294901760
    %v510 = vsub.f32 %v221, %v509
    %v511 = vand.u32 %v510, 4294901760
    %512 = vmatpush.msra.mxu0 %v511
    %v513 = vand.u32 %v220, 4294901760
    %v514 = vsub.f32 %v220, %v513
    %v515 = vand.u32 %v514, 4294901760
    %516 = vmatpush.msra.mxu0 %v515
    %v517 = vand.u32 %v219, 4294901760
    %v518 = vsub.f32 %v219, %v517
    %v519 = vand.u32 %v518, 4294901760
    %520 = vmatpush.msra.mxu0 %v519
    %v521 = vand.u32 %v218, 4294901760
    %v522 = vsub.f32 %v218, %v521
    %v523 = vand.u32 %v522, 4294901760
    %524 = vmatpush.msra.mxu0 %v523
    %v525 = vand.u32 %v217, 4294901760
    %v526 = vsub.f32 %v217, %v525
    %v527 = vand.u32 %v526, 4294901760
    %528 = vmatpush.msra.mxu0 %v527
    %v529 = vand.u32 %v216, 4294901760
    %v530 = vsub.f32 %v216, %v529
    %v531 = vand.u32 %v530, 4294901760
    %532 = vmatpush.msra.mxu0 %v531
    %v533 = vand.u32 %v215, 4294901760
    %v534 = vsub.f32 %v215, %v533
    %v535 = vand.u32 %v534, 4294901760
    %536 = vmatpush.msra.mxu0 %v535
    %v537 = vand.u32 %v214, 4294901760
    %v538 = vsub.f32 %v214, %v537
    %v539 = vand.u32 %v538, 4294901760
    %540 = vmatpush.msra.mxu0 %v539
    %v541 = vand.u32 %v213, 4294901760
    %v542 = vsub.f32 %v213, %v541
    %v543 = vand.u32 %v542, 4294901760
    %544 = vmatpush.msra.mxu0 %v543
    %v545 = vand.u32 %v84, 4294901760
    %546 = vmatmul.f32.gmra.mxu0 %v545
    %v547 = vpop.f32.mrf.mxu0
    %v548 = vadd.f32 %v479, %v547
    %549 = vdwg.mxu0
    %v550 = vand.u32 %v228, 4294901760
    %551 = vmatpush.msra.mxu0 %v550
    %v552 = vand.u32 %v227, 4294901760
    %553 = vmatpush.msra.mxu0 %v552
    %v554 = vand.u32 %v226, 4294901760
    %555 = vmatpush.msra.mxu0 %v554
    %v556 = vand.u32 %v225, 4294901760
    %557 = vmatpush.msra.mxu0 %v556
    %v558 = vand.u32 %v224, 4294901760
    %559 = vmatpush.msra.mxu0 %v558
    %v560 = vand.u32 %v223, 4294901760
    %561 = vmatpush.msra.mxu0 %v560
    %v562 = vand.u32 %v222, 4294901760
    %563 = vmatpush.msra.mxu0 %v562
    %v564 = vand.u32 %v221, 4294901760
    %565 = vmatpush.msra.mxu0 %v564
    %v566 = vand.u32 %v220, 4294901760
    %567 = vmatpush.msra.mxu0 %v566
    %v568 = vand.u32 %v219, 4294901760
    %569 = vmatpush.msra.mxu0 %v568
    %v570 = vand.u32 %v218, 4294901760
    %571 = vmatpush.msra.mxu0 %v570
    %v572 = vand.u32 %v217, 4294901760
    %573 = vmatpush.msra.mxu0 %v572
    %v574 = vand.u32 %v216, 4294901760
    %575 = vmatpush.msra.mxu0 %v574
    %v576 = vand.u32 %v215, 4294901760
    %577 = vmatpush.msra.mxu0 %v576
    %v578 = vand.u32 %v214, 4294901760
    %579 = vmatpush.msra.mxu0 %v578
    %v580 = vand.u32 %v213, 4294901760
    %581 = vmatpush.msra.mxu0 %v580
    %v582 = vand.u32 %v84, 4294901760
    %583 = vmatmul.f32.gmra.mxu0 %v582
    %v584 = vpop.f32.mrf.mxu0
    %v585 = vadd.f32 %v548, %v584
    %586 = vdwg.mxu0
    %v587 = vand.u32 %v244, 4294901760
    %588 = vmatpush.msra.mxu0 %v587
    %v589 = vand.u32 %v243, 4294901760
    %590 = vmatpush.msra.mxu0 %v589
    %v591 = vand.u32 %v242, 4294901760
    %592 = vmatpush.msra.mxu0 %v591
    %v593 = vand.u32 %v241, 4294901760
    %594 = vmatpush.msra.mxu0 %v593
    %v595 = vand.u32 %v240, 4294901760
    %596 = vmatpush.msra.mxu0 %v595
    %v597 = vand.u32 %v239, 4294901760
    %598 = vmatpush.msra.mxu0 %v597
    %v599 = vand.u32 %v238, 4294901760
    %600 = vmatpush.msra.mxu0 %v599
    %v601 = vand.u32 %v237, 4294901760
    %602 = vmatpush.msra.mxu0 %v601
    %v603 = vand.u32 %v236, 4294901760
    %604 = vmatpush.msra.mxu0 %v603
    %v605 = vand.u32 %v235, 4294901760
    %606 = vmatpush.msra.mxu0 %v605
    %v607 = vand.u32 %v234, 4294901760
    %608 = vmatpush.msra.mxu0 %v607
    %v609 = vand.u32 %v233, 4294901760
    %610 = vmatpush.msra.mxu0 %v609
    %v611 = vand.u32 %v232, 4294901760
    %612 = vmatpush.msra.mxu0 %v611
    %v613 = vand.u32 %v231, 4294901760
    %614 = vmatpush.msra.mxu0 %v613
    %v615 = vand.u32 %v230, 4294901760
    %616 = vmatpush.msra.mxu0 %v615
    %v617 = vand.u32 %v229, 4294901760
    %618 = vmatpush.msra.mxu0 %v617
    %v619 = vand.u32 %v85, 4294901760
    %v620 = vsub.f32 %v85, %v619
    %v621 = vand.u32 %v620, 4294901760
    %v622 = vsub.f32 %v620, %v621
    %v623 = vand.u32 %v622, 4294901760
    %624 = vmatmul.f32.gmra.mxu0 %v623
    %v625 = vpop.f32.mrf.mxu0
    %v626 = vadd.f32 0.0, %v625
    %v627 = vand.u32 %v86, 4294901760
    %v628 = vsub.f32 %v86, %v627
    %v629 = vand.u32 %v628, 4294901760
    %v630 = vsub.f32 %v628, %v629
    %v631 = vand.u32 %v630, 4294901760
    %632 = vmatmul.f32.gmra.mxu0 %v631
    %v633 = vpop.f32.mrf.mxu0
    %v634 = vadd.f32 0.0, %v633
    %v635 = vand.u32 %v87, 4294901760
    %v636 = vsub.f32 %v87, %v635
    %v637 = vand.u32 %v636, 4294901760
    %v638 = vsub.f32 %v636, %v637
    %v639 = vand.u32 %v638, 4294901760
    %640 = vmatmul.f32.gmra.mxu0 %v639
    %v641 = vpop.f32.mrf.mxu0
    %v642 = vadd.f32 0.0, %v641
    %v643 = vand.u32 %v88, 4294901760
    %v644 = vsub.f32 %v88, %v643
    %v645 = vand.u32 %v644, 4294901760
    %v646 = vsub.f32 %v644, %v645
    %v647 = vand.u32 %v646, 4294901760
    %648 = vmatmul.f32.gmra.mxu0 %v647
    %v649 = vpop.f32.mrf.mxu0
    %v650 = vadd.f32 0.0, %v649
    %v651 = vand.u32 %v89, 4294901760
    %v652 = vsub.f32 %v89, %v651
    %v653 = vand.u32 %v652, 4294901760
    %v654 = vsub.f32 %v652, %v653
    %v655 = vand.u32 %v654, 4294901760
    %656 = vmatmul.f32.gmra.mxu0 %v655
    %v657 = vpop.f32.mrf.mxu0
    %v658 = vadd.f32 0.0, %v657
    %v659 = vand.u32 %v90, 4294901760
    %v660 = vsub.f32 %v90, %v659
    %v661 = vand.u32 %v660, 4294901760
    %v662 = vsub.f32 %v660, %v661
    %v663 = vand.u32 %v662, 4294901760
    %664 = vmatmul.f32.gmra.mxu0 %v663
    %v665 = vpop.f32.mrf.mxu0
    %v666 = vadd.f32 0.0, %v665
    %v667 = vand.u32 %v91, 4294901760
    %v668 = vsub.f32 %v91, %v667
    %v669 = vand.u32 %v668, 4294901760
    %v670 = vsub.f32 %v668, %v669
    %v671 = vand.u32 %v670, 4294901760
    %672 = vmatmul.f32.gmra.mxu0 %v671
    %v673 = vpop.f32.mrf.mxu0
    %v674 = vadd.f32 0.0, %v673
    %v675 = vand.u32 %v92, 4294901760
    %v676 = vsub.f32 %v92, %v675
    %v677 = vand.u32 %v676, 4294901760
    %v678 = vsub.f32 %v676, %v677
    %v679 = vand.u32 %v678, 4294901760
    %680 = vmatmul.f32.gmra.mxu0 %v679
    %v681 = vpop.f32.mrf.mxu0
    %v682 = vadd.f32 0.0, %v681
    %v683 = vand.u32 %v93, 4294901760
    %v684 = vsub.f32 %v93, %v683
    %v685 = vand.u32 %v684, 4294901760
    %v686 = vsub.f32 %v684, %v685
    %v687 = vand.u32 %v686, 4294901760
    %688 = vmatmul.f32.gmra.mxu0 %v687
    %v689 = vpop.f32.mrf.mxu0
    %v690 = vadd.f32 0.0, %v689
    %v691 = vand.u32 %v94, 4294901760
    %v692 = vsub.f32 %v94, %v691
    %v693 = vand.u32 %v692, 4294901760
    %v694 = vsub.f32 %v692, %v693
    %v695 = vand.u32 %v694, 4294901760
    %696 = vmatmul.f32.gmra.mxu0 %v695
    %v697 = vpop.f32.mrf.mxu0
    %v698 = vadd.f32 0.0, %v697
    %v699 = vand.u32 %v95, 4294901760
    %v700 = vsub.f32 %v95, %v699
    %v701 = vand.u32 %v700, 4294901760
    %v702 = vsub.f32 %v700, %v701
    %v703 = vand.u32 %v702, 4294901760
    %704 = vmatmul.f32.gmra.mxu0 %v703
    %v705 = vpop.f32.mrf.mxu0
    %v706 = vadd.f32 0.0, %v705
    %v707 = vand.u32 %v96, 4294901760
    %v708 = vsub.f32 %v96, %v707
    %v709 = vand.u32 %v708, 4294901760
    %v710 = vsub.f32 %v708, %v709
    %v711 = vand.u32 %v710, 4294901760
    %712 = vmatmul.f32.gmra.mxu0 %v711
    %v713 = vpop.f32.mrf.mxu0
    %v714 = vadd.f32 0.0, %v713
    %v715 = vand.u32 %v97, 4294901760
    %v716 = vsub.f32 %v97, %v715
    %v717 = vand.u32 %v716, 4294901760
    %v718 = vsub.f32 %v716, %v717
    %v719 = vand.u32 %v718, 4294901760
    %720 = vmatmul.f32.gmra.mxu0 %v719
    %v721 = vpop.f32.mrf.mxu0
    %v722 = vadd.f32 0.0, %v721
    %v723 = vand.u32 %v98, 4294901760
    %v724 = vsub.f32 %v98, %v723
    %v725 = vand.u32 %v724, 4294901760
    %v726 = vsub.f32 %v724, %v725
    %v727 = vand.u32 %v726, 4294901760
    %728 = vmatmul.f32.gmra.mxu0 %v727
    %v729 = vpop.f32.mrf.mxu0
    %v730 = vadd.f32 0.0, %v729
    %v731 = vand.u32 %v99, 4294901760
    %v732 = vsub.f32 %v99, %v731
    %v733 = vand.u32 %v732, 4294901760
    %v734 = vsub.f32 %v732, %v733
    %v735 = vand.u32 %v734, 4294901760
    %736 = vmatmul.f32.gmra.mxu0 %v735
    %v737 = vpop.f32.mrf.mxu0
    %v738 = vadd.f32 0.0, %v737
    %v739 = vand.u32 %v100, 4294901760
    %v740 = vsub.f32 %v100, %v739
    %v741 = vand.u32 %v740, 4294901760
    %v742 = vsub.f32 %v740, %v741
    %v743 = vand.u32 %v742, 4294901760
    %744 = vmatmul.f32.gmra.mxu0 %v743
    %v745 = vpop.f32.mrf.mxu0
    %v746 = vadd.f32 0.0, %v745
    %v747 = vand.u32 %v101, 4294901760
    %v748 = vsub.f32 %v101, %v747
    %v749 = vand.u32 %v748, 4294901760
    %v750 = vsub.f32 %v748, %v749
    %v751 = vand.u32 %v750, 4294901760
    %752 = vmatmul.f32.gmra.mxu0 %v751
    %v753 = vpop.f32.mrf.mxu0
    %v754 = vadd.f32 0.0, %v753
    %v755 = vand.u32 %v102, 4294901760
    %v756 = vsub.f32 %v102, %v755
    %v757 = vand.u32 %v756, 4294901760
    %v758 = vsub.f32 %v756, %v757
    %v759 = vand.u32 %v758, 4294901760
    %760 = vmatmul.f32.gmra.mxu0 %v759
    %v761 = vpop.f32.mrf.mxu0
    %v762 = vadd.f32 0.0, %v761
    %v763 = vand.u32 %v103, 4294901760
    %v764 = vsub.f32 %v103, %v763
    %v765 = vand.u32 %v764, 4294901760
    %v766 = vsub.f32 %v764, %v765
    %v767 = vand.u32 %v766, 4294901760
    %768 = vmatmul.f32.gmra.mxu0 %v767
    %v769 = vpop.f32.mrf.mxu0
    %v770 = vadd.f32 0.0, %v769
    %v771 = vand.u32 %v104, 4294901760
    %v772 = vsub.f32 %v104, %v771
    %v773 = vand.u32 %v772, 4294901760
    %v774 = vsub.f32 %v772, %v773
    %v775 = vand.u32 %v774, 4294901760
    %776 = vmatmul.f32.gmra.mxu0 %v775
    %v777 = vpop.f32.mrf.mxu0
    %v778 = vadd.f32 0.0, %v777
    %v779 = vand.u32 %v105, 4294901760
    %v780 = vsub.f32 %v105, %v779
    %v781 = vand.u32 %v780, 4294901760
    %v782 = vsub.f32 %v780, %v781
    %v783 = vand.u32 %v782, 4294901760
    %784 = vmatmul.f32.gmra.mxu0 %v783
    %v785 = vpop.f32.mrf.mxu0
    %v786 = vadd.f32 0.0, %v785
    %v787 = vand.u32 %v106, 4294901760
    %v788 = vsub.f32 %v106, %v787
    %v789 = vand.u32 %v788, 4294901760
    %v790 = vsub.f32 %v788, %v789
    %v791 = vand.u32 %v790, 4294901760
    %792 = vmatmul.f32.gmra.mxu0 %v791
    %v793 = vpop.f32.mrf.mxu0
    %v794 = vadd.f32 0.0, %v793
    %v795 = vand.u32 %v107, 4294901760
    %v796 = vsub.f32 %v107, %v795
    %v797 = vand.u32 %v796, 4294901760
    %v798 = vsub.f32 %v796, %v797
    %v799 = vand.u32 %v798, 4294901760
    %800 = vmatmul.f32.gmra.mxu0 %v799
    %v801 = vpop.f32.mrf.mxu0
    %v802 = vadd.f32 0.0, %v801
    %v803 = vand.u32 %v108, 4294901760
    %v804 = vsub.f32 %v108, %v803
    %v805 = vand.u32 %v804, 4294901760
    %v806 = vsub.f32 %v804, %v805
    %v807 = vand.u32 %v806, 4294901760
    %808 = vmatmul.f32.gmra.mxu0 %v807
    %v809 = vpop.f32.mrf.mxu0
    %v810 = vadd.f32 0.0, %v809
    %v811 = vand.u32 %v109, 4294901760
    %v812 = vsub.f32 %v109, %v811
    %v813 = vand.u32 %v812, 4294901760
    %v814 = vsub.f32 %v812, %v813
    %v815 = vand.u32 %v814, 4294901760
    %816 = vmatmul.f32.gmra.mxu0 %v815
    %v817 = vpop.f32.mrf.mxu0
    %v818 = vadd.f32 0.0, %v817
    %v819 = vand.u32 %v110, 4294901760
    %v820 = vsub.f32 %v110, %v819
    %v821 = vand.u32 %v820, 4294901760
    %v822 = vsub.f32 %v820, %v821
    %v823 = vand.u32 %v822, 4294901760
    %824 = vmatmul.f32.gmra.mxu0 %v823
    %v825 = vpop.f32.mrf.mxu0
    %v826 = vadd.f32 0.0, %v825
    %v827 = vand.u32 %v111, 4294901760
    %v828 = vsub.f32 %v111, %v827
    %v829 = vand.u32 %v828, 4294901760
    %v830 = vsub.f32 %v828, %v829
    %v831 = vand.u32 %v830, 4294901760
    %832 = vmatmul.f32.gmra.mxu0 %v831
    %v833 = vpop.f32.mrf.mxu0
    %v834 = vadd.f32 0.0, %v833
    %v835 = vand.u32 %v112, 4294901760
    %v836 = vsub.f32 %v112, %v835
    %v837 = vand.u32 %v836, 4294901760
    %v838 = vsub.f32 %v836, %v837
    %v839 = vand.u32 %v838, 4294901760
    %840 = vmatmul.f32.gmra.mxu0 %v839
    %v841 = vpop.f32.mrf.mxu0
    %v842 = vadd.f32 0.0, %v841
    %v843 = vand.u32 %v113, 4294901760
    %v844 = vsub.f32 %v113, %v843
    %v845 = vand.u32 %v844, 4294901760
    %v846 = vsub.f32 %v844, %v845
    %v847 = vand.u32 %v846, 4294901760
    %848 = vmatmul.f32.gmra.mxu0 %v847
    %v849 = vpop.f32.mrf.mxu0
    %v850 = vadd.f32 0.0, %v849
    %v851 = vand.u32 %v114, 4294901760
    %v852 = vsub.f32 %v114, %v851
    %v853 = vand.u32 %v852, 4294901760
    %v854 = vsub.f32 %v852, %v853
    %v855 = vand.u32 %v854, 4294901760
    %856 = vmatmul.f32.gmra.mxu0 %v855
    %v857 = vpop.f32.mrf.mxu0
    %v858 = vadd.f32 0.0, %v857
    %v859 = vand.u32 %v115, 4294901760
    %v860 = vsub.f32 %v115, %v859
    %v861 = vand.u32 %v860, 4294901760
    %v862 = vsub.f32 %v860, %v861
    %v863 = vand.u32 %v862, 4294901760
    %864 = vmatmul.f32.gmra.mxu0 %v863
    %v865 = vpop.f32.mrf.mxu0
    %v866 = vadd.f32 0.0, %v865
    %v867 = vand.u32 %v116, 4294901760
    %v868 = vsub.f32 %v116, %v867
    %v869 = vand.u32 %v868, 4294901760
    %v870 = vsub.f32 %v868, %v869
    %v871 = vand.u32 %v870, 4294901760
    %872 = vmatmul.f32.gmra.mxu0 %v871
    %v873 = vpop.f32.mrf.mxu0
    %v874 = vadd.f32 0.0, %v873
    %v875 = vand.u32 %v117, 4294901760
    %v876 = vsub.f32 %v117, %v875
    %v877 = vand.u32 %v876, 4294901760
    %v878 = vsub.f32 %v876, %v877
    %v879 = vand.u32 %v878, 4294901760
    %880 = vmatmul.f32.gmra.mxu0 %v879
    %v881 = vpop.f32.mrf.mxu0
    %v882 = vadd.f32 0.0, %v881
    %v883 = vand.u32 %v118, 4294901760
    %v884 = vsub.f32 %v118, %v883
    %v885 = vand.u32 %v884, 4294901760
    %v886 = vsub.f32 %v884, %v885
    %v887 = vand.u32 %v886, 4294901760
    %888 = vmatmul.f32.gmra.mxu0 %v887
    %v889 = vpop.f32.mrf.mxu0
    %v890 = vadd.f32 0.0, %v889
    %v891 = vand.u32 %v119, 4294901760
    %v892 = vsub.f32 %v119, %v891
    %v893 = vand.u32 %v892, 4294901760
    %v894 = vsub.f32 %v892, %v893
    %v895 = vand.u32 %v894, 4294901760
    %896 = vmatmul.f32.gmra.mxu0 %v895
    %v897 = vpop.f32.mrf.mxu0
    %v898 = vadd.f32 0.0, %v897
    %v899 = vand.u32 %v120, 4294901760
    %v900 = vsub.f32 %v120, %v899
    %v901 = vand.u32 %v900, 4294901760
    %v902 = vsub.f32 %v900, %v901
    %v903 = vand.u32 %v902, 4294901760
    %904 = vmatmul.f32.gmra.mxu0 %v903
    %v905 = vpop.f32.mrf.mxu0
    %v906 = vadd.f32 0.0, %v905
    %v907 = vand.u32 %v121, 4294901760
    %v908 = vsub.f32 %v121, %v907
    %v909 = vand.u32 %v908, 4294901760
    %v910 = vsub.f32 %v908, %v909
    %v911 = vand.u32 %v910, 4294901760
    %912 = vmatmul.f32.gmra.mxu0 %v911
    %v913 = vpop.f32.mrf.mxu0
    %v914 = vadd.f32 0.0, %v913
    %v915 = vand.u32 %v122, 4294901760
    %v916 = vsub.f32 %v122, %v915
    %v917 = vand.u32 %v916, 4294901760
    %v918 = vsub.f32 %v916, %v917
    %v919 = vand.u32 %v918, 4294901760
    %920 = vmatmul.f32.gmra.mxu0 %v919
    %v921 = vpop.f32.mrf.mxu0
    %v922 = vadd.f32 0.0, %v921
    %v923 = vand.u32 %v123, 4294901760
    %v924 = vsub.f32 %v123, %v923
    %v925 = vand.u32 %v924, 4294901760
    %v926 = vsub.f32 %v924, %v925
    %v927 = vand.u32 %v926, 4294901760
    %928 = vmatmul.f32.gmra.mxu0 %v927
    %v929 = vpop.f32.mrf.mxu0
    %v930 = vadd.f32 0.0, %v929
    %v931 = vand.u32 %v124, 4294901760
    %v932 = vsub.f32 %v124, %v931
    %v933 = vand.u32 %v932, 4294901760
    %v934 = vsub.f32 %v932, %v933
    %v935 = vand.u32 %v934, 4294901760
    %936 = vmatmul.f32.gmra.mxu0 %v935
    %v937 = vpop.f32.mrf.mxu0
    %v938 = vadd.f32 0.0, %v937
    %v939 = vand.u32 %v125, 4294901760
    %v940 = vsub.f32 %v125, %v939
    %v941 = vand.u32 %v940, 4294901760
    %v942 = vsub.f32 %v940, %v941
    %v943 = vand.u32 %v942, 4294901760
    %944 = vmatmul.f32.gmra.mxu0 %v943
    %v945 = vpop.f32.mrf.mxu0
    %v946 = vadd.f32 0.0, %v945
    %v947 = vand.u32 %v126, 4294901760
    %v948 = vsub.f32 %v126, %v947
    %v949 = vand.u32 %v948, 4294901760
    %v950 = vsub.f32 %v948, %v949
    %v951 = vand.u32 %v950, 4294901760
    %952 = vmatmul.f32.gmra.mxu0 %v951
    %v953 = vpop.f32.mrf.mxu0
    %v954 = vadd.f32 0.0, %v953
    %v955 = vand.u32 %v127, 4294901760
    %v956 = vsub.f32 %v127, %v955
    %v957 = vand.u32 %v956, 4294901760
    %v958 = vsub.f32 %v956, %v957
    %v959 = vand.u32 %v958, 4294901760
    %960 = vmatmul.f32.gmra.mxu0 %v959
    %v961 = vpop.f32.mrf.mxu0
    %v962 = vadd.f32 0.0, %v961
    %v963 = vand.u32 %v128, 4294901760
    %v964 = vsub.f32 %v128, %v963
    %v965 = vand.u32 %v964, 4294901760
    %v966 = vsub.f32 %v964, %v965
    %v967 = vand.u32 %v966, 4294901760
    %968 = vmatmul.f32.gmra.mxu0 %v967
    %v969 = vpop.f32.mrf.mxu0
    %v970 = vadd.f32 0.0, %v969
    %v971 = vand.u32 %v129, 4294901760
    %v972 = vsub.f32 %v129, %v971
    %v973 = vand.u32 %v972, 4294901760
    %v974 = vsub.f32 %v972, %v973
    %v975 = vand.u32 %v974, 4294901760
    %976 = vmatmul.f32.gmra.mxu0 %v975
    %v977 = vpop.f32.mrf.mxu0
    %v978 = vadd.f32 0.0, %v977
    %v979 = vand.u32 %v130, 4294901760
    %v980 = vsub.f32 %v130, %v979
    %v981 = vand.u32 %v980, 4294901760
    %v982 = vsub.f32 %v980, %v981
    %v983 = vand.u32 %v982, 4294901760
    %984 = vmatmul.f32.gmra.mxu0 %v983
    %v985 = vpop.f32.mrf.mxu0
    %v986 = vadd.f32 0.0, %v985
    %v987 = vand.u32 %v131, 4294901760
    %v988 = vsub.f32 %v131, %v987
    %v989 = vand.u32 %v988, 4294901760
    %v990 = vsub.f32 %v988, %v989
    %v991 = vand.u32 %v990, 4294901760
    %992 = vmatmul.f32.gmra.mxu0 %v991
    %v993 = vpop.f32.mrf.mxu0
    %v994 = vadd.f32 0.0, %v993
    %v995 = vand.u32 %v132, 4294901760
    %v996 = vsub.f32 %v132, %v995
    %v997 = vand.u32 %v996, 4294901760
    %v998 = vsub.f32 %v996, %v997
    %v999 = vand.u32 %v998, 4294901760
    %1000 = vmatmul.f32.gmra.mxu0 %v999
    %v1001 = vpop.f32.mrf.mxu0
    %v1002 = vadd.f32 0.0, %v1001
    %v1003 = vand.u32 %v133, 4294901760
    %v1004 = vsub.f32 %v133, %v1003
    %v1005 = vand.u32 %v1004, 4294901760
    %v1006 = vsub.f32 %v1004, %v1005
    %v1007 = vand.u32 %v1006, 4294901760
    %1008 = vmatmul.f32.gmra.mxu0 %v1007
    %v1009 = vpop.f32.mrf.mxu0
    %v1010 = vadd.f32 0.0, %v1009
    %v1011 = vand.u32 %v134, 4294901760
    %v1012 = vsub.f32 %v134, %v1011
    %v1013 = vand.u32 %v1012, 4294901760
    %v1014 = vsub.f32 %v1012, %v1013
    %v1015 = vand.u32 %v1014, 4294901760
    %1016 = vmatmul.f32.gmra.mxu0 %v1015
    %v1017 = vpop.f32.mrf.mxu0
    %v1018 = vadd.f32 0.0, %v1017
    %v1019 = vand.u32 %v135, 4294901760
    %v1020 = vsub.f32 %v135, %v1019
    %v1021 = vand.u32 %v1020, 4294901760
    %v1022 = vsub.f32 %v1020, %v1021
    %v1023 = vand.u32 %v1022, 4294901760
    %1024 = vmatmul.f32.gmra.mxu0 %v1023
    %v1025 = vpop.f32.mrf.mxu0
    %v1026 = vadd.f32 0.0, %v1025
    %v1027 = vand.u32 %v136, 4294901760
    %v1028 = vsub.f32 %v136, %v1027
    %v1029 = vand.u32 %v1028, 4294901760
    %v1030 = vsub.f32 %v1028, %v1029
    %v1031 = vand.u32 %v1030, 4294901760
    %1032 = vmatmul.f32.gmra.mxu0 %v1031
    %v1033 = vpop.f32.mrf.mxu0
    %v1034 = vadd.f32 0.0, %v1033
    %v1035 = vand.u32 %v137, 4294901760
    %v1036 = vsub.f32 %v137, %v1035
    %v1037 = vand.u32 %v1036, 4294901760
    %v1038 = vsub.f32 %v1036, %v1037
    %v1039 = vand.u32 %v1038, 4294901760
    %1040 = vmatmul.f32.gmra.mxu0 %v1039
    %v1041 = vpop.f32.mrf.mxu0
    %v1042 = vadd.f32 0.0, %v1041
    %v1043 = vand.u32 %v138, 4294901760
    %v1044 = vsub.f32 %v138, %v1043
    %v1045 = vand.u32 %v1044, 4294901760
    %v1046 = vsub.f32 %v1044, %v1045
    %v1047 = vand.u32 %v1046, 4294901760
    %1048 = vmatmul.f32.gmra.mxu0 %v1047
    %v1049 = vpop.f32.mrf.mxu0
    %v1050 = vadd.f32 0.0, %v1049
    %v1051 = vand.u32 %v139, 4294901760
    %v1052 = vsub.f32 %v139, %v1051
    %v1053 = vand.u32 %v1052, 4294901760
    %v1054 = vsub.f32 %v1052, %v1053
    %v1055 = vand.u32 %v1054, 4294901760
    %1056 = vmatmul.f32.gmra.mxu0 %v1055
    %v1057 = vpop.f32.mrf.mxu0
    %v1058 = vadd.f32 0.0, %v1057
    %v1059 = vand.u32 %v140, 4294901760
    %v1060 = vsub.f32 %v140, %v1059
    %v1061 = vand.u32 %v1060, 4294901760
    %v1062 = vsub.f32 %v1060, %v1061
    %v1063 = vand.u32 %v1062, 4294901760
    %1064 = vmatmul.f32.gmra.mxu0 %v1063
    %v1065 = vpop.f32.mrf.mxu0
    %v1066 = vadd.f32 0.0, %v1065
    %v1067 = vand.u32 %v141, 4294901760
    %v1068 = vsub.f32 %v141, %v1067
    %v1069 = vand.u32 %v1068, 4294901760
    %v1070 = vsub.f32 %v1068, %v1069
    %v1071 = vand.u32 %v1070, 4294901760
    %1072 = vmatmul.f32.gmra.mxu0 %v1071
    %v1073 = vpop.f32.mrf.mxu0
    %v1074 = vadd.f32 0.0, %v1073
    %v1075 = vand.u32 %v142, 4294901760
    %v1076 = vsub.f32 %v142, %v1075
    %v1077 = vand.u32 %v1076, 4294901760
    %v1078 = vsub.f32 %v1076, %v1077
    %v1079 = vand.u32 %v1078, 4294901760
    %1080 = vmatmul.f32.gmra.mxu0 %v1079
    %v1081 = vpop.f32.mrf.mxu0
    %v1082 = vadd.f32 0.0, %v1081
    %v1083 = vand.u32 %v143, 4294901760
    %v1084 = vsub.f32 %v143, %v1083
    %v1085 = vand.u32 %v1084, 4294901760
    %v1086 = vsub.f32 %v1084, %v1085
    %v1087 = vand.u32 %v1086, 4294901760
    %1088 = vmatmul.f32.gmra.mxu0 %v1087
    %v1089 = vpop.f32.mrf.mxu0
    %v1090 = vadd.f32 0.0, %v1089
    %v1091 = vand.u32 %v144, 4294901760
    %v1092 = vsub.f32 %v144, %v1091
    %v1093 = vand.u32 %v1092, 4294901760
    %v1094 = vsub.f32 %v1092, %v1093
    %v1095 = vand.u32 %v1094, 4294901760
    %1096 = vmatmul.f32.gmra.mxu0 %v1095
    %v1097 = vpop.f32.mrf.mxu0
    %v1098 = vadd.f32 0.0, %v1097
    %v1099 = vand.u32 %v145, 4294901760
    %v1100 = vsub.f32 %v145, %v1099
    %v1101 = vand.u32 %v1100, 4294901760
    %v1102 = vsub.f32 %v1100, %v1101
    %v1103 = vand.u32 %v1102, 4294901760
    %1104 = vmatmul.f32.gmra.mxu0 %v1103
    %v1105 = vpop.f32.mrf.mxu0
    %v1106 = vadd.f32 0.0, %v1105
    %v1107 = vand.u32 %v146, 4294901760
    %v1108 = vsub.f32 %v146, %v1107
    %v1109 = vand.u32 %v1108, 4294901760
    %v1110 = vsub.f32 %v1108, %v1109
    %v1111 = vand.u32 %v1110, 4294901760
    %1112 = vmatmul.f32.gmra.mxu0 %v1111
    %v1113 = vpop.f32.mrf.mxu0
    %v1114 = vadd.f32 0.0, %v1113
    %v1115 = vand.u32 %v147, 4294901760
    %v1116 = vsub.f32 %v147, %v1115
    %v1117 = vand.u32 %v1116, 4294901760
    %v1118 = vsub.f32 %v1116, %v1117
    %v1119 = vand.u32 %v1118, 4294901760
    %1120 = vmatmul.f32.gmra.mxu0 %v1119
    %v1121 = vpop.f32.mrf.mxu0
    %v1122 = vadd.f32 0.0, %v1121
    %v1123 = vand.u32 %v148, 4294901760
    %v1124 = vsub.f32 %v148, %v1123
    %v1125 = vand.u32 %v1124, 4294901760
    %v1126 = vsub.f32 %v1124, %v1125
    %v1127 = vand.u32 %v1126, 4294901760
    %1128 = vmatmul.f32.gmra.mxu0 %v1127
    %v1129 = vpop.f32.mrf.mxu0
    %v1130 = vadd.f32 0.0, %v1129
    %v1131 = vand.u32 %v149, 4294901760
    %v1132 = vsub.f32 %v149, %v1131
    %v1133 = vand.u32 %v1132, 4294901760
    %v1134 = vsub.f32 %v1132, %v1133
    %v1135 = vand.u32 %v1134, 4294901760
    %1136 = vmatmul.f32.gmra.mxu0 %v1135
    %v1137 = vpop.f32.mrf.mxu0
    %v1138 = vadd.f32 0.0, %v1137
    %v1139 = vand.u32 %v150, 4294901760
    %v1140 = vsub.f32 %v150, %v1139
    %v1141 = vand.u32 %v1140, 4294901760
    %v1142 = vsub.f32 %v1140, %v1141
    %v1143 = vand.u32 %v1142, 4294901760
    %1144 = vmatmul.f32.gmra.mxu0 %v1143
    %v1145 = vpop.f32.mrf.mxu0
    %v1146 = vadd.f32 0.0, %v1145
    %v1147 = vand.u32 %v151, 4294901760
    %v1148 = vsub.f32 %v151, %v1147
    %v1149 = vand.u32 %v1148, 4294901760
    %v1150 = vsub.f32 %v1148, %v1149
    %v1151 = vand.u32 %v1150, 4294901760
    %1152 = vmatmul.f32.gmra.mxu0 %v1151
    %v1153 = vpop.f32.mrf.mxu0
    %v1154 = vadd.f32 0.0, %v1153
    %v1155 = vand.u32 %v152, 4294901760
    %v1156 = vsub.f32 %v152, %v1155
    %v1157 = vand.u32 %v1156, 4294901760
    %v1158 = vsub.f32 %v1156, %v1157
    %v1159 = vand.u32 %v1158, 4294901760
    %1160 = vmatmul.f32.gmra.mxu0 %v1159
    %v1161 = vpop.f32.mrf.mxu0
    %v1162 = vadd.f32 0.0, %v1161
    %v1163 = vand.u32 %v153, 4294901760
    %v1164 = vsub.f32 %v153, %v1163
    %v1165 = vand.u32 %v1164, 4294901760
    %v1166 = vsub.f32 %v1164, %v1165
    %v1167 = vand.u32 %v1166, 4294901760
    %1168 = vmatmul.f32.gmra.mxu0 %v1167
    %v1169 = vpop.f32.mrf.mxu0
    %v1170 = vadd.f32 0.0, %v1169
    %v1171 = vand.u32 %v154, 4294901760
    %v1172 = vsub.f32 %v154, %v1171
    %v1173 = vand.u32 %v1172, 4294901760
    %v1174 = vsub.f32 %v1172, %v1173
    %v1175 = vand.u32 %v1174, 4294901760
    %1176 = vmatmul.f32.gmra.mxu0 %v1175
    %v1177 = vpop.f32.mrf.mxu0
    %v1178 = vadd.f32 0.0, %v1177
    %v1179 = vand.u32 %v155, 4294901760
    %v1180 = vsub.f32 %v155, %v1179
    %v1181 = vand.u32 %v1180, 4294901760
    %v1182 = vsub.f32 %v1180, %v1181
    %v1183 = vand.u32 %v1182, 4294901760
    %1184 = vmatmul.f32.gmra.mxu0 %v1183
    %v1185 = vpop.f32.mrf.mxu0
    %v1186 = vadd.f32 0.0, %v1185
    %v1187 = vand.u32 %v156, 4294901760
    %v1188 = vsub.f32 %v156, %v1187
    %v1189 = vand.u32 %v1188, 4294901760
    %v1190 = vsub.f32 %v1188, %v1189
    %v1191 = vand.u32 %v1190, 4294901760
    %1192 = vmatmul.f32.gmra.mxu0 %v1191
    %v1193 = vpop.f32.mrf.mxu0
    %v1194 = vadd.f32 0.0, %v1193
    %v1195 = vand.u32 %v157, 4294901760
    %v1196 = vsub.f32 %v157, %v1195
    %v1197 = vand.u32 %v1196, 4294901760
    %v1198 = vsub.f32 %v1196, %v1197
    %v1199 = vand.u32 %v1198, 4294901760
    %1200 = vmatmul.f32.gmra.mxu0 %v1199
    %v1201 = vpop.f32.mrf.mxu0
    %v1202 = vadd.f32 0.0, %v1201
    %v1203 = vand.u32 %v158, 4294901760
    %v1204 = vsub.f32 %v158, %v1203
    %v1205 = vand.u32 %v1204, 4294901760
    %v1206 = vsub.f32 %v1204, %v1205
    %v1207 = vand.u32 %v1206, 4294901760
    %1208 = vmatmul.f32.gmra.mxu0 %v1207
    %v1209 = vpop.f32.mrf.mxu0
    %v1210 = vadd.f32 0.0, %v1209
    %v1211 = vand.u32 %v159, 4294901760
    %v1212 = vsub.f32 %v159, %v1211
    %v1213 = vand.u32 %v1212, 4294901760
    %v1214 = vsub.f32 %v1212, %v1213
    %v1215 = vand.u32 %v1214, 4294901760
    %1216 = vmatmul.f32.gmra.mxu0 %v1215
    %v1217 = vpop.f32.mrf.mxu0
    %v1218 = vadd.f32 0.0, %v1217
    %v1219 = vand.u32 %v160, 4294901760
    %v1220 = vsub.f32 %v160, %v1219
    %v1221 = vand.u32 %v1220, 4294901760
    %v1222 = vsub.f32 %v1220, %v1221
    %v1223 = vand.u32 %v1222, 4294901760
    %1224 = vmatmul.f32.gmra.mxu0 %v1223
    %v1225 = vpop.f32.mrf.mxu0
    %v1226 = vadd.f32 0.0, %v1225
    %v1227 = vand.u32 %v161, 4294901760
    %v1228 = vsub.f32 %v161, %v1227
    %v1229 = vand.u32 %v1228, 4294901760
    %v1230 = vsub.f32 %v1228, %v1229
    %v1231 = vand.u32 %v1230, 4294901760
    %1232 = vmatmul.f32.gmra.mxu0 %v1231
    %v1233 = vpop.f32.mrf.mxu0
    %v1234 = vadd.f32 0.0, %v1233
    %v1235 = vand.u32 %v162, 4294901760
    %v1236 = vsub.f32 %v162, %v1235
    %v1237 = vand.u32 %v1236, 4294901760
    %v1238 = vsub.f32 %v1236, %v1237
    %v1239 = vand.u32 %v1238, 4294901760
    %1240 = vmatmul.f32.gmra.mxu0 %v1239
    %v1241 = vpop.f32.mrf.mxu0
    %v1242 = vadd.f32 0.0, %v1241
    %v1243 = vand.u32 %v163, 4294901760
    %v1244 = vsub.f32 %v163, %v1243
    %v1245 = vand.u32 %v1244, 4294901760
    %v1246 = vsub.f32 %v1244, %v1245
    %v1247 = vand.u32 %v1246, 4294901760
    %1248 = vmatmul.f32.gmra.mxu0 %v1247
    %v1249 = vpop.f32.mrf.mxu0
    %v1250 = vadd.f32 0.0, %v1249
    %v1251 = vand.u32 %v164, 4294901760
    %v1252 = vsub.f32 %v164, %v1251
    %v1253 = vand.u32 %v1252, 4294901760
    %v1254 = vsub.f32 %v1252, %v1253
    %v1255 = vand.u32 %v1254, 4294901760
    %1256 = vmatmul.f32.gmra.mxu0 %v1255
    %v1257 = vpop.f32.mrf.mxu0
    %v1258 = vadd.f32 0.0, %v1257
    %v1259 = vand.u32 %v165, 4294901760
    %v1260 = vsub.f32 %v165, %v1259
    %v1261 = vand.u32 %v1260, 4294901760
    %v1262 = vsub.f32 %v1260, %v1261
    %v1263 = vand.u32 %v1262, 4294901760
    %1264 = vmatmul.f32.gmra.mxu0 %v1263
    %v1265 = vpop.f32.mrf.mxu0
    %v1266 = vadd.f32 0.0, %v1265
    %v1267 = vand.u32 %v166, 4294901760
    %v1268 = vsub.f32 %v166, %v1267
    %v1269 = vand.u32 %v1268, 4294901760
    %v1270 = vsub.f32 %v1268, %v1269
    %v1271 = vand.u32 %v1270, 4294901760
    %1272 = vmatmul.f32.gmra.mxu0 %v1271
    %v1273 = vpop.f32.mrf.mxu0
    %v1274 = vadd.f32 0.0, %v1273
    %v1275 = vand.u32 %v167, 4294901760
    %v1276 = vsub.f32 %v167, %v1275
    %v1277 = vand.u32 %v1276, 4294901760
    %v1278 = vsub.f32 %v1276, %v1277
    %v1279 = vand.u32 %v1278, 4294901760
    %1280 = vmatmul.f32.gmra.mxu0 %v1279
    %v1281 = vpop.f32.mrf.mxu0
    %v1282 = vadd.f32 0.0, %v1281
    %v1283 = vand.u32 %v168, 4294901760
    %v1284 = vsub.f32 %v168, %v1283
    %v1285 = vand.u32 %v1284, 4294901760
    %v1286 = vsub.f32 %v1284, %v1285
    %v1287 = vand.u32 %v1286, 4294901760
    %1288 = vmatmul.f32.gmra.mxu0 %v1287
    %v1289 = vpop.f32.mrf.mxu0
    %v1290 = vadd.f32 0.0, %v1289
    %v1291 = vand.u32 %v169, 4294901760
    %v1292 = vsub.f32 %v169, %v1291
    %v1293 = vand.u32 %v1292, 4294901760
    %v1294 = vsub.f32 %v1292, %v1293
    %v1295 = vand.u32 %v1294, 4294901760
    %1296 = vmatmul.f32.gmra.mxu0 %v1295
    %v1297 = vpop.f32.mrf.mxu0
    %v1298 = vadd.f32 0.0, %v1297
    %v1299 = vand.u32 %v170, 4294901760
    %v1300 = vsub.f32 %v170, %v1299
    %v1301 = vand.u32 %v1300, 4294901760
    %v1302 = vsub.f32 %v1300, %v1301
    %v1303 = vand.u32 %v1302, 4294901760
    %1304 = vmatmul.f32.gmra.mxu0 %v1303
    %v1305 = vpop.f32.mrf.mxu0
    %v1306 = vadd.f32 0.0, %v1305
    %v1307 = vand.u32 %v171, 4294901760
    %v1308 = vsub.f32 %v171, %v1307
    %v1309 = vand.u32 %v1308, 4294901760
    %v1310 = vsub.f32 %v1308, %v1309
    %v1311 = vand.u32 %v1310, 4294901760
    %1312 = vmatmul.f32.gmra.mxu0 %v1311
    %v1313 = vpop.f32.mrf.mxu0
    %v1314 = vadd.f32 0.0, %v1313
    %v1315 = vand.u32 %v172, 4294901760
    %v1316 = vsub.f32 %v172, %v1315
    %v1317 = vand.u32 %v1316, 4294901760
    %v1318 = vsub.f32 %v1316, %v1317
    %v1319 = vand.u32 %v1318, 4294901760
    %1320 = vmatmul.f32.gmra.mxu0 %v1319
    %v1321 = vpop.f32.mrf.mxu0
    %v1322 = vadd.f32 0.0, %v1321
    %v1323 = vand.u32 %v173, 4294901760
    %v1324 = vsub.f32 %v173, %v1323
    %v1325 = vand.u32 %v1324, 4294901760
    %v1326 = vsub.f32 %v1324, %v1325
    %v1327 = vand.u32 %v1326, 4294901760
    %1328 = vmatmul.f32.gmra.mxu0 %v1327
    %v1329 = vpop.f32.mrf.mxu0
    %v1330 = vadd.f32 0.0, %v1329
    %v1331 = vand.u32 %v174, 4294901760
    %v1332 = vsub.f32 %v174, %v1331
    %v1333 = vand.u32 %v1332, 4294901760
    %v1334 = vsub.f32 %v1332, %v1333
    %v1335 = vand.u32 %v1334, 4294901760
    %1336 = vmatmul.f32.gmra.mxu0 %v1335
    %v1337 = vpop.f32.mrf.mxu0
    %v1338 = vadd.f32 0.0, %v1337
    %v1339 = vand.u32 %v175, 4294901760
    %v1340 = vsub.f32 %v175, %v1339
    %v1341 = vand.u32 %v1340, 4294901760
    %v1342 = vsub.f32 %v1340, %v1341
    %v1343 = vand.u32 %v1342, 4294901760
    %1344 = vmatmul.f32.gmra.mxu0 %v1343
    %v1345 = vpop.f32.mrf.mxu0
    %v1346 = vadd.f32 0.0, %v1345
    %v1347 = vand.u32 %v176, 4294901760
    %v1348 = vsub.f32 %v176, %v1347
    %v1349 = vand.u32 %v1348, 4294901760
    %v1350 = vsub.f32 %v1348, %v1349
    %v1351 = vand.u32 %v1350, 4294901760
    %1352 = vmatmul.f32.gmra.mxu0 %v1351
    %v1353 = vpop.f32.mrf.mxu0
    %v1354 = vadd.f32 0.0, %v1353
    %v1355 = vand.u32 %v177, 4294901760
    %v1356 = vsub.f32 %v177, %v1355
    %v1357 = vand.u32 %v1356, 4294901760
    %v1358 = vsub.f32 %v1356, %v1357
    %v1359 = vand.u32 %v1358, 4294901760
    %1360 = vmatmul.f32.gmra.mxu0 %v1359
    %v1361 = vpop.f32.mrf.mxu0
    %v1362 = vadd.f32 0.0, %v1361
    %v1363 = vand.u32 %v178, 4294901760
    %v1364 = vsub.f32 %v178, %v1363
    %v1365 = vand.u32 %v1364, 4294901760
    %v1366 = vsub.f32 %v1364, %v1365
    %v1367 = vand.u32 %v1366, 4294901760
    %1368 = vmatmul.f32.gmra.mxu0 %v1367
    %v1369 = vpop.f32.mrf.mxu0
    %v1370 = vadd.f32 0.0, %v1369
    %v1371 = vand.u32 %v179, 4294901760
    %v1372 = vsub.f32 %v179, %v1371
    %v1373 = vand.u32 %v1372, 4294901760
    %v1374 = vsub.f32 %v1372, %v1373
    %v1375 = vand.u32 %v1374, 4294901760
    %1376 = vmatmul.f32.gmra.mxu0 %v1375
    %v1377 = vpop.f32.mrf.mxu0
    %v1378 = vadd.f32 0.0, %v1377
    %v1379 = vand.u32 %v180, 4294901760
    %v1380 = vsub.f32 %v180, %v1379
    %v1381 = vand.u32 %v1380, 4294901760
    %v1382 = vsub.f32 %v1380, %v1381
    %v1383 = vand.u32 %v1382, 4294901760
    %1384 = vmatmul.f32.gmra.mxu0 %v1383
    %v1385 = vpop.f32.mrf.mxu0
    %v1386 = vadd.f32 0.0, %v1385
    %v1387 = vand.u32 %v181, 4294901760
    %v1388 = vsub.f32 %v181, %v1387
    %v1389 = vand.u32 %v1388, 4294901760
    %v1390 = vsub.f32 %v1388, %v1389
    %v1391 = vand.u32 %v1390, 4294901760
    %1392 = vmatmul.f32.gmra.mxu0 %v1391
    %v1393 = vpop.f32.mrf.mxu0
    %v1394 = vadd.f32 0.0, %v1393
    %v1395 = vand.u32 %v182, 4294901760
    %v1396 = vsub.f32 %v182, %v1395
    %v1397 = vand.u32 %v1396, 4294901760
    %v1398 = vsub.f32 %v1396, %v1397
    %v1399 = vand.u32 %v1398, 4294901760
    %1400 = vmatmul.f32.gmra.mxu0 %v1399
    %v1401 = vpop.f32.mrf.mxu0
    %v1402 = vadd.f32 0.0, %v1401
    %v1403 = vand.u32 %v183, 4294901760
    %v1404 = vsub.f32 %v183, %v1403
    %v1405 = vand.u32 %v1404, 4294901760
    %v1406 = vsub.f32 %v1404, %v1405
    %v1407 = vand.u32 %v1406, 4294901760
    %1408 = vmatmul.f32.gmra.mxu0 %v1407
    %v1409 = vpop.f32.mrf.mxu0
    %v1410 = vadd.f32 0.0, %v1409
    %v1411 = vand.u32 %v184, 4294901760
    %v1412 = vsub.f32 %v184, %v1411
    %v1413 = vand.u32 %v1412, 4294901760
    %v1414 = vsub.f32 %v1412, %v1413
    %v1415 = vand.u32 %v1414, 4294901760
    %1416 = vmatmul.f32.gmra.mxu0 %v1415
    %v1417 = vpop.f32.mrf.mxu0
    %v1418 = vadd.f32 0.0, %v1417
    %v1419 = vand.u32 %v185, 4294901760
    %v1420 = vsub.f32 %v185, %v1419
    %v1421 = vand.u32 %v1420, 4294901760
    %v1422 = vsub.f32 %v1420, %v1421
    %v1423 = vand.u32 %v1422, 4294901760
    %1424 = vmatmul.f32.gmra.mxu0 %v1423
    %v1425 = vpop.f32.mrf.mxu0
    %v1426 = vadd.f32 0.0, %v1425
    %v1427 = vand.u32 %v186, 4294901760
    %v1428 = vsub.f32 %v186, %v1427
    %v1429 = vand.u32 %v1428, 4294901760
    %v1430 = vsub.f32 %v1428, %v1429
    %v1431 = vand.u32 %v1430, 4294901760
    %1432 = vmatmul.f32.gmra.mxu0 %v1431
    %v1433 = vpop.f32.mrf.mxu0
    %v1434 = vadd.f32 0.0, %v1433
    %v1435 = vand.u32 %v187, 4294901760
    %v1436 = vsub.f32 %v187, %v1435
    %v1437 = vand.u32 %v1436, 4294901760
    %v1438 = vsub.f32 %v1436, %v1437
    %v1439 = vand.u32 %v1438, 4294901760
    %1440 = vmatmul.f32.gmra.mxu0 %v1439
    %v1441 = vpop.f32.mrf.mxu0
    %v1442 = vadd.f32 0.0, %v1441
    %v1443 = vand.u32 %v188, 4294901760
    %v1444 = vsub.f32 %v188, %v1443
    %v1445 = vand.u32 %v1444, 4294901760
    %v1446 = vsub.f32 %v1444, %v1445
    %v1447 = vand.u32 %v1446, 4294901760
    %1448 = vmatmul.f32.gmra.mxu0 %v1447
    %v1449 = vpop.f32.mrf.mxu0
    %v1450 = vadd.f32 0.0, %v1449
    %v1451 = vand.u32 %v189, 4294901760
    %v1452 = vsub.f32 %v189, %v1451
    %v1453 = vand.u32 %v1452, 4294901760
    %v1454 = vsub.f32 %v1452, %v1453
    %v1455 = vand.u32 %v1454, 4294901760
    %1456 = vmatmul.f32.gmra.mxu0 %v1455
    %v1457 = vpop.f32.mrf.mxu0
    %v1458 = vadd.f32 0.0, %v1457
    %v1459 = vand.u32 %v190, 4294901760
    %v1460 = vsub.f32 %v190, %v1459
    %v1461 = vand.u32 %v1460, 4294901760
    %v1462 = vsub.f32 %v1460, %v1461
    %v1463 = vand.u32 %v1462, 4294901760
    %1464 = vmatmul.f32.gmra.mxu0 %v1463
    %v1465 = vpop.f32.mrf.mxu0
    %v1466 = vadd.f32 0.0, %v1465
    %v1467 = vand.u32 %v191, 4294901760
    %v1468 = vsub.f32 %v191, %v1467
    %v1469 = vand.u32 %v1468, 4294901760
    %v1470 = vsub.f32 %v1468, %v1469
    %v1471 = vand.u32 %v1470, 4294901760
    %1472 = vmatmul.f32.gmra.mxu0 %v1471
    %v1473 = vpop.f32.mrf.mxu0
    %v1474 = vadd.f32 0.0, %v1473
    %v1475 = vand.u32 %v192, 4294901760
    %v1476 = vsub.f32 %v192, %v1475
    %v1477 = vand.u32 %v1476, 4294901760
    %v1478 = vsub.f32 %v1476, %v1477
    %v1479 = vand.u32 %v1478, 4294901760
    %1480 = vmatmul.f32.gmra.mxu0 %v1479
    %v1481 = vpop.f32.mrf.mxu0
    %v1482 = vadd.f32 0.0, %v1481
    %v1483 = vand.u32 %v193, 4294901760
    %v1484 = vsub.f32 %v193, %v1483
    %v1485 = vand.u32 %v1484, 4294901760
    %v1486 = vsub.f32 %v1484, %v1485
    %v1487 = vand.u32 %v1486, 4294901760
    %1488 = vmatmul.f32.gmra.mxu0 %v1487
    %v1489 = vpop.f32.mrf.mxu0
    %v1490 = vadd.f32 0.0, %v1489
    %v1491 = vand.u32 %v194, 4294901760
    %v1492 = vsub.f32 %v194, %v1491
    %v1493 = vand.u32 %v1492, 4294901760
    %v1494 = vsub.f32 %v1492, %v1493
    %v1495 = vand.u32 %v1494, 4294901760
    %1496 = vmatmul.f32.gmra.mxu0 %v1495
    %v1497 = vpop.f32.mrf.mxu0
    %v1498 = vadd.f32 0.0, %v1497
    %v1499 = vand.u32 %v195, 4294901760
    %v1500 = vsub.f32 %v195, %v1499
    %v1501 = vand.u32 %v1500, 4294901760
    %v1502 = vsub.f32 %v1500, %v1501
    %v1503 = vand.u32 %v1502, 4294901760
    %1504 = vmatmul.f32.gmra.mxu0 %v1503
    %v1505 = vpop.f32.mrf.mxu0
    %v1506 = vadd.f32 0.0, %v1505
    %v1507 = vand.u32 %v196, 4294901760
    %v1508 = vsub.f32 %v196, %v1507
    %v1509 = vand.u32 %v1508, 4294901760
    %v1510 = vsub.f32 %v1508, %v1509
    %v1511 = vand.u32 %v1510, 4294901760
    %1512 = vmatmul.f32.gmra.mxu0 %v1511
    %v1513 = vpop.f32.mrf.mxu0
    %v1514 = vadd.f32 0.0, %v1513
    %v1515 = vand.u32 %v197, 4294901760
    %v1516 = vsub.f32 %v197, %v1515
    %v1517 = vand.u32 %v1516, 4294901760
    %v1518 = vsub.f32 %v1516, %v1517
    %v1519 = vand.u32 %v1518, 4294901760
    %1520 = vmatmul.f32.gmra.mxu0 %v1519
    %v1521 = vpop.f32.mrf.mxu0
    %v1522 = vadd.f32 0.0, %v1521
    %v1523 = vand.u32 %v198, 4294901760
    %v1524 = vsub.f32 %v198, %v1523
    %v1525 = vand.u32 %v1524, 4294901760
    %v1526 = vsub.f32 %v1524, %v1525
    %v1527 = vand.u32 %v1526, 4294901760
    %1528 = vmatmul.f32.gmra.mxu0 %v1527
    %v1529 = vpop.f32.mrf.mxu0
    %v1530 = vadd.f32 0.0, %v1529
    %v1531 = vand.u32 %v199, 4294901760
    %v1532 = vsub.f32 %v199, %v1531
    %v1533 = vand.u32 %v1532, 4294901760
    %v1534 = vsub.f32 %v1532, %v1533
    %v1535 = vand.u32 %v1534, 4294901760
    %1536 = vmatmul.f32.gmra.mxu0 %v1535
    %v1537 = vpop.f32.mrf.mxu0
    %v1538 = vadd.f32 0.0, %v1537
    %v1539 = vand.u32 %v200, 4294901760
    %v1540 = vsub.f32 %v200, %v1539
    %v1541 = vand.u32 %v1540, 4294901760
    %v1542 = vsub.f32 %v1540, %v1541
    %v1543 = vand.u32 %v1542, 4294901760
    %1544 = vmatmul.f32.gmra.mxu0 %v1543
    %v1545 = vpop.f32.mrf.mxu0
    %v1546 = vadd.f32 0.0, %v1545
    %v1547 = vand.u32 %v201, 4294901760
    %v1548 = vsub.f32 %v201, %v1547
    %v1549 = vand.u32 %v1548, 4294901760
    %v1550 = vsub.f32 %v1548, %v1549
    %v1551 = vand.u32 %v1550, 4294901760
    %1552 = vmatmul.f32.gmra.mxu0 %v1551
    %v1553 = vpop.f32.mrf.mxu0
    %v1554 = vadd.f32 0.0, %v1553
    %v1555 = vand.u32 %v202, 4294901760
    %v1556 = vsub.f32 %v202, %v1555
    %v1557 = vand.u32 %v1556, 4294901760
    %v1558 = vsub.f32 %v1556, %v1557
    %v1559 = vand.u32 %v1558, 4294901760
    %1560 = vmatmul.f32.gmra.mxu0 %v1559
    %v1561 = vpop.f32.mrf.mxu0
    %v1562 = vadd.f32 0.0, %v1561
    %v1563 = vand.u32 %v203, 4294901760
    %v1564 = vsub.f32 %v203, %v1563
    %v1565 = vand.u32 %v1564, 4294901760
    %v1566 = vsub.f32 %v1564, %v1565
    %v1567 = vand.u32 %v1566, 4294901760
    %1568 = vmatmul.f32.gmra.mxu0 %v1567
    %v1569 = vpop.f32.mrf.mxu0
    %v1570 = vadd.f32 0.0, %v1569
    %v1571 = vand.u32 %v204, 4294901760
    %v1572 = vsub.f32 %v204, %v1571
    %v1573 = vand.u32 %v1572, 4294901760
    %v1574 = vsub.f32 %v1572, %v1573
    %v1575 = vand.u32 %v1574, 4294901760
    %1576 = vmatmul.f32.gmra.mxu0 %v1575
    %v1577 = vpop.f32.mrf.mxu0
    %v1578 = vadd.f32 0.0, %v1577
    %v1579 = vand.u32 %v205, 4294901760
    %v1580 = vsub.f32 %v205, %v1579
    %v1581 = vand.u32 %v1580, 4294901760
    %v1582 = vsub.f32 %v1580, %v1581
    %v1583 = vand.u32 %v1582, 4294901760
    %1584 = vmatmul.f32.gmra.mxu0 %v1583
    %v1585 = vpop.f32.mrf.mxu0
    %v1586 = vadd.f32 0.0, %v1585
    %v1587 = vand.u32 %v206, 4294901760
    %v1588 = vsub.f32 %v206, %v1587
    %v1589 = vand.u32 %v1588, 4294901760
    %v1590 = vsub.f32 %v1588, %v1589
    %v1591 = vand.u32 %v1590, 4294901760
    %1592 = vmatmul.f32.gmra.mxu0 %v1591
    %v1593 = vpop.f32.mrf.mxu0
    %v1594 = vadd.f32 0.0, %v1593
    %v1595 = vand.u32 %v207, 4294901760
    %v1596 = vsub.f32 %v207, %v1595
    %v1597 = vand.u32 %v1596, 4294901760
    %v1598 = vsub.f32 %v1596, %v1597
    %v1599 = vand.u32 %v1598, 4294901760
    %1600 = vmatmul.f32.gmra.mxu0 %v1599
    %v1601 = vpop.f32.mrf.mxu0
    %v1602 = vadd.f32 0.0, %v1601
    %v1603 = vand.u32 %v208, 4294901760
    %v1604 = vsub.f32 %v208, %v1603
    %v1605 = vand.u32 %v1604, 4294901760
    %v1606 = vsub.f32 %v1604, %v1605
    %v1607 = vand.u32 %v1606, 4294901760
    %1608 = vmatmul.f32.gmra.mxu0 %v1607
    %v1609 = vpop.f32.mrf.mxu0
    %v1610 = vadd.f32 0.0, %v1609
    %v1611 = vand.u32 %v209, 4294901760
    %v1612 = vsub.f32 %v209, %v1611
    %v1613 = vand.u32 %v1612, 4294901760
    %v1614 = vsub.f32 %v1612, %v1613
    %v1615 = vand.u32 %v1614, 4294901760
    %1616 = vmatmul.f32.gmra.mxu0 %v1615
    %v1617 = vpop.f32.mrf.mxu0
    %v1618 = vadd.f32 0.0, %v1617
    %v1619 = vand.u32 %v210, 4294901760
    %v1620 = vsub.f32 %v210, %v1619
    %v1621 = vand.u32 %v1620, 4294901760
    %v1622 = vsub.f32 %v1620, %v1621
    %v1623 = vand.u32 %v1622, 4294901760
    %1624 = vmatmul.f32.gmra.mxu0 %v1623
    %v1625 = vpop.f32.mrf.mxu0
    %v1626 = vadd.f32 0.0, %v1625
    %v1627 = vand.u32 %v211, 4294901760
    %v1628 = vsub.f32 %v211, %v1627
    %v1629 = vand.u32 %v1628, 4294901760
    %v1630 = vsub.f32 %v1628, %v1629
    %v1631 = vand.u32 %v1630, 4294901760
    %1632 = vmatmul.f32.gmra.mxu0 %v1631
    %v1633 = vpop.f32.mrf.mxu0
    %v1634 = vadd.f32 0.0, %v1633
    %v1635 = vand.u32 %v212, 4294901760
    %v1636 = vsub.f32 %v212, %v1635
    %v1637 = vand.u32 %v1636, 4294901760
    %v1638 = vsub.f32 %v1636, %v1637
    %v1639 = vand.u32 %v1638, 4294901760
    %1640 = vmatmul.f32.gmra.mxu0 %v1639
    %v1641 = vpop.f32.mrf.mxu0
    %v1642 = vadd.f32 0.0, %v1641
    %1643 = vdwg.mxu0
    %v1644 = vand.u32 %v244, 4294901760
    %v1645 = vsub.f32 %v244, %v1644
    %v1646 = vand.u32 %v1645, 4294901760
    %v1647 = vsub.f32 %v1645, %v1646
    %v1648 = vand.u32 %v1647, 4294901760
    %1649 = vmatpush.msra.mxu0 %v1648
    %v1650 = vand.u32 %v243, 4294901760
    %v1651 = vsub.f32 %v243, %v1650
    %v1652 = vand.u32 %v1651, 4294901760
    %v1653 = vsub.f32 %v1651, %v1652
    %v1654 = vand.u32 %v1653, 4294901760
    %1655 = vmatpush.msra.mxu0 %v1654
    %v1656 = vand.u32 %v242, 4294901760
    %v1657 = vsub.f32 %v242, %v1656
    %v1658 = vand.u32 %v1657, 4294901760
    %v1659 = vsub.f32 %v1657, %v1658
    %v1660 = vand.u32 %v1659, 4294901760
    %1661 = vmatpush.msra.mxu0 %v1660
    %v1662 = vand.u32 %v241, 4294901760
    %v1663 = vsub.f32 %v241, %v1662
    %v1664 = vand.u32 %v1663, 4294901760
    %v1665 = vsub.f32 %v1663, %v1664
    %v1666 = vand.u32 %v1665, 4294901760
    %1667 = vmatpush.msra.mxu0 %v1666
    %v1668 = vand.u32 %v240, 4294901760
    %v1669 = vsub.f32 %v240, %v1668
    %v1670 = vand.u32 %v1669, 4294901760
    %v1671 = vsub.f32 %v1669, %v1670
    %v1672 = vand.u32 %v1671, 4294901760
    %1673 = vmatpush.msra.mxu0 %v1672
    %v1674 = vand.u32 %v239, 4294901760
    %v1675 = vsub.f32 %v239, %v1674
    %v1676 = vand.u32 %v1675, 4294901760
    %v1677 = vsub.f32 %v1675, %v1676
    %v1678 = vand.u32 %v1677, 4294901760
    %1679 = vmatpush.msra.mxu0 %v1678
    %v1680 = vand.u32 %v238, 4294901760
    %v1681 = vsub.f32 %v238, %v1680
    %v1682 = vand.u32 %v1681, 4294901760
    %v1683 = vsub.f32 %v1681, %v1682
    %v1684 = vand.u32 %v1683, 4294901760
    %1685 = vmatpush.msra.mxu0 %v1684
    %v1686 = vand.u32 %v237, 4294901760
    %v1687 = vsub.f32 %v237, %v1686
    %v1688 = vand.u32 %v1687, 4294901760
    %v1689 = vsub.f32 %v1687, %v1688
    %v1690 = vand.u32 %v1689, 4294901760
    %1691 = vmatpush.msra.mxu0 %v1690
    %v1692 = vand.u32 %v236, 4294901760
    %v1693 = vsub.f32 %v236, %v1692
    %v1694 = vand.u32 %v1693, 4294901760
    %v1695 = vsub.f32 %v1693, %v1694
    %v1696 = vand.u32 %v1695, 4294901760
    %1697 = vmatpush.msra.mxu0 %v1696
    %v1698 = vand.u32 %v235, 4294901760
    %v1699 = vsub.f32 %v235, %v1698
    %v1700 = vand.u32 %v1699, 4294901760
    %v1701 = vsub.f32 %v1699, %v1700
    %v1702 = vand.u32 %v1701, 4294901760
    %1703 = vmatpush.msra.mxu0 %v1702
    %v1704 = vand.u32 %v234, 4294901760
    %v1705 = vsub.f32 %v234, %v1704
    %v1706 = vand.u32 %v1705, 4294901760
    %v1707 = vsub.f32 %v1705, %v1706
    %v1708 = vand.u32 %v1707, 4294901760
    %1709 = vmatpush.msra.mxu0 %v1708
    %v1710 = vand.u32 %v233, 4294901760
    %v1711 = vsub.f32 %v233, %v1710
    %v1712 = vand.u32 %v1711, 4294901760
    %v1713 = vsub.f32 %v1711, %v1712
    %v1714 = vand.u32 %v1713, 4294901760
    %1715 = vmatpush.msra.mxu0 %v1714
    %v1716 = vand.u32 %v232, 4294901760
    %v1717 = vsub.f32 %v232, %v1716
    %v1718 = vand.u32 %v1717, 4294901760
    %v1719 = vsub.f32 %v1717, %v1718
    %v1720 = vand.u32 %v1719, 4294901760
    %1721 = vmatpush.msra.mxu0 %v1720
    %v1722 = vand.u32 %v231, 4294901760
    %v1723 = vsub.f32 %v231, %v1722
    %v1724 = vand.u32 %v1723, 4294901760
    %v1725 = vsub.f32 %v1723, %v1724
    %v1726 = vand.u32 %v1725, 4294901760
    %1727 = vmatpush.msra.mxu0 %v1726
    %v1728 = vand.u32 %v230, 4294901760
    %v1729 = vsub.f32 %v230, %v1728
    %v1730 = vand.u32 %v1729, 4294901760
    %v1731 = vsub.f32 %v1729, %v1730
    %v1732 = vand.u32 %v1731, 4294901760
    %1733 = vmatpush.msra.mxu0 %v1732
    %v1734 = vand.u32 %v229, 4294901760
    %v1735 = vsub.f32 %v229, %v1734
    %v1736 = vand.u32 %v1735, 4294901760
    %v1737 = vsub.f32 %v1735, %v1736
    %v1738 = vand.u32 %v1737, 4294901760
    %1739 = vmatpush.msra.mxu0 %v1738
    %v1740 = vand.u32 %v85, 4294901760
    %1741 = vmatmul.f32.gmra.mxu0 %v1740
    %v1742 = vpop.f32.mrf.mxu0
    %v1743 = vadd.f32 %v626, %v1742
    %v1744 = vand.u32 %v86, 4294901760
    %1745 = vmatmul.f32.gmra.mxu0 %v1744
    %v1746 = vpop.f32.mrf.mxu0
    %v1747 = vadd.f32 %v634, %v1746
    %v1748 = vand.u32 %v87, 4294901760
    %1749 = vmatmul.f32.gmra.mxu0 %v1748
    %v1750 = vpop.f32.mrf.mxu0
    %v1751 = vadd.f32 %v642, %v1750
    %v1752 = vand.u32 %v88, 4294901760
    %1753 = vmatmul.f32.gmra.mxu0 %v1752
    %v1754 = vpop.f32.mrf.mxu0
    %v1755 = vadd.f32 %v650, %v1754
    %v1756 = vand.u32 %v89, 4294901760
    %1757 = vmatmul.f32.gmra.mxu0 %v1756
    %v1758 = vpop.f32.mrf.mxu0
    %v1759 = vadd.f32 %v658, %v1758
    %v1760 = vand.u32 %v90, 4294901760
    %1761 = vmatmul.f32.gmra.mxu0 %v1760
    %v1762 = vpop.f32.mrf.mxu0
    %v1763 = vadd.f32 %v666, %v1762
    %v1764 = vand.u32 %v91, 4294901760
    %1765 = vmatmul.f32.gmra.mxu0 %v1764
    %v1766 = vpop.f32.mrf.mxu0
    %v1767 = vadd.f32 %v674, %v1766
    %v1768 = vand.u32 %v92, 4294901760
    %1769 = vmatmul.f32.gmra.mxu0 %v1768
    %v1770 = vpop.f32.mrf.mxu0
    %v1771 = vadd.f32 %v682, %v1770
    %v1772 = vand.u32 %v93, 4294901760
    %1773 = vmatmul.f32.gmra.mxu0 %v1772
    %v1774 = vpop.f32.mrf.mxu0
    %v1775 = vadd.f32 %v690, %v1774
    %v1776 = vand.u32 %v94, 4294901760
    %1777 = vmatmul.f32.gmra.mxu0 %v1776
    %v1778 = vpop.f32.mrf.mxu0
    %v1779 = vadd.f32 %v698, %v1778
    %v1780 = vand.u32 %v95, 4294901760
    %1781 = vmatmul.f32.gmra.mxu0 %v1780
    %v1782 = vpop.f32.mrf.mxu0
    %v1783 = vadd.f32 %v706, %v1782
    %v1784 = vand.u32 %v96, 4294901760
    %1785 = vmatmul.f32.gmra.mxu0 %v1784
    %v1786 = vpop.f32.mrf.mxu0
    %v1787 = vadd.f32 %v714, %v1786
    %v1788 = vand.u32 %v97, 4294901760
    %1789 = vmatmul.f32.gmra.mxu0 %v1788
    %v1790 = vpop.f32.mrf.mxu0
    %v1791 = vadd.f32 %v722, %v1790
    %v1792 = vand.u32 %v98, 4294901760
    %1793 = vmatmul.f32.gmra.mxu0 %v1792
    %v1794 = vpop.f32.mrf.mxu0
    %v1795 = vadd.f32 %v730, %v1794
    %v1796 = vand.u32 %v99, 4294901760
    %1797 = vmatmul.f32.gmra.mxu0 %v1796
    %v1798 = vpop.f32.mrf.mxu0
    %v1799 = vadd.f32 %v738, %v1798
    %v1800 = vand.u32 %v100, 4294901760
    %1801 = vmatmul.f32.gmra.mxu0 %v1800
    %v1802 = vpop.f32.mrf.mxu0
    %v1803 = vadd.f32 %v746, %v1802
    %v1804 = vand.u32 %v101, 4294901760
    %1805 = vmatmul.f32.gmra.mxu0 %v1804
    %v1806 = vpop.f32.mrf.mxu0
    %v1807 = vadd.f32 %v754, %v1806
    %v1808 = vand.u32 %v102, 4294901760
    %1809 = vmatmul.f32.gmra.mxu0 %v1808
    %v1810 = vpop.f32.mrf.mxu0
    %v1811 = vadd.f32 %v762, %v1810
    %v1812 = vand.u32 %v103, 4294901760
    %1813 = vmatmul.f32.gmra.mxu0 %v1812
    %v1814 = vpop.f32.mrf.mxu0
    %v1815 = vadd.f32 %v770, %v1814
    %v1816 = vand.u32 %v104, 4294901760
    %1817 = vmatmul.f32.gmra.mxu0 %v1816
    %v1818 = vpop.f32.mrf.mxu0
    %v1819 = vadd.f32 %v778, %v1818
    %v1820 = vand.u32 %v105, 4294901760
    %1821 = vmatmul.f32.gmra.mxu0 %v1820
    %v1822 = vpop.f32.mrf.mxu0
    %v1823 = vadd.f32 %v786, %v1822
    %v1824 = vand.u32 %v106, 4294901760
    %1825 = vmatmul.f32.gmra.mxu0 %v1824
    %v1826 = vpop.f32.mrf.mxu0
    %v1827 = vadd.f32 %v794, %v1826
    %v1828 = vand.u32 %v107, 4294901760
    %1829 = vmatmul.f32.gmra.mxu0 %v1828
    %v1830 = vpop.f32.mrf.mxu0
    %v1831 = vadd.f32 %v802, %v1830
    %v1832 = vand.u32 %v108, 4294901760
    %1833 = vmatmul.f32.gmra.mxu0 %v1832
    %v1834 = vpop.f32.mrf.mxu0
    %v1835 = vadd.f32 %v810, %v1834
    %v1836 = vand.u32 %v109, 4294901760
    %1837 = vmatmul.f32.gmra.mxu0 %v1836
    %v1838 = vpop.f32.mrf.mxu0
    %v1839 = vadd.f32 %v818, %v1838
    %v1840 = vand.u32 %v110, 4294901760
    %1841 = vmatmul.f32.gmra.mxu0 %v1840
    %v1842 = vpop.f32.mrf.mxu0
    %v1843 = vadd.f32 %v826, %v1842
    %v1844 = vand.u32 %v111, 4294901760
    %1845 = vmatmul.f32.gmra.mxu0 %v1844
    %v1846 = vpop.f32.mrf.mxu0
    %v1847 = vadd.f32 %v834, %v1846
    %v1848 = vand.u32 %v112, 4294901760
    %1849 = vmatmul.f32.gmra.mxu0 %v1848
    %v1850 = vpop.f32.mrf.mxu0
    %v1851 = vadd.f32 %v842, %v1850
    %v1852 = vand.u32 %v113, 4294901760
    %1853 = vmatmul.f32.gmra.mxu0 %v1852
    %v1854 = vpop.f32.mrf.mxu0
    %v1855 = vadd.f32 %v850, %v1854
    %v1856 = vand.u32 %v114, 4294901760
    %1857 = vmatmul.f32.gmra.mxu0 %v1856
    %v1858 = vpop.f32.mrf.mxu0
    %v1859 = vadd.f32 %v858, %v1858
    %v1860 = vand.u32 %v115, 4294901760
    %1861 = vmatmul.f32.gmra.mxu0 %v1860
    %v1862 = vpop.f32.mrf.mxu0
    %v1863 = vadd.f32 %v866, %v1862
    %v1864 = vand.u32 %v116, 4294901760
    %1865 = vmatmul.f32.gmra.mxu0 %v1864
    %v1866 = vpop.f32.mrf.mxu0
    %v1867 = vadd.f32 %v874, %v1866
    %v1868 = vand.u32 %v117, 4294901760
    %1869 = vmatmul.f32.gmra.mxu0 %v1868
    %v1870 = vpop.f32.mrf.mxu0
    %v1871 = vadd.f32 %v882, %v1870
    %v1872 = vand.u32 %v118, 4294901760
    %1873 = vmatmul.f32.gmra.mxu0 %v1872
    %v1874 = vpop.f32.mrf.mxu0
    %v1875 = vadd.f32 %v890, %v1874
    %v1876 = vand.u32 %v119, 4294901760
    %1877 = vmatmul.f32.gmra.mxu0 %v1876
    %v1878 = vpop.f32.mrf.mxu0
    %v1879 = vadd.f32 %v898, %v1878
    %v1880 = vand.u32 %v120, 4294901760
    %1881 = vmatmul.f32.gmra.mxu0 %v1880
    %v1882 = vpop.f32.mrf.mxu0
    %v1883 = vadd.f32 %v906, %v1882
    %v1884 = vand.u32 %v121, 4294901760
    %1885 = vmatmul.f32.gmra.mxu0 %v1884
    %v1886 = vpop.f32.mrf.mxu0
    %v1887 = vadd.f32 %v914, %v1886
    %v1888 = vand.u32 %v122, 4294901760
    %1889 = vmatmul.f32.gmra.mxu0 %v1888
    %v1890 = vpop.f32.mrf.mxu0
    %v1891 = vadd.f32 %v922, %v1890
    %v1892 = vand.u32 %v123, 4294901760
    %1893 = vmatmul.f32.gmra.mxu0 %v1892
    %v1894 = vpop.f32.mrf.mxu0
    %v1895 = vadd.f32 %v930, %v1894
    %v1896 = vand.u32 %v124, 4294901760
    %1897 = vmatmul.f32.gmra.mxu0 %v1896
    %v1898 = vpop.f32.mrf.mxu0
    %v1899 = vadd.f32 %v938, %v1898
    %v1900 = vand.u32 %v125, 4294901760
    %1901 = vmatmul.f32.gmra.mxu0 %v1900
    %v1902 = vpop.f32.mrf.mxu0
    %v1903 = vadd.f32 %v946, %v1902
    %v1904 = vand.u32 %v126, 4294901760
    %1905 = vmatmul.f32.gmra.mxu0 %v1904
    %v1906 = vpop.f32.mrf.mxu0
    %v1907 = vadd.f32 %v954, %v1906
    %v1908 = vand.u32 %v127, 4294901760
    %1909 = vmatmul.f32.gmra.mxu0 %v1908
    %v1910 = vpop.f32.mrf.mxu0
    %v1911 = vadd.f32 %v962, %v1910
    %v1912 = vand.u32 %v128, 4294901760
    %1913 = vmatmul.f32.gmra.mxu0 %v1912
    %v1914 = vpop.f32.mrf.mxu0
    %v1915 = vadd.f32 %v970, %v1914
    %v1916 = vand.u32 %v129, 4294901760
    %1917 = vmatmul.f32.gmra.mxu0 %v1916
    %v1918 = vpop.f32.mrf.mxu0
    %v1919 = vadd.f32 %v978, %v1918
    %v1920 = vand.u32 %v130, 4294901760
    %1921 = vmatmul.f32.gmra.mxu0 %v1920
    %v1922 = vpop.f32.mrf.mxu0
    %v1923 = vadd.f32 %v986, %v1922
    %v1924 = vand.u32 %v131, 4294901760
    %1925 = vmatmul.f32.gmra.mxu0 %v1924
    %v1926 = vpop.f32.mrf.mxu0
    %v1927 = vadd.f32 %v994, %v1926
    %v1928 = vand.u32 %v132, 4294901760
    %1929 = vmatmul.f32.gmra.mxu0 %v1928
    %v1930 = vpop.f32.mrf.mxu0
    %v1931 = vadd.f32 %v1002, %v1930
    %v1932 = vand.u32 %v133, 4294901760
    %1933 = vmatmul.f32.gmra.mxu0 %v1932
    %v1934 = vpop.f32.mrf.mxu0
    %v1935 = vadd.f32 %v1010, %v1934
    %v1936 = vand.u32 %v134, 4294901760
    %1937 = vmatmul.f32.gmra.mxu0 %v1936
    %v1938 = vpop.f32.mrf.mxu0
    %v1939 = vadd.f32 %v1018, %v1938
    %v1940 = vand.u32 %v135, 4294901760
    %1941 = vmatmul.f32.gmra.mxu0 %v1940
    %v1942 = vpop.f32.mrf.mxu0
    %v1943 = vadd.f32 %v1026, %v1942
    %v1944 = vand.u32 %v136, 4294901760
    %1945 = vmatmul.f32.gmra.mxu0 %v1944
    %v1946 = vpop.f32.mrf.mxu0
    %v1947 = vadd.f32 %v1034, %v1946
    %v1948 = vand.u32 %v137, 4294901760
    %1949 = vmatmul.f32.gmra.mxu0 %v1948
    %v1950 = vpop.f32.mrf.mxu0
    %v1951 = vadd.f32 %v1042, %v1950
    %v1952 = vand.u32 %v138, 4294901760
    %1953 = vmatmul.f32.gmra.mxu0 %v1952
    %v1954 = vpop.f32.mrf.mxu0
    %v1955 = vadd.f32 %v1050, %v1954
    %v1956 = vand.u32 %v139, 4294901760
    %1957 = vmatmul.f32.gmra.mxu0 %v1956
    %v1958 = vpop.f32.mrf.mxu0
    %v1959 = vadd.f32 %v1058, %v1958
    %v1960 = vand.u32 %v140, 4294901760
    %1961 = vmatmul.f32.gmra.mxu0 %v1960
    %v1962 = vpop.f32.mrf.mxu0
    %v1963 = vadd.f32 %v1066, %v1962
    %v1964 = vand.u32 %v141, 4294901760
    %1965 = vmatmul.f32.gmra.mxu0 %v1964
    %v1966 = vpop.f32.mrf.mxu0
    %v1967 = vadd.f32 %v1074, %v1966
    %v1968 = vand.u32 %v142, 4294901760
    %1969 = vmatmul.f32.gmra.mxu0 %v1968
    %v1970 = vpop.f32.mrf.mxu0
    %v1971 = vadd.f32 %v1082, %v1970
    %v1972 = vand.u32 %v143, 4294901760
    %1973 = vmatmul.f32.gmra.mxu0 %v1972
    %v1974 = vpop.f32.mrf.mxu0
    %v1975 = vadd.f32 %v1090, %v1974
    %v1976 = vand.u32 %v144, 4294901760
    %1977 = vmatmul.f32.gmra.mxu0 %v1976
    %v1978 = vpop.f32.mrf.mxu0
    %v1979 = vadd.f32 %v1098, %v1978
    %v1980 = vand.u32 %v145, 4294901760
    %1981 = vmatmul.f32.gmra.mxu0 %v1980
    %v1982 = vpop.f32.mrf.mxu0
    %v1983 = vadd.f32 %v1106, %v1982
    %v1984 = vand.u32 %v146, 4294901760
    %1985 = vmatmul.f32.gmra.mxu0 %v1984
    %v1986 = vpop.f32.mrf.mxu0
    %v1987 = vadd.f32 %v1114, %v1986
    %v1988 = vand.u32 %v147, 4294901760
    %1989 = vmatmul.f32.gmra.mxu0 %v1988
    %v1990 = vpop.f32.mrf.mxu0
    %v1991 = vadd.f32 %v1122, %v1990
    %v1992 = vand.u32 %v148, 4294901760
    %1993 = vmatmul.f32.gmra.mxu0 %v1992
    %v1994 = vpop.f32.mrf.mxu0
    %v1995 = vadd.f32 %v1130, %v1994
    %v1996 = vand.u32 %v149, 4294901760
    %1997 = vmatmul.f32.gmra.mxu0 %v1996
    %v1998 = vpop.f32.mrf.mxu0
    %v1999 = vadd.f32 %v1138, %v1998
    %v2000 = vand.u32 %v150, 4294901760
    %2001 = vmatmul.f32.gmra.mxu0 %v2000
    %v2002 = vpop.f32.mrf.mxu0
    %v2003 = vadd.f32 %v1146, %v2002
    %v2004 = vand.u32 %v151, 4294901760
    %2005 = vmatmul.f32.gmra.mxu0 %v2004
    %v2006 = vpop.f32.mrf.mxu0
    %v2007 = vadd.f32 %v1154, %v2006
    %v2008 = vand.u32 %v152, 4294901760
    %2009 = vmatmul.f32.gmra.mxu0 %v2008
    %v2010 = vpop.f32.mrf.mxu0
    %v2011 = vadd.f32 %v1162, %v2010
    %v2012 = vand.u32 %v153, 4294901760
    %2013 = vmatmul.f32.gmra.mxu0 %v2012
    %v2014 = vpop.f32.mrf.mxu0
    %v2015 = vadd.f32 %v1170, %v2014
    %v2016 = vand.u32 %v154, 4294901760
    %2017 = vmatmul.f32.gmra.mxu0 %v2016
    %v2018 = vpop.f32.mrf.mxu0
    %v2019 = vadd.f32 %v1178, %v2018
    %v2020 = vand.u32 %v155, 4294901760
    %2021 = vmatmul.f32.gmra.mxu0 %v2020
    %v2022 = vpop.f32.mrf.mxu0
    %v2023 = vadd.f32 %v1186, %v2022
    %v2024 = vand.u32 %v156, 4294901760
    %2025 = vmatmul.f32.gmra.mxu0 %v2024
    %v2026 = vpop.f32.mrf.mxu0
    %v2027 = vadd.f32 %v1194, %v2026
    %v2028 = vand.u32 %v157, 4294901760
    %2029 = vmatmul.f32.gmra.mxu0 %v2028
    %v2030 = vpop.f32.mrf.mxu0
    %v2031 = vadd.f32 %v1202, %v2030
    %v2032 = vand.u32 %v158, 4294901760
    %2033 = vmatmul.f32.gmra.mxu0 %v2032
    %v2034 = vpop.f32.mrf.mxu0
    %v2035 = vadd.f32 %v1210, %v2034
    %v2036 = vand.u32 %v159, 4294901760
    %2037 = vmatmul.f32.gmra.mxu0 %v2036
    %v2038 = vpop.f32.mrf.mxu0
    %v2039 = vadd.f32 %v1218, %v2038
    %v2040 = vand.u32 %v160, 4294901760
    %2041 = vmatmul.f32.gmra.mxu0 %v2040
    %v2042 = vpop.f32.mrf.mxu0
    %v2043 = vadd.f32 %v1226, %v2042
    %v2044 = vand.u32 %v161, 4294901760
    %2045 = vmatmul.f32.gmra.mxu0 %v2044
    %v2046 = vpop.f32.mrf.mxu0
    %v2047 = vadd.f32 %v1234, %v2046
    %v2048 = vand.u32 %v162, 4294901760
    %2049 = vmatmul.f32.gmra.mxu0 %v2048
    %v2050 = vpop.f32.mrf.mxu0
    %v2051 = vadd.f32 %v1242, %v2050
    %v2052 = vand.u32 %v163, 4294901760
    %2053 = vmatmul.f32.gmra.mxu0 %v2052
    %v2054 = vpop.f32.mrf.mxu0
    %v2055 = vadd.f32 %v1250, %v2054
    %v2056 = vand.u32 %v164, 4294901760
    %2057 = vmatmul.f32.gmra.mxu0 %v2056
    %v2058 = vpop.f32.mrf.mxu0
    %v2059 = vadd.f32 %v1258, %v2058
    %v2060 = vand.u32 %v165, 4294901760
    %2061 = vmatmul.f32.gmra.mxu0 %v2060
    %v2062 = vpop.f32.mrf.mxu0
    %v2063 = vadd.f32 %v1266, %v2062
    %v2064 = vand.u32 %v166, 4294901760
    %2065 = vmatmul.f32.gmra.mxu0 %v2064
    %v2066 = vpop.f32.mrf.mxu0
    %v2067 = vadd.f32 %v1274, %v2066
    %v2068 = vand.u32 %v167, 4294901760
    %2069 = vmatmul.f32.gmra.mxu0 %v2068
    %v2070 = vpop.f32.mrf.mxu0
    %v2071 = vadd.f32 %v1282, %v2070
    %v2072 = vand.u32 %v168, 4294901760
    %2073 = vmatmul.f32.gmra.mxu0 %v2072
    %v2074 = vpop.f32.mrf.mxu0
    %v2075 = vadd.f32 %v1290, %v2074
    %v2076 = vand.u32 %v169, 4294901760
    %2077 = vmatmul.f32.gmra.mxu0 %v2076
    %v2078 = vpop.f32.mrf.mxu0
    %v2079 = vadd.f32 %v1298, %v2078
    %v2080 = vand.u32 %v170, 4294901760
    %2081 = vmatmul.f32.gmra.mxu0 %v2080
    %v2082 = vpop.f32.mrf.mxu0
    %v2083 = vadd.f32 %v1306, %v2082
    %v2084 = vand.u32 %v171, 4294901760
    %2085 = vmatmul.f32.gmra.mxu0 %v2084
    %v2086 = vpop.f32.mrf.mxu0
    %v2087 = vadd.f32 %v1314, %v2086
    %v2088 = vand.u32 %v172, 4294901760
    %2089 = vmatmul.f32.gmra.mxu0 %v2088
    %v2090 = vpop.f32.mrf.mxu0
    %v2091 = vadd.f32 %v1322, %v2090
    %v2092 = vand.u32 %v173, 4294901760
    %2093 = vmatmul.f32.gmra.mxu0 %v2092
    %v2094 = vpop.f32.mrf.mxu0
    %v2095 = vadd.f32 %v1330, %v2094
    %v2096 = vand.u32 %v174, 4294901760
    %2097 = vmatmul.f32.gmra.mxu0 %v2096
    %v2098 = vpop.f32.mrf.mxu0
    %v2099 = vadd.f32 %v1338, %v2098
    %v2100 = vand.u32 %v175, 4294901760
    %2101 = vmatmul.f32.gmra.mxu0 %v2100
    %v2102 = vpop.f32.mrf.mxu0
    %v2103 = vadd.f32 %v1346, %v2102
    %v2104 = vand.u32 %v176, 4294901760
    %2105 = vmatmul.f32.gmra.mxu0 %v2104
    %v2106 = vpop.f32.mrf.mxu0
    %v2107 = vadd.f32 %v1354, %v2106
    %v2108 = vand.u32 %v177, 4294901760
    %2109 = vmatmul.f32.gmra.mxu0 %v2108
    %v2110 = vpop.f32.mrf.mxu0
    %v2111 = vadd.f32 %v1362, %v2110
    %v2112 = vand.u32 %v178, 4294901760
    %2113 = vmatmul.f32.gmra.mxu0 %v2112
    %v2114 = vpop.f32.mrf.mxu0
    %v2115 = vadd.f32 %v1370, %v2114
    %v2116 = vand.u32 %v179, 4294901760
    %2117 = vmatmul.f32.gmra.mxu0 %v2116
    %v2118 = vpop.f32.mrf.mxu0
    %v2119 = vadd.f32 %v1378, %v2118
    %v2120 = vand.u32 %v180, 4294901760
    %2121 = vmatmul.f32.gmra.mxu0 %v2120
    %v2122 = vpop.f32.mrf.mxu0
    %v2123 = vadd.f32 %v1386, %v2122
    %v2124 = vand.u32 %v181, 4294901760
    %2125 = vmatmul.f32.gmra.mxu0 %v2124
    %v2126 = vpop.f32.mrf.mxu0
    %v2127 = vadd.f32 %v1394, %v2126
    %v2128 = vand.u32 %v182, 4294901760
    %2129 = vmatmul.f32.gmra.mxu0 %v2128
    %v2130 = vpop.f32.mrf.mxu0
    %v2131 = vadd.f32 %v1402, %v2130
    %v2132 = vand.u32 %v183, 4294901760
    %2133 = vmatmul.f32.gmra.mxu0 %v2132
    %v2134 = vpop.f32.mrf.mxu0
    %v2135 = vadd.f32 %v1410, %v2134
    %v2136 = vand.u32 %v184, 4294901760
    %2137 = vmatmul.f32.gmra.mxu0 %v2136
    %v2138 = vpop.f32.mrf.mxu0
    %v2139 = vadd.f32 %v1418, %v2138
    %v2140 = vand.u32 %v185, 4294901760
    %2141 = vmatmul.f32.gmra.mxu0 %v2140
    %v2142 = vpop.f32.mrf.mxu0
    %v2143 = vadd.f32 %v1426, %v2142
    %v2144 = vand.u32 %v186, 4294901760
    %2145 = vmatmul.f32.gmra.mxu0 %v2144
    %v2146 = vpop.f32.mrf.mxu0
    %v2147 = vadd.f32 %v1434, %v2146
    %v2148 = vand.u32 %v187, 4294901760
    %2149 = vmatmul.f32.gmra.mxu0 %v2148
    %v2150 = vpop.f32.mrf.mxu0
    %v2151 = vadd.f32 %v1442, %v2150
    %v2152 = vand.u32 %v188, 4294901760
    %2153 = vmatmul.f32.gmra.mxu0 %v2152
    %v2154 = vpop.f32.mrf.mxu0
    %v2155 = vadd.f32 %v1450, %v2154
    %v2156 = vand.u32 %v189, 4294901760
    %2157 = vmatmul.f32.gmra.mxu0 %v2156
    %v2158 = vpop.f32.mrf.mxu0
    %v2159 = vadd.f32 %v1458, %v2158
    %v2160 = vand.u32 %v190, 4294901760
    %2161 = vmatmul.f32.gmra.mxu0 %v2160
    %v2162 = vpop.f32.mrf.mxu0
    %v2163 = vadd.f32 %v1466, %v2162
    %v2164 = vand.u32 %v191, 4294901760
    %2165 = vmatmul.f32.gmra.mxu0 %v2164
    %v2166 = vpop.f32.mrf.mxu0
    %v2167 = vadd.f32 %v1474, %v2166
    %v2168 = vand.u32 %v192, 4294901760
    %2169 = vmatmul.f32.gmra.mxu0 %v2168
    %v2170 = vpop.f32.mrf.mxu0
    %v2171 = vadd.f32 %v1482, %v2170
    %v2172 = vand.u32 %v193, 4294901760
    %2173 = vmatmul.f32.gmra.mxu0 %v2172
    %v2174 = vpop.f32.mrf.mxu0
    %v2175 = vadd.f32 %v1490, %v2174
    %v2176 = vand.u32 %v194, 4294901760
    %2177 = vmatmul.f32.gmra.mxu0 %v2176
    %v2178 = vpop.f32.mrf.mxu0
    %v2179 = vadd.f32 %v1498, %v2178
    %v2180 = vand.u32 %v195, 4294901760
    %2181 = vmatmul.f32.gmra.mxu0 %v2180
    %v2182 = vpop.f32.mrf.mxu0
    %v2183 = vadd.f32 %v1506, %v2182
    %v2184 = vand.u32 %v196, 4294901760
    %2185 = vmatmul.f32.gmra.mxu0 %v2184
    %v2186 = vpop.f32.mrf.mxu0
    %v2187 = vadd.f32 %v1514, %v2186
    %v2188 = vand.u32 %v197, 4294901760
    %2189 = vmatmul.f32.gmra.mxu0 %v2188
    %v2190 = vpop.f32.mrf.mxu0
    %v2191 = vadd.f32 %v1522, %v2190
    %v2192 = vand.u32 %v198, 4294901760
    %2193 = vmatmul.f32.gmra.mxu0 %v2192
    %v2194 = vpop.f32.mrf.mxu0
    %v2195 = vadd.f32 %v1530, %v2194
    %v2196 = vand.u32 %v199, 4294901760
    %2197 = vmatmul.f32.gmra.mxu0 %v2196
    %v2198 = vpop.f32.mrf.mxu0
    %v2199 = vadd.f32 %v1538, %v2198
    %v2200 = vand.u32 %v200, 4294901760
    %2201 = vmatmul.f32.gmra.mxu0 %v2200
    %v2202 = vpop.f32.mrf.mxu0
    %v2203 = vadd.f32 %v1546, %v2202
    %v2204 = vand.u32 %v201, 4294901760
    %2205 = vmatmul.f32.gmra.mxu0 %v2204
    %v2206 = vpop.f32.mrf.mxu0
    %v2207 = vadd.f32 %v1554, %v2206
    %v2208 = vand.u32 %v202, 4294901760
    %2209 = vmatmul.f32.gmra.mxu0 %v2208
    %v2210 = vpop.f32.mrf.mxu0
    %v2211 = vadd.f32 %v1562, %v2210
    %v2212 = vand.u32 %v203, 4294901760
    %2213 = vmatmul.f32.gmra.mxu0 %v2212
    %v2214 = vpop.f32.mrf.mxu0
    %v2215 = vadd.f32 %v1570, %v2214
    %v2216 = vand.u32 %v204, 4294901760
    %2217 = vmatmul.f32.gmra.mxu0 %v2216
    %v2218 = vpop.f32.mrf.mxu0
    %v2219 = vadd.f32 %v1578, %v2218
    %v2220 = vand.u32 %v205, 4294901760
    %2221 = vmatmul.f32.gmra.mxu0 %v2220
    %v2222 = vpop.f32.mrf.mxu0
    %v2223 = vadd.f32 %v1586, %v2222
    %v2224 = vand.u32 %v206, 4294901760
    %2225 = vmatmul.f32.gmra.mxu0 %v2224
    %v2226 = vpop.f32.mrf.mxu0
    %v2227 = vadd.f32 %v1594, %v2226
    %v2228 = vand.u32 %v207, 4294901760
    %2229 = vmatmul.f32.gmra.mxu0 %v2228
    %v2230 = vpop.f32.mrf.mxu0
    %v2231 = vadd.f32 %v1602, %v2230
    %v2232 = vand.u32 %v208, 4294901760
    %2233 = vmatmul.f32.gmra.mxu0 %v2232
    %v2234 = vpop.f32.mrf.mxu0
    %v2235 = vadd.f32 %v1610, %v2234
    %v2236 = vand.u32 %v209, 4294901760
    %2237 = vmatmul.f32.gmra.mxu0 %v2236
    %v2238 = vpop.f32.mrf.mxu0
    %v2239 = vadd.f32 %v1618, %v2238
    %v2240 = vand.u32 %v210, 4294901760
    %2241 = vmatmul.f32.gmra.mxu0 %v2240
    %v2242 = vpop.f32.mrf.mxu0
    %v2243 = vadd.f32 %v1626, %v2242
    %v2244 = vand.u32 %v211, 4294901760
    %2245 = vmatmul.f32.gmra.mxu0 %v2244
    %v2246 = vpop.f32.mrf.mxu0
    %v2247 = vadd.f32 %v1634, %v2246
    %v2248 = vand.u32 %v212, 4294901760
    %2249 = vmatmul.f32.gmra.mxu0 %v2248
    %v2250 = vpop.f32.mrf.mxu0
    %v2251 = vadd.f32 %v1642, %v2250
    %2252 = vdwg.mxu0
    %v2253 = vand.u32 %v244, 4294901760
    %v2254 = vsub.f32 %v244, %v2253
    %2255 = vmatpush.msra.mxu0 %v2254
    %v2256 = vand.u32 %v243, 4294901760
    %v2257 = vsub.f32 %v243, %v2256
    %2258 = vmatpush.msra.mxu0 %v2257
    %v2259 = vand.u32 %v242, 4294901760
    %v2260 = vsub.f32 %v242, %v2259
    %2261 = vmatpush.msra.mxu0 %v2260
    %v2262 = vand.u32 %v241, 4294901760
    %v2263 = vsub.f32 %v241, %v2262
    %2264 = vmatpush.msra.mxu0 %v2263
    %v2265 = vand.u32 %v240, 4294901760
    %v2266 = vsub.f32 %v240, %v2265
    %2267 = vmatpush.msra.mxu0 %v2266
    %v2268 = vand.u32 %v239, 4294901760
    %v2269 = vsub.f32 %v239, %v2268
    %2270 = vmatpush.msra.mxu0 %v2269
    %v2271 = vand.u32 %v238, 4294901760
    %v2272 = vsub.f32 %v238, %v2271
    %2273 = vmatpush.msra.mxu0 %v2272
    %v2274 = vand.u32 %v237, 4294901760
    %v2275 = vsub.f32 %v237, %v2274
    %2276 = vmatpush.msra.mxu0 %v2275
    %v2277 = vand.u32 %v236, 4294901760
    %v2278 = vsub.f32 %v236, %v2277
    %2279 = vmatpush.msra.mxu0 %v2278
    %v2280 = vand.u32 %v235, 4294901760
    %v2281 = vsub.f32 %v235, %v2280
    %2282 = vmatpush.msra.mxu0 %v2281
    %v2283 = vand.u32 %v234, 4294901760
    %v2284 = vsub.f32 %v234, %v2283
    %2285 = vmatpush.msra.mxu0 %v2284
    %v2286 = vand.u32 %v233, 4294901760
    %v2287 = vsub.f32 %v233, %v2286
    %2288 = vmatpush.msra.mxu0 %v2287
    %v2289 = vand.u32 %v232, 4294901760
    %v2290 = vsub.f32 %v232, %v2289
    %2291 = vmatpush.msra.mxu0 %v2290
    %v2292 = vand.u32 %v231, 4294901760
    %v2293 = vsub.f32 %v231, %v2292
    %2294 = vmatpush.msra.mxu0 %v2293
    %v2295 = vand.u32 %v230, 4294901760
    %v2296 = vsub.f32 %v230, %v2295
    %2297 = vmatpush.msra.mxu0 %v2296
    %v2298 = vand.u32 %v229, 4294901760
    %v2299 = vsub.f32 %v229, %v2298
    %2300 = vmatpush.msra.mxu0 %v2299
    %v2301 = vand.u32 %v85, 4294901760
    %v2302 = vsub.f32 %v85, %v2301
    %2303 = vmatmul.f32.gmra.mxu0 %v2302
    %v2304 = vpop.f32.mrf.mxu0
    %v2305 = vadd.f32 %v1743, %v2304
    %v2306 = vand.u32 %v86, 4294901760
    %v2307 = vsub.f32 %v86, %v2306
    %2308 = vmatmul.f32.gmra.mxu0 %v2307
    %v2309 = vpop.f32.mrf.mxu0
    %v2310 = vadd.f32 %v1747, %v2309
    %v2311 = vand.u32 %v87, 4294901760
    %v2312 = vsub.f32 %v87, %v2311
    %2313 = vmatmul.f32.gmra.mxu0 %v2312
    %v2314 = vpop.f32.mrf.mxu0
    %v2315 = vadd.f32 %v1751, %v2314
    %v2316 = vand.u32 %v88, 4294901760
    %v2317 = vsub.f32 %v88, %v2316
    %2318 = vmatmul.f32.gmra.mxu0 %v2317
    %v2319 = vpop.f32.mrf.mxu0
    %v2320 = vadd.f32 %v1755, %v2319
    %v2321 = vand.u32 %v89, 4294901760
    %v2322 = vsub.f32 %v89, %v2321
    %2323 = vmatmul.f32.gmra.mxu0 %v2322
    %v2324 = vpop.f32.mrf.mxu0
    %v2325 = vadd.f32 %v1759, %v2324
    %v2326 = vand.u32 %v90, 4294901760
    %v2327 = vsub.f32 %v90, %v2326
    %2328 = vmatmul.f32.gmra.mxu0 %v2327
    %v2329 = vpop.f32.mrf.mxu0
    %v2330 = vadd.f32 %v1763, %v2329
    %v2331 = vand.u32 %v91, 4294901760
    %v2332 = vsub.f32 %v91, %v2331
    %2333 = vmatmul.f32.gmra.mxu0 %v2332
    %v2334 = vpop.f32.mrf.mxu0
    %v2335 = vadd.f32 %v1767, %v2334
    %v2336 = vand.u32 %v92, 4294901760
    %v2337 = vsub.f32 %v92, %v2336
    %2338 = vmatmul.f32.gmra.mxu0 %v2337
    %v2339 = vpop.f32.mrf.mxu0
    %v2340 = vadd.f32 %v1771, %v2339
    %v2341 = vand.u32 %v93, 4294901760
    %v2342 = vsub.f32 %v93, %v2341
    %2343 = vmatmul.f32.gmra.mxu0 %v2342
    %v2344 = vpop.f32.mrf.mxu0
    %v2345 = vadd.f32 %v1775, %v2344
    %v2346 = vand.u32 %v94, 4294901760
    %v2347 = vsub.f32 %v94, %v2346
    %2348 = vmatmul.f32.gmra.mxu0 %v2347
    %v2349 = vpop.f32.mrf.mxu0
    %v2350 = vadd.f32 %v1779, %v2349
    %v2351 = vand.u32 %v95, 4294901760
    %v2352 = vsub.f32 %v95, %v2351
    %2353 = vmatmul.f32.gmra.mxu0 %v2352
    %v2354 = vpop.f32.mrf.mxu0
    %v2355 = vadd.f32 %v1783, %v2354
    %v2356 = vand.u32 %v96, 4294901760
    %v2357 = vsub.f32 %v96, %v2356
    %2358 = vmatmul.f32.gmra.mxu0 %v2357
    %v2359 = vpop.f32.mrf.mxu0
    %v2360 = vadd.f32 %v1787, %v2359
    %v2361 = vand.u32 %v97, 4294901760
    %v2362 = vsub.f32 %v97, %v2361
    %2363 = vmatmul.f32.gmra.mxu0 %v2362
    %v2364 = vpop.f32.mrf.mxu0
    %v2365 = vadd.f32 %v1791, %v2364
    %v2366 = vand.u32 %v98, 4294901760
    %v2367 = vsub.f32 %v98, %v2366
    %2368 = vmatmul.f32.gmra.mxu0 %v2367
    %v2369 = vpop.f32.mrf.mxu0
    %v2370 = vadd.f32 %v1795, %v2369
    %v2371 = vand.u32 %v99, 4294901760
    %v2372 = vsub.f32 %v99, %v2371
    %2373 = vmatmul.f32.gmra.mxu0 %v2372
    %v2374 = vpop.f32.mrf.mxu0
    %v2375 = vadd.f32 %v1799, %v2374
    %v2376 = vand.u32 %v100, 4294901760
    %v2377 = vsub.f32 %v100, %v2376
    %2378 = vmatmul.f32.gmra.mxu0 %v2377
    %v2379 = vpop.f32.mrf.mxu0
    %v2380 = vadd.f32 %v1803, %v2379
    %v2381 = vand.u32 %v101, 4294901760
    %v2382 = vsub.f32 %v101, %v2381
    %2383 = vmatmul.f32.gmra.mxu0 %v2382
    %v2384 = vpop.f32.mrf.mxu0
    %v2385 = vadd.f32 %v1807, %v2384
    %v2386 = vand.u32 %v102, 4294901760
    %v2387 = vsub.f32 %v102, %v2386
    %2388 = vmatmul.f32.gmra.mxu0 %v2387
    %v2389 = vpop.f32.mrf.mxu0
    %v2390 = vadd.f32 %v1811, %v2389
    %v2391 = vand.u32 %v103, 4294901760
    %v2392 = vsub.f32 %v103, %v2391
    %2393 = vmatmul.f32.gmra.mxu0 %v2392
    %v2394 = vpop.f32.mrf.mxu0
    %v2395 = vadd.f32 %v1815, %v2394
    %v2396 = vand.u32 %v104, 4294901760
    %v2397 = vsub.f32 %v104, %v2396
    %2398 = vmatmul.f32.gmra.mxu0 %v2397
    %v2399 = vpop.f32.mrf.mxu0
    %v2400 = vadd.f32 %v1819, %v2399
    %v2401 = vand.u32 %v105, 4294901760
    %v2402 = vsub.f32 %v105, %v2401
    %2403 = vmatmul.f32.gmra.mxu0 %v2402
    %v2404 = vpop.f32.mrf.mxu0
    %v2405 = vadd.f32 %v1823, %v2404
    %v2406 = vand.u32 %v106, 4294901760
    %v2407 = vsub.f32 %v106, %v2406
    %2408 = vmatmul.f32.gmra.mxu0 %v2407
    %v2409 = vpop.f32.mrf.mxu0
    %v2410 = vadd.f32 %v1827, %v2409
    %v2411 = vand.u32 %v107, 4294901760
    %v2412 = vsub.f32 %v107, %v2411
    %2413 = vmatmul.f32.gmra.mxu0 %v2412
    %v2414 = vpop.f32.mrf.mxu0
    %v2415 = vadd.f32 %v1831, %v2414
    %v2416 = vand.u32 %v108, 4294901760
    %v2417 = vsub.f32 %v108, %v2416
    %2418 = vmatmul.f32.gmra.mxu0 %v2417
    %v2419 = vpop.f32.mrf.mxu0
    %v2420 = vadd.f32 %v1835, %v2419
    %v2421 = vand.u32 %v109, 4294901760
    %v2422 = vsub.f32 %v109, %v2421
    %2423 = vmatmul.f32.gmra.mxu0 %v2422
    %v2424 = vpop.f32.mrf.mxu0
    %v2425 = vadd.f32 %v1839, %v2424
    %v2426 = vand.u32 %v110, 4294901760
    %v2427 = vsub.f32 %v110, %v2426
    %2428 = vmatmul.f32.gmra.mxu0 %v2427
    %v2429 = vpop.f32.mrf.mxu0
    %v2430 = vadd.f32 %v1843, %v2429
    %v2431 = vand.u32 %v111, 4294901760
    %v2432 = vsub.f32 %v111, %v2431
    %2433 = vmatmul.f32.gmra.mxu0 %v2432
    %v2434 = vpop.f32.mrf.mxu0
    %v2435 = vadd.f32 %v1847, %v2434
    %v2436 = vand.u32 %v112, 4294901760
    %v2437 = vsub.f32 %v112, %v2436
    %2438 = vmatmul.f32.gmra.mxu0 %v2437
    %v2439 = vpop.f32.mrf.mxu0
    %v2440 = vadd.f32 %v1851, %v2439
    %v2441 = vand.u32 %v113, 4294901760
    %v2442 = vsub.f32 %v113, %v2441
    %2443 = vmatmul.f32.gmra.mxu0 %v2442
    %v2444 = vpop.f32.mrf.mxu0
    %v2445 = vadd.f32 %v1855, %v2444
    %v2446 = vand.u32 %v114, 4294901760
    %v2447 = vsub.f32 %v114, %v2446
    %2448 = vmatmul.f32.gmra.mxu0 %v2447
    %v2449 = vpop.f32.mrf.mxu0
    %v2450 = vadd.f32 %v1859, %v2449
    %v2451 = vand.u32 %v115, 4294901760
    %v2452 = vsub.f32 %v115, %v2451
    %2453 = vmatmul.f32.gmra.mxu0 %v2452
    %v2454 = vpop.f32.mrf.mxu0
    %v2455 = vadd.f32 %v1863, %v2454
    %v2456 = vand.u32 %v116, 4294901760
    %v2457 = vsub.f32 %v116, %v2456
    %2458 = vmatmul.f32.gmra.mxu0 %v2457
    %v2459 = vpop.f32.mrf.mxu0
    %v2460 = vadd.f32 %v1867, %v2459
    %v2461 = vand.u32 %v117, 4294901760
    %v2462 = vsub.f32 %v117, %v2461
    %2463 = vmatmul.f32.gmra.mxu0 %v2462
    %v2464 = vpop.f32.mrf.mxu0
    %v2465 = vadd.f32 %v1871, %v2464
    %v2466 = vand.u32 %v118, 4294901760
    %v2467 = vsub.f32 %v118, %v2466
    %2468 = vmatmul.f32.gmra.mxu0 %v2467
    %v2469 = vpop.f32.mrf.mxu0
    %v2470 = vadd.f32 %v1875, %v2469
    %v2471 = vand.u32 %v119, 4294901760
    %v2472 = vsub.f32 %v119, %v2471
    %2473 = vmatmul.f32.gmra.mxu0 %v2472
    %v2474 = vpop.f32.mrf.mxu0
    %v2475 = vadd.f32 %v1879, %v2474
    %v2476 = vand.u32 %v120, 4294901760
    %v2477 = vsub.f32 %v120, %v2476
    %2478 = vmatmul.f32.gmra.mxu0 %v2477
    %v2479 = vpop.f32.mrf.mxu0
    %v2480 = vadd.f32 %v1883, %v2479
    %v2481 = vand.u32 %v121, 4294901760
    %v2482 = vsub.f32 %v121, %v2481
    %2483 = vmatmul.f32.gmra.mxu0 %v2482
    %v2484 = vpop.f32.mrf.mxu0
    %v2485 = vadd.f32 %v1887, %v2484
    %v2486 = vand.u32 %v122, 4294901760
    %v2487 = vsub.f32 %v122, %v2486
    %2488 = vmatmul.f32.gmra.mxu0 %v2487
    %v2489 = vpop.f32.mrf.mxu0
    %v2490 = vadd.f32 %v1891, %v2489
    %v2491 = vand.u32 %v123, 4294901760
    %v2492 = vsub.f32 %v123, %v2491
    %2493 = vmatmul.f32.gmra.mxu0 %v2492
    %v2494 = vpop.f32.mrf.mxu0
    %v2495 = vadd.f32 %v1895, %v2494
    %v2496 = vand.u32 %v124, 4294901760
    %v2497 = vsub.f32 %v124, %v2496
    %2498 = vmatmul.f32.gmra.mxu0 %v2497
    %v2499 = vpop.f32.mrf.mxu0
    %v2500 = vadd.f32 %v1899, %v2499
    %v2501 = vand.u32 %v125, 4294901760
    %v2502 = vsub.f32 %v125, %v2501
    %2503 = vmatmul.f32.gmra.mxu0 %v2502
    %v2504 = vpop.f32.mrf.mxu0
    %v2505 = vadd.f32 %v1903, %v2504
    %v2506 = vand.u32 %v126, 4294901760
    %v2507 = vsub.f32 %v126, %v2506
    %2508 = vmatmul.f32.gmra.mxu0 %v2507
    %v2509 = vpop.f32.mrf.mxu0
    %v2510 = vadd.f32 %v1907, %v2509
    %v2511 = vand.u32 %v127, 4294901760
    %v2512 = vsub.f32 %v127, %v2511
    %2513 = vmatmul.f32.gmra.mxu0 %v2512
    %v2514 = vpop.f32.mrf.mxu0
    %v2515 = vadd.f32 %v1911, %v2514
    %v2516 = vand.u32 %v128, 4294901760
    %v2517 = vsub.f32 %v128, %v2516
    %2518 = vmatmul.f32.gmra.mxu0 %v2517
    %v2519 = vpop.f32.mrf.mxu0
    %v2520 = vadd.f32 %v1915, %v2519
    %v2521 = vand.u32 %v129, 4294901760
    %v2522 = vsub.f32 %v129, %v2521
    %2523 = vmatmul.f32.gmra.mxu0 %v2522
    %v2524 = vpop.f32.mrf.mxu0
    %v2525 = vadd.f32 %v1919, %v2524
    %v2526 = vand.u32 %v130, 4294901760
    %v2527 = vsub.f32 %v130, %v2526
    %2528 = vmatmul.f32.gmra.mxu0 %v2527
    %v2529 = vpop.f32.mrf.mxu0
    %v2530 = vadd.f32 %v1923, %v2529
    %v2531 = vand.u32 %v131, 4294901760
    %v2532 = vsub.f32 %v131, %v2531
    %2533 = vmatmul.f32.gmra.mxu0 %v2532
    %v2534 = vpop.f32.mrf.mxu0
    %v2535 = vadd.f32 %v1927, %v2534
    %v2536 = vand.u32 %v132, 4294901760
    %v2537 = vsub.f32 %v132, %v2536
    %2538 = vmatmul.f32.gmra.mxu0 %v2537
    %v2539 = vpop.f32.mrf.mxu0
    %v2540 = vadd.f32 %v1931, %v2539
    %v2541 = vand.u32 %v133, 4294901760
    %v2542 = vsub.f32 %v133, %v2541
    %2543 = vmatmul.f32.gmra.mxu0 %v2542
    %v2544 = vpop.f32.mrf.mxu0
    %v2545 = vadd.f32 %v1935, %v2544
    %v2546 = vand.u32 %v134, 4294901760
    %v2547 = vsub.f32 %v134, %v2546
    %2548 = vmatmul.f32.gmra.mxu0 %v2547
    %v2549 = vpop.f32.mrf.mxu0
    %v2550 = vadd.f32 %v1939, %v2549
    %v2551 = vand.u32 %v135, 4294901760
    %v2552 = vsub.f32 %v135, %v2551
    %2553 = vmatmul.f32.gmra.mxu0 %v2552
    %v2554 = vpop.f32.mrf.mxu0
    %v2555 = vadd.f32 %v1943, %v2554
    %v2556 = vand.u32 %v136, 4294901760
    %v2557 = vsub.f32 %v136, %v2556
    %2558 = vmatmul.f32.gmra.mxu0 %v2557
    %v2559 = vpop.f32.mrf.mxu0
    %v2560 = vadd.f32 %v1947, %v2559
    %v2561 = vand.u32 %v137, 4294901760
    %v2562 = vsub.f32 %v137, %v2561
    %2563 = vmatmul.f32.gmra.mxu0 %v2562
    %v2564 = vpop.f32.mrf.mxu0
    %v2565 = vadd.f32 %v1951, %v2564
    %v2566 = vand.u32 %v138, 4294901760
    %v2567 = vsub.f32 %v138, %v2566
    %2568 = vmatmul.f32.gmra.mxu0 %v2567
    %v2569 = vpop.f32.mrf.mxu0
    %v2570 = vadd.f32 %v1955, %v2569
    %v2571 = vand.u32 %v139, 4294901760
    %v2572 = vsub.f32 %v139, %v2571
    %2573 = vmatmul.f32.gmra.mxu0 %v2572
    %v2574 = vpop.f32.mrf.mxu0
    %v2575 = vadd.f32 %v1959, %v2574
    %v2576 = vand.u32 %v140, 4294901760
    %v2577 = vsub.f32 %v140, %v2576
    %2578 = vmatmul.f32.gmra.mxu0 %v2577
    %v2579 = vpop.f32.mrf.mxu0
    %v2580 = vadd.f32 %v1963, %v2579
    %v2581 = vand.u32 %v141, 4294901760
    %v2582 = vsub.f32 %v141, %v2581
    %2583 = vmatmul.f32.gmra.mxu0 %v2582
    %v2584 = vpop.f32.mrf.mxu0
    %v2585 = vadd.f32 %v1967, %v2584
    %v2586 = vand.u32 %v142, 4294901760
    %v2587 = vsub.f32 %v142, %v2586
    %2588 = vmatmul.f32.gmra.mxu0 %v2587
    %v2589 = vpop.f32.mrf.mxu0
    %v2590 = vadd.f32 %v1971, %v2589
    %v2591 = vand.u32 %v143, 4294901760
    %v2592 = vsub.f32 %v143, %v2591
    %2593 = vmatmul.f32.gmra.mxu0 %v2592
    %v2594 = vpop.f32.mrf.mxu0
    %v2595 = vadd.f32 %v1975, %v2594
    %v2596 = vand.u32 %v144, 4294901760
    %v2597 = vsub.f32 %v144, %v2596
    %2598 = vmatmul.f32.gmra.mxu0 %v2597
    %v2599 = vpop.f32.mrf.mxu0
    %v2600 = vadd.f32 %v1979, %v2599
    %v2601 = vand.u32 %v145, 4294901760
    %v2602 = vsub.f32 %v145, %v2601
    %2603 = vmatmul.f32.gmra.mxu0 %v2602
    %v2604 = vpop.f32.mrf.mxu0
    %v2605 = vadd.f32 %v1983, %v2604
    %v2606 = vand.u32 %v146, 4294901760
    %v2607 = vsub.f32 %v146, %v2606
    %2608 = vmatmul.f32.gmra.mxu0 %v2607
    %v2609 = vpop.f32.mrf.mxu0
    %v2610 = vadd.f32 %v1987, %v2609
    %v2611 = vand.u32 %v147, 4294901760
    %v2612 = vsub.f32 %v147, %v2611
    %2613 = vmatmul.f32.gmra.mxu0 %v2612
    %v2614 = vpop.f32.mrf.mxu0
    %v2615 = vadd.f32 %v1991, %v2614
    %v2616 = vand.u32 %v148, 4294901760
    %v2617 = vsub.f32 %v148, %v2616
    %2618 = vmatmul.f32.gmra.mxu0 %v2617
    %v2619 = vpop.f32.mrf.mxu0
    %v2620 = vadd.f32 %v1995, %v2619
    %v2621 = vand.u32 %v149, 4294901760
    %v2622 = vsub.f32 %v149, %v2621
    %2623 = vmatmul.f32.gmra.mxu0 %v2622
    %v2624 = vpop.f32.mrf.mxu0
    %v2625 = vadd.f32 %v1999, %v2624
    %v2626 = vand.u32 %v150, 4294901760
    %v2627 = vsub.f32 %v150, %v2626
    %2628 = vmatmul.f32.gmra.mxu0 %v2627
    %v2629 = vpop.f32.mrf.mxu0
    %v2630 = vadd.f32 %v2003, %v2629
    %v2631 = vand.u32 %v151, 4294901760
    %v2632 = vsub.f32 %v151, %v2631
    %2633 = vmatmul.f32.gmra.mxu0 %v2632
    %v2634 = vpop.f32.mrf.mxu0
    %v2635 = vadd.f32 %v2007, %v2634
    %v2636 = vand.u32 %v152, 4294901760
    %v2637 = vsub.f32 %v152, %v2636
    %2638 = vmatmul.f32.gmra.mxu0 %v2637
    %v2639 = vpop.f32.mrf.mxu0
    %v2640 = vadd.f32 %v2011, %v2639
    %v2641 = vand.u32 %v153, 4294901760
    %v2642 = vsub.f32 %v153, %v2641
    %2643 = vmatmul.f32.gmra.mxu0 %v2642
    %v2644 = vpop.f32.mrf.mxu0
    %v2645 = vadd.f32 %v2015, %v2644
    %v2646 = vand.u32 %v154, 4294901760
    %v2647 = vsub.f32 %v154, %v2646
    %2648 = vmatmul.f32.gmra.mxu0 %v2647
    %v2649 = vpop.f32.mrf.mxu0
    %v2650 = vadd.f32 %v2019, %v2649
    %v2651 = vand.u32 %v155, 4294901760
    %v2652 = vsub.f32 %v155, %v2651
    %2653 = vmatmul.f32.gmra.mxu0 %v2652
    %v2654 = vpop.f32.mrf.mxu0
    %v2655 = vadd.f32 %v2023, %v2654
    %v2656 = vand.u32 %v156, 4294901760
    %v2657 = vsub.f32 %v156, %v2656
    %2658 = vmatmul.f32.gmra.mxu0 %v2657
    %v2659 = vpop.f32.mrf.mxu0
    %v2660 = vadd.f32 %v2027, %v2659
    %v2661 = vand.u32 %v157, 4294901760
    %v2662 = vsub.f32 %v157, %v2661
    %2663 = vmatmul.f32.gmra.mxu0 %v2662
    %v2664 = vpop.f32.mrf.mxu0
    %v2665 = vadd.f32 %v2031, %v2664
    %v2666 = vand.u32 %v158, 4294901760
    %v2667 = vsub.f32 %v158, %v2666
    %2668 = vmatmul.f32.gmra.mxu0 %v2667
    %v2669 = vpop.f32.mrf.mxu0
    %v2670 = vadd.f32 %v2035, %v2669
    %v2671 = vand.u32 %v159, 4294901760
    %v2672 = vsub.f32 %v159, %v2671
    %2673 = vmatmul.f32.gmra.mxu0 %v2672
    %v2674 = vpop.f32.mrf.mxu0
    %v2675 = vadd.f32 %v2039, %v2674
    %v2676 = vand.u32 %v160, 4294901760
    %v2677 = vsub.f32 %v160, %v2676
    %2678 = vmatmul.f32.gmra.mxu0 %v2677
    %v2679 = vpop.f32.mrf.mxu0
    %v2680 = vadd.f32 %v2043, %v2679
    %v2681 = vand.u32 %v161, 4294901760
    %v2682 = vsub.f32 %v161, %v2681
    %2683 = vmatmul.f32.gmra.mxu0 %v2682
    %v2684 = vpop.f32.mrf.mxu0
    %v2685 = vadd.f32 %v2047, %v2684
    %v2686 = vand.u32 %v162, 4294901760
    %v2687 = vsub.f32 %v162, %v2686
    %2688 = vmatmul.f32.gmra.mxu0 %v2687
    %v2689 = vpop.f32.mrf.mxu0
    %v2690 = vadd.f32 %v2051, %v2689
    %v2691 = vand.u32 %v163, 4294901760
    %v2692 = vsub.f32 %v163, %v2691
    %2693 = vmatmul.f32.gmra.mxu0 %v2692
    %v2694 = vpop.f32.mrf.mxu0
    %v2695 = vadd.f32 %v2055, %v2694
    %v2696 = vand.u32 %v164, 4294901760
    %v2697 = vsub.f32 %v164, %v2696
    %2698 = vmatmul.f32.gmra.mxu0 %v2697
    %v2699 = vpop.f32.mrf.mxu0
    %v2700 = vadd.f32 %v2059, %v2699
    %v2701 = vand.u32 %v165, 4294901760
    %v2702 = vsub.f32 %v165, %v2701
    %2703 = vmatmul.f32.gmra.mxu0 %v2702
    %v2704 = vpop.f32.mrf.mxu0
    %v2705 = vadd.f32 %v2063, %v2704
    %v2706 = vand.u32 %v166, 4294901760
    %v2707 = vsub.f32 %v166, %v2706
    %2708 = vmatmul.f32.gmra.mxu0 %v2707
    %v2709 = vpop.f32.mrf.mxu0
    %v2710 = vadd.f32 %v2067, %v2709
    %v2711 = vand.u32 %v167, 4294901760
    %v2712 = vsub.f32 %v167, %v2711
    %2713 = vmatmul.f32.gmra.mxu0 %v2712
    %v2714 = vpop.f32.mrf.mxu0
    %v2715 = vadd.f32 %v2071, %v2714
    %v2716 = vand.u32 %v168, 4294901760
    %v2717 = vsub.f32 %v168, %v2716
    %2718 = vmatmul.f32.gmra.mxu0 %v2717
    %v2719 = vpop.f32.mrf.mxu0
    %v2720 = vadd.f32 %v2075, %v2719
    %v2721 = vand.u32 %v169, 4294901760
    %v2722 = vsub.f32 %v169, %v2721
    %2723 = vmatmul.f32.gmra.mxu0 %v2722
    %v2724 = vpop.f32.mrf.mxu0
    %v2725 = vadd.f32 %v2079, %v2724
    %v2726 = vand.u32 %v170, 4294901760
    %v2727 = vsub.f32 %v170, %v2726
    %2728 = vmatmul.f32.gmra.mxu0 %v2727
    %v2729 = vpop.f32.mrf.mxu0
    %v2730 = vadd.f32 %v2083, %v2729
    %v2731 = vand.u32 %v171, 4294901760
    %v2732 = vsub.f32 %v171, %v2731
    %2733 = vmatmul.f32.gmra.mxu0 %v2732
    %v2734 = vpop.f32.mrf.mxu0
    %v2735 = vadd.f32 %v2087, %v2734
    %v2736 = vand.u32 %v172, 4294901760
    %v2737 = vsub.f32 %v172, %v2736
    %2738 = vmatmul.f32.gmra.mxu0 %v2737
    %v2739 = vpop.f32.mrf.mxu0
    %v2740 = vadd.f32 %v2091, %v2739
    %v2741 = vand.u32 %v173, 4294901760
    %v2742 = vsub.f32 %v173, %v2741
    %2743 = vmatmul.f32.gmra.mxu0 %v2742
    %v2744 = vpop.f32.mrf.mxu0
    %v2745 = vadd.f32 %v2095, %v2744
    %v2746 = vand.u32 %v174, 4294901760
    %v2747 = vsub.f32 %v174, %v2746
    %2748 = vmatmul.f32.gmra.mxu0 %v2747
    %v2749 = vpop.f32.mrf.mxu0
    %v2750 = vadd.f32 %v2099, %v2749
    %v2751 = vand.u32 %v175, 4294901760
    %v2752 = vsub.f32 %v175, %v2751
    %2753 = vmatmul.f32.gmra.mxu0 %v2752
    %v2754 = vpop.f32.mrf.mxu0
    %v2755 = vadd.f32 %v2103, %v2754
    %v2756 = vand.u32 %v176, 4294901760
    %v2757 = vsub.f32 %v176, %v2756
    %2758 = vmatmul.f32.gmra.mxu0 %v2757
    %v2759 = vpop.f32.mrf.mxu0
    %v2760 = vadd.f32 %v2107, %v2759
    %v2761 = vand.u32 %v177, 4294901760
    %v2762 = vsub.f32 %v177, %v2761
    %2763 = vmatmul.f32.gmra.mxu0 %v2762
    %v2764 = vpop.f32.mrf.mxu0
    %v2765 = vadd.f32 %v2111, %v2764
    %v2766 = vand.u32 %v178, 4294901760
    %v2767 = vsub.f32 %v178, %v2766
    %2768 = vmatmul.f32.gmra.mxu0 %v2767
    %v2769 = vpop.f32.mrf.mxu0
    %v2770 = vadd.f32 %v2115, %v2769
    %v2771 = vand.u32 %v179, 4294901760
    %v2772 = vsub.f32 %v179, %v2771
    %2773 = vmatmul.f32.gmra.mxu0 %v2772
    %v2774 = vpop.f32.mrf.mxu0
    %v2775 = vadd.f32 %v2119, %v2774
    %v2776 = vand.u32 %v180, 4294901760
    %v2777 = vsub.f32 %v180, %v2776
    %2778 = vmatmul.f32.gmra.mxu0 %v2777
    %v2779 = vpop.f32.mrf.mxu0
    %v2780 = vadd.f32 %v2123, %v2779
    %v2781 = vand.u32 %v181, 4294901760
    %v2782 = vsub.f32 %v181, %v2781
    %2783 = vmatmul.f32.gmra.mxu0 %v2782
    %v2784 = vpop.f32.mrf.mxu0
    %v2785 = vadd.f32 %v2127, %v2784
    %v2786 = vand.u32 %v182, 4294901760
    %v2787 = vsub.f32 %v182, %v2786
    %2788 = vmatmul.f32.gmra.mxu0 %v2787
    %v2789 = vpop.f32.mrf.mxu0
    %v2790 = vadd.f32 %v2131, %v2789
    %v2791 = vand.u32 %v183, 4294901760
    %v2792 = vsub.f32 %v183, %v2791
    %2793 = vmatmul.f32.gmra.mxu0 %v2792
    %v2794 = vpop.f32.mrf.mxu0
    %v2795 = vadd.f32 %v2135, %v2794
    %v2796 = vand.u32 %v184, 4294901760
    %v2797 = vsub.f32 %v184, %v2796
    %2798 = vmatmul.f32.gmra.mxu0 %v2797
    %v2799 = vpop.f32.mrf.mxu0
    %v2800 = vadd.f32 %v2139, %v2799
    %v2801 = vand.u32 %v185, 4294901760
    %v2802 = vsub.f32 %v185, %v2801
    %2803 = vmatmul.f32.gmra.mxu0 %v2802
    %v2804 = vpop.f32.mrf.mxu0
    %v2805 = vadd.f32 %v2143, %v2804
    %v2806 = vand.u32 %v186, 4294901760
    %v2807 = vsub.f32 %v186, %v2806
    %2808 = vmatmul.f32.gmra.mxu0 %v2807
    %v2809 = vpop.f32.mrf.mxu0
    %v2810 = vadd.f32 %v2147, %v2809
    %v2811 = vand.u32 %v187, 4294901760
    %v2812 = vsub.f32 %v187, %v2811
    %2813 = vmatmul.f32.gmra.mxu0 %v2812
    %v2814 = vpop.f32.mrf.mxu0
    %v2815 = vadd.f32 %v2151, %v2814
    %v2816 = vand.u32 %v188, 4294901760
    %v2817 = vsub.f32 %v188, %v2816
    %2818 = vmatmul.f32.gmra.mxu0 %v2817
    %v2819 = vpop.f32.mrf.mxu0
    %v2820 = vadd.f32 %v2155, %v2819
    %v2821 = vand.u32 %v189, 4294901760
    %v2822 = vsub.f32 %v189, %v2821
    %2823 = vmatmul.f32.gmra.mxu0 %v2822
    %v2824 = vpop.f32.mrf.mxu0
    %v2825 = vadd.f32 %v2159, %v2824
    %v2826 = vand.u32 %v190, 4294901760
    %v2827 = vsub.f32 %v190, %v2826
    %2828 = vmatmul.f32.gmra.mxu0 %v2827
    %v2829 = vpop.f32.mrf.mxu0
    %v2830 = vadd.f32 %v2163, %v2829
    %v2831 = vand.u32 %v191, 4294901760
    %v2832 = vsub.f32 %v191, %v2831
    %2833 = vmatmul.f32.gmra.mxu0 %v2832
    %v2834 = vpop.f32.mrf.mxu0
    %v2835 = vadd.f32 %v2167, %v2834
    %v2836 = vand.u32 %v192, 4294901760
    %v2837 = vsub.f32 %v192, %v2836
    %2838 = vmatmul.f32.gmra.mxu0 %v2837
    %v2839 = vpop.f32.mrf.mxu0
    %v2840 = vadd.f32 %v2171, %v2839
    %v2841 = vand.u32 %v193, 4294901760
    %v2842 = vsub.f32 %v193, %v2841
    %2843 = vmatmul.f32.gmra.mxu0 %v2842
    %v2844 = vpop.f32.mrf.mxu0
    %v2845 = vadd.f32 %v2175, %v2844
    %v2846 = vand.u32 %v194, 4294901760
    %v2847 = vsub.f32 %v194, %v2846
    %2848 = vmatmul.f32.gmra.mxu0 %v2847
    %v2849 = vpop.f32.mrf.mxu0
    %v2850 = vadd.f32 %v2179, %v2849
    %v2851 = vand.u32 %v195, 4294901760
    %v2852 = vsub.f32 %v195, %v2851
    %2853 = vmatmul.f32.gmra.mxu0 %v2852
    %v2854 = vpop.f32.mrf.mxu0
    %v2855 = vadd.f32 %v2183, %v2854
    %v2856 = vand.u32 %v196, 4294901760
    %v2857 = vsub.f32 %v196, %v2856
    %2858 = vmatmul.f32.gmra.mxu0 %v2857
    %v2859 = vpop.f32.mrf.mxu0
    %v2860 = vadd.f32 %v2187, %v2859
    %v2861 = vand.u32 %v197, 4294901760
    %v2862 = vsub.f32 %v197, %v2861
    %2863 = vmatmul.f32.gmra.mxu0 %v2862
    %v2864 = vpop.f32.mrf.mxu0
    %v2865 = vadd.f32 %v2191, %v2864
    %v2866 = vand.u32 %v198, 4294901760
    %v2867 = vsub.f32 %v198, %v2866
    %2868 = vmatmul.f32.gmra.mxu0 %v2867
    %v2869 = vpop.f32.mrf.mxu0
    %v2870 = vadd.f32 %v2195, %v2869
    %v2871 = vand.u32 %v199, 4294901760
    %v2872 = vsub.f32 %v199, %v2871
    %2873 = vmatmul.f32.gmra.mxu0 %v2872
    %v2874 = vpop.f32.mrf.mxu0
    %v2875 = vadd.f32 %v2199, %v2874
    %v2876 = vand.u32 %v200, 4294901760
    %v2877 = vsub.f32 %v200, %v2876
    %2878 = vmatmul.f32.gmra.mxu0 %v2877
    %v2879 = vpop.f32.mrf.mxu0
    %v2880 = vadd.f32 %v2203, %v2879
    %v2881 = vand.u32 %v201, 4294901760
    %v2882 = vsub.f32 %v201, %v2881
    %2883 = vmatmul.f32.gmra.mxu0 %v2882
    %v2884 = vpop.f32.mrf.mxu0
    %v2885 = vadd.f32 %v2207, %v2884
    %v2886 = vand.u32 %v202, 4294901760
    %v2887 = vsub.f32 %v202, %v2886
    %2888 = vmatmul.f32.gmra.mxu0 %v2887
    %v2889 = vpop.f32.mrf.mxu0
    %v2890 = vadd.f32 %v2211, %v2889
    %v2891 = vand.u32 %v203, 4294901760
    %v2892 = vsub.f32 %v203, %v2891
    %2893 = vmatmul.f32.gmra.mxu0 %v2892
    %v2894 = vpop.f32.mrf.mxu0
    %v2895 = vadd.f32 %v2215, %v2894
    %v2896 = vand.u32 %v204, 4294901760
    %v2897 = vsub.f32 %v204, %v2896
    %2898 = vmatmul.f32.gmra.mxu0 %v2897
    %v2899 = vpop.f32.mrf.mxu0
    %v2900 = vadd.f32 %v2219, %v2899
    %v2901 = vand.u32 %v205, 4294901760
    %v2902 = vsub.f32 %v205, %v2901
    %2903 = vmatmul.f32.gmra.mxu0 %v2902
    %v2904 = vpop.f32.mrf.mxu0
    %v2905 = vadd.f32 %v2223, %v2904
    %v2906 = vand.u32 %v206, 4294901760
    %v2907 = vsub.f32 %v206, %v2906
    %2908 = vmatmul.f32.gmra.mxu0 %v2907
    %v2909 = vpop.f32.mrf.mxu0
    %v2910 = vadd.f32 %v2227, %v2909
    %v2911 = vand.u32 %v207, 4294901760
    %v2912 = vsub.f32 %v207, %v2911
    %2913 = vmatmul.f32.gmra.mxu0 %v2912
    %v2914 = vpop.f32.mrf.mxu0
    %v2915 = vadd.f32 %v2231, %v2914
    %v2916 = vand.u32 %v208, 4294901760
    %v2917 = vsub.f32 %v208, %v2916
    %2918 = vmatmul.f32.gmra.mxu0 %v2917
    %v2919 = vpop.f32.mrf.mxu0
    %v2920 = vadd.f32 %v2235, %v2919
    %v2921 = vand.u32 %v209, 4294901760
    %v2922 = vsub.f32 %v209, %v2921
    %2923 = vmatmul.f32.gmra.mxu0 %v2922
    %v2924 = vpop.f32.mrf.mxu0
    %v2925 = vadd.f32 %v2239, %v2924
    %v2926 = vand.u32 %v210, 4294901760
    %v2927 = vsub.f32 %v210, %v2926
    %2928 = vmatmul.f32.gmra.mxu0 %v2927
    %v2929 = vpop.f32.mrf.mxu0
    %v2930 = vadd.f32 %v2243, %v2929
    %v2931 = vand.u32 %v211, 4294901760
    %v2932 = vsub.f32 %v211, %v2931
    %2933 = vmatmul.f32.gmra.mxu0 %v2932
    %v2934 = vpop.f32.mrf.mxu0
    %v2935 = vadd.f32 %v2247, %v2934
    %v2936 = vand.u32 %v212, 4294901760
    %v2937 = vsub.f32 %v212, %v2936
    %2938 = vmatmul.f32.gmra.mxu0 %v2937
    %v2939 = vpop.f32.mrf.mxu0
    %v2940 = vadd.f32 %v2251, %v2939
    %2941 = vdwg.mxu0
    %v2942 = vand.u32 %v244, 4294901760
    %2943 = vmatpush.msra.mxu0 %v2942
    %v2944 = vand.u32 %v243, 4294901760
    %2945 = vmatpush.msra.mxu0 %v2944
    %v2946 = vand.u32 %v242, 4294901760
    %2947 = vmatpush.msra.mxu0 %v2946
    %v2948 = vand.u32 %v241, 4294901760
    %2949 = vmatpush.msra.mxu0 %v2948
    %v2950 = vand.u32 %v240, 4294901760
    %2951 = vmatpush.msra.mxu0 %v2950
    %v2952 = vand.u32 %v239, 4294901760
    %2953 = vmatpush.msra.mxu0 %v2952
    %v2954 = vand.u32 %v238, 4294901760
    %2955 = vmatpush.msra.mxu0 %v2954
    %v2956 = vand.u32 %v237, 4294901760
    %2957 = vmatpush.msra.mxu0 %v2956
    %v2958 = vand.u32 %v236, 4294901760
    %2959 = vmatpush.msra.mxu0 %v2958
    %v2960 = vand.u32 %v235, 4294901760
    %2961 = vmatpush.msra.mxu0 %v2960
    %v2962 = vand.u32 %v234, 4294901760
    %2963 = vmatpush.msra.mxu0 %v2962
    %v2964 = vand.u32 %v233, 4294901760
    %2965 = vmatpush.msra.mxu0 %v2964
    %v2966 = vand.u32 %v232, 4294901760
    %2967 = vmatpush.msra.mxu0 %v2966
    %v2968 = vand.u32 %v231, 4294901760
    %2969 = vmatpush.msra.mxu0 %v2968
    %v2970 = vand.u32 %v230, 4294901760
    %2971 = vmatpush.msra.mxu0 %v2970
    %v2972 = vand.u32 %v229, 4294901760
    %2973 = vmatpush.msra.mxu0 %v2972
    %v2974 = vand.u32 %v85, 4294901760
    %v2975 = vsub.f32 %v85, %v2974
    %v2976 = vand.u32 %v2975, 4294901760
    %2977 = vmatmul.f32.gmra.mxu0 %v2976
    %v2978 = vpop.f32.mrf.mxu0
    %v2979 = vadd.f32 %v2305, %v2978
    %v2980 = vand.u32 %v86, 4294901760
    %v2981 = vsub.f32 %v86, %v2980
    %v2982 = vand.u32 %v2981, 4294901760
    %2983 = vmatmul.f32.gmra.mxu0 %v2982
    %v2984 = vpop.f32.mrf.mxu0
    %v2985 = vadd.f32 %v2310, %v2984
    %v2986 = vand.u32 %v87, 4294901760
    %v2987 = vsub.f32 %v87, %v2986
    %v2988 = vand.u32 %v2987, 4294901760
    %2989 = vmatmul.f32.gmra.mxu0 %v2988
    %v2990 = vpop.f32.mrf.mxu0
    %v2991 = vadd.f32 %v2315, %v2990
    %v2992 = vand.u32 %v88, 4294901760
    %v2993 = vsub.f32 %v88, %v2992
    %v2994 = vand.u32 %v2993, 4294901760
    %2995 = vmatmul.f32.gmra.mxu0 %v2994
    %v2996 = vpop.f32.mrf.mxu0
    %v2997 = vadd.f32 %v2320, %v2996
    %v2998 = vand.u32 %v89, 4294901760
    %v2999 = vsub.f32 %v89, %v2998
    %v3000 = vand.u32 %v2999, 4294901760
    %3001 = vmatmul.f32.gmra.mxu0 %v3000
    %v3002 = vpop.f32.mrf.mxu0
    %v3003 = vadd.f32 %v2325, %v3002
    %v3004 = vand.u32 %v90, 4294901760
    %v3005 = vsub.f32 %v90, %v3004
    %v3006 = vand.u32 %v3005, 4294901760
    %3007 = vmatmul.f32.gmra.mxu0 %v3006
    %v3008 = vpop.f32.mrf.mxu0
    %v3009 = vadd.f32 %v2330, %v3008
    %v3010 = vand.u32 %v91, 4294901760
    %v3011 = vsub.f32 %v91, %v3010
    %v3012 = vand.u32 %v3011, 4294901760
    %3013 = vmatmul.f32.gmra.mxu0 %v3012
    %v3014 = vpop.f32.mrf.mxu0
    %v3015 = vadd.f32 %v2335, %v3014
    %v3016 = vand.u32 %v92, 4294901760
    %v3017 = vsub.f32 %v92, %v3016
    %v3018 = vand.u32 %v3017, 4294901760
    %3019 = vmatmul.f32.gmra.mxu0 %v3018
    %v3020 = vpop.f32.mrf.mxu0
    %v3021 = vadd.f32 %v2340, %v3020
    %v3022 = vand.u32 %v93, 4294901760
    %v3023 = vsub.f32 %v93, %v3022
    %v3024 = vand.u32 %v3023, 4294901760
    %3025 = vmatmul.f32.gmra.mxu0 %v3024
    %v3026 = vpop.f32.mrf.mxu0
    %v3027 = vadd.f32 %v2345, %v3026
    %v3028 = vand.u32 %v94, 4294901760
    %v3029 = vsub.f32 %v94, %v3028
    %v3030 = vand.u32 %v3029, 4294901760
    %3031 = vmatmul.f32.gmra.mxu0 %v3030
    %v3032 = vpop.f32.mrf.mxu0
    %v3033 = vadd.f32 %v2350, %v3032
    %v3034 = vand.u32 %v95, 4294901760
    %v3035 = vsub.f32 %v95, %v3034
    %v3036 = vand.u32 %v3035, 4294901760
    %3037 = vmatmul.f32.gmra.mxu0 %v3036
    %v3038 = vpop.f32.mrf.mxu0
    %v3039 = vadd.f32 %v2355, %v3038
    %v3040 = vand.u32 %v96, 4294901760
    %v3041 = vsub.f32 %v96, %v3040
    %v3042 = vand.u32 %v3041, 4294901760
    %3043 = vmatmul.f32.gmra.mxu0 %v3042
    %v3044 = vpop.f32.mrf.mxu0
    %v3045 = vadd.f32 %v2360, %v3044
    %v3046 = vand.u32 %v97, 4294901760
    %v3047 = vsub.f32 %v97, %v3046
    %v3048 = vand.u32 %v3047, 4294901760
    %3049 = vmatmul.f32.gmra.mxu0 %v3048
    %v3050 = vpop.f32.mrf.mxu0
    %v3051 = vadd.f32 %v2365, %v3050
    %v3052 = vand.u32 %v98, 4294901760
    %v3053 = vsub.f32 %v98, %v3052
    %v3054 = vand.u32 %v3053, 4294901760
    %3055 = vmatmul.f32.gmra.mxu0 %v3054
    %v3056 = vpop.f32.mrf.mxu0
    %v3057 = vadd.f32 %v2370, %v3056
    %v3058 = vand.u32 %v99, 4294901760
    %v3059 = vsub.f32 %v99, %v3058
    %v3060 = vand.u32 %v3059, 4294901760
    %3061 = vmatmul.f32.gmra.mxu0 %v3060
    %v3062 = vpop.f32.mrf.mxu0
    %v3063 = vadd.f32 %v2375, %v3062
    %v3064 = vand.u32 %v100, 4294901760
    %v3065 = vsub.f32 %v100, %v3064
    %v3066 = vand.u32 %v3065, 4294901760
    %3067 = vmatmul.f32.gmra.mxu0 %v3066
    %v3068 = vpop.f32.mrf.mxu0
    %v3069 = vadd.f32 %v2380, %v3068
    %v3070 = vand.u32 %v101, 4294901760
    %v3071 = vsub.f32 %v101, %v3070
    %v3072 = vand.u32 %v3071, 4294901760
    %3073 = vmatmul.f32.gmra.mxu0 %v3072
    %v3074 = vpop.f32.mrf.mxu0
    %v3075 = vadd.f32 %v2385, %v3074
    %v3076 = vand.u32 %v102, 4294901760
    %v3077 = vsub.f32 %v102, %v3076
    %v3078 = vand.u32 %v3077, 4294901760
    %3079 = vmatmul.f32.gmra.mxu0 %v3078
    %v3080 = vpop.f32.mrf.mxu0
    %v3081 = vadd.f32 %v2390, %v3080
    %v3082 = vand.u32 %v103, 4294901760
    %v3083 = vsub.f32 %v103, %v3082
    %v3084 = vand.u32 %v3083, 4294901760
    %3085 = vmatmul.f32.gmra.mxu0 %v3084
    %v3086 = vpop.f32.mrf.mxu0
    %v3087 = vadd.f32 %v2395, %v3086
    %v3088 = vand.u32 %v104, 4294901760
    %v3089 = vsub.f32 %v104, %v3088
    %v3090 = vand.u32 %v3089, 4294901760
    %3091 = vmatmul.f32.gmra.mxu0 %v3090
    %v3092 = vpop.f32.mrf.mxu0
    %v3093 = vadd.f32 %v2400, %v3092
    %v3094 = vand.u32 %v105, 4294901760
    %v3095 = vsub.f32 %v105, %v3094
    %v3096 = vand.u32 %v3095, 4294901760
    %3097 = vmatmul.f32.gmra.mxu0 %v3096
    %v3098 = vpop.f32.mrf.mxu0
    %v3099 = vadd.f32 %v2405, %v3098
    %v3100 = vand.u32 %v106, 4294901760
    %v3101 = vsub.f32 %v106, %v3100
    %v3102 = vand.u32 %v3101, 4294901760
    %3103 = vmatmul.f32.gmra.mxu0 %v3102
    %v3104 = vpop.f32.mrf.mxu0
    %v3105 = vadd.f32 %v2410, %v3104
    %v3106 = vand.u32 %v107, 4294901760
    %v3107 = vsub.f32 %v107, %v3106
    %v3108 = vand.u32 %v3107, 4294901760
    %3109 = vmatmul.f32.gmra.mxu0 %v3108
    %v3110 = vpop.f32.mrf.mxu0
    %v3111 = vadd.f32 %v2415, %v3110
    %v3112 = vand.u32 %v108, 4294901760
    %v3113 = vsub.f32 %v108, %v3112
    %v3114 = vand.u32 %v3113, 4294901760
    %3115 = vmatmul.f32.gmra.mxu0 %v3114
    %v3116 = vpop.f32.mrf.mxu0
    %v3117 = vadd.f32 %v2420, %v3116
    %v3118 = vand.u32 %v109, 4294901760
    %v3119 = vsub.f32 %v109, %v3118
    %v3120 = vand.u32 %v3119, 4294901760
    %3121 = vmatmul.f32.gmra.mxu0 %v3120
    %v3122 = vpop.f32.mrf.mxu0
    %v3123 = vadd.f32 %v2425, %v3122
    %v3124 = vand.u32 %v110, 4294901760
    %v3125 = vsub.f32 %v110, %v3124
    %v3126 = vand.u32 %v3125, 4294901760
    %3127 = vmatmul.f32.gmra.mxu0 %v3126
    %v3128 = vpop.f32.mrf.mxu0
    %v3129 = vadd.f32 %v2430, %v3128
    %v3130 = vand.u32 %v111, 4294901760
    %v3131 = vsub.f32 %v111, %v3130
    %v3132 = vand.u32 %v3131, 4294901760
    %3133 = vmatmul.f32.gmra.mxu0 %v3132
    %v3134 = vpop.f32.mrf.mxu0
    %v3135 = vadd.f32 %v2435, %v3134
    %v3136 = vand.u32 %v112, 4294901760
    %v3137 = vsub.f32 %v112, %v3136
    %v3138 = vand.u32 %v3137, 4294901760
    %3139 = vmatmul.f32.gmra.mxu0 %v3138
    %v3140 = vpop.f32.mrf.mxu0
    %v3141 = vadd.f32 %v2440, %v3140
    %v3142 = vand.u32 %v113, 4294901760
    %v3143 = vsub.f32 %v113, %v3142
    %v3144 = vand.u32 %v3143, 4294901760
    %3145 = vmatmul.f32.gmra.mxu0 %v3144
    %v3146 = vpop.f32.mrf.mxu0
    %v3147 = vadd.f32 %v2445, %v3146
    %v3148 = vand.u32 %v114, 4294901760
    %v3149 = vsub.f32 %v114, %v3148
    %v3150 = vand.u32 %v3149, 4294901760
    %3151 = vmatmul.f32.gmra.mxu0 %v3150
    %v3152 = vpop.f32.mrf.mxu0
    %v3153 = vadd.f32 %v2450, %v3152
    %v3154 = vand.u32 %v115, 4294901760
    %v3155 = vsub.f32 %v115, %v3154
    %v3156 = vand.u32 %v3155, 4294901760
    %3157 = vmatmul.f32.gmra.mxu0 %v3156
    %v3158 = vpop.f32.mrf.mxu0
    %v3159 = vadd.f32 %v2455, %v3158
    %v3160 = vand.u32 %v116, 4294901760
    %v3161 = vsub.f32 %v116, %v3160
    %v3162 = vand.u32 %v3161, 4294901760
    %3163 = vmatmul.f32.gmra.mxu0 %v3162
    %v3164 = vpop.f32.mrf.mxu0
    %v3165 = vadd.f32 %v2460, %v3164
    %v3166 = vand.u32 %v117, 4294901760
    %v3167 = vsub.f32 %v117, %v3166
    %v3168 = vand.u32 %v3167, 4294901760
    %3169 = vmatmul.f32.gmra.mxu0 %v3168
    %v3170 = vpop.f32.mrf.mxu0
    %v3171 = vadd.f32 %v2465, %v3170
    %v3172 = vand.u32 %v118, 4294901760
    %v3173 = vsub.f32 %v118, %v3172
    %v3174 = vand.u32 %v3173, 4294901760
    %3175 = vmatmul.f32.gmra.mxu0 %v3174
    %v3176 = vpop.f32.mrf.mxu0
    %v3177 = vadd.f32 %v2470, %v3176
    %v3178 = vand.u32 %v119, 4294901760
    %v3179 = vsub.f32 %v119, %v3178
    %v3180 = vand.u32 %v3179, 4294901760
    %3181 = vmatmul.f32.gmra.mxu0 %v3180
    %v3182 = vpop.f32.mrf.mxu0
    %v3183 = vadd.f32 %v2475, %v3182
    %v3184 = vand.u32 %v120, 4294901760
    %v3185 = vsub.f32 %v120, %v3184
    %v3186 = vand.u32 %v3185, 4294901760
    %3187 = vmatmul.f32.gmra.mxu0 %v3186
    %v3188 = vpop.f32.mrf.mxu0
    %v3189 = vadd.f32 %v2480, %v3188
    %v3190 = vand.u32 %v121, 4294901760
    %v3191 = vsub.f32 %v121, %v3190
    %v3192 = vand.u32 %v3191, 4294901760
    %3193 = vmatmul.f32.gmra.mxu0 %v3192
    %v3194 = vpop.f32.mrf.mxu0
    %v3195 = vadd.f32 %v2485, %v3194
    %v3196 = vand.u32 %v122, 4294901760
    %v3197 = vsub.f32 %v122, %v3196
    %v3198 = vand.u32 %v3197, 4294901760
    %3199 = vmatmul.f32.gmra.mxu0 %v3198
    %v3200 = vpop.f32.mrf.mxu0
    %v3201 = vadd.f32 %v2490, %v3200
    %v3202 = vand.u32 %v123, 4294901760
    %v3203 = vsub.f32 %v123, %v3202
    %v3204 = vand.u32 %v3203, 4294901760
    %3205 = vmatmul.f32.gmra.mxu0 %v3204
    %v3206 = vpop.f32.mrf.mxu0
    %v3207 = vadd.f32 %v2495, %v3206
    %v3208 = vand.u32 %v124, 4294901760
    %v3209 = vsub.f32 %v124, %v3208
    %v3210 = vand.u32 %v3209, 4294901760
    %3211 = vmatmul.f32.gmra.mxu0 %v3210
    %v3212 = vpop.f32.mrf.mxu0
    %v3213 = vadd.f32 %v2500, %v3212
    %v3214 = vand.u32 %v125, 4294901760
    %v3215 = vsub.f32 %v125, %v3214
    %v3216 = vand.u32 %v3215, 4294901760
    %3217 = vmatmul.f32.gmra.mxu0 %v3216
    %v3218 = vpop.f32.mrf.mxu0
    %v3219 = vadd.f32 %v2505, %v3218
    %v3220 = vand.u32 %v126, 4294901760
    %v3221 = vsub.f32 %v126, %v3220
    %v3222 = vand.u32 %v3221, 4294901760
    %3223 = vmatmul.f32.gmra.mxu0 %v3222
    %v3224 = vpop.f32.mrf.mxu0
    %v3225 = vadd.f32 %v2510, %v3224
    %v3226 = vand.u32 %v127, 4294901760
    %v3227 = vsub.f32 %v127, %v3226
    %v3228 = vand.u32 %v3227, 4294901760
    %3229 = vmatmul.f32.gmra.mxu0 %v3228
    %v3230 = vpop.f32.mrf.mxu0
    %v3231 = vadd.f32 %v2515, %v3230
    %v3232 = vand.u32 %v128, 4294901760
    %v3233 = vsub.f32 %v128, %v3232
    %v3234 = vand.u32 %v3233, 4294901760
    %3235 = vmatmul.f32.gmra.mxu0 %v3234
    %v3236 = vpop.f32.mrf.mxu0
    %v3237 = vadd.f32 %v2520, %v3236
    %v3238 = vand.u32 %v129, 4294901760
    %v3239 = vsub.f32 %v129, %v3238
    %v3240 = vand.u32 %v3239, 4294901760
    %3241 = vmatmul.f32.gmra.mxu0 %v3240
    %v3242 = vpop.f32.mrf.mxu0
    %v3243 = vadd.f32 %v2525, %v3242
    %v3244 = vand.u32 %v130, 4294901760
    %v3245 = vsub.f32 %v130, %v3244
    %v3246 = vand.u32 %v3245, 4294901760
    %3247 = vmatmul.f32.gmra.mxu0 %v3246
    %v3248 = vpop.f32.mrf.mxu0
    %v3249 = vadd.f32 %v2530, %v3248
    %v3250 = vand.u32 %v131, 4294901760
    %v3251 = vsub.f32 %v131, %v3250
    %v3252 = vand.u32 %v3251, 4294901760
    %3253 = vmatmul.f32.gmra.mxu0 %v3252
    %v3254 = vpop.f32.mrf.mxu0
    %v3255 = vadd.f32 %v2535, %v3254
    %v3256 = vand.u32 %v132, 4294901760
    %v3257 = vsub.f32 %v132, %v3256
    %v3258 = vand.u32 %v3257, 4294901760
    %3259 = vmatmul.f32.gmra.mxu0 %v3258
    %v3260 = vpop.f32.mrf.mxu0
    %v3261 = vadd.f32 %v2540, %v3260
    %v3262 = vand.u32 %v133, 4294901760
    %v3263 = vsub.f32 %v133, %v3262
    %v3264 = vand.u32 %v3263, 4294901760
    %3265 = vmatmul.f32.gmra.mxu0 %v3264
    %v3266 = vpop.f32.mrf.mxu0
    %v3267 = vadd.f32 %v2545, %v3266
    %v3268 = vand.u32 %v134, 4294901760
    %v3269 = vsub.f32 %v134, %v3268
    %v3270 = vand.u32 %v3269, 4294901760
    %3271 = vmatmul.f32.gmra.mxu0 %v3270
    %v3272 = vpop.f32.mrf.mxu0
    %v3273 = vadd.f32 %v2550, %v3272
    %v3274 = vand.u32 %v135, 4294901760
    %v3275 = vsub.f32 %v135, %v3274
    %v3276 = vand.u32 %v3275, 4294901760
    %3277 = vmatmul.f32.gmra.mxu0 %v3276
    %v3278 = vpop.f32.mrf.mxu0
    %v3279 = vadd.f32 %v2555, %v3278
    %v3280 = vand.u32 %v136, 4294901760
    %v3281 = vsub.f32 %v136, %v3280
    %v3282 = vand.u32 %v3281, 4294901760
    %3283 = vmatmul.f32.gmra.mxu0 %v3282
    %v3284 = vpop.f32.mrf.mxu0
    %v3285 = vadd.f32 %v2560, %v3284
    %v3286 = vand.u32 %v137, 4294901760
    %v3287 = vsub.f32 %v137, %v3286
    %v3288 = vand.u32 %v3287, 4294901760
    %3289 = vmatmul.f32.gmra.mxu0 %v3288
    %v3290 = vpop.f32.mrf.mxu0
    %v3291 = vadd.f32 %v2565, %v3290
    %v3292 = vand.u32 %v138, 4294901760
    %v3293 = vsub.f32 %v138, %v3292
    %v3294 = vand.u32 %v3293, 4294901760
    %3295 = vmatmul.f32.gmra.mxu0 %v3294
    %v3296 = vpop.f32.mrf.mxu0
    %v3297 = vadd.f32 %v2570, %v3296
    %v3298 = vand.u32 %v139, 4294901760
    %v3299 = vsub.f32 %v139, %v3298
    %v3300 = vand.u32 %v3299, 4294901760
    %3301 = vmatmul.f32.gmra.mxu0 %v3300
    %v3302 = vpop.f32.mrf.mxu0
    %v3303 = vadd.f32 %v2575, %v3302
    %v3304 = vand.u32 %v140, 4294901760
    %v3305 = vsub.f32 %v140, %v3304
    %v3306 = vand.u32 %v3305, 4294901760
    %3307 = vmatmul.f32.gmra.mxu0 %v3306
    %v3308 = vpop.f32.mrf.mxu0
    %v3309 = vadd.f32 %v2580, %v3308
    %v3310 = vand.u32 %v141, 4294901760
    %v3311 = vsub.f32 %v141, %v3310
    %v3312 = vand.u32 %v3311, 4294901760
    %3313 = vmatmul.f32.gmra.mxu0 %v3312
    %v3314 = vpop.f32.mrf.mxu0
    %v3315 = vadd.f32 %v2585, %v3314
    %v3316 = vand.u32 %v142, 4294901760
    %v3317 = vsub.f32 %v142, %v3316
    %v3318 = vand.u32 %v3317, 4294901760
    %3319 = vmatmul.f32.gmra.mxu0 %v3318
    %v3320 = vpop.f32.mrf.mxu0
    %v3321 = vadd.f32 %v2590, %v3320
    %v3322 = vand.u32 %v143, 4294901760
    %v3323 = vsub.f32 %v143, %v3322
    %v3324 = vand.u32 %v3323, 4294901760
    %3325 = vmatmul.f32.gmra.mxu0 %v3324
    %v3326 = vpop.f32.mrf.mxu0
    %v3327 = vadd.f32 %v2595, %v3326
    %v3328 = vand.u32 %v144, 4294901760
    %v3329 = vsub.f32 %v144, %v3328
    %v3330 = vand.u32 %v3329, 4294901760
    %3331 = vmatmul.f32.gmra.mxu0 %v3330
    %v3332 = vpop.f32.mrf.mxu0
    %v3333 = vadd.f32 %v2600, %v3332
    %v3334 = vand.u32 %v145, 4294901760
    %v3335 = vsub.f32 %v145, %v3334
    %v3336 = vand.u32 %v3335, 4294901760
    %3337 = vmatmul.f32.gmra.mxu0 %v3336
    %v3338 = vpop.f32.mrf.mxu0
    %v3339 = vadd.f32 %v2605, %v3338
    %v3340 = vand.u32 %v146, 4294901760
    %v3341 = vsub.f32 %v146, %v3340
    %v3342 = vand.u32 %v3341, 4294901760
    %3343 = vmatmul.f32.gmra.mxu0 %v3342
    %v3344 = vpop.f32.mrf.mxu0
    %v3345 = vadd.f32 %v2610, %v3344
    %v3346 = vand.u32 %v147, 4294901760
    %v3347 = vsub.f32 %v147, %v3346
    %v3348 = vand.u32 %v3347, 4294901760
    %3349 = vmatmul.f32.gmra.mxu0 %v3348
    %v3350 = vpop.f32.mrf.mxu0
    %v3351 = vadd.f32 %v2615, %v3350
    %v3352 = vand.u32 %v148, 4294901760
    %v3353 = vsub.f32 %v148, %v3352
    %v3354 = vand.u32 %v3353, 4294901760
    %3355 = vmatmul.f32.gmra.mxu0 %v3354
    %v3356 = vpop.f32.mrf.mxu0
    %v3357 = vadd.f32 %v2620, %v3356
    %v3358 = vand.u32 %v149, 4294901760
    %v3359 = vsub.f32 %v149, %v3358
    %v3360 = vand.u32 %v3359, 4294901760
    %3361 = vmatmul.f32.gmra.mxu0 %v3360
    %v3362 = vpop.f32.mrf.mxu0
    %v3363 = vadd.f32 %v2625, %v3362
    %v3364 = vand.u32 %v150, 4294901760
    %v3365 = vsub.f32 %v150, %v3364
    %v3366 = vand.u32 %v3365, 4294901760
    %3367 = vmatmul.f32.gmra.mxu0 %v3366
    %v3368 = vpop.f32.mrf.mxu0
    %v3369 = vadd.f32 %v2630, %v3368
    %v3370 = vand.u32 %v151, 4294901760
    %v3371 = vsub.f32 %v151, %v3370
    %v3372 = vand.u32 %v3371, 4294901760
    %3373 = vmatmul.f32.gmra.mxu0 %v3372
    %v3374 = vpop.f32.mrf.mxu0
    %v3375 = vadd.f32 %v2635, %v3374
    %v3376 = vand.u32 %v152, 4294901760
    %v3377 = vsub.f32 %v152, %v3376
    %v3378 = vand.u32 %v3377, 4294901760
    %3379 = vmatmul.f32.gmra.mxu0 %v3378
    %v3380 = vpop.f32.mrf.mxu0
    %v3381 = vadd.f32 %v2640, %v3380
    %v3382 = vand.u32 %v153, 4294901760
    %v3383 = vsub.f32 %v153, %v3382
    %v3384 = vand.u32 %v3383, 4294901760
    %3385 = vmatmul.f32.gmra.mxu0 %v3384
    %v3386 = vpop.f32.mrf.mxu0
    %v3387 = vadd.f32 %v2645, %v3386
    %v3388 = vand.u32 %v154, 4294901760
    %v3389 = vsub.f32 %v154, %v3388
    %v3390 = vand.u32 %v3389, 4294901760
    %3391 = vmatmul.f32.gmra.mxu0 %v3390
    %v3392 = vpop.f32.mrf.mxu0
    %v3393 = vadd.f32 %v2650, %v3392
    %v3394 = vand.u32 %v155, 4294901760
    %v3395 = vsub.f32 %v155, %v3394
    %v3396 = vand.u32 %v3395, 4294901760
    %3397 = vmatmul.f32.gmra.mxu0 %v3396
    %v3398 = vpop.f32.mrf.mxu0
    %v3399 = vadd.f32 %v2655, %v3398
    %v3400 = vand.u32 %v156, 4294901760
    %v3401 = vsub.f32 %v156, %v3400
    %v3402 = vand.u32 %v3401, 4294901760
    %3403 = vmatmul.f32.gmra.mxu0 %v3402
    %v3404 = vpop.f32.mrf.mxu0
    %v3405 = vadd.f32 %v2660, %v3404
    %v3406 = vand.u32 %v157, 4294901760
    %v3407 = vsub.f32 %v157, %v3406
    %v3408 = vand.u32 %v3407, 4294901760
    %3409 = vmatmul.f32.gmra.mxu0 %v3408
    %v3410 = vpop.f32.mrf.mxu0
    %v3411 = vadd.f32 %v2665, %v3410
    %v3412 = vand.u32 %v158, 4294901760
    %v3413 = vsub.f32 %v158, %v3412
    %v3414 = vand.u32 %v3413, 4294901760
    %3415 = vmatmul.f32.gmra.mxu0 %v3414
    %v3416 = vpop.f32.mrf.mxu0
    %v3417 = vadd.f32 %v2670, %v3416
    %v3418 = vand.u32 %v159, 4294901760
    %v3419 = vsub.f32 %v159, %v3418
    %v3420 = vand.u32 %v3419, 4294901760
    %3421 = vmatmul.f32.gmra.mxu0 %v3420
    %v3422 = vpop.f32.mrf.mxu0
    %v3423 = vadd.f32 %v2675, %v3422
    %v3424 = vand.u32 %v160, 4294901760
    %v3425 = vsub.f32 %v160, %v3424
    %v3426 = vand.u32 %v3425, 4294901760
    %3427 = vmatmul.f32.gmra.mxu0 %v3426
    %v3428 = vpop.f32.mrf.mxu0
    %v3429 = vadd.f32 %v2680, %v3428
    %v3430 = vand.u32 %v161, 4294901760
    %v3431 = vsub.f32 %v161, %v3430
    %v3432 = vand.u32 %v3431, 4294901760
    %3433 = vmatmul.f32.gmra.mxu0 %v3432
    %v3434 = vpop.f32.mrf.mxu0
    %v3435 = vadd.f32 %v2685, %v3434
    %v3436 = vand.u32 %v162, 4294901760
    %v3437 = vsub.f32 %v162, %v3436
    %v3438 = vand.u32 %v3437, 4294901760
    %3439 = vmatmul.f32.gmra.mxu0 %v3438
    %v3440 = vpop.f32.mrf.mxu0
    %v3441 = vadd.f32 %v2690, %v3440
    %v3442 = vand.u32 %v163, 4294901760
    %v3443 = vsub.f32 %v163, %v3442
    %v3444 = vand.u32 %v3443, 4294901760
    %3445 = vmatmul.f32.gmra.mxu0 %v3444
    %v3446 = vpop.f32.mrf.mxu0
    %v3447 = vadd.f32 %v2695, %v3446
    %v3448 = vand.u32 %v164, 4294901760
    %v3449 = vsub.f32 %v164, %v3448
    %v3450 = vand.u32 %v3449, 4294901760
    %3451 = vmatmul.f32.gmra.mxu0 %v3450
    %v3452 = vpop.f32.mrf.mxu0
    %v3453 = vadd.f32 %v2700, %v3452
    %v3454 = vand.u32 %v165, 4294901760
    %v3455 = vsub.f32 %v165, %v3454
    %v3456 = vand.u32 %v3455, 4294901760
    %3457 = vmatmul.f32.gmra.mxu0 %v3456
    %v3458 = vpop.f32.mrf.mxu0
    %v3459 = vadd.f32 %v2705, %v3458
    %v3460 = vand.u32 %v166, 4294901760
    %v3461 = vsub.f32 %v166, %v3460
    %v3462 = vand.u32 %v3461, 4294901760
    %3463 = vmatmul.f32.gmra.mxu0 %v3462
    %v3464 = vpop.f32.mrf.mxu0
    %v3465 = vadd.f32 %v2710, %v3464
    %v3466 = vand.u32 %v167, 4294901760
    %v3467 = vsub.f32 %v167, %v3466
    %v3468 = vand.u32 %v3467, 4294901760
    %3469 = vmatmul.f32.gmra.mxu0 %v3468
    %v3470 = vpop.f32.mrf.mxu0
    %v3471 = vadd.f32 %v2715, %v3470
    %v3472 = vand.u32 %v168, 4294901760
    %v3473 = vsub.f32 %v168, %v3472
    %v3474 = vand.u32 %v3473, 4294901760
    %3475 = vmatmul.f32.gmra.mxu0 %v3474
    %v3476 = vpop.f32.mrf.mxu0
    %v3477 = vadd.f32 %v2720, %v3476
    %v3478 = vand.u32 %v169, 4294901760
    %v3479 = vsub.f32 %v169, %v3478
    %v3480 = vand.u32 %v3479, 4294901760
    %3481 = vmatmul.f32.gmra.mxu0 %v3480
    %v3482 = vpop.f32.mrf.mxu0
    %v3483 = vadd.f32 %v2725, %v3482
    %v3484 = vand.u32 %v170, 4294901760
    %v3485 = vsub.f32 %v170, %v3484
    %v3486 = vand.u32 %v3485, 4294901760
    %3487 = vmatmul.f32.gmra.mxu0 %v3486
    %v3488 = vpop.f32.mrf.mxu0
    %v3489 = vadd.f32 %v2730, %v3488
    %v3490 = vand.u32 %v171, 4294901760
    %v3491 = vsub.f32 %v171, %v3490
    %v3492 = vand.u32 %v3491, 4294901760
    %3493 = vmatmul.f32.gmra.mxu0 %v3492
    %v3494 = vpop.f32.mrf.mxu0
    %v3495 = vadd.f32 %v2735, %v3494
    %v3496 = vand.u32 %v172, 4294901760
    %v3497 = vsub.f32 %v172, %v3496
    %v3498 = vand.u32 %v3497, 4294901760
    %3499 = vmatmul.f32.gmra.mxu0 %v3498
    %v3500 = vpop.f32.mrf.mxu0
    %v3501 = vadd.f32 %v2740, %v3500
    %v3502 = vand.u32 %v173, 4294901760
    %v3503 = vsub.f32 %v173, %v3502
    %v3504 = vand.u32 %v3503, 4294901760
    %3505 = vmatmul.f32.gmra.mxu0 %v3504
    %v3506 = vpop.f32.mrf.mxu0
    %v3507 = vadd.f32 %v2745, %v3506
    %v3508 = vand.u32 %v174, 4294901760
    %v3509 = vsub.f32 %v174, %v3508
    %v3510 = vand.u32 %v3509, 4294901760
    %3511 = vmatmul.f32.gmra.mxu0 %v3510
    %v3512 = vpop.f32.mrf.mxu0
    %v3513 = vadd.f32 %v2750, %v3512
    %v3514 = vand.u32 %v175, 4294901760
    %v3515 = vsub.f32 %v175, %v3514
    %v3516 = vand.u32 %v3515, 4294901760
    %3517 = vmatmul.f32.gmra.mxu0 %v3516
    %v3518 = vpop.f32.mrf.mxu0
    %v3519 = vadd.f32 %v2755, %v3518
    %v3520 = vand.u32 %v176, 4294901760
    %v3521 = vsub.f32 %v176, %v3520
    %v3522 = vand.u32 %v3521, 4294901760
    %3523 = vmatmul.f32.gmra.mxu0 %v3522
    %v3524 = vpop.f32.mrf.mxu0
    %v3525 = vadd.f32 %v2760, %v3524
    %v3526 = vand.u32 %v177, 4294901760
    %v3527 = vsub.f32 %v177, %v3526
    %v3528 = vand.u32 %v3527, 4294901760
    %3529 = vmatmul.f32.gmra.mxu0 %v3528
    %v3530 = vpop.f32.mrf.mxu0
    %v3531 = vadd.f32 %v2765, %v3530
    %v3532 = vand.u32 %v178, 4294901760
    %v3533 = vsub.f32 %v178, %v3532
    %v3534 = vand.u32 %v3533, 4294901760
    %3535 = vmatmul.f32.gmra.mxu0 %v3534
    %v3536 = vpop.f32.mrf.mxu0
    %v3537 = vadd.f32 %v2770, %v3536
    %v3538 = vand.u32 %v179, 4294901760
    %v3539 = vsub.f32 %v179, %v3538
    %v3540 = vand.u32 %v3539, 4294901760
    %3541 = vmatmul.f32.gmra.mxu0 %v3540
    %v3542 = vpop.f32.mrf.mxu0
    %v3543 = vadd.f32 %v2775, %v3542
    %v3544 = vand.u32 %v180, 4294901760
    %v3545 = vsub.f32 %v180, %v3544
    %v3546 = vand.u32 %v3545, 4294901760
    %3547 = vmatmul.f32.gmra.mxu0 %v3546
    %v3548 = vpop.f32.mrf.mxu0
    %v3549 = vadd.f32 %v2780, %v3548
    %v3550 = vand.u32 %v181, 4294901760
    %v3551 = vsub.f32 %v181, %v3550
    %v3552 = vand.u32 %v3551, 4294901760
    %3553 = vmatmul.f32.gmra.mxu0 %v3552
    %v3554 = vpop.f32.mrf.mxu0
    %v3555 = vadd.f32 %v2785, %v3554
    %v3556 = vand.u32 %v182, 4294901760
    %v3557 = vsub.f32 %v182, %v3556
    %v3558 = vand.u32 %v3557, 4294901760
    %3559 = vmatmul.f32.gmra.mxu0 %v3558
    %v3560 = vpop.f32.mrf.mxu0
    %v3561 = vadd.f32 %v2790, %v3560
    %v3562 = vand.u32 %v183, 4294901760
    %v3563 = vsub.f32 %v183, %v3562
    %v3564 = vand.u32 %v3563, 4294901760
    %3565 = vmatmul.f32.gmra.mxu0 %v3564
    %v3566 = vpop.f32.mrf.mxu0
    %v3567 = vadd.f32 %v2795, %v3566
    %v3568 = vand.u32 %v184, 4294901760
    %v3569 = vsub.f32 %v184, %v3568
    %v3570 = vand.u32 %v3569, 4294901760
    %3571 = vmatmul.f32.gmra.mxu0 %v3570
    %v3572 = vpop.f32.mrf.mxu0
    %v3573 = vadd.f32 %v2800, %v3572
    %v3574 = vand.u32 %v185, 4294901760
    %v3575 = vsub.f32 %v185, %v3574
    %v3576 = vand.u32 %v3575, 4294901760
    %3577 = vmatmul.f32.gmra.mxu0 %v3576
    %v3578 = vpop.f32.mrf.mxu0
    %v3579 = vadd.f32 %v2805, %v3578
    %v3580 = vand.u32 %v186, 4294901760
    %v3581 = vsub.f32 %v186, %v3580
    %v3582 = vand.u32 %v3581, 4294901760
    %3583 = vmatmul.f32.gmra.mxu0 %v3582
    %v3584 = vpop.f32.mrf.mxu0
    %v3585 = vadd.f32 %v2810, %v3584
    %v3586 = vand.u32 %v187, 4294901760
    %v3587 = vsub.f32 %v187, %v3586
    %v3588 = vand.u32 %v3587, 4294901760
    %3589 = vmatmul.f32.gmra.mxu0 %v3588
    %v3590 = vpop.f32.mrf.mxu0
    %v3591 = vadd.f32 %v2815, %v3590
    %v3592 = vand.u32 %v188, 4294901760
    %v3593 = vsub.f32 %v188, %v3592
    %v3594 = vand.u32 %v3593, 4294901760
    %3595 = vmatmul.f32.gmra.mxu0 %v3594
    %v3596 = vpop.f32.mrf.mxu0
    %v3597 = vadd.f32 %v2820, %v3596
    %v3598 = vand.u32 %v189, 4294901760
    %v3599 = vsub.f32 %v189, %v3598
    %v3600 = vand.u32 %v3599, 4294901760
    %3601 = vmatmul.f32.gmra.mxu0 %v3600
    %v3602 = vpop.f32.mrf.mxu0
    %v3603 = vadd.f32 %v2825, %v3602
    %v3604 = vand.u32 %v190, 4294901760
    %v3605 = vsub.f32 %v190, %v3604
    %v3606 = vand.u32 %v3605, 4294901760
    %3607 = vmatmul.f32.gmra.mxu0 %v3606
    %v3608 = vpop.f32.mrf.mxu0
    %v3609 = vadd.f32 %v2830, %v3608
    %v3610 = vand.u32 %v191, 4294901760
    %v3611 = vsub.f32 %v191, %v3610
    %v3612 = vand.u32 %v3611, 4294901760
    %3613 = vmatmul.f32.gmra.mxu0 %v3612
    %v3614 = vpop.f32.mrf.mxu0
    %v3615 = vadd.f32 %v2835, %v3614
    %v3616 = vand.u32 %v192, 4294901760
    %v3617 = vsub.f32 %v192, %v3616
    %v3618 = vand.u32 %v3617, 4294901760
    %3619 = vmatmul.f32.gmra.mxu0 %v3618
    %v3620 = vpop.f32.mrf.mxu0
    %v3621 = vadd.f32 %v2840, %v3620
    %v3622 = vand.u32 %v193, 4294901760
    %v3623 = vsub.f32 %v193, %v3622
    %v3624 = vand.u32 %v3623, 4294901760
    %3625 = vmatmul.f32.gmra.mxu0 %v3624
    %v3626 = vpop.f32.mrf.mxu0
    %v3627 = vadd.f32 %v2845, %v3626
    %v3628 = vand.u32 %v194, 4294901760
    %v3629 = vsub.f32 %v194, %v3628
    %v3630 = vand.u32 %v3629, 4294901760
    %3631 = vmatmul.f32.gmra.mxu0 %v3630
    %v3632 = vpop.f32.mrf.mxu0
    %v3633 = vadd.f32 %v2850, %v3632
    %v3634 = vand.u32 %v195, 4294901760
    %v3635 = vsub.f32 %v195, %v3634
    %v3636 = vand.u32 %v3635, 4294901760
    %3637 = vmatmul.f32.gmra.mxu0 %v3636
    %v3638 = vpop.f32.mrf.mxu0
    %v3639 = vadd.f32 %v2855, %v3638
    %v3640 = vand.u32 %v196, 4294901760
    %v3641 = vsub.f32 %v196, %v3640
    %v3642 = vand.u32 %v3641, 4294901760
    %3643 = vmatmul.f32.gmra.mxu0 %v3642
    %v3644 = vpop.f32.mrf.mxu0
    %v3645 = vadd.f32 %v2860, %v3644
    %v3646 = vand.u32 %v197, 4294901760
    %v3647 = vsub.f32 %v197, %v3646
    %v3648 = vand.u32 %v3647, 4294901760
    %3649 = vmatmul.f32.gmra.mxu0 %v3648
    %v3650 = vpop.f32.mrf.mxu0
    %v3651 = vadd.f32 %v2865, %v3650
    %v3652 = vand.u32 %v198, 4294901760
    %v3653 = vsub.f32 %v198, %v3652
    %v3654 = vand.u32 %v3653, 4294901760
    %3655 = vmatmul.f32.gmra.mxu0 %v3654
    %v3656 = vpop.f32.mrf.mxu0
    %v3657 = vadd.f32 %v2870, %v3656
    %v3658 = vand.u32 %v199, 4294901760
    %v3659 = vsub.f32 %v199, %v3658
    %v3660 = vand.u32 %v3659, 4294901760
    %3661 = vmatmul.f32.gmra.mxu0 %v3660
    %v3662 = vpop.f32.mrf.mxu0
    %v3663 = vadd.f32 %v2875, %v3662
    %v3664 = vand.u32 %v200, 4294901760
    %v3665 = vsub.f32 %v200, %v3664
    %v3666 = vand.u32 %v3665, 4294901760
    %3667 = vmatmul.f32.gmra.mxu0 %v3666
    %v3668 = vpop.f32.mrf.mxu0
    %v3669 = vadd.f32 %v2880, %v3668
    %v3670 = vand.u32 %v201, 4294901760
    %v3671 = vsub.f32 %v201, %v3670
    %v3672 = vand.u32 %v3671, 4294901760
    %3673 = vmatmul.f32.gmra.mxu0 %v3672
    %v3674 = vpop.f32.mrf.mxu0
    %v3675 = vadd.f32 %v2885, %v3674
    %v3676 = vand.u32 %v202, 4294901760
    %v3677 = vsub.f32 %v202, %v3676
    %v3678 = vand.u32 %v3677, 4294901760
    %3679 = vmatmul.f32.gmra.mxu0 %v3678
    %v3680 = vpop.f32.mrf.mxu0
    %v3681 = vadd.f32 %v2890, %v3680
    %v3682 = vand.u32 %v203, 4294901760
    %v3683 = vsub.f32 %v203, %v3682
    %v3684 = vand.u32 %v3683, 4294901760
    %3685 = vmatmul.f32.gmra.mxu0 %v3684
    %v3686 = vpop.f32.mrf.mxu0
    %v3687 = vadd.f32 %v2895, %v3686
    %v3688 = vand.u32 %v204, 4294901760
    %v3689 = vsub.f32 %v204, %v3688
    %v3690 = vand.u32 %v3689, 4294901760
    %3691 = vmatmul.f32.gmra.mxu0 %v3690
    %v3692 = vpop.f32.mrf.mxu0
    %v3693 = vadd.f32 %v2900, %v3692
    %v3694 = vand.u32 %v205, 4294901760
    %v3695 = vsub.f32 %v205, %v3694
    %v3696 = vand.u32 %v3695, 4294901760
    %3697 = vmatmul.f32.gmra.mxu0 %v3696
    %v3698 = vpop.f32.mrf.mxu0
    %v3699 = vadd.f32 %v2905, %v3698
    %v3700 = vand.u32 %v206, 4294901760
    %v3701 = vsub.f32 %v206, %v3700
    %v3702 = vand.u32 %v3701, 4294901760
    %3703 = vmatmul.f32.gmra.mxu0 %v3702
    %v3704 = vpop.f32.mrf.mxu0
    %v3705 = vadd.f32 %v2910, %v3704
    %v3706 = vand.u32 %v207, 4294901760
    %v3707 = vsub.f32 %v207, %v3706
    %v3708 = vand.u32 %v3707, 4294901760
    %3709 = vmatmul.f32.gmra.mxu0 %v3708
    %v3710 = vpop.f32.mrf.mxu0
    %v3711 = vadd.f32 %v2915, %v3710
    %v3712 = vand.u32 %v208, 4294901760
    %v3713 = vsub.f32 %v208, %v3712
    %v3714 = vand.u32 %v3713, 4294901760
    %3715 = vmatmul.f32.gmra.mxu0 %v3714
    %v3716 = vpop.f32.mrf.mxu0
    %v3717 = vadd.f32 %v2920, %v3716
    %v3718 = vand.u32 %v209, 4294901760
    %v3719 = vsub.f32 %v209, %v3718
    %v3720 = vand.u32 %v3719, 4294901760
    %3721 = vmatmul.f32.gmra.mxu0 %v3720
    %v3722 = vpop.f32.mrf.mxu0
    %v3723 = vadd.f32 %v2925, %v3722
    %v3724 = vand.u32 %v210, 4294901760
    %v3725 = vsub.f32 %v210, %v3724
    %v3726 = vand.u32 %v3725, 4294901760
    %3727 = vmatmul.f32.gmra.mxu0 %v3726
    %v3728 = vpop.f32.mrf.mxu0
    %v3729 = vadd.f32 %v2930, %v3728
    %v3730 = vand.u32 %v211, 4294901760
    %v3731 = vsub.f32 %v211, %v3730
    %v3732 = vand.u32 %v3731, 4294901760
    %3733 = vmatmul.f32.gmra.mxu0 %v3732
    %v3734 = vpop.f32.mrf.mxu0
    %v3735 = vadd.f32 %v2935, %v3734
    %v3736 = vand.u32 %v212, 4294901760
    %v3737 = vsub.f32 %v212, %v3736
    %v3738 = vand.u32 %v3737, 4294901760
    %3739 = vmatmul.f32.gmra.mxu0 %v3738
    %v3740 = vpop.f32.mrf.mxu0
    %v3741 = vadd.f32 %v2940, %v3740
    %3742 = vdwg.mxu0
    %v3743 = vand.u32 %v244, 4294901760
    %v3744 = vsub.f32 %v244, %v3743
    %v3745 = vand.u32 %v3744, 4294901760
    %3746 = vmatpush.msra.mxu0 %v3745
    %v3747 = vand.u32 %v243, 4294901760
    %v3748 = vsub.f32 %v243, %v3747
    %v3749 = vand.u32 %v3748, 4294901760
    %3750 = vmatpush.msra.mxu0 %v3749
    %v3751 = vand.u32 %v242, 4294901760
    %v3752 = vsub.f32 %v242, %v3751
    %v3753 = vand.u32 %v3752, 4294901760
    %3754 = vmatpush.msra.mxu0 %v3753
    %v3755 = vand.u32 %v241, 4294901760
    %v3756 = vsub.f32 %v241, %v3755
    %v3757 = vand.u32 %v3756, 4294901760
    %3758 = vmatpush.msra.mxu0 %v3757
    %v3759 = vand.u32 %v240, 4294901760
    %v3760 = vsub.f32 %v240, %v3759
    %v3761 = vand.u32 %v3760, 4294901760
    %3762 = vmatpush.msra.mxu0 %v3761
    %v3763 = vand.u32 %v239, 4294901760
    %v3764 = vsub.f32 %v239, %v3763
    %v3765 = vand.u32 %v3764, 4294901760
    %3766 = vmatpush.msra.mxu0 %v3765
    %v3767 = vand.u32 %v238, 4294901760
    %v3768 = vsub.f32 %v238, %v3767
    %v3769 = vand.u32 %v3768, 4294901760
    %3770 = vmatpush.msra.mxu0 %v3769
    %v3771 = vand.u32 %v237, 4294901760
    %v3772 = vsub.f32 %v237, %v3771
    %v3773 = vand.u32 %v3772, 4294901760
    %3774 = vmatpush.msra.mxu0 %v3773
    %v3775 = vand.u32 %v236, 4294901760
    %v3776 = vsub.f32 %v236, %v3775
    %v3777 = vand.u32 %v3776, 4294901760
    %3778 = vmatpush.msra.mxu0 %v3777
    %v3779 = vand.u32 %v235, 4294901760
    %v3780 = vsub.f32 %v235, %v3779
    %v3781 = vand.u32 %v3780, 4294901760
    %3782 = vmatpush.msra.mxu0 %v3781
    %v3783 = vand.u32 %v234, 4294901760
    %v3784 = vsub.f32 %v234, %v3783
    %v3785 = vand.u32 %v3784, 4294901760
    %3786 = vmatpush.msra.mxu0 %v3785
    %v3787 = vand.u32 %v233, 4294901760
    %v3788 = vsub.f32 %v233, %v3787
    %v3789 = vand.u32 %v3788, 4294901760
    %3790 = vmatpush.msra.mxu0 %v3789
    %v3791 = vand.u32 %v232, 4294901760
    %v3792 = vsub.f32 %v232, %v3791
    %v3793 = vand.u32 %v3792, 4294901760
    %3794 = vmatpush.msra.mxu0 %v3793
    %v3795 = vand.u32 %v231, 4294901760
    %v3796 = vsub.f32 %v231, %v3795
    %v3797 = vand.u32 %v3796, 4294901760
    %3798 = vmatpush.msra.mxu0 %v3797
    %v3799 = vand.u32 %v230, 4294901760
    %v3800 = vsub.f32 %v230, %v3799
    %v3801 = vand.u32 %v3800, 4294901760
    %3802 = vmatpush.msra.mxu0 %v3801
    %v3803 = vand.u32 %v229, 4294901760
    %v3804 = vsub.f32 %v229, %v3803
    %v3805 = vand.u32 %v3804, 4294901760
    %3806 = vmatpush.msra.mxu0 %v3805
    %v3807 = vand.u32 %v85, 4294901760
    %3808 = vmatmul.f32.gmra.mxu0 %v3807
    %v3809 = vpop.f32.mrf.mxu0
    %v3810 = vadd.f32 %v2979, %v3809
    %v3811 = vand.u32 %v86, 4294901760
    %3812 = vmatmul.f32.gmra.mxu0 %v3811
    %v3813 = vpop.f32.mrf.mxu0
    %v3814 = vadd.f32 %v2985, %v3813
    %v3815 = vand.u32 %v87, 4294901760
    %3816 = vmatmul.f32.gmra.mxu0 %v3815
    %v3817 = vpop.f32.mrf.mxu0
    %v3818 = vadd.f32 %v2991, %v3817
    %v3819 = vand.u32 %v88, 4294901760
    %3820 = vmatmul.f32.gmra.mxu0 %v3819
    %v3821 = vpop.f32.mrf.mxu0
    %v3822 = vadd.f32 %v2997, %v3821
    %v3823 = vand.u32 %v89, 4294901760
    %3824 = vmatmul.f32.gmra.mxu0 %v3823
    %v3825 = vpop.f32.mrf.mxu0
    %v3826 = vadd.f32 %v3003, %v3825
    %v3827 = vand.u32 %v90, 4294901760
    %3828 = vmatmul.f32.gmra.mxu0 %v3827
    %v3829 = vpop.f32.mrf.mxu0
    %v3830 = vadd.f32 %v3009, %v3829
    %v3831 = vand.u32 %v91, 4294901760
    %3832 = vmatmul.f32.gmra.mxu0 %v3831
    %v3833 = vpop.f32.mrf.mxu0
    %v3834 = vadd.f32 %v3015, %v3833
    %v3835 = vand.u32 %v92, 4294901760
    %3836 = vmatmul.f32.gmra.mxu0 %v3835
    %v3837 = vpop.f32.mrf.mxu0
    %v3838 = vadd.f32 %v3021, %v3837
    %v3839 = vand.u32 %v93, 4294901760
    %3840 = vmatmul.f32.gmra.mxu0 %v3839
    %v3841 = vpop.f32.mrf.mxu0
    %v3842 = vadd.f32 %v3027, %v3841
    %v3843 = vand.u32 %v94, 4294901760
    %3844 = vmatmul.f32.gmra.mxu0 %v3843
    %v3845 = vpop.f32.mrf.mxu0
    %v3846 = vadd.f32 %v3033, %v3845
    %v3847 = vand.u32 %v95, 4294901760
    %3848 = vmatmul.f32.gmra.mxu0 %v3847
    %v3849 = vpop.f32.mrf.mxu0
    %v3850 = vadd.f32 %v3039, %v3849
    %v3851 = vand.u32 %v96, 4294901760
    %3852 = vmatmul.f32.gmra.mxu0 %v3851
    %v3853 = vpop.f32.mrf.mxu0
    %v3854 = vadd.f32 %v3045, %v3853
    %v3855 = vand.u32 %v97, 4294901760
    %3856 = vmatmul.f32.gmra.mxu0 %v3855
    %v3857 = vpop.f32.mrf.mxu0
    %v3858 = vadd.f32 %v3051, %v3857
    %v3859 = vand.u32 %v98, 4294901760
    %3860 = vmatmul.f32.gmra.mxu0 %v3859
    %v3861 = vpop.f32.mrf.mxu0
    %v3862 = vadd.f32 %v3057, %v3861
    %v3863 = vand.u32 %v99, 4294901760
    %3864 = vmatmul.f32.gmra.mxu0 %v3863
    %v3865 = vpop.f32.mrf.mxu0
    %v3866 = vadd.f32 %v3063, %v3865
    %v3867 = vand.u32 %v100, 4294901760
    %3868 = vmatmul.f32.gmra.mxu0 %v3867
    %v3869 = vpop.f32.mrf.mxu0
    %v3870 = vadd.f32 %v3069, %v3869
    %v3871 = vand.u32 %v101, 4294901760
    %3872 = vmatmul.f32.gmra.mxu0 %v3871
    %v3873 = vpop.f32.mrf.mxu0
    %v3874 = vadd.f32 %v3075, %v3873
    %v3875 = vand.u32 %v102, 4294901760
    %3876 = vmatmul.f32.gmra.mxu0 %v3875
    %v3877 = vpop.f32.mrf.mxu0
    %v3878 = vadd.f32 %v3081, %v3877
    %v3879 = vand.u32 %v103, 4294901760
    %3880 = vmatmul.f32.gmra.mxu0 %v3879
    %v3881 = vpop.f32.mrf.mxu0
    %v3882 = vadd.f32 %v3087, %v3881
    %v3883 = vand.u32 %v104, 4294901760
    %3884 = vmatmul.f32.gmra.mxu0 %v3883
    %v3885 = vpop.f32.mrf.mxu0
    %v3886 = vadd.f32 %v3093, %v3885
    %v3887 = vand.u32 %v105, 4294901760
    %3888 = vmatmul.f32.gmra.mxu0 %v3887
    %v3889 = vpop.f32.mrf.mxu0
    %v3890 = vadd.f32 %v3099, %v3889
    %v3891 = vand.u32 %v106, 4294901760
    %3892 = vmatmul.f32.gmra.mxu0 %v3891
    %v3893 = vpop.f32.mrf.mxu0
    %v3894 = vadd.f32 %v3105, %v3893
    %v3895 = vand.u32 %v107, 4294901760
    %3896 = vmatmul.f32.gmra.mxu0 %v3895
    %v3897 = vpop.f32.mrf.mxu0
    %v3898 = vadd.f32 %v3111, %v3897
    %v3899 = vand.u32 %v108, 4294901760
    %3900 = vmatmul.f32.gmra.mxu0 %v3899
    %v3901 = vpop.f32.mrf.mxu0
    %v3902 = vadd.f32 %v3117, %v3901
    %v3903 = vand.u32 %v109, 4294901760
    %3904 = vmatmul.f32.gmra.mxu0 %v3903
    %v3905 = vpop.f32.mrf.mxu0
    %v3906 = vadd.f32 %v3123, %v3905
    %v3907 = vand.u32 %v110, 4294901760
    %3908 = vmatmul.f32.gmra.mxu0 %v3907
    %v3909 = vpop.f32.mrf.mxu0
    %v3910 = vadd.f32 %v3129, %v3909
    %v3911 = vand.u32 %v111, 4294901760
    %3912 = vmatmul.f32.gmra.mxu0 %v3911
    %v3913 = vpop.f32.mrf.mxu0
    %v3914 = vadd.f32 %v3135, %v3913
    %v3915 = vand.u32 %v112, 4294901760
    %3916 = vmatmul.f32.gmra.mxu0 %v3915
    %v3917 = vpop.f32.mrf.mxu0
    %v3918 = vadd.f32 %v3141, %v3917
    %v3919 = vand.u32 %v113, 4294901760
    %3920 = vmatmul.f32.gmra.mxu0 %v3919
    %v3921 = vpop.f32.mrf.mxu0
    %v3922 = vadd.f32 %v3147, %v3921
    %v3923 = vand.u32 %v114, 4294901760
    %3924 = vmatmul.f32.gmra.mxu0 %v3923
    %v3925 = vpop.f32.mrf.mxu0
    %v3926 = vadd.f32 %v3153, %v3925
    %v3927 = vand.u32 %v115, 4294901760
    %3928 = vmatmul.f32.gmra.mxu0 %v3927
    %v3929 = vpop.f32.mrf.mxu0
    %v3930 = vadd.f32 %v3159, %v3929
    %v3931 = vand.u32 %v116, 4294901760
    %3932 = vmatmul.f32.gmra.mxu0 %v3931
    %v3933 = vpop.f32.mrf.mxu0
    %v3934 = vadd.f32 %v3165, %v3933
    %v3935 = vand.u32 %v117, 4294901760
    %3936 = vmatmul.f32.gmra.mxu0 %v3935
    %v3937 = vpop.f32.mrf.mxu0
    %v3938 = vadd.f32 %v3171, %v3937
    %v3939 = vand.u32 %v118, 4294901760
    %3940 = vmatmul.f32.gmra.mxu0 %v3939
    %v3941 = vpop.f32.mrf.mxu0
    %v3942 = vadd.f32 %v3177, %v3941
    %v3943 = vand.u32 %v119, 4294901760
    %3944 = vmatmul.f32.gmra.mxu0 %v3943
    %v3945 = vpop.f32.mrf.mxu0
    %v3946 = vadd.f32 %v3183, %v3945
    %v3947 = vand.u32 %v120, 4294901760
    %3948 = vmatmul.f32.gmra.mxu0 %v3947
    %v3949 = vpop.f32.mrf.mxu0
    %v3950 = vadd.f32 %v3189, %v3949
    %v3951 = vand.u32 %v121, 4294901760
    %3952 = vmatmul.f32.gmra.mxu0 %v3951
    %v3953 = vpop.f32.mrf.mxu0
    %v3954 = vadd.f32 %v3195, %v3953
    %v3955 = vand.u32 %v122, 4294901760
    %3956 = vmatmul.f32.gmra.mxu0 %v3955
    %v3957 = vpop.f32.mrf.mxu0
    %v3958 = vadd.f32 %v3201, %v3957
    %v3959 = vand.u32 %v123, 4294901760
    %3960 = vmatmul.f32.gmra.mxu0 %v3959
    %v3961 = vpop.f32.mrf.mxu0
    %v3962 = vadd.f32 %v3207, %v3961
    %v3963 = vand.u32 %v124, 4294901760
    %3964 = vmatmul.f32.gmra.mxu0 %v3963
    %v3965 = vpop.f32.mrf.mxu0
    %v3966 = vadd.f32 %v3213, %v3965
    %v3967 = vand.u32 %v125, 4294901760
    %3968 = vmatmul.f32.gmra.mxu0 %v3967
    %v3969 = vpop.f32.mrf.mxu0
    %v3970 = vadd.f32 %v3219, %v3969
    %v3971 = vand.u32 %v126, 4294901760
    %3972 = vmatmul.f32.gmra.mxu0 %v3971
    %v3973 = vpop.f32.mrf.mxu0
    %v3974 = vadd.f32 %v3225, %v3973
    %v3975 = vand.u32 %v127, 4294901760
    %3976 = vmatmul.f32.gmra.mxu0 %v3975
    %v3977 = vpop.f32.mrf.mxu0
    %v3978 = vadd.f32 %v3231, %v3977
    %v3979 = vand.u32 %v128, 4294901760
    %3980 = vmatmul.f32.gmra.mxu0 %v3979
    %v3981 = vpop.f32.mrf.mxu0
    %v3982 = vadd.f32 %v3237, %v3981
    %v3983 = vand.u32 %v129, 4294901760
    %3984 = vmatmul.f32.gmra.mxu0 %v3983
    %v3985 = vpop.f32.mrf.mxu0
    %v3986 = vadd.f32 %v3243, %v3985
    %v3987 = vand.u32 %v130, 4294901760
    %3988 = vmatmul.f32.gmra.mxu0 %v3987
    %v3989 = vpop.f32.mrf.mxu0
    %v3990 = vadd.f32 %v3249, %v3989
    %v3991 = vand.u32 %v131, 4294901760
    %3992 = vmatmul.f32.gmra.mxu0 %v3991
    %v3993 = vpop.f32.mrf.mxu0
    %v3994 = vadd.f32 %v3255, %v3993
    %v3995 = vand.u32 %v132, 4294901760
    %3996 = vmatmul.f32.gmra.mxu0 %v3995
    %v3997 = vpop.f32.mrf.mxu0
    %v3998 = vadd.f32 %v3261, %v3997
    %v3999 = vand.u32 %v133, 4294901760
    %4000 = vmatmul.f32.gmra.mxu0 %v3999
    %v4001 = vpop.f32.mrf.mxu0
    %v4002 = vadd.f32 %v3267, %v4001
    %v4003 = vand.u32 %v134, 4294901760
    %4004 = vmatmul.f32.gmra.mxu0 %v4003
    %v4005 = vpop.f32.mrf.mxu0
    %v4006 = vadd.f32 %v3273, %v4005
    %v4007 = vand.u32 %v135, 4294901760
    %4008 = vmatmul.f32.gmra.mxu0 %v4007
    %v4009 = vpop.f32.mrf.mxu0
    %v4010 = vadd.f32 %v3279, %v4009
    %v4011 = vand.u32 %v136, 4294901760
    %4012 = vmatmul.f32.gmra.mxu0 %v4011
    %v4013 = vpop.f32.mrf.mxu0
    %v4014 = vadd.f32 %v3285, %v4013
    %v4015 = vand.u32 %v137, 4294901760
    %4016 = vmatmul.f32.gmra.mxu0 %v4015
    %v4017 = vpop.f32.mrf.mxu0
    %v4018 = vadd.f32 %v3291, %v4017
    %v4019 = vand.u32 %v138, 4294901760
    %4020 = vmatmul.f32.gmra.mxu0 %v4019
    %v4021 = vpop.f32.mrf.mxu0
    %v4022 = vadd.f32 %v3297, %v4021
    %v4023 = vand.u32 %v139, 4294901760
    %4024 = vmatmul.f32.gmra.mxu0 %v4023
    %v4025 = vpop.f32.mrf.mxu0
    %v4026 = vadd.f32 %v3303, %v4025
    %v4027 = vand.u32 %v140, 4294901760
    %4028 = vmatmul.f32.gmra.mxu0 %v4027
    %v4029 = vpop.f32.mrf.mxu0
    %v4030 = vadd.f32 %v3309, %v4029
    %v4031 = vand.u32 %v141, 4294901760
    %4032 = vmatmul.f32.gmra.mxu0 %v4031
    %v4033 = vpop.f32.mrf.mxu0
    %v4034 = vadd.f32 %v3315, %v4033
    %v4035 = vand.u32 %v142, 4294901760
    %4036 = vmatmul.f32.gmra.mxu0 %v4035
    %v4037 = vpop.f32.mrf.mxu0
    %v4038 = vadd.f32 %v3321, %v4037
    %v4039 = vand.u32 %v143, 4294901760
    %4040 = vmatmul.f32.gmra.mxu0 %v4039
    %v4041 = vpop.f32.mrf.mxu0
    %v4042 = vadd.f32 %v3327, %v4041
    %v4043 = vand.u32 %v144, 4294901760
    %4044 = vmatmul.f32.gmra.mxu0 %v4043
    %v4045 = vpop.f32.mrf.mxu0
    %v4046 = vadd.f32 %v3333, %v4045
    %v4047 = vand.u32 %v145, 4294901760
    %4048 = vmatmul.f32.gmra.mxu0 %v4047
    %v4049 = vpop.f32.mrf.mxu0
    %v4050 = vadd.f32 %v3339, %v4049
    %v4051 = vand.u32 %v146, 4294901760
    %4052 = vmatmul.f32.gmra.mxu0 %v4051
    %v4053 = vpop.f32.mrf.mxu0
    %v4054 = vadd.f32 %v3345, %v4053
    %v4055 = vand.u32 %v147, 4294901760
    %4056 = vmatmul.f32.gmra.mxu0 %v4055
    %v4057 = vpop.f32.mrf.mxu0
    %v4058 = vadd.f32 %v3351, %v4057
    %v4059 = vand.u32 %v148, 4294901760
    %4060 = vmatmul.f32.gmra.mxu0 %v4059
    %v4061 = vpop.f32.mrf.mxu0
    %v4062 = vadd.f32 %v3357, %v4061
    %v4063 = vand.u32 %v149, 4294901760
    %4064 = vmatmul.f32.gmra.mxu0 %v4063
    %v4065 = vpop.f32.mrf.mxu0
    %v4066 = vadd.f32 %v3363, %v4065
    %v4067 = vand.u32 %v150, 4294901760
    %4068 = vmatmul.f32.gmra.mxu0 %v4067
    %v4069 = vpop.f32.mrf.mxu0
    %v4070 = vadd.f32 %v3369, %v4069
    %v4071 = vand.u32 %v151, 4294901760
    %4072 = vmatmul.f32.gmra.mxu0 %v4071
    %v4073 = vpop.f32.mrf.mxu0
    %v4074 = vadd.f32 %v3375, %v4073
    %v4075 = vand.u32 %v152, 4294901760
    %4076 = vmatmul.f32.gmra.mxu0 %v4075
    %v4077 = vpop.f32.mrf.mxu0
    %v4078 = vadd.f32 %v3381, %v4077
    %v4079 = vand.u32 %v153, 4294901760
    %4080 = vmatmul.f32.gmra.mxu0 %v4079
    %v4081 = vpop.f32.mrf.mxu0
    %v4082 = vadd.f32 %v3387, %v4081
    %v4083 = vand.u32 %v154, 4294901760
    %4084 = vmatmul.f32.gmra.mxu0 %v4083
    %v4085 = vpop.f32.mrf.mxu0
    %v4086 = vadd.f32 %v3393, %v4085
    %v4087 = vand.u32 %v155, 4294901760
    %4088 = vmatmul.f32.gmra.mxu0 %v4087
    %v4089 = vpop.f32.mrf.mxu0
    %v4090 = vadd.f32 %v3399, %v4089
    %v4091 = vand.u32 %v156, 4294901760
    %4092 = vmatmul.f32.gmra.mxu0 %v4091
    %v4093 = vpop.f32.mrf.mxu0
    %v4094 = vadd.f32 %v3405, %v4093
    %v4095 = vand.u32 %v157, 4294901760
    %4096 = vmatmul.f32.gmra.mxu0 %v4095
    %v4097 = vpop.f32.mrf.mxu0
    %v4098 = vadd.f32 %v3411, %v4097
    %v4099 = vand.u32 %v158, 4294901760
    %4100 = vmatmul.f32.gmra.mxu0 %v4099
    %v4101 = vpop.f32.mrf.mxu0
    %v4102 = vadd.f32 %v3417, %v4101
    %v4103 = vand.u32 %v159, 4294901760
    %4104 = vmatmul.f32.gmra.mxu0 %v4103
    %v4105 = vpop.f32.mrf.mxu0
    %v4106 = vadd.f32 %v3423, %v4105
    %v4107 = vand.u32 %v160, 4294901760
    %4108 = vmatmul.f32.gmra.mxu0 %v4107
    %v4109 = vpop.f32.mrf.mxu0
    %v4110 = vadd.f32 %v3429, %v4109
    %v4111 = vand.u32 %v161, 4294901760
    %4112 = vmatmul.f32.gmra.mxu0 %v4111
    %v4113 = vpop.f32.mrf.mxu0
    %v4114 = vadd.f32 %v3435, %v4113
    %v4115 = vand.u32 %v162, 4294901760
    %4116 = vmatmul.f32.gmra.mxu0 %v4115
    %v4117 = vpop.f32.mrf.mxu0
    %v4118 = vadd.f32 %v3441, %v4117
    %v4119 = vand.u32 %v163, 4294901760
    %4120 = vmatmul.f32.gmra.mxu0 %v4119
    %v4121 = vpop.f32.mrf.mxu0
    %v4122 = vadd.f32 %v3447, %v4121
    %v4123 = vand.u32 %v164, 4294901760
    %4124 = vmatmul.f32.gmra.mxu0 %v4123
    %v4125 = vpop.f32.mrf.mxu0
    %v4126 = vadd.f32 %v3453, %v4125
    %v4127 = vand.u32 %v165, 4294901760
    %4128 = vmatmul.f32.gmra.mxu0 %v4127
    %v4129 = vpop.f32.mrf.mxu0
    %v4130 = vadd.f32 %v3459, %v4129
    %v4131 = vand.u32 %v166, 4294901760
    %4132 = vmatmul.f32.gmra.mxu0 %v4131
    %v4133 = vpop.f32.mrf.mxu0
    %v4134 = vadd.f32 %v3465, %v4133
    %v4135 = vand.u32 %v167, 4294901760
    %4136 = vmatmul.f32.gmra.mxu0 %v4135
    %v4137 = vpop.f32.mrf.mxu0
    %v4138 = vadd.f32 %v3471, %v4137
    %v4139 = vand.u32 %v168, 4294901760
    %4140 = vmatmul.f32.gmra.mxu0 %v4139
    %v4141 = vpop.f32.mrf.mxu0
    %v4142 = vadd.f32 %v3477, %v4141
    %v4143 = vand.u32 %v169, 4294901760
    %4144 = vmatmul.f32.gmra.mxu0 %v4143
    %v4145 = vpop.f32.mrf.mxu0
    %v4146 = vadd.f32 %v3483, %v4145
    %v4147 = vand.u32 %v170, 4294901760
    %4148 = vmatmul.f32.gmra.mxu0 %v4147
    %v4149 = vpop.f32.mrf.mxu0
    %v4150 = vadd.f32 %v3489, %v4149
    %v4151 = vand.u32 %v171, 4294901760
    %4152 = vmatmul.f32.gmra.mxu0 %v4151
    %v4153 = vpop.f32.mrf.mxu0
    %v4154 = vadd.f32 %v3495, %v4153
    %v4155 = vand.u32 %v172, 4294901760
    %4156 = vmatmul.f32.gmra.mxu0 %v4155
    %v4157 = vpop.f32.mrf.mxu0
    %v4158 = vadd.f32 %v3501, %v4157
    %v4159 = vand.u32 %v173, 4294901760
    %4160 = vmatmul.f32.gmra.mxu0 %v4159
    %v4161 = vpop.f32.mrf.mxu0
    %v4162 = vadd.f32 %v3507, %v4161
    %v4163 = vand.u32 %v174, 4294901760
    %4164 = vmatmul.f32.gmra.mxu0 %v4163
    %v4165 = vpop.f32.mrf.mxu0
    %v4166 = vadd.f32 %v3513, %v4165
    %v4167 = vand.u32 %v175, 4294901760
    %4168 = vmatmul.f32.gmra.mxu0 %v4167
    %v4169 = vpop.f32.mrf.mxu0
    %v4170 = vadd.f32 %v3519, %v4169
    %v4171 = vand.u32 %v176, 4294901760
    %4172 = vmatmul.f32.gmra.mxu0 %v4171
    %v4173 = vpop.f32.mrf.mxu0
    %v4174 = vadd.f32 %v3525, %v4173
    %v4175 = vand.u32 %v177, 4294901760
    %4176 = vmatmul.f32.gmra.mxu0 %v4175
    %v4177 = vpop.f32.mrf.mxu0
    %v4178 = vadd.f32 %v3531, %v4177
    %v4179 = vand.u32 %v178, 4294901760
    %4180 = vmatmul.f32.gmra.mxu0 %v4179
    %v4181 = vpop.f32.mrf.mxu0
    %v4182 = vadd.f32 %v3537, %v4181
    %v4183 = vand.u32 %v179, 4294901760
    %4184 = vmatmul.f32.gmra.mxu0 %v4183
    %v4185 = vpop.f32.mrf.mxu0
    %v4186 = vadd.f32 %v3543, %v4185
    %v4187 = vand.u32 %v180, 4294901760
    %4188 = vmatmul.f32.gmra.mxu0 %v4187
    %v4189 = vpop.f32.mrf.mxu0
    %v4190 = vadd.f32 %v3549, %v4189
    %v4191 = vand.u32 %v181, 4294901760
    %4192 = vmatmul.f32.gmra.mxu0 %v4191
    %v4193 = vpop.f32.mrf.mxu0
    %v4194 = vadd.f32 %v3555, %v4193
    %v4195 = vand.u32 %v182, 4294901760
    %4196 = vmatmul.f32.gmra.mxu0 %v4195
    %v4197 = vpop.f32.mrf.mxu0
    %v4198 = vadd.f32 %v3561, %v4197
    %v4199 = vand.u32 %v183, 4294901760
    %4200 = vmatmul.f32.gmra.mxu0 %v4199
    %v4201 = vpop.f32.mrf.mxu0
    %v4202 = vadd.f32 %v3567, %v4201
    %v4203 = vand.u32 %v184, 4294901760
    %4204 = vmatmul.f32.gmra.mxu0 %v4203
    %v4205 = vpop.f32.mrf.mxu0
    %v4206 = vadd.f32 %v3573, %v4205
    %v4207 = vand.u32 %v185, 4294901760
    %4208 = vmatmul.f32.gmra.mxu0 %v4207
    %v4209 = vpop.f32.mrf.mxu0
    %v4210 = vadd.f32 %v3579, %v4209
    %v4211 = vand.u32 %v186, 4294901760
    %4212 = vmatmul.f32.gmra.mxu0 %v4211
    %v4213 = vpop.f32.mrf.mxu0
    %v4214 = vadd.f32 %v3585, %v4213
    %v4215 = vand.u32 %v187, 4294901760
    %4216 = vmatmul.f32.gmra.mxu0 %v4215
    %v4217 = vpop.f32.mrf.mxu0
    %v4218 = vadd.f32 %v3591, %v4217
    %v4219 = vand.u32 %v188, 4294901760
    %4220 = vmatmul.f32.gmra.mxu0 %v4219
    %v4221 = vpop.f32.mrf.mxu0
    %v4222 = vadd.f32 %v3597, %v4221
    %v4223 = vand.u32 %v189, 4294901760
    %4224 = vmatmul.f32.gmra.mxu0 %v4223
    %v4225 = vpop.f32.mrf.mxu0
    %v4226 = vadd.f32 %v3603, %v4225
    %v4227 = vand.u32 %v190, 4294901760
    %4228 = vmatmul.f32.gmra.mxu0 %v4227
    %v4229 = vpop.f32.mrf.mxu0
    %v4230 = vadd.f32 %v3609, %v4229
    %v4231 = vand.u32 %v191, 4294901760
    %4232 = vmatmul.f32.gmra.mxu0 %v4231
    %v4233 = vpop.f32.mrf.mxu0
    %v4234 = vadd.f32 %v3615, %v4233
    %v4235 = vand.u32 %v192, 4294901760
    %4236 = vmatmul.f32.gmra.mxu0 %v4235
    %v4237 = vpop.f32.mrf.mxu0
    %v4238 = vadd.f32 %v3621, %v4237
    %v4239 = vand.u32 %v193, 4294901760
    %4240 = vmatmul.f32.gmra.mxu0 %v4239
    %v4241 = vpop.f32.mrf.mxu0
    %v4242 = vadd.f32 %v3627, %v4241
    %v4243 = vand.u32 %v194, 4294901760
    %4244 = vmatmul.f32.gmra.mxu0 %v4243
    %v4245 = vpop.f32.mrf.mxu0
    %v4246 = vadd.f32 %v3633, %v4245
    %v4247 = vand.u32 %v195, 4294901760
    %4248 = vmatmul.f32.gmra.mxu0 %v4247
    %v4249 = vpop.f32.mrf.mxu0
    %v4250 = vadd.f32 %v3639, %v4249
    %v4251 = vand.u32 %v196, 4294901760
    %4252 = vmatmul.f32.gmra.mxu0 %v4251
    %v4253 = vpop.f32.mrf.mxu0
    %v4254 = vadd.f32 %v3645, %v4253
    %v4255 = vand.u32 %v197, 4294901760
    %4256 = vmatmul.f32.gmra.mxu0 %v4255
    %v4257 = vpop.f32.mrf.mxu0
    %v4258 = vadd.f32 %v3651, %v4257
    %v4259 = vand.u32 %v198, 4294901760
    %4260 = vmatmul.f32.gmra.mxu0 %v4259
    %v4261 = vpop.f32.mrf.mxu0
    %v4262 = vadd.f32 %v3657, %v4261
    %v4263 = vand.u32 %v199, 4294901760
    %4264 = vmatmul.f32.gmra.mxu0 %v4263
    %v4265 = vpop.f32.mrf.mxu0
    %v4266 = vadd.f32 %v3663, %v4265
    %v4267 = vand.u32 %v200, 4294901760
    %4268 = vmatmul.f32.gmra.mxu0 %v4267
    %v4269 = vpop.f32.mrf.mxu0
    %v4270 = vadd.f32 %v3669, %v4269
    %v4271 = vand.u32 %v201, 4294901760
    %4272 = vmatmul.f32.gmra.mxu0 %v4271
    %v4273 = vpop.f32.mrf.mxu0
    %v4274 = vadd.f32 %v3675, %v4273
    %v4275 = vand.u32 %v202, 4294901760
    %4276 = vmatmul.f32.gmra.mxu0 %v4275
    %v4277 = vpop.f32.mrf.mxu0
    %v4278 = vadd.f32 %v3681, %v4277
    %v4279 = vand.u32 %v203, 4294901760
    %4280 = vmatmul.f32.gmra.mxu0 %v4279
    %v4281 = vpop.f32.mrf.mxu0
    %v4282 = vadd.f32 %v3687, %v4281
    %v4283 = vand.u32 %v204, 4294901760
    %4284 = vmatmul.f32.gmra.mxu0 %v4283
    %v4285 = vpop.f32.mrf.mxu0
    %v4286 = vadd.f32 %v3693, %v4285
    %v4287 = vand.u32 %v205, 4294901760
    %4288 = vmatmul.f32.gmra.mxu0 %v4287
    %v4289 = vpop.f32.mrf.mxu0
    %v4290 = vadd.f32 %v3699, %v4289
    %v4291 = vand.u32 %v206, 4294901760
    %4292 = vmatmul.f32.gmra.mxu0 %v4291
    %v4293 = vpop.f32.mrf.mxu0
    %v4294 = vadd.f32 %v3705, %v4293
    %v4295 = vand.u32 %v207, 4294901760
    %4296 = vmatmul.f32.gmra.mxu0 %v4295
    %v4297 = vpop.f32.mrf.mxu0
    %v4298 = vadd.f32 %v3711, %v4297
    %v4299 = vand.u32 %v208, 4294901760
    %4300 = vmatmul.f32.gmra.mxu0 %v4299
    %v4301 = vpop.f32.mrf.mxu0
    %v4302 = vadd.f32 %v3717, %v4301
    %v4303 = vand.u32 %v209, 4294901760
    %4304 = vmatmul.f32.gmra.mxu0 %v4303
    %v4305 = vpop.f32.mrf.mxu0
    %v4306 = vadd.f32 %v3723, %v4305
    %v4307 = vand.u32 %v210, 4294901760
    %4308 = vmatmul.f32.gmra.mxu0 %v4307
    %v4309 = vpop.f32.mrf.mxu0
    %v4310 = vadd.f32 %v3729, %v4309
    %v4311 = vand.u32 %v211, 4294901760
    %4312 = vmatmul.f32.gmra.mxu0 %v4311
    %v4313 = vpop.f32.mrf.mxu0
    %v4314 = vadd.f32 %v3735, %v4313
    %v4315 = vand.u32 %v212, 4294901760
    %4316 = vmatmul.f32.gmra.mxu0 %v4315
    %v4317 = vpop.f32.mrf.mxu0
    %v4318 = vadd.f32 %v3741, %v4317
    %4319 = vdwg.mxu0
    %v4320 = vand.u32 %v244, 4294901760
    %4321 = vmatpush.msra.mxu0 %v4320
    %v4322 = vand.u32 %v243, 4294901760
    %4323 = vmatpush.msra.mxu0 %v4322
    %v4324 = vand.u32 %v242, 4294901760
    %4325 = vmatpush.msra.mxu0 %v4324
    %v4326 = vand.u32 %v241, 4294901760
    %4327 = vmatpush.msra.mxu0 %v4326
    %v4328 = vand.u32 %v240, 4294901760
    %4329 = vmatpush.msra.mxu0 %v4328
    %v4330 = vand.u32 %v239, 4294901760
    %4331 = vmatpush.msra.mxu0 %v4330
    %v4332 = vand.u32 %v238, 4294901760
    %4333 = vmatpush.msra.mxu0 %v4332
    %v4334 = vand.u32 %v237, 4294901760
    %4335 = vmatpush.msra.mxu0 %v4334
    %v4336 = vand.u32 %v236, 4294901760
    %4337 = vmatpush.msra.mxu0 %v4336
    %v4338 = vand.u32 %v235, 4294901760
    %4339 = vmatpush.msra.mxu0 %v4338
    %v4340 = vand.u32 %v234, 4294901760
    %4341 = vmatpush.msra.mxu0 %v4340
    %v4342 = vand.u32 %v233, 4294901760
    %4343 = vmatpush.msra.mxu0 %v4342
    %v4344 = vand.u32 %v232, 4294901760
    %4345 = vmatpush.msra.mxu0 %v4344
    %v4346 = vand.u32 %v231, 4294901760
    %4347 = vmatpush.msra.mxu0 %v4346
    %v4348 = vand.u32 %v230, 4294901760
    %4349 = vmatpush.msra.mxu0 %v4348
    %v4350 = vand.u32 %v229, 4294901760
    %4351 = vmatpush.msra.mxu0 %v4350
    %v4352 = vand.u32 %v85, 4294901760
    %4353 = vmatmul.f32.gmra.mxu0 %v4352
    %v4354 = vpop.f32.mrf.mxu0
    %v4355 = vadd.f32 %v3810, %v4354
    %v4356 = vand.u32 %v86, 4294901760
    %4357 = vmatmul.f32.gmra.mxu0 %v4356
    %v4358 = vpop.f32.mrf.mxu0
    %v4359 = vadd.f32 %v3814, %v4358
    %v4360 = vand.u32 %v87, 4294901760
    %4361 = vmatmul.f32.gmra.mxu0 %v4360
    %v4362 = vpop.f32.mrf.mxu0
    %v4363 = vadd.f32 %v3818, %v4362
    %v4364 = vand.u32 %v88, 4294901760
    %4365 = vmatmul.f32.gmra.mxu0 %v4364
    %v4366 = vpop.f32.mrf.mxu0
    %v4367 = vadd.f32 %v3822, %v4366
    %v4368 = vand.u32 %v89, 4294901760
    %4369 = vmatmul.f32.gmra.mxu0 %v4368
    %v4370 = vpop.f32.mrf.mxu0
    %v4371 = vadd.f32 %v3826, %v4370
    %v4372 = vand.u32 %v90, 4294901760
    %4373 = vmatmul.f32.gmra.mxu0 %v4372
    %v4374 = vpop.f32.mrf.mxu0
    %v4375 = vadd.f32 %v3830, %v4374
    %v4376 = vand.u32 %v91, 4294901760
    %4377 = vmatmul.f32.gmra.mxu0 %v4376
    %v4378 = vpop.f32.mrf.mxu0
    %v4379 = vadd.f32 %v3834, %v4378
    %v4380 = vand.u32 %v92, 4294901760
    %4381 = vmatmul.f32.gmra.mxu0 %v4380
    %v4382 = vpop.f32.mrf.mxu0
    %v4383 = vadd.f32 %v3838, %v4382
    %v4384 = vand.u32 %v93, 4294901760
    %4385 = vmatmul.f32.gmra.mxu0 %v4384
    %v4386 = vpop.f32.mrf.mxu0
    %v4387 = vadd.f32 %v3842, %v4386
    %v4388 = vand.u32 %v94, 4294901760
    %4389 = vmatmul.f32.gmra.mxu0 %v4388
    %v4390 = vpop.f32.mrf.mxu0
    %v4391 = vadd.f32 %v3846, %v4390
    %v4392 = vand.u32 %v95, 4294901760
    %4393 = vmatmul.f32.gmra.mxu0 %v4392
    %v4394 = vpop.f32.mrf.mxu0
    %v4395 = vadd.f32 %v3850, %v4394
    %v4396 = vand.u32 %v96, 4294901760
    %4397 = vmatmul.f32.gmra.mxu0 %v4396
    %v4398 = vpop.f32.mrf.mxu0
    %v4399 = vadd.f32 %v3854, %v4398
    %v4400 = vand.u32 %v97, 4294901760
    %4401 = vmatmul.f32.gmra.mxu0 %v4400
    %v4402 = vpop.f32.mrf.mxu0
    %v4403 = vadd.f32 %v3858, %v4402
    %v4404 = vand.u32 %v98, 4294901760
    %4405 = vmatmul.f32.gmra.mxu0 %v4404
    %v4406 = vpop.f32.mrf.mxu0
    %v4407 = vadd.f32 %v3862, %v4406
    %v4408 = vand.u32 %v99, 4294901760
    %4409 = vmatmul.f32.gmra.mxu0 %v4408
    %v4410 = vpop.f32.mrf.mxu0
    %v4411 = vadd.f32 %v3866, %v4410
    %v4412 = vand.u32 %v100, 4294901760
    %4413 = vmatmul.f32.gmra.mxu0 %v4412
    %v4414 = vpop.f32.mrf.mxu0
    %v4415 = vadd.f32 %v3870, %v4414
    %v4416 = vand.u32 %v101, 4294901760
    %4417 = vmatmul.f32.gmra.mxu0 %v4416
    %v4418 = vpop.f32.mrf.mxu0
    %v4419 = vadd.f32 %v3874, %v4418
    %v4420 = vand.u32 %v102, 4294901760
    %4421 = vmatmul.f32.gmra.mxu0 %v4420
    %v4422 = vpop.f32.mrf.mxu0
    %v4423 = vadd.f32 %v3878, %v4422
    %v4424 = vand.u32 %v103, 4294901760
    %4425 = vmatmul.f32.gmra.mxu0 %v4424
    %v4426 = vpop.f32.mrf.mxu0
    %v4427 = vadd.f32 %v3882, %v4426
    %v4428 = vand.u32 %v104, 4294901760
    %4429 = vmatmul.f32.gmra.mxu0 %v4428
    %v4430 = vpop.f32.mrf.mxu0
    %v4431 = vadd.f32 %v3886, %v4430
    %v4432 = vand.u32 %v105, 4294901760
    %4433 = vmatmul.f32.gmra.mxu0 %v4432
    %v4434 = vpop.f32.mrf.mxu0
    %v4435 = vadd.f32 %v3890, %v4434
    %v4436 = vand.u32 %v106, 4294901760
    %4437 = vmatmul.f32.gmra.mxu0 %v4436
    %v4438 = vpop.f32.mrf.mxu0
    %v4439 = vadd.f32 %v3894, %v4438
    %v4440 = vand.u32 %v107, 4294901760
    %4441 = vmatmul.f32.gmra.mxu0 %v4440
    %v4442 = vpop.f32.mrf.mxu0
    %v4443 = vadd.f32 %v3898, %v4442
    %v4444 = vand.u32 %v108, 4294901760
    %4445 = vmatmul.f32.gmra.mxu0 %v4444
    %v4446 = vpop.f32.mrf.mxu0
    %v4447 = vadd.f32 %v3902, %v4446
    %v4448 = vand.u32 %v109, 4294901760
    %4449 = vmatmul.f32.gmra.mxu0 %v4448
    %v4450 = vpop.f32.mrf.mxu0
    %v4451 = vadd.f32 %v3906, %v4450
    %v4452 = vand.u32 %v110, 4294901760
    %4453 = vmatmul.f32.gmra.mxu0 %v4452
    %v4454 = vpop.f32.mrf.mxu0
    %v4455 = vadd.f32 %v3910, %v4454
    %v4456 = vand.u32 %v111, 4294901760
    %4457 = vmatmul.f32.gmra.mxu0 %v4456
    %v4458 = vpop.f32.mrf.mxu0
    %v4459 = vadd.f32 %v3914, %v4458
    %v4460 = vand.u32 %v112, 4294901760
    %4461 = vmatmul.f32.gmra.mxu0 %v4460
    %v4462 = vpop.f32.mrf.mxu0
    %v4463 = vadd.f32 %v3918, %v4462
    %v4464 = vand.u32 %v113, 4294901760
    %4465 = vmatmul.f32.gmra.mxu0 %v4464
    %v4466 = vpop.f32.mrf.mxu0
    %v4467 = vadd.f32 %v3922, %v4466
    %v4468 = vand.u32 %v114, 4294901760
    %4469 = vmatmul.f32.gmra.mxu0 %v4468
    %v4470 = vpop.f32.mrf.mxu0
    %v4471 = vadd.f32 %v3926, %v4470
    %v4472 = vand.u32 %v115, 4294901760
    %4473 = vmatmul.f32.gmra.mxu0 %v4472
    %v4474 = vpop.f32.mrf.mxu0
    %v4475 = vadd.f32 %v3930, %v4474
    %v4476 = vand.u32 %v116, 4294901760
    %4477 = vmatmul.f32.gmra.mxu0 %v4476
    %v4478 = vpop.f32.mrf.mxu0
    %v4479 = vadd.f32 %v3934, %v4478
    %v4480 = vand.u32 %v117, 4294901760
    %4481 = vmatmul.f32.gmra.mxu0 %v4480
    %v4482 = vpop.f32.mrf.mxu0
    %v4483 = vadd.f32 %v3938, %v4482
    %v4484 = vand.u32 %v118, 4294901760
    %4485 = vmatmul.f32.gmra.mxu0 %v4484
    %v4486 = vpop.f32.mrf.mxu0
    %v4487 = vadd.f32 %v3942, %v4486
    %v4488 = vand.u32 %v119, 4294901760
    %4489 = vmatmul.f32.gmra.mxu0 %v4488
    %v4490 = vpop.f32.mrf.mxu0
    %v4491 = vadd.f32 %v3946, %v4490
    %v4492 = vand.u32 %v120, 4294901760
    %4493 = vmatmul.f32.gmra.mxu0 %v4492
    %v4494 = vpop.f32.mrf.mxu0
    %v4495 = vadd.f32 %v3950, %v4494
    %v4496 = vand.u32 %v121, 4294901760
    %4497 = vmatmul.f32.gmra.mxu0 %v4496
    %v4498 = vpop.f32.mrf.mxu0
    %v4499 = vadd.f32 %v3954, %v4498
    %v4500 = vand.u32 %v122, 4294901760
    %4501 = vmatmul.f32.gmra.mxu0 %v4500
    %v4502 = vpop.f32.mrf.mxu0
    %v4503 = vadd.f32 %v3958, %v4502
    %v4504 = vand.u32 %v123, 4294901760
    %4505 = vmatmul.f32.gmra.mxu0 %v4504
    %v4506 = vpop.f32.mrf.mxu0
    %v4507 = vadd.f32 %v3962, %v4506
    %v4508 = vand.u32 %v124, 4294901760
    %4509 = vmatmul.f32.gmra.mxu0 %v4508
    %v4510 = vpop.f32.mrf.mxu0
    %v4511 = vadd.f32 %v3966, %v4510
    %v4512 = vand.u32 %v125, 4294901760
    %4513 = vmatmul.f32.gmra.mxu0 %v4512
    %v4514 = vpop.f32.mrf.mxu0
    %v4515 = vadd.f32 %v3970, %v4514
    %v4516 = vand.u32 %v126, 4294901760
    %4517 = vmatmul.f32.gmra.mxu0 %v4516
    %v4518 = vpop.f32.mrf.mxu0
    %v4519 = vadd.f32 %v3974, %v4518
    %v4520 = vand.u32 %v127, 4294901760
    %4521 = vmatmul.f32.gmra.mxu0 %v4520
    %v4522 = vpop.f32.mrf.mxu0
    %v4523 = vadd.f32 %v3978, %v4522
    %v4524 = vand.u32 %v128, 4294901760
    %4525 = vmatmul.f32.gmra.mxu0 %v4524
    %v4526 = vpop.f32.mrf.mxu0
    %v4527 = vadd.f32 %v3982, %v4526
    %v4528 = vand.u32 %v129, 4294901760
    %4529 = vmatmul.f32.gmra.mxu0 %v4528
    %v4530 = vpop.f32.mrf.mxu0
    %v4531 = vadd.f32 %v3986, %v4530
    %v4532 = vand.u32 %v130, 4294901760
    %4533 = vmatmul.f32.gmra.mxu0 %v4532
    %v4534 = vpop.f32.mrf.mxu0
    %v4535 = vadd.f32 %v3990, %v4534
    %v4536 = vand.u32 %v131, 4294901760
    %4537 = vmatmul.f32.gmra.mxu0 %v4536
    %v4538 = vpop.f32.mrf.mxu0
    %v4539 = vadd.f32 %v3994, %v4538
    %v4540 = vand.u32 %v132, 4294901760
    %4541 = vmatmul.f32.gmra.mxu0 %v4540
    %v4542 = vpop.f32.mrf.mxu0
    %v4543 = vadd.f32 %v3998, %v4542
    %v4544 = vand.u32 %v133, 4294901760
    %4545 = vmatmul.f32.gmra.mxu0 %v4544
    %v4546 = vpop.f32.mrf.mxu0
    %v4547 = vadd.f32 %v4002, %v4546
    %v4548 = vand.u32 %v134, 4294901760
    %4549 = vmatmul.f32.gmra.mxu0 %v4548
    %v4550 = vpop.f32.mrf.mxu0
    %v4551 = vadd.f32 %v4006, %v4550
    %v4552 = vand.u32 %v135, 4294901760
    %4553 = vmatmul.f32.gmra.mxu0 %v4552
    %v4554 = vpop.f32.mrf.mxu0
    %v4555 = vadd.f32 %v4010, %v4554
    %v4556 = vand.u32 %v136, 4294901760
    %4557 = vmatmul.f32.gmra.mxu0 %v4556
    %v4558 = vpop.f32.mrf.mxu0
    %v4559 = vadd.f32 %v4014, %v4558
    %v4560 = vand.u32 %v137, 4294901760
    %4561 = vmatmul.f32.gmra.mxu0 %v4560
    %v4562 = vpop.f32.mrf.mxu0
    %v4563 = vadd.f32 %v4018, %v4562
    %v4564 = vand.u32 %v138, 4294901760
    %4565 = vmatmul.f32.gmra.mxu0 %v4564
    %v4566 = vpop.f32.mrf.mxu0
    %v4567 = vadd.f32 %v4022, %v4566
    %v4568 = vand.u32 %v139, 4294901760
    %4569 = vmatmul.f32.gmra.mxu0 %v4568
    %v4570 = vpop.f32.mrf.mxu0
    %v4571 = vadd.f32 %v4026, %v4570
    %v4572 = vand.u32 %v140, 4294901760
    %4573 = vmatmul.f32.gmra.mxu0 %v4572
    %v4574 = vpop.f32.mrf.mxu0
    %v4575 = vadd.f32 %v4030, %v4574
    %v4576 = vand.u32 %v141, 4294901760
    %4577 = vmatmul.f32.gmra.mxu0 %v4576
    %v4578 = vpop.f32.mrf.mxu0
    %v4579 = vadd.f32 %v4034, %v4578
    %v4580 = vand.u32 %v142, 4294901760
    %4581 = vmatmul.f32.gmra.mxu0 %v4580
    %v4582 = vpop.f32.mrf.mxu0
    %v4583 = vadd.f32 %v4038, %v4582
    %v4584 = vand.u32 %v143, 4294901760
    %4585 = vmatmul.f32.gmra.mxu0 %v4584
    %v4586 = vpop.f32.mrf.mxu0
    %v4587 = vadd.f32 %v4042, %v4586
    %v4588 = vand.u32 %v144, 4294901760
    %4589 = vmatmul.f32.gmra.mxu0 %v4588
    %v4590 = vpop.f32.mrf.mxu0
    %v4591 = vadd.f32 %v4046, %v4590
    %v4592 = vand.u32 %v145, 4294901760
    %4593 = vmatmul.f32.gmra.mxu0 %v4592
    %v4594 = vpop.f32.mrf.mxu0
    %v4595 = vadd.f32 %v4050, %v4594
    %v4596 = vand.u32 %v146, 4294901760
    %4597 = vmatmul.f32.gmra.mxu0 %v4596
    %v4598 = vpop.f32.mrf.mxu0
    %v4599 = vadd.f32 %v4054, %v4598
    %v4600 = vand.u32 %v147, 4294901760
    %4601 = vmatmul.f32.gmra.mxu0 %v4600
    %v4602 = vpop.f32.mrf.mxu0
    %v4603 = vadd.f32 %v4058, %v4602
    %v4604 = vand.u32 %v148, 4294901760
    %4605 = vmatmul.f32.gmra.mxu0 %v4604
    %v4606 = vpop.f32.mrf.mxu0
    %v4607 = vadd.f32 %v4062, %v4606
    %v4608 = vand.u32 %v149, 4294901760
    %4609 = vmatmul.f32.gmra.mxu0 %v4608
    %v4610 = vpop.f32.mrf.mxu0
    %v4611 = vadd.f32 %v4066, %v4610
    %v4612 = vand.u32 %v150, 4294901760
    %4613 = vmatmul.f32.gmra.mxu0 %v4612
    %v4614 = vpop.f32.mrf.mxu0
    %v4615 = vadd.f32 %v4070, %v4614
    %v4616 = vand.u32 %v151, 4294901760
    %4617 = vmatmul.f32.gmra.mxu0 %v4616
    %v4618 = vpop.f32.mrf.mxu0
    %v4619 = vadd.f32 %v4074, %v4618
    %v4620 = vand.u32 %v152, 4294901760
    %4621 = vmatmul.f32.gmra.mxu0 %v4620
    %v4622 = vpop.f32.mrf.mxu0
    %v4623 = vadd.f32 %v4078, %v4622
    %v4624 = vand.u32 %v153, 4294901760
    %4625 = vmatmul.f32.gmra.mxu0 %v4624
    %v4626 = vpop.f32.mrf.mxu0
    %v4627 = vadd.f32 %v4082, %v4626
    %v4628 = vand.u32 %v154, 4294901760
    %4629 = vmatmul.f32.gmra.mxu0 %v4628
    %v4630 = vpop.f32.mrf.mxu0
    %v4631 = vadd.f32 %v4086, %v4630
    %v4632 = vand.u32 %v155, 4294901760
    %4633 = vmatmul.f32.gmra.mxu0 %v4632
    %v4634 = vpop.f32.mrf.mxu0
    %v4635 = vadd.f32 %v4090, %v4634
    %v4636 = vand.u32 %v156, 4294901760
    %4637 = vmatmul.f32.gmra.mxu0 %v4636
    %v4638 = vpop.f32.mrf.mxu0
    %v4639 = vadd.f32 %v4094, %v4638
    %v4640 = vand.u32 %v157, 4294901760
    %4641 = vmatmul.f32.gmra.mxu0 %v4640
    %v4642 = vpop.f32.mrf.mxu0
    %v4643 = vadd.f32 %v4098, %v4642
    %v4644 = vand.u32 %v158, 4294901760
    %4645 = vmatmul.f32.gmra.mxu0 %v4644
    %v4646 = vpop.f32.mrf.mxu0
    %v4647 = vadd.f32 %v4102, %v4646
    %v4648 = vand.u32 %v159, 4294901760
    %4649 = vmatmul.f32.gmra.mxu0 %v4648
    %v4650 = vpop.f32.mrf.mxu0
    %v4651 = vadd.f32 %v4106, %v4650
    %v4652 = vand.u32 %v160, 4294901760
    %4653 = vmatmul.f32.gmra.mxu0 %v4652
    %v4654 = vpop.f32.mrf.mxu0
    %v4655 = vadd.f32 %v4110, %v4654
    %v4656 = vand.u32 %v161, 4294901760
    %4657 = vmatmul.f32.gmra.mxu0 %v4656
    %v4658 = vpop.f32.mrf.mxu0
    %v4659 = vadd.f32 %v4114, %v4658
    %v4660 = vand.u32 %v162, 4294901760
    %4661 = vmatmul.f32.gmra.mxu0 %v4660
    %v4662 = vpop.f32.mrf.mxu0
    %v4663 = vadd.f32 %v4118, %v4662
    %v4664 = vand.u32 %v163, 4294901760
    %4665 = vmatmul.f32.gmra.mxu0 %v4664
    %v4666 = vpop.f32.mrf.mxu0
    %v4667 = vadd.f32 %v4122, %v4666
    %v4668 = vand.u32 %v164, 4294901760
    %4669 = vmatmul.f32.gmra.mxu0 %v4668
    %v4670 = vpop.f32.mrf.mxu0
    %v4671 = vadd.f32 %v4126, %v4670
    %v4672 = vand.u32 %v165, 4294901760
    %4673 = vmatmul.f32.gmra.mxu0 %v4672
    %v4674 = vpop.f32.mrf.mxu0
    %v4675 = vadd.f32 %v4130, %v4674
    %v4676 = vand.u32 %v166, 4294901760
    %4677 = vmatmul.f32.gmra.mxu0 %v4676
    %v4678 = vpop.f32.mrf.mxu0
    %v4679 = vadd.f32 %v4134, %v4678
    %v4680 = vand.u32 %v167, 4294901760
    %4681 = vmatmul.f32.gmra.mxu0 %v4680
    %v4682 = vpop.f32.mrf.mxu0
    %v4683 = vadd.f32 %v4138, %v4682
    %v4684 = vand.u32 %v168, 4294901760
    %4685 = vmatmul.f32.gmra.mxu0 %v4684
    %v4686 = vpop.f32.mrf.mxu0
    %v4687 = vadd.f32 %v4142, %v4686
    %v4688 = vand.u32 %v169, 4294901760
    %4689 = vmatmul.f32.gmra.mxu0 %v4688
    %v4690 = vpop.f32.mrf.mxu0
    %v4691 = vadd.f32 %v4146, %v4690
    %v4692 = vand.u32 %v170, 4294901760
    %4693 = vmatmul.f32.gmra.mxu0 %v4692
    %v4694 = vpop.f32.mrf.mxu0
    %v4695 = vadd.f32 %v4150, %v4694
    %v4696 = vand.u32 %v171, 4294901760
    %4697 = vmatmul.f32.gmra.mxu0 %v4696
    %v4698 = vpop.f32.mrf.mxu0
    %v4699 = vadd.f32 %v4154, %v4698
    %v4700 = vand.u32 %v172, 4294901760
    %4701 = vmatmul.f32.gmra.mxu0 %v4700
    %v4702 = vpop.f32.mrf.mxu0
    %v4703 = vadd.f32 %v4158, %v4702
    %v4704 = vand.u32 %v173, 4294901760
    %4705 = vmatmul.f32.gmra.mxu0 %v4704
    %v4706 = vpop.f32.mrf.mxu0
    %v4707 = vadd.f32 %v4162, %v4706
    %v4708 = vand.u32 %v174, 4294901760
    %4709 = vmatmul.f32.gmra.mxu0 %v4708
    %v4710 = vpop.f32.mrf.mxu0
    %v4711 = vadd.f32 %v4166, %v4710
    %v4712 = vand.u32 %v175, 4294901760
    %4713 = vmatmul.f32.gmra.mxu0 %v4712
    %v4714 = vpop.f32.mrf.mxu0
    %v4715 = vadd.f32 %v4170, %v4714
    %v4716 = vand.u32 %v176, 4294901760
    %4717 = vmatmul.f32.gmra.mxu0 %v4716
    %v4718 = vpop.f32.mrf.mxu0
    %v4719 = vadd.f32 %v4174, %v4718
    %v4720 = vand.u32 %v177, 4294901760
    %4721 = vmatmul.f32.gmra.mxu0 %v4720
    %v4722 = vpop.f32.mrf.mxu0
    %v4723 = vadd.f32 %v4178, %v4722
    %v4724 = vand.u32 %v178, 4294901760
    %4725 = vmatmul.f32.gmra.mxu0 %v4724
    %v4726 = vpop.f32.mrf.mxu0
    %v4727 = vadd.f32 %v4182, %v4726
    %v4728 = vand.u32 %v179, 4294901760
    %4729 = vmatmul.f32.gmra.mxu0 %v4728
    %v4730 = vpop.f32.mrf.mxu0
    %v4731 = vadd.f32 %v4186, %v4730
    %v4732 = vand.u32 %v180, 4294901760
    %4733 = vmatmul.f32.gmra.mxu0 %v4732
    %v4734 = vpop.f32.mrf.mxu0
    %v4735 = vadd.f32 %v4190, %v4734
    %v4736 = vand.u32 %v181, 4294901760
    %4737 = vmatmul.f32.gmra.mxu0 %v4736
    %v4738 = vpop.f32.mrf.mxu0
    %v4739 = vadd.f32 %v4194, %v4738
    %v4740 = vand.u32 %v182, 4294901760
    %4741 = vmatmul.f32.gmra.mxu0 %v4740
    %v4742 = vpop.f32.mrf.mxu0
    %v4743 = vadd.f32 %v4198, %v4742
    %v4744 = vand.u32 %v183, 4294901760
    %4745 = vmatmul.f32.gmra.mxu0 %v4744
    %v4746 = vpop.f32.mrf.mxu0
    %v4747 = vadd.f32 %v4202, %v4746
    %v4748 = vand.u32 %v184, 4294901760
    %4749 = vmatmul.f32.gmra.mxu0 %v4748
    %v4750 = vpop.f32.mrf.mxu0
    %v4751 = vadd.f32 %v4206, %v4750
    %v4752 = vand.u32 %v185, 4294901760
    %4753 = vmatmul.f32.gmra.mxu0 %v4752
    %v4754 = vpop.f32.mrf.mxu0
    %v4755 = vadd.f32 %v4210, %v4754
    %v4756 = vand.u32 %v186, 4294901760
    %4757 = vmatmul.f32.gmra.mxu0 %v4756
    %v4758 = vpop.f32.mrf.mxu0
    %v4759 = vadd.f32 %v4214, %v4758
    %v4760 = vand.u32 %v187, 4294901760
    %4761 = vmatmul.f32.gmra.mxu0 %v4760
    %v4762 = vpop.f32.mrf.mxu0
    %v4763 = vadd.f32 %v4218, %v4762
    %v4764 = vand.u32 %v188, 4294901760
    %4765 = vmatmul.f32.gmra.mxu0 %v4764
    %v4766 = vpop.f32.mrf.mxu0
    %v4767 = vadd.f32 %v4222, %v4766
    %v4768 = vand.u32 %v189, 4294901760
    %4769 = vmatmul.f32.gmra.mxu0 %v4768
    %v4770 = vpop.f32.mrf.mxu0
    %v4771 = vadd.f32 %v4226, %v4770
    %v4772 = vand.u32 %v190, 4294901760
    %4773 = vmatmul.f32.gmra.mxu0 %v4772
    %v4774 = vpop.f32.mrf.mxu0
    %v4775 = vadd.f32 %v4230, %v4774
    %v4776 = vand.u32 %v191, 4294901760
    %4777 = vmatmul.f32.gmra.mxu0 %v4776
    %v4778 = vpop.f32.mrf.mxu0
    %v4779 = vadd.f32 %v4234, %v4778
    %v4780 = vand.u32 %v192, 4294901760
    %4781 = vmatmul.f32.gmra.mxu0 %v4780
    %v4782 = vpop.f32.mrf.mxu0
    %v4783 = vadd.f32 %v4238, %v4782
    %v4784 = vand.u32 %v193, 4294901760
    %4785 = vmatmul.f32.gmra.mxu0 %v4784
    %v4786 = vpop.f32.mrf.mxu0
    %v4787 = vadd.f32 %v4242, %v4786
    %v4788 = vand.u32 %v194, 4294901760
    %4789 = vmatmul.f32.gmra.mxu0 %v4788
    %v4790 = vpop.f32.mrf.mxu0
    %v4791 = vadd.f32 %v4246, %v4790
    %v4792 = vand.u32 %v195, 4294901760
    %4793 = vmatmul.f32.gmra.mxu0 %v4792
    %v4794 = vpop.f32.mrf.mxu0
    %v4795 = vadd.f32 %v4250, %v4794
    %v4796 = vand.u32 %v196, 4294901760
    %4797 = vmatmul.f32.gmra.mxu0 %v4796
    %v4798 = vpop.f32.mrf.mxu0
    %v4799 = vadd.f32 %v4254, %v4798
    %v4800 = vand.u32 %v197, 4294901760
    %4801 = vmatmul.f32.gmra.mxu0 %v4800
    %v4802 = vpop.f32.mrf.mxu0
    %v4803 = vadd.f32 %v4258, %v4802
    %v4804 = vand.u32 %v198, 4294901760
    %4805 = vmatmul.f32.gmra.mxu0 %v4804
    %v4806 = vpop.f32.mrf.mxu0
    %v4807 = vadd.f32 %v4262, %v4806
    %v4808 = vand.u32 %v199, 4294901760
    %4809 = vmatmul.f32.gmra.mxu0 %v4808
    %v4810 = vpop.f32.mrf.mxu0
    %v4811 = vadd.f32 %v4266, %v4810
    %v4812 = vand.u32 %v200, 4294901760
    %4813 = vmatmul.f32.gmra.mxu0 %v4812
    %v4814 = vpop.f32.mrf.mxu0
    %v4815 = vadd.f32 %v4270, %v4814
    %v4816 = vand.u32 %v201, 4294901760
    %4817 = vmatmul.f32.gmra.mxu0 %v4816
    %v4818 = vpop.f32.mrf.mxu0
    %v4819 = vadd.f32 %v4274, %v4818
    %v4820 = vand.u32 %v202, 4294901760
    %4821 = vmatmul.f32.gmra.mxu0 %v4820
    %v4822 = vpop.f32.mrf.mxu0
    %v4823 = vadd.f32 %v4278, %v4822
    %v4824 = vand.u32 %v203, 4294901760
    %4825 = vmatmul.f32.gmra.mxu0 %v4824
    %v4826 = vpop.f32.mrf.mxu0
    %v4827 = vadd.f32 %v4282, %v4826
    %v4828 = vand.u32 %v204, 4294901760
    %4829 = vmatmul.f32.gmra.mxu0 %v4828
    %v4830 = vpop.f32.mrf.mxu0
    %v4831 = vadd.f32 %v4286, %v4830
    %v4832 = vand.u32 %v205, 4294901760
    %4833 = vmatmul.f32.gmra.mxu0 %v4832
    %v4834 = vpop.f32.mrf.mxu0
    %v4835 = vadd.f32 %v4290, %v4834
    %v4836 = vand.u32 %v206, 4294901760
    %4837 = vmatmul.f32.gmra.mxu0 %v4836
    %v4838 = vpop.f32.mrf.mxu0
    %v4839 = vadd.f32 %v4294, %v4838
    %v4840 = vand.u32 %v207, 4294901760
    %4841 = vmatmul.f32.gmra.mxu0 %v4840
    %v4842 = vpop.f32.mrf.mxu0
    %v4843 = vadd.f32 %v4298, %v4842
    %v4844 = vand.u32 %v208, 4294901760
    %4845 = vmatmul.f32.gmra.mxu0 %v4844
    %v4846 = vpop.f32.mrf.mxu0
    %v4847 = vadd.f32 %v4302, %v4846
    %v4848 = vand.u32 %v209, 4294901760
    %4849 = vmatmul.f32.gmra.mxu0 %v4848
    %v4850 = vpop.f32.mrf.mxu0
    %v4851 = vadd.f32 %v4306, %v4850
    %v4852 = vand.u32 %v210, 4294901760
    %4853 = vmatmul.f32.gmra.mxu0 %v4852
    %v4854 = vpop.f32.mrf.mxu0
    %v4855 = vadd.f32 %v4310, %v4854
    %v4856 = vand.u32 %v211, 4294901760
    %4857 = vmatmul.f32.gmra.mxu0 %v4856
    %v4858 = vpop.f32.mrf.mxu0
    %v4859 = vadd.f32 %v4314, %v4858
    %v4860 = vand.u32 %v212, 4294901760
    %4861 = vmatmul.f32.gmra.mxu0 %v4860
    %v4862 = vpop.f32.mrf.mxu0
    %v4863 = vadd.f32 %v4318, %v4862
    %4864 = vdwg.mxu0
    %v4866 = vrot.slane %v585, 1
    %v4867 = vrot.slane %v585, 2
    %v4868 = vrot.slane %v585, 3
    %v4869 = vrot.slane %v585, 4
    %v4870 = vrot.slane %v585, 5
    %v4871 = vrot.slane %v585, 6
    %v4872 = vrot.slane %v585, 7
    %v4873 = vperm.slane %v585, 0
    %v4874 = vperm.slane %v4866, 0
    %v4875 = vperm.slane %v4867, 0
    %v4876 = vperm.slane %v4868, 0
    %v4877 = vperm.slane %v4869, 0
    %v4878 = vperm.slane %v4870, 0
    %v4879 = vperm.slane %v4871, 0
    %v4880 = vperm.slane %v4872, 0
    %v4889 = vadd.f32 %v4355, %v4873
    %v4890 = vadd.f32 %v4359, %v4873
    %v4891 = vadd.f32 %v4363, %v4873
    %v4892 = vadd.f32 %v4367, %v4873
    %v4893 = vadd.f32 %v4371, %v4873
    %v4894 = vadd.f32 %v4375, %v4873
    %v4895 = vadd.f32 %v4379, %v4873
    %v4896 = vadd.f32 %v4383, %v4873
    %v4897 = vadd.f32 %v4387, %v4873
    %v4898 = vadd.f32 %v4391, %v4873
    %v4899 = vadd.f32 %v4395, %v4873
    %v4900 = vadd.f32 %v4399, %v4873
    %v4901 = vadd.f32 %v4403, %v4873
    %v4902 = vadd.f32 %v4407, %v4873
    %v4903 = vadd.f32 %v4411, %v4873
    %v4904 = vadd.f32 %v4415, %v4873
    %v4905 = vadd.f32 %v4419, %v4874
    %v4906 = vadd.f32 %v4423, %v4874
    %v4907 = vadd.f32 %v4427, %v4874
    %v4908 = vadd.f32 %v4431, %v4874
    %v4909 = vadd.f32 %v4435, %v4874
    %v4910 = vadd.f32 %v4439, %v4874
    %v4911 = vadd.f32 %v4443, %v4874
    %v4912 = vadd.f32 %v4447, %v4874
    %v4913 = vadd.f32 %v4451, %v4874
    %v4914 = vadd.f32 %v4455, %v4874
    %v4915 = vadd.f32 %v4459, %v4874
    %v4916 = vadd.f32 %v4463, %v4874
    %v4917 = vadd.f32 %v4467, %v4874
    %v4918 = vadd.f32 %v4471, %v4874
    %v4919 = vadd.f32 %v4475, %v4874
    %v4920 = vadd.f32 %v4479, %v4874
    %v4921 = vadd.f32 %v4483, %v4875
    %v4922 = vadd.f32 %v4487, %v4875
    %v4923 = vadd.f32 %v4491, %v4875
    %v4924 = vadd.f32 %v4495, %v4875
    %v4925 = vadd.f32 %v4499, %v4875
    %v4926 = vadd.f32 %v4503, %v4875
    %v4927 = vadd.f32 %v4507, %v4875
    %v4928 = vadd.f32 %v4511, %v4875
    %v4929 = vadd.f32 %v4515, %v4875
    %v4930 = vadd.f32 %v4519, %v4875
    %v4931 = vadd.f32 %v4523, %v4875
    %v4932 = vadd.f32 %v4527, %v4875
    %v4933 = vadd.f32 %v4531, %v4875
    %v4934 = vadd.f32 %v4535, %v4875
    %v4935 = vadd.f32 %v4539, %v4875
    %v4936 = vadd.f32 %v4543, %v4875
    %v4937 = vadd.f32 %v4547, %v4876
    %v4938 = vadd.f32 %v4551, %v4876
    %v4939 = vadd.f32 %v4555, %v4876
    %v4940 = vadd.f32 %v4559, %v4876
    %v4941 = vadd.f32 %v4563, %v4876
    %v4942 = vadd.f32 %v4567, %v4876
    %v4943 = vadd.f32 %v4571, %v4876
    %v4944 = vadd.f32 %v4575, %v4876
    %v4945 = vadd.f32 %v4579, %v4876
    %v4946 = vadd.f32 %v4583, %v4876
    %v4947 = vadd.f32 %v4587, %v4876
    %v4948 = vadd.f32 %v4591, %v4876
    %v4949 = vadd.f32 %v4595, %v4876
    %v4950 = vadd.f32 %v4599, %v4876
    %v4951 = vadd.f32 %v4603, %v4876
    %v4952 = vadd.f32 %v4607, %v4876
    %v4953 = vadd.f32 %v4611, %v4877
    %v4954 = vadd.f32 %v4615, %v4877
    %v4955 = vadd.f32 %v4619, %v4877
    %v4956 = vadd.f32 %v4623, %v4877
    %v4957 = vadd.f32 %v4627, %v4877
    %v4958 = vadd.f32 %v4631, %v4877
    %v4959 = vadd.f32 %v4635, %v4877
    %v4960 = vadd.f32 %v4639, %v4877
    %v4961 = vadd.f32 %v4643, %v4877
    %v4962 = vadd.f32 %v4647, %v4877
    %v4963 = vadd.f32 %v4651, %v4877
    %v4964 = vadd.f32 %v4655, %v4877
    %v4965 = vadd.f32 %v4659, %v4877
    %v4966 = vadd.f32 %v4663, %v4877
    %v4967 = vadd.f32 %v4667, %v4877
    %v4968 = vadd.f32 %v4671, %v4877
    %v4969 = vadd.f32 %v4675, %v4878
    %v4970 = vadd.f32 %v4679, %v4878
    %v4971 = vadd.f32 %v4683, %v4878
    %v4972 = vadd.f32 %v4687, %v4878
    %v4973 = vadd.f32 %v4691, %v4878
    %v4974 = vadd.f32 %v4695, %v4878
    %v4975 = vadd.f32 %v4699, %v4878
    %v4976 = vadd.f32 %v4703, %v4878
    %v4977 = vadd.f32 %v4707, %v4878
    %v4978 = vadd.f32 %v4711, %v4878
    %v4979 = vadd.f32 %v4715, %v4878
    %v4980 = vadd.f32 %v4719, %v4878
    %v4981 = vadd.f32 %v4723, %v4878
    %v4982 = vadd.f32 %v4727, %v4878
    %v4983 = vadd.f32 %v4731, %v4878
    %v4984 = vadd.f32 %v4735, %v4878
    %v4985 = vadd.f32 %v4739, %v4879
    %v4986 = vadd.f32 %v4743, %v4879
    %v4987 = vadd.f32 %v4747, %v4879
    %v4988 = vadd.f32 %v4751, %v4879
    %v4989 = vadd.f32 %v4755, %v4879
    %v4990 = vadd.f32 %v4759, %v4879
    %v4991 = vadd.f32 %v4763, %v4879
    %v4992 = vadd.f32 %v4767, %v4879
    %v4993 = vadd.f32 %v4771, %v4879
    %v4994 = vadd.f32 %v4775, %v4879
    %v4995 = vadd.f32 %v4779, %v4879
    %v4996 = vadd.f32 %v4783, %v4879
    %v4997 = vadd.f32 %v4787, %v4879
    %v4998 = vadd.f32 %v4791, %v4879
    %v4999 = vadd.f32 %v4795, %v4879
    %v5000 = vadd.f32 %v4799, %v4879
    %v5001 = vadd.f32 %v4803, %v4880
    %v5002 = vadd.f32 %v4807, %v4880
    %v5003 = vadd.f32 %v4811, %v4880
    %v5004 = vadd.f32 %v4815, %v4880
    %v5005 = vadd.f32 %v4819, %v4880
    %v5006 = vadd.f32 %v4823, %v4880
    %v5007 = vadd.f32 %v4827, %v4880
    %v5008 = vadd.f32 %v4831, %v4880
    %v5009 = vadd.f32 %v4835, %v4880
    %v5010 = vadd.f32 %v4839, %v4880
    %v5011 = vadd.f32 %v4843, %v4880
    %v5012 = vadd.f32 %v4847, %v4880
    %v5013 = vadd.f32 %v4851, %v4880
    %v5014 = vadd.f32 %v4855, %v4880
    %v5015 = vadd.f32 %v4859, %v4880
    %v5016 = vadd.f32 %v4863, %v4880
    %v5017 = vtanh.pop %v4889
    %v5018 = vtanh.pop %v4890
    %v5019 = vtanh.pop %v4891
    %v5020 = vtanh.pop %v4892
    %v5021 = vtanh.pop %v4893
    %v5022 = vtanh.pop %v4894
    %v5023 = vtanh.pop %v4895
    %v5024 = vtanh.pop %v4896
    %v5025 = vtanh.pop %v4897
    %v5026 = vtanh.pop %v4898
    %v5027 = vtanh.pop %v4899
    %v5028 = vtanh.pop %v4900
    %v5029 = vtanh.pop %v4901
    %v5030 = vtanh.pop %v4902
    %v5031 = vtanh.pop %v4903
    %v5032 = vtanh.pop %v4904
    %v5033 = vtanh.pop %v4905
    %v5034 = vtanh.pop %v4906
    %v5035 = vtanh.pop %v4907
    %v5036 = vtanh.pop %v4908
    %v5037 = vtanh.pop %v4909
    %v5038 = vtanh.pop %v4910
    %v5039 = vtanh.pop %v4911
    %v5040 = vtanh.pop %v4912
    %v5041 = vtanh.pop %v4913
    %v5042 = vtanh.pop %v4914
    %v5043 = vtanh.pop %v4915
    %v5044 = vtanh.pop %v4916
    %v5045 = vtanh.pop %v4917
    %v5046 = vtanh.pop %v4918
    %v5047 = vtanh.pop %v4919
    %v5048 = vtanh.pop %v4920
    %v5049 = vtanh.pop %v4921
    %v5050 = vtanh.pop %v4922
    %v5051 = vtanh.pop %v4923
    %v5052 = vtanh.pop %v4924
    %v5053 = vtanh.pop %v4925
    %v5054 = vtanh.pop %v4926
    %v5055 = vtanh.pop %v4927
    %v5056 = vtanh.pop %v4928
    %v5057 = vtanh.pop %v4929
    %v5058 = vtanh.pop %v4930
    %v5059 = vtanh.pop %v4931
    %v5060 = vtanh.pop %v4932
    %v5061 = vtanh.pop %v4933
    %v5062 = vtanh.pop %v4934
    %v5063 = vtanh.pop %v4935
    %v5064 = vtanh.pop %v4936
    %v5065 = vtanh.pop %v4937
    %v5066 = vtanh.pop %v4938
    %v5067 = vtanh.pop %v4939
    %v5068 = vtanh.pop %v4940
    %v5069 = vtanh.pop %v4941
    %v5070 = vtanh.pop %v4942
    %v5071 = vtanh.pop %v4943
    %v5072 = vtanh.pop %v4944
    %v5073 = vtanh.pop %v4945
    %v5074 = vtanh.pop %v4946
    %v5075 = vtanh.pop %v4947
    %v5076 = vtanh.pop %v4948
    %v5077 = vtanh.pop %v4949
    %v5078 = vtanh.pop %v4950
    %v5079 = vtanh.pop %v4951
    %v5080 = vtanh.pop %v4952
    %v5081 = vtanh.pop %v4953
    %v5082 = vtanh.pop %v4954
    %v5083 = vtanh.pop %v4955
    %v5084 = vtanh.pop %v4956
    %v5085 = vtanh.pop %v4957
    %v5086 = vtanh.pop %v4958
    %v5087 = vtanh.pop %v4959
    %v5088 = vtanh.pop %v4960
    %v5089 = vtanh.pop %v4961
    %v5090 = vtanh.pop %v4962
    %v5091 = vtanh.pop %v4963
    %v5092 = vtanh.pop %v4964
    %v5093 = vtanh.pop %v4965
    %v5094 = vtanh.pop %v4966
    %v5095 = vtanh.pop %v4967
    %v5096 = vtanh.pop %v4968
    %v5097 = vtanh.pop %v4969
    %v5098 = vtanh.pop %v4970
    %v5099 = vtanh.pop %v4971
    %v5100 = vtanh.pop %v4972
    %v5101 = vtanh.pop %v4973
    %v5102 = vtanh.pop %v4974
    %v5103 = vtanh.pop %v4975
    %v5104 = vtanh.pop %v4976
    %v5105 = vtanh.pop %v4977
    %v5106 = vtanh.pop %v4978
    %v5107 = vtanh.pop %v4979
    %v5108 = vtanh.pop %v4980
    %v5109 = vtanh.pop %v4981
    %v5110 = vtanh.pop %v4982
    %v5111 = vtanh.pop %v4983
    %v5112 = vtanh.pop %v4984
    %v5113 = vtanh.pop %v4985
    %v5114 = vtanh.pop %v4986
    %v5115 = vtanh.pop %v4987
    %v5116 = vtanh.pop %v4988
    %v5117 = vtanh.pop %v4989
    %v5118 = vtanh.pop %v4990
    %v5119 = vtanh.pop %v4991
    %v5120 = vtanh.pop %v4992
    %v5121 = vtanh.pop %v4993
    %v5122 = vtanh.pop %v4994
    %v5123 = vtanh.pop %v4995
    %v5124 = vtanh.pop %v4996
    %v5125 = vtanh.pop %v4997
    %v5126 = vtanh.pop %v4998
    %v5127 = vtanh.pop %v4999
    %v5128 = vtanh.pop %v5000
    %v5129 = vtanh.pop %v5001
    %v5130 = vtanh.pop %v5002
    %v5131 = vtanh.pop %v5003
    %v5132 = vtanh.pop %v5004
    %v5133 = vtanh.pop %v5005
    %v5134 = vtanh.pop %v5006
    %v5135 = vtanh.pop %v5007
    %v5136 = vtanh.pop %v5008
    %v5137 = vtanh.pop %v5009
    %v5138 = vtanh.pop %v5010
    %v5139 = vtanh.pop %v5011
    %v5140 = vtanh.pop %v5012
    %v5141 = vtanh.pop %v5013
    %v5142 = vtanh.pop %v5014
    %v5143 = vtanh.pop %v5015
    %v5144 = vtanh.pop %v5016
    %v5146 = vperm.slane %v245, 0
    %v5148 = vmul.f32 %v5017, %v5146
    %v5149 = vmul.f32 %v5018, %v5146
    %v5150 = vmul.f32 %v5019, %v5146
    %v5151 = vmul.f32 %v5020, %v5146
    %v5152 = vmul.f32 %v5021, %v5146
    %v5153 = vmul.f32 %v5022, %v5146
    %v5154 = vmul.f32 %v5023, %v5146
    %v5155 = vmul.f32 %v5024, %v5146
    %v5156 = vmul.f32 %v5025, %v5146
    %v5157 = vmul.f32 %v5026, %v5146
    %v5158 = vmul.f32 %v5027, %v5146
    %v5159 = vmul.f32 %v5028, %v5146
    %v5160 = vmul.f32 %v5029, %v5146
    %v5161 = vmul.f32 %v5030, %v5146
    %v5162 = vmul.f32 %v5031, %v5146
    %v5163 = vmul.f32 %v5032, %v5146
    %v5164 = vmul.f32 %v5033, %v5146
    %v5165 = vmul.f32 %v5034, %v5146
    %v5166 = vmul.f32 %v5035, %v5146
    %v5167 = vmul.f32 %v5036, %v5146
    %v5168 = vmul.f32 %v5037, %v5146
    %v5169 = vmul.f32 %v5038, %v5146
    %v5170 = vmul.f32 %v5039, %v5146
    %v5171 = vmul.f32 %v5040, %v5146
    %v5172 = vmul.f32 %v5041, %v5146
    %v5173 = vmul.f32 %v5042, %v5146
    %v5174 = vmul.f32 %v5043, %v5146
    %v5175 = vmul.f32 %v5044, %v5146
    %v5176 = vmul.f32 %v5045, %v5146
    %v5177 = vmul.f32 %v5046, %v5146
    %v5178 = vmul.f32 %v5047, %v5146
    %v5179 = vmul.f32 %v5048, %v5146
    %v5180 = vmul.f32 %v5049, %v5146
    %v5181 = vmul.f32 %v5050, %v5146
    %v5182 = vmul.f32 %v5051, %v5146
    %v5183 = vmul.f32 %v5052, %v5146
    %v5184 = vmul.f32 %v5053, %v5146
    %v5185 = vmul.f32 %v5054, %v5146
    %v5186 = vmul.f32 %v5055, %v5146
    %v5187 = vmul.f32 %v5056, %v5146
    %v5188 = vmul.f32 %v5057, %v5146
    %v5189 = vmul.f32 %v5058, %v5146
    %v5190 = vmul.f32 %v5059, %v5146
    %v5191 = vmul.f32 %v5060, %v5146
    %v5192 = vmul.f32 %v5061, %v5146
    %v5193 = vmul.f32 %v5062, %v5146
    %v5194 = vmul.f32 %v5063, %v5146
    %v5195 = vmul.f32 %v5064, %v5146
    %v5196 = vmul.f32 %v5065, %v5146
    %v5197 = vmul.f32 %v5066, %v5146
    %v5198 = vmul.f32 %v5067, %v5146
    %v5199 = vmul.f32 %v5068, %v5146
    %v5200 = vmul.f32 %v5069, %v5146
    %v5201 = vmul.f32 %v5070, %v5146
    %v5202 = vmul.f32 %v5071, %v5146
    %v5203 = vmul.f32 %v5072, %v5146
    %v5204 = vmul.f32 %v5073, %v5146
    %v5205 = vmul.f32 %v5074, %v5146
    %v5206 = vmul.f32 %v5075, %v5146
    %v5207 = vmul.f32 %v5076, %v5146
    %v5208 = vmul.f32 %v5077, %v5146
    %v5209 = vmul.f32 %v5078, %v5146
    %v5210 = vmul.f32 %v5079, %v5146
    %v5211 = vmul.f32 %v5080, %v5146
    %v5212 = vmul.f32 %v5081, %v5146
    %v5213 = vmul.f32 %v5082, %v5146
    %v5214 = vmul.f32 %v5083, %v5146
    %v5215 = vmul.f32 %v5084, %v5146
    %v5216 = vmul.f32 %v5085, %v5146
    %v5217 = vmul.f32 %v5086, %v5146
    %v5218 = vmul.f32 %v5087, %v5146
    %v5219 = vmul.f32 %v5088, %v5146
    %v5220 = vmul.f32 %v5089, %v5146
    %v5221 = vmul.f32 %v5090, %v5146
    %v5222 = vmul.f32 %v5091, %v5146
    %v5223 = vmul.f32 %v5092, %v5146
    %v5224 = vmul.f32 %v5093, %v5146
    %v5225 = vmul.f32 %v5094, %v5146
    %v5226 = vmul.f32 %v5095, %v5146
    %v5227 = vmul.f32 %v5096, %v5146
    %v5228 = vmul.f32 %v5097, %v5146
    %v5229 = vmul.f32 %v5098, %v5146
    %v5230 = vmul.f32 %v5099, %v5146
    %v5231 = vmul.f32 %v5100, %v5146
    %v5232 = vmul.f32 %v5101, %v5146
    %v5233 = vmul.f32 %v5102, %v5146
    %v5234 = vmul.f32 %v5103, %v5146
    %v5235 = vmul.f32 %v5104, %v5146
    %v5236 = vmul.f32 %v5105, %v5146
    %v5237 = vmul.f32 %v5106, %v5146
    %v5238 = vmul.f32 %v5107, %v5146
    %v5239 = vmul.f32 %v5108, %v5146
    %v5240 = vmul.f32 %v5109, %v5146
    %v5241 = vmul.f32 %v5110, %v5146
    %v5242 = vmul.f32 %v5111, %v5146
    %v5243 = vmul.f32 %v5112, %v5146
    %v5244 = vmul.f32 %v5113, %v5146
    %v5245 = vmul.f32 %v5114, %v5146
    %v5246 = vmul.f32 %v5115, %v5146
    %v5247 = vmul.f32 %v5116, %v5146
    %v5248 = vmul.f32 %v5117, %v5146
    %v5249 = vmul.f32 %v5118, %v5146
    %v5250 = vmul.f32 %v5119, %v5146
    %v5251 = vmul.f32 %v5120, %v5146
    %v5252 = vmul.f32 %v5121, %v5146
    %v5253 = vmul.f32 %v5122, %v5146
    %v5254 = vmul.f32 %v5123, %v5146
    %v5255 = vmul.f32 %v5124, %v5146
    %v5256 = vmul.f32 %v5125, %v5146
    %v5257 = vmul.f32 %v5126, %v5146
    %v5258 = vmul.f32 %v5127, %v5146
    %v5259 = vmul.f32 %v5128, %v5146
    %v5260 = vmul.f32 %v5129, %v5146
    %v5261 = vmul.f32 %v5130, %v5146
    %v5262 = vmul.f32 %v5131, %v5146
    %v5263 = vmul.f32 %v5132, %v5146
    %v5264 = vmul.f32 %v5133, %v5146
    %v5265 = vmul.f32 %v5134, %v5146
    %v5266 = vmul.f32 %v5135, %v5146
    %v5267 = vmul.f32 %v5136, %v5146
    %v5268 = vmul.f32 %v5137, %v5146
    %v5269 = vmul.f32 %v5138, %v5146
    %v5270 = vmul.f32 %v5139, %v5146
    %v5271 = vmul.f32 %v5140, %v5146
    %v5272 = vmul.f32 %v5141, %v5146
    %v5273 = vmul.f32 %v5142, %v5146
    %v5274 = vmul.f32 %v5143, %v5146
    %v5275 = vmul.f32 %v5144, %v5146
    %5276 = vadd.xlane.f32.xlu0 %v5148
    %v5277 = vpop.xlane.xlu0 %5276
    %5278 = vadd.xlane.f32.xlu0 %v5149
    %v5279 = vpop.xlane.xlu0 %5278
    %5280 = vadd.xlane.f32.xlu0 %v5150
    %v5281 = vpop.xlane.xlu0 %5280
    %5282 = vadd.xlane.f32.xlu0 %v5151
    %v5283 = vpop.xlane.xlu0 %5282
    %5284 = vadd.xlane.f32.xlu0 %v5152
    %v5285 = vpop.xlane.xlu0 %5284
    %5286 = vadd.xlane.f32.xlu0 %v5153
    %v5287 = vpop.xlane.xlu0 %5286
    %5288 = vadd.xlane.f32.xlu0 %v5154
    %v5289 = vpop.xlane.xlu0 %5288
    %5290 = vadd.xlane.f32.xlu0 %v5155
    %v5291 = vpop.xlane.xlu0 %5290
    %5292 = vadd.xlane.f32.xlu0 %v5156
    %v5293 = vpop.xlane.xlu0 %5292
    %5294 = vadd.xlane.f32.xlu0 %v5157
    %v5295 = vpop.xlane.xlu0 %5294
    %5296 = vadd.xlane.f32.xlu0 %v5158
    %v5297 = vpop.xlane.xlu0 %5296
    %5298 = vadd.xlane.f32.xlu0 %v5159
    %v5299 = vpop.xlane.xlu0 %5298
    %5300 = vadd.xlane.f32.xlu0 %v5160
    %v5301 = vpop.xlane.xlu0 %5300
    %5302 = vadd.xlane.f32.xlu0 %v5161
    %v5303 = vpop.xlane.xlu0 %5302
    %5304 = vadd.xlane.f32.xlu0 %v5162
    %v5305 = vpop.xlane.xlu0 %5304
    %5306 = vadd.xlane.f32.xlu0 %v5163
    %v5307 = vpop.xlane.xlu0 %5306
    %5308 = vadd.xlane.f32.xlu0 %v5164
    %v5309 = vpop.xlane.xlu0 %5308
    %5310 = vadd.xlane.f32.xlu0 %v5165
    %v5311 = vpop.xlane.xlu0 %5310
    %5312 = vadd.xlane.f32.xlu0 %v5166
    %v5313 = vpop.xlane.xlu0 %5312
    %5314 = vadd.xlane.f32.xlu0 %v5167
    %v5315 = vpop.xlane.xlu0 %5314
    %5316 = vadd.xlane.f32.xlu0 %v5168
    %v5317 = vpop.xlane.xlu0 %5316
    %5318 = vadd.xlane.f32.xlu0 %v5169
    %v5319 = vpop.xlane.xlu0 %5318
    %5320 = vadd.xlane.f32.xlu0 %v5170
    %v5321 = vpop.xlane.xlu0 %5320
    %5322 = vadd.xlane.f32.xlu0 %v5171
    %v5323 = vpop.xlane.xlu0 %5322
    %5324 = vadd.xlane.f32.xlu0 %v5172
    %v5325 = vpop.xlane.xlu0 %5324
    %5326 = vadd.xlane.f32.xlu0 %v5173
    %v5327 = vpop.xlane.xlu0 %5326
    %5328 = vadd.xlane.f32.xlu0 %v5174
    %v5329 = vpop.xlane.xlu0 %5328
    %5330 = vadd.xlane.f32.xlu0 %v5175
    %v5331 = vpop.xlane.xlu0 %5330
    %5332 = vadd.xlane.f32.xlu0 %v5176
    %v5333 = vpop.xlane.xlu0 %5332
    %5334 = vadd.xlane.f32.xlu0 %v5177
    %v5335 = vpop.xlane.xlu0 %5334
    %5336 = vadd.xlane.f32.xlu0 %v5178
    %v5337 = vpop.xlane.xlu0 %5336
    %5338 = vadd.xlane.f32.xlu0 %v5179
    %v5339 = vpop.xlane.xlu0 %5338
    %5340 = vadd.xlane.f32.xlu0 %v5180
    %v5341 = vpop.xlane.xlu0 %5340
    %5342 = vadd.xlane.f32.xlu0 %v5181
    %v5343 = vpop.xlane.xlu0 %5342
    %5344 = vadd.xlane.f32.xlu0 %v5182
    %v5345 = vpop.xlane.xlu0 %5344
    %5346 = vadd.xlane.f32.xlu0 %v5183
    %v5347 = vpop.xlane.xlu0 %5346
    %5348 = vadd.xlane.f32.xlu0 %v5184
    %v5349 = vpop.xlane.xlu0 %5348
    %5350 = vadd.xlane.f32.xlu0 %v5185
    %v5351 = vpop.xlane.xlu0 %5350
    %5352 = vadd.xlane.f32.xlu0 %v5186
    %v5353 = vpop.xlane.xlu0 %5352
    %5354 = vadd.xlane.f32.xlu0 %v5187
    %v5355 = vpop.xlane.xlu0 %5354
    %5356 = vadd.xlane.f32.xlu0 %v5188
    %v5357 = vpop.xlane.xlu0 %5356
    %5358 = vadd.xlane.f32.xlu0 %v5189
    %v5359 = vpop.xlane.xlu0 %5358
    %5360 = vadd.xlane.f32.xlu0 %v5190
    %v5361 = vpop.xlane.xlu0 %5360
    %5362 = vadd.xlane.f32.xlu0 %v5191
    %v5363 = vpop.xlane.xlu0 %5362
    %5364 = vadd.xlane.f32.xlu0 %v5192
    %v5365 = vpop.xlane.xlu0 %5364
    %5366 = vadd.xlane.f32.xlu0 %v5193
    %v5367 = vpop.xlane.xlu0 %5366
    %5368 = vadd.xlane.f32.xlu0 %v5194
    %v5369 = vpop.xlane.xlu0 %5368
    %5370 = vadd.xlane.f32.xlu0 %v5195
    %v5371 = vpop.xlane.xlu0 %5370
    %5372 = vadd.xlane.f32.xlu0 %v5196
    %v5373 = vpop.xlane.xlu0 %5372
    %5374 = vadd.xlane.f32.xlu0 %v5197
    %v5375 = vpop.xlane.xlu0 %5374
    %5376 = vadd.xlane.f32.xlu0 %v5198
    %v5377 = vpop.xlane.xlu0 %5376
    %5378 = vadd.xlane.f32.xlu0 %v5199
    %v5379 = vpop.xlane.xlu0 %5378
    %5380 = vadd.xlane.f32.xlu0 %v5200
    %v5381 = vpop.xlane.xlu0 %5380
    %5382 = vadd.xlane.f32.xlu0 %v5201
    %v5383 = vpop.xlane.xlu0 %5382
    %5384 = vadd.xlane.f32.xlu0 %v5202
    %v5385 = vpop.xlane.xlu0 %5384
    %5386 = vadd.xlane.f32.xlu0 %v5203
    %v5387 = vpop.xlane.xlu0 %5386
    %5388 = vadd.xlane.f32.xlu0 %v5204
    %v5389 = vpop.xlane.xlu0 %5388
    %5390 = vadd.xlane.f32.xlu0 %v5205
    %v5391 = vpop.xlane.xlu0 %5390
    %5392 = vadd.xlane.f32.xlu0 %v5206
    %v5393 = vpop.xlane.xlu0 %5392
    %5394 = vadd.xlane.f32.xlu0 %v5207
    %v5395 = vpop.xlane.xlu0 %5394
    %5396 = vadd.xlane.f32.xlu0 %v5208
    %v5397 = vpop.xlane.xlu0 %5396
    %5398 = vadd.xlane.f32.xlu0 %v5209
    %v5399 = vpop.xlane.xlu0 %5398
    %5400 = vadd.xlane.f32.xlu0 %v5210
    %v5401 = vpop.xlane.xlu0 %5400
    %5402 = vadd.xlane.f32.xlu0 %v5211
    %v5403 = vpop.xlane.xlu0 %5402
    %5404 = vadd.xlane.f32.xlu0 %v5212
    %v5405 = vpop.xlane.xlu0 %5404
    %5406 = vadd.xlane.f32.xlu0 %v5213
    %v5407 = vpop.xlane.xlu0 %5406
    %5408 = vadd.xlane.f32.xlu0 %v5214
    %v5409 = vpop.xlane.xlu0 %5408
    %5410 = vadd.xlane.f32.xlu0 %v5215
    %v5411 = vpop.xlane.xlu0 %5410
    %5412 = vadd.xlane.f32.xlu0 %v5216
    %v5413 = vpop.xlane.xlu0 %5412
    %5414 = vadd.xlane.f32.xlu0 %v5217
    %v5415 = vpop.xlane.xlu0 %5414
    %5416 = vadd.xlane.f32.xlu0 %v5218
    %v5417 = vpop.xlane.xlu0 %5416
    %5418 = vadd.xlane.f32.xlu0 %v5219
    %v5419 = vpop.xlane.xlu0 %5418
    %5420 = vadd.xlane.f32.xlu0 %v5220
    %v5421 = vpop.xlane.xlu0 %5420
    %5422 = vadd.xlane.f32.xlu0 %v5221
    %v5423 = vpop.xlane.xlu0 %5422
    %5424 = vadd.xlane.f32.xlu0 %v5222
    %v5425 = vpop.xlane.xlu0 %5424
    %5426 = vadd.xlane.f32.xlu0 %v5223
    %v5427 = vpop.xlane.xlu0 %5426
    %5428 = vadd.xlane.f32.xlu0 %v5224
    %v5429 = vpop.xlane.xlu0 %5428
    %5430 = vadd.xlane.f32.xlu0 %v5225
    %v5431 = vpop.xlane.xlu0 %5430
    %5432 = vadd.xlane.f32.xlu0 %v5226
    %v5433 = vpop.xlane.xlu0 %5432
    %5434 = vadd.xlane.f32.xlu0 %v5227
    %v5435 = vpop.xlane.xlu0 %5434
    %5436 = vadd.xlane.f32.xlu0 %v5228
    %v5437 = vpop.xlane.xlu0 %5436
    %5438 = vadd.xlane.f32.xlu0 %v5229
    %v5439 = vpop.xlane.xlu0 %5438
    %5440 = vadd.xlane.f32.xlu0 %v5230
    %v5441 = vpop.xlane.xlu0 %5440
    %5442 = vadd.xlane.f32.xlu0 %v5231
    %v5443 = vpop.xlane.xlu0 %5442
    %5444 = vadd.xlane.f32.xlu0 %v5232
    %v5445 = vpop.xlane.xlu0 %5444
    %5446 = vadd.xlane.f32.xlu0 %v5233
    %v5447 = vpop.xlane.xlu0 %5446
    %5448 = vadd.xlane.f32.xlu0 %v5234
    %v5449 = vpop.xlane.xlu0 %5448
    %5450 = vadd.xlane.f32.xlu0 %v5235
    %v5451 = vpop.xlane.xlu0 %5450
    %5452 = vadd.xlane.f32.xlu0 %v5236
    %v5453 = vpop.xlane.xlu0 %5452
    %5454 = vadd.xlane.f32.xlu0 %v5237
    %v5455 = vpop.xlane.xlu0 %5454
    %5456 = vadd.xlane.f32.xlu0 %v5238
    %v5457 = vpop.xlane.xlu0 %5456
    %5458 = vadd.xlane.f32.xlu0 %v5239
    %v5459 = vpop.xlane.xlu0 %5458
    %5460 = vadd.xlane.f32.xlu0 %v5240
    %v5461 = vpop.xlane.xlu0 %5460
    %5462 = vadd.xlane.f32.xlu0 %v5241
    %v5463 = vpop.xlane.xlu0 %5462
    %5464 = vadd.xlane.f32.xlu0 %v5242
    %v5465 = vpop.xlane.xlu0 %5464
    %5466 = vadd.xlane.f32.xlu0 %v5243
    %v5467 = vpop.xlane.xlu0 %5466
    %5468 = vadd.xlane.f32.xlu0 %v5244
    %v5469 = vpop.xlane.xlu0 %5468
    %5470 = vadd.xlane.f32.xlu0 %v5245
    %v5471 = vpop.xlane.xlu0 %5470
    %5472 = vadd.xlane.f32.xlu0 %v5246
    %v5473 = vpop.xlane.xlu0 %5472
    %5474 = vadd.xlane.f32.xlu0 %v5247
    %v5475 = vpop.xlane.xlu0 %5474
    %5476 = vadd.xlane.f32.xlu0 %v5248
    %v5477 = vpop.xlane.xlu0 %5476
    %5478 = vadd.xlane.f32.xlu0 %v5249
    %v5479 = vpop.xlane.xlu0 %5478
    %5480 = vadd.xlane.f32.xlu0 %v5250
    %v5481 = vpop.xlane.xlu0 %5480
    %5482 = vadd.xlane.f32.xlu0 %v5251
    %v5483 = vpop.xlane.xlu0 %5482
    %5484 = vadd.xlane.f32.xlu0 %v5252
    %v5485 = vpop.xlane.xlu0 %5484
    %5486 = vadd.xlane.f32.xlu0 %v5253
    %v5487 = vpop.xlane.xlu0 %5486
    %5488 = vadd.xlane.f32.xlu0 %v5254
    %v5489 = vpop.xlane.xlu0 %5488
    %5490 = vadd.xlane.f32.xlu0 %v5255
    %v5491 = vpop.xlane.xlu0 %5490
    %5492 = vadd.xlane.f32.xlu0 %v5256
    %v5493 = vpop.xlane.xlu0 %5492
    %5494 = vadd.xlane.f32.xlu0 %v5257
    %v5495 = vpop.xlane.xlu0 %5494
    %5496 = vadd.xlane.f32.xlu0 %v5258
    %v5497 = vpop.xlane.xlu0 %5496
    %5498 = vadd.xlane.f32.xlu0 %v5259
    %v5499 = vpop.xlane.xlu0 %5498
    %5500 = vadd.xlane.f32.xlu0 %v5260
    %v5501 = vpop.xlane.xlu0 %5500
    %5502 = vadd.xlane.f32.xlu0 %v5261
    %v5503 = vpop.xlane.xlu0 %5502
    %5504 = vadd.xlane.f32.xlu0 %v5262
    %v5505 = vpop.xlane.xlu0 %5504
    %5506 = vadd.xlane.f32.xlu0 %v5263
    %v5507 = vpop.xlane.xlu0 %5506
    %5508 = vadd.xlane.f32.xlu0 %v5264
    %v5509 = vpop.xlane.xlu0 %5508
    %5510 = vadd.xlane.f32.xlu0 %v5265
    %v5511 = vpop.xlane.xlu0 %5510
    %5512 = vadd.xlane.f32.xlu0 %v5266
    %v5513 = vpop.xlane.xlu0 %5512
    %5514 = vadd.xlane.f32.xlu0 %v5267
    %v5515 = vpop.xlane.xlu0 %5514
    %5516 = vadd.xlane.f32.xlu0 %v5268
    %v5517 = vpop.xlane.xlu0 %5516
    %5518 = vadd.xlane.f32.xlu0 %v5269
    %v5519 = vpop.xlane.xlu0 %5518
    %5520 = vadd.xlane.f32.xlu0 %v5270
    %v5521 = vpop.xlane.xlu0 %5520
    %5522 = vadd.xlane.f32.xlu0 %v5271
    %v5523 = vpop.xlane.xlu0 %5522
    %5524 = vadd.xlane.f32.xlu0 %v5272
    %v5525 = vpop.xlane.xlu0 %5524
    %5526 = vadd.xlane.f32.xlu0 %v5273
    %v5527 = vpop.xlane.xlu0 %5526
    %5528 = vadd.xlane.f32.xlu0 %v5274
    %v5529 = vpop.xlane.xlu0 %5528
    %5530 = vadd.xlane.f32.xlu0 %v5275
    %v5531 = vpop.xlane.xlu0 %5530
    %v5660 = vlaneseq
    %v5661 = vand.u32 %v5660, 127
    %v5662 = vperm.slane %v5277, %v5661
    %v5663 = vadd.s32 %v5661, 4294967288
    %v5664 = vperm.slane %v5279, %v5663
    %vm5665 = vcmask 130112
    %v5666 = vsel %vm5665, %v5664, %v5662
    %v5667 = vadd.s32 %v5661, 4294967280
    %v5668 = vperm.slane %v5281, %v5667
    %vm5669 = vcmask 195712
    %v5670 = vsel %vm5669, %v5668, %v5666
    %v5671 = vadd.s32 %v5661, 4294967272
    %v5672 = vperm.slane %v5283, %v5671
    %vm5673 = vcmask 261312
    %v5674 = vsel %vm5673, %v5672, %v5670
    %v5675 = vadd.s32 %v5661, 4294967264
    %v5676 = vperm.slane %v5285, %v5675
    %vm5677 = vcmask 326912
    %v5678 = vsel %vm5677, %v5676, %v5674
    %v5679 = vadd.s32 %v5661, 4294967256
    %v5680 = vperm.slane %v5287, %v5679
    %vm5681 = vcmask 392512
    %v5682 = vsel %vm5681, %v5680, %v5678
    %v5683 = vadd.s32 %v5661, 4294967248
    %v5684 = vperm.slane %v5289, %v5683
    %vm5685 = vcmask 458112
    %v5686 = vsel %vm5685, %v5684, %v5682
    %v5687 = vadd.s32 %v5661, 4294967240
    %v5688 = vperm.slane %v5291, %v5687
    %vm5689 = vcmask 523712
    %v5690 = vsel %vm5689, %v5688, %v5686
    %v5691 = vadd.s32 %v5661, 4294967232
    %v5692 = vperm.slane %v5293, %v5691
    %vm5693 = vcmask 589312
    %v5694 = vsel %vm5693, %v5692, %v5690
    %v5695 = vadd.s32 %v5661, 4294967224
    %v5696 = vperm.slane %v5295, %v5695
    %vm5697 = vcmask 654912
    %v5698 = vsel %vm5697, %v5696, %v5694
    %v5699 = vadd.s32 %v5661, 4294967216
    %v5700 = vperm.slane %v5297, %v5699
    %vm5701 = vcmask 720512
    %v5702 = vsel %vm5701, %v5700, %v5698
    %v5703 = vadd.s32 %v5661, 4294967208
    %v5704 = vperm.slane %v5299, %v5703
    %vm5705 = vcmask 786112
    %v5706 = vsel %vm5705, %v5704, %v5702
    %v5707 = vadd.s32 %v5661, 4294967200
    %v5708 = vperm.slane %v5301, %v5707
    %vm5709 = vcmask 851712
    %v5710 = vsel %vm5709, %v5708, %v5706
    %v5711 = vadd.s32 %v5661, 4294967192
    %v5712 = vperm.slane %v5303, %v5711
    %vm5713 = vcmask 917312
    %v5714 = vsel %vm5713, %v5712, %v5710
    %v5715 = vadd.s32 %v5661, 4294967184
    %v5716 = vperm.slane %v5305, %v5715
    %vm5717 = vcmask 982912
    %v5718 = vsel %vm5717, %v5716, %v5714
    %v5719 = vadd.s32 %v5661, 4294967176
    %v5720 = vperm.slane %v5307, %v5719
    %vm5721 = vcmask 1048512
    %v5722 = vsel %vm5721, %v5720, %v5718
    %v5723 = vperm.slane %v5309, %v5661
    %v5724 = vperm.slane %v5311, %v5663
    %v5725 = vsel %vm5665, %v5724, %v5723
    %v5726 = vperm.slane %v5313, %v5667
    %v5727 = vsel %vm5669, %v5726, %v5725
    %v5728 = vperm.slane %v5315, %v5671
    %v5729 = vsel %vm5673, %v5728, %v5727
    %v5730 = vperm.slane %v5317, %v5675
    %v5731 = vsel %vm5677, %v5730, %v5729
    %v5732 = vperm.slane %v5319, %v5679
    %v5733 = vsel %vm5681, %v5732, %v5731
    %v5734 = vperm.slane %v5321, %v5683
    %v5735 = vsel %vm5685, %v5734, %v5733
    %v5736 = vperm.slane %v5323, %v5687
    %v5737 = vsel %vm5689, %v5736, %v5735
    %v5738 = vperm.slane %v5325, %v5691
    %v5739 = vsel %vm5693, %v5738, %v5737
    %v5740 = vperm.slane %v5327, %v5695
    %v5741 = vsel %vm5697, %v5740, %v5739
    %v5742 = vperm.slane %v5329, %v5699
    %v5743 = vsel %vm5701, %v5742, %v5741
    %v5744 = vperm.slane %v5331, %v5703
    %v5745 = vsel %vm5705, %v5744, %v5743
    %v5746 = vperm.slane %v5333, %v5707
    %v5747 = vsel %vm5709, %v5746, %v5745
    %v5748 = vperm.slane %v5335, %v5711
    %v5749 = vsel %vm5713, %v5748, %v5747
    %v5750 = vperm.slane %v5337, %v5715
    %v5751 = vsel %vm5717, %v5750, %v5749
    %v5752 = vperm.slane %v5339, %v5719
    %v5753 = vsel %vm5721, %v5752, %v5751
    %v5754 = vperm.slane %v5341, %v5661
    %v5755 = vperm.slane %v5343, %v5663
    %v5756 = vsel %vm5665, %v5755, %v5754
    %v5757 = vperm.slane %v5345, %v5667
    %v5758 = vsel %vm5669, %v5757, %v5756
    %v5759 = vperm.slane %v5347, %v5671
    %v5760 = vsel %vm5673, %v5759, %v5758
    %v5761 = vperm.slane %v5349, %v5675
    %v5762 = vsel %vm5677, %v5761, %v5760
    %v5763 = vperm.slane %v5351, %v5679
    %v5764 = vsel %vm5681, %v5763, %v5762
    %v5765 = vperm.slane %v5353, %v5683
    %v5766 = vsel %vm5685, %v5765, %v5764
    %v5767 = vperm.slane %v5355, %v5687
    %v5768 = vsel %vm5689, %v5767, %v5766
    %v5769 = vperm.slane %v5357, %v5691
    %v5770 = vsel %vm5693, %v5769, %v5768
    %v5771 = vperm.slane %v5359, %v5695
    %v5772 = vsel %vm5697, %v5771, %v5770
    %v5773 = vperm.slane %v5361, %v5699
    %v5774 = vsel %vm5701, %v5773, %v5772
    %v5775 = vperm.slane %v5363, %v5703
    %v5776 = vsel %vm5705, %v5775, %v5774
    %v5777 = vperm.slane %v5365, %v5707
    %v5778 = vsel %vm5709, %v5777, %v5776
    %v5779 = vperm.slane %v5367, %v5711
    %v5780 = vsel %vm5713, %v5779, %v5778
    %v5781 = vperm.slane %v5369, %v5715
    %v5782 = vsel %vm5717, %v5781, %v5780
    %v5783 = vperm.slane %v5371, %v5719
    %v5784 = vsel %vm5721, %v5783, %v5782
    %v5785 = vperm.slane %v5373, %v5661
    %v5786 = vperm.slane %v5375, %v5663
    %v5787 = vsel %vm5665, %v5786, %v5785
    %v5788 = vperm.slane %v5377, %v5667
    %v5789 = vsel %vm5669, %v5788, %v5787
    %v5790 = vperm.slane %v5379, %v5671
    %v5791 = vsel %vm5673, %v5790, %v5789
    %v5792 = vperm.slane %v5381, %v5675
    %v5793 = vsel %vm5677, %v5792, %v5791
    %v5794 = vperm.slane %v5383, %v5679
    %v5795 = vsel %vm5681, %v5794, %v5793
    %v5796 = vperm.slane %v5385, %v5683
    %v5797 = vsel %vm5685, %v5796, %v5795
    %v5798 = vperm.slane %v5387, %v5687
    %v5799 = vsel %vm5689, %v5798, %v5797
    %v5800 = vperm.slane %v5389, %v5691
    %v5801 = vsel %vm5693, %v5800, %v5799
    %v5802 = vperm.slane %v5391, %v5695
    %v5803 = vsel %vm5697, %v5802, %v5801
    %v5804 = vperm.slane %v5393, %v5699
    %v5805 = vsel %vm5701, %v5804, %v5803
    %v5806 = vperm.slane %v5395, %v5703
    %v5807 = vsel %vm5705, %v5806, %v5805
    %v5808 = vperm.slane %v5397, %v5707
    %v5809 = vsel %vm5709, %v5808, %v5807
    %v5810 = vperm.slane %v5399, %v5711
    %v5811 = vsel %vm5713, %v5810, %v5809
    %v5812 = vperm.slane %v5401, %v5715
    %v5813 = vsel %vm5717, %v5812, %v5811
    %v5814 = vperm.slane %v5403, %v5719
    %v5815 = vsel %vm5721, %v5814, %v5813
    %v5816 = vperm.slane %v5405, %v5661
    %v5817 = vperm.slane %v5407, %v5663
    %v5818 = vsel %vm5665, %v5817, %v5816
    %v5819 = vperm.slane %v5409, %v5667
    %v5820 = vsel %vm5669, %v5819, %v5818
    %v5821 = vperm.slane %v5411, %v5671
    %v5822 = vsel %vm5673, %v5821, %v5820
    %v5823 = vperm.slane %v5413, %v5675
    %v5824 = vsel %vm5677, %v5823, %v5822
    %v5825 = vperm.slane %v5415, %v5679
    %v5826 = vsel %vm5681, %v5825, %v5824
    %v5827 = vperm.slane %v5417, %v5683
    %v5828 = vsel %vm5685, %v5827, %v5826
    %v5829 = vperm.slane %v5419, %v5687
    %v5830 = vsel %vm5689, %v5829, %v5828
    %v5831 = vperm.slane %v5421, %v5691
    %v5832 = vsel %vm5693, %v5831, %v5830
    %v5833 = vperm.slane %v5423, %v5695
    %v5834 = vsel %vm5697, %v5833, %v5832
    %v5835 = vperm.slane %v5425, %v5699
    %v5836 = vsel %vm5701, %v5835, %v5834
    %v5837 = vperm.slane %v5427, %v5703
    %v5838 = vsel %vm5705, %v5837, %v5836
    %v5839 = vperm.slane %v5429, %v5707
    %v5840 = vsel %vm5709, %v5839, %v5838
    %v5841 = vperm.slane %v5431, %v5711
    %v5842 = vsel %vm5713, %v5841, %v5840
    %v5843 = vperm.slane %v5433, %v5715
    %v5844 = vsel %vm5717, %v5843, %v5842
    %v5845 = vperm.slane %v5435, %v5719
    %v5846 = vsel %vm5721, %v5845, %v5844
    %v5847 = vperm.slane %v5437, %v5661
    %v5848 = vperm.slane %v5439, %v5663
    %v5849 = vsel %vm5665, %v5848, %v5847
    %v5850 = vperm.slane %v5441, %v5667
    %v5851 = vsel %vm5669, %v5850, %v5849
    %v5852 = vperm.slane %v5443, %v5671
    %v5853 = vsel %vm5673, %v5852, %v5851
    %v5854 = vperm.slane %v5445, %v5675
    %v5855 = vsel %vm5677, %v5854, %v5853
    %v5856 = vperm.slane %v5447, %v5679
    %v5857 = vsel %vm5681, %v5856, %v5855
    %v5858 = vperm.slane %v5449, %v5683
    %v5859 = vsel %vm5685, %v5858, %v5857
    %v5860 = vperm.slane %v5451, %v5687
    %v5861 = vsel %vm5689, %v5860, %v5859
    %v5862 = vperm.slane %v5453, %v5691
    %v5863 = vsel %vm5693, %v5862, %v5861
    %v5864 = vperm.slane %v5455, %v5695
    %v5865 = vsel %vm5697, %v5864, %v5863
    %v5866 = vperm.slane %v5457, %v5699
    %v5867 = vsel %vm5701, %v5866, %v5865
    %v5868 = vperm.slane %v5459, %v5703
    %v5869 = vsel %vm5705, %v5868, %v5867
    %v5870 = vperm.slane %v5461, %v5707
    %v5871 = vsel %vm5709, %v5870, %v5869
    %v5872 = vperm.slane %v5463, %v5711
    %v5873 = vsel %vm5713, %v5872, %v5871
    %v5874 = vperm.slane %v5465, %v5715
    %v5875 = vsel %vm5717, %v5874, %v5873
    %v5876 = vperm.slane %v5467, %v5719
    %v5877 = vsel %vm5721, %v5876, %v5875
    %v5878 = vperm.slane %v5469, %v5661
    %v5879 = vperm.slane %v5471, %v5663
    %v5880 = vsel %vm5665, %v5879, %v5878
    %v5881 = vperm.slane %v5473, %v5667
    %v5882 = vsel %vm5669, %v5881, %v5880
    %v5883 = vperm.slane %v5475, %v5671
    %v5884 = vsel %vm5673, %v5883, %v5882
    %v5885 = vperm.slane %v5477, %v5675
    %v5886 = vsel %vm5677, %v5885, %v5884
    %v5887 = vperm.slane %v5479, %v5679
    %v5888 = vsel %vm5681, %v5887, %v5886
    %v5889 = vperm.slane %v5481, %v5683
    %v5890 = vsel %vm5685, %v5889, %v5888
    %v5891 = vperm.slane %v5483, %v5687
    %v5892 = vsel %vm5689, %v5891, %v5890
    %v5893 = vperm.slane %v5485, %v5691
    %v5894 = vsel %vm5693, %v5893, %v5892
    %v5895 = vperm.slane %v5487, %v5695
    %v5896 = vsel %vm5697, %v5895, %v5894
    %v5897 = vperm.slane %v5489, %v5699
    %v5898 = vsel %vm5701, %v5897, %v5896
    %v5899 = vperm.slane %v5491, %v5703
    %v5900 = vsel %vm5705, %v5899, %v5898
    %v5901 = vperm.slane %v5493, %v5707
    %v5902 = vsel %vm5709, %v5901, %v5900
    %v5903 = vperm.slane %v5495, %v5711
    %v5904 = vsel %vm5713, %v5903, %v5902
    %v5905 = vperm.slane %v5497, %v5715
    %v5906 = vsel %vm5717, %v5905, %v5904
    %v5907 = vperm.slane %v5499, %v5719
    %v5908 = vsel %vm5721, %v5907, %v5906
    %v5909 = vperm.slane %v5501, %v5661
    %v5910 = vperm.slane %v5503, %v5663
    %v5911 = vsel %vm5665, %v5910, %v5909
    %v5912 = vperm.slane %v5505, %v5667
    %v5913 = vsel %vm5669, %v5912, %v5911
    %v5914 = vperm.slane %v5507, %v5671
    %v5915 = vsel %vm5673, %v5914, %v5913
    %v5916 = vperm.slane %v5509, %v5675
    %v5917 = vsel %vm5677, %v5916, %v5915
    %v5918 = vperm.slane %v5511, %v5679
    %v5919 = vsel %vm5681, %v5918, %v5917
    %v5920 = vperm.slane %v5513, %v5683
    %v5921 = vsel %vm5685, %v5920, %v5919
    %v5922 = vperm.slane %v5515, %v5687
    %v5923 = vsel %vm5689, %v5922, %v5921
    %v5924 = vperm.slane %v5517, %v5691
    %v5925 = vsel %vm5693, %v5924, %v5923
    %v5926 = vperm.slane %v5519, %v5695
    %v5927 = vsel %vm5697, %v5926, %v5925
    %v5928 = vperm.slane %v5521, %v5699
    %v5929 = vsel %vm5701, %v5928, %v5927
    %v5930 = vperm.slane %v5523, %v5703
    %v5931 = vsel %vm5705, %v5930, %v5929
    %v5932 = vperm.slane %v5525, %v5707
    %v5933 = vsel %vm5709, %v5932, %v5931
    %v5934 = vperm.slane %v5527, %v5711
    %v5935 = vsel %vm5713, %v5934, %v5933
    %v5936 = vperm.slane %v5529, %v5715
    %v5937 = vsel %vm5717, %v5936, %v5935
    %v5938 = vperm.slane %v5531, %v5719
    %v5939 = vsel %vm5721, %v5938, %v5937
    %vm5940 = vcmask 1041409
    %v5941 = vsel %vm5940, %v5753, %v5722
    %vm5942 = vcmask 1042434
    %v5943 = vsel %vm5942, %v5784, %v5941
    %vm5944 = vcmask 1043459
    %v5945 = vsel %vm5944, %v5815, %v5943
    %vm5946 = vcmask 1044484
    %v5947 = vsel %vm5946, %v5846, %v5945
    %vm5948 = vcmask 1045509
    %v5949 = vsel %vm5948, %v5877, %v5947
    %vm5950 = vcmask 1046534
    %v5951 = vsel %vm5950, %v5908, %v5949
    %vm5952 = vcmask 1047559
    %v5953 = vsel %vm5952, %v5939, %v5951
    %5955 = vmax.xlane.f32.xlu0 %v5953
    %v5956 = vpop.xlane.xlu0 %5955
    %v5958 = vperm.slane %v5956, 0
    %v5959 = vperm.slane %v5956, 1
    %v5960 = vperm.slane %v5956, 2
    %v5961 = vperm.slane %v5956, 3
    %v5962 = vperm.slane %v5956, 4
    %v5963 = vperm.slane %v5956, 5
    %v5964 = vperm.slane %v5956, 6
    %v5965 = vperm.slane %v5956, 7
    %v5974 = vsub.f32 %v5277, %v5958
    %v5975 = vsub.f32 %v5279, %v5958
    %v5976 = vsub.f32 %v5281, %v5958
    %v5977 = vsub.f32 %v5283, %v5958
    %v5978 = vsub.f32 %v5285, %v5958
    %v5979 = vsub.f32 %v5287, %v5958
    %v5980 = vsub.f32 %v5289, %v5958
    %v5981 = vsub.f32 %v5291, %v5958
    %v5982 = vsub.f32 %v5293, %v5958
    %v5983 = vsub.f32 %v5295, %v5958
    %v5984 = vsub.f32 %v5297, %v5958
    %v5985 = vsub.f32 %v5299, %v5958
    %v5986 = vsub.f32 %v5301, %v5958
    %v5987 = vsub.f32 %v5303, %v5958
    %v5988 = vsub.f32 %v5305, %v5958
    %v5989 = vsub.f32 %v5307, %v5958
    %v5990 = vsub.f32 %v5309, %v5959
    %v5991 = vsub.f32 %v5311, %v5959
    %v5992 = vsub.f32 %v5313, %v5959
    %v5993 = vsub.f32 %v5315, %v5959
    %v5994 = vsub.f32 %v5317, %v5959
    %v5995 = vsub.f32 %v5319, %v5959
    %v5996 = vsub.f32 %v5321, %v5959
    %v5997 = vsub.f32 %v5323, %v5959
    %v5998 = vsub.f32 %v5325, %v5959
    %v5999 = vsub.f32 %v5327, %v5959
    %v6000 = vsub.f32 %v5329, %v5959
    %v6001 = vsub.f32 %v5331, %v5959
    %v6002 = vsub.f32 %v5333, %v5959
    %v6003 = vsub.f32 %v5335, %v5959
    %v6004 = vsub.f32 %v5337, %v5959
    %v6005 = vsub.f32 %v5339, %v5959
    %v6006 = vsub.f32 %v5341, %v5960
    %v6007 = vsub.f32 %v5343, %v5960
    %v6008 = vsub.f32 %v5345, %v5960
    %v6009 = vsub.f32 %v5347, %v5960
    %v6010 = vsub.f32 %v5349, %v5960
    %v6011 = vsub.f32 %v5351, %v5960
    %v6012 = vsub.f32 %v5353, %v5960
    %v6013 = vsub.f32 %v5355, %v5960
    %v6014 = vsub.f32 %v5357, %v5960
    %v6015 = vsub.f32 %v5359, %v5960
    %v6016 = vsub.f32 %v5361, %v5960
    %v6017 = vsub.f32 %v5363, %v5960
    %v6018 = vsub.f32 %v5365, %v5960
    %v6019 = vsub.f32 %v5367, %v5960
    %v6020 = vsub.f32 %v5369, %v5960
    %v6021 = vsub.f32 %v5371, %v5960
    %v6022 = vsub.f32 %v5373, %v5961
    %v6023 = vsub.f32 %v5375, %v5961
    %v6024 = vsub.f32 %v5377, %v5961
    %v6025 = vsub.f32 %v5379, %v5961
    %v6026 = vsub.f32 %v5381, %v5961
    %v6027 = vsub.f32 %v5383, %v5961
    %v6028 = vsub.f32 %v5385, %v5961
    %v6029 = vsub.f32 %v5387, %v5961
    %v6030 = vsub.f32 %v5389, %v5961
    %v6031 = vsub.f32 %v5391, %v5961
    %v6032 = vsub.f32 %v5393, %v5961
    %v6033 = vsub.f32 %v5395, %v5961
    %v6034 = vsub.f32 %v5397, %v5961
    %v6035 = vsub.f32 %v5399, %v5961
    %v6036 = vsub.f32 %v5401, %v5961
    %v6037 = vsub.f32 %v5403, %v5961
    %v6038 = vsub.f32 %v5405, %v5962
    %v6039 = vsub.f32 %v5407, %v5962
    %v6040 = vsub.f32 %v5409, %v5962
    %v6041 = vsub.f32 %v5411, %v5962
    %v6042 = vsub.f32 %v5413, %v5962
    %v6043 = vsub.f32 %v5415, %v5962
    %v6044 = vsub.f32 %v5417, %v5962
    %v6045 = vsub.f32 %v5419, %v5962
    %v6046 = vsub.f32 %v5421, %v5962
    %v6047 = vsub.f32 %v5423, %v5962
    %v6048 = vsub.f32 %v5425, %v5962
    %v6049 = vsub.f32 %v5427, %v5962
    %v6050 = vsub.f32 %v5429, %v5962
    %v6051 = vsub.f32 %v5431, %v5962
    %v6052 = vsub.f32 %v5433, %v5962
    %v6053 = vsub.f32 %v5435, %v5962
    %v6054 = vsub.f32 %v5437, %v5963
    %v6055 = vsub.f32 %v5439, %v5963
    %v6056 = vsub.f32 %v5441, %v5963
    %v6057 = vsub.f32 %v5443, %v5963
    %v6058 = vsub.f32 %v5445, %v5963
    %v6059 = vsub.f32 %v5447, %v5963
    %v6060 = vsub.f32 %v5449, %v5963
    %v6061 = vsub.f32 %v5451, %v5963
    %v6062 = vsub.f32 %v5453, %v5963
    %v6063 = vsub.f32 %v5455, %v5963
    %v6064 = vsub.f32 %v5457, %v5963
    %v6065 = vsub.f32 %v5459, %v5963
    %v6066 = vsub.f32 %v5461, %v5963
    %v6067 = vsub.f32 %v5463, %v5963
    %v6068 = vsub.f32 %v5465, %v5963
    %v6069 = vsub.f32 %v5467, %v5963
    %v6070 = vsub.f32 %v5469, %v5964
    %v6071 = vsub.f32 %v5471, %v5964
    %v6072 = vsub.f32 %v5473, %v5964
    %v6073 = vsub.f32 %v5475, %v5964
    %v6074 = vsub.f32 %v5477, %v5964
    %v6075 = vsub.f32 %v5479, %v5964
    %v6076 = vsub.f32 %v5481, %v5964
    %v6077 = vsub.f32 %v5483, %v5964
    %v6078 = vsub.f32 %v5485, %v5964
    %v6079 = vsub.f32 %v5487, %v5964
    %v6080 = vsub.f32 %v5489, %v5964
    %v6081 = vsub.f32 %v5491, %v5964
    %v6082 = vsub.f32 %v5493, %v5964
    %v6083 = vsub.f32 %v5495, %v5964
    %v6084 = vsub.f32 %v5497, %v5964
    %v6085 = vsub.f32 %v5499, %v5964
    %v6086 = vsub.f32 %v5501, %v5965
    %v6087 = vsub.f32 %v5503, %v5965
    %v6088 = vsub.f32 %v5505, %v5965
    %v6089 = vsub.f32 %v5507, %v5965
    %v6090 = vsub.f32 %v5509, %v5965
    %v6091 = vsub.f32 %v5511, %v5965
    %v6092 = vsub.f32 %v5513, %v5965
    %v6093 = vsub.f32 %v5515, %v5965
    %v6094 = vsub.f32 %v5517, %v5965
    %v6095 = vsub.f32 %v5519, %v5965
    %v6096 = vsub.f32 %v5521, %v5965
    %v6097 = vsub.f32 %v5523, %v5965
    %v6098 = vsub.f32 %v5525, %v5965
    %v6099 = vsub.f32 %v5527, %v5965
    %v6100 = vsub.f32 %v5529, %v5965
    %v6101 = vsub.f32 %v5531, %v5965
    %v6102 = vmul.f32 %v5974, 1.442695
    %v6103 = vpow.pop %v6102
    %v6104 = vmul.f32 %v5975, 1.442695
    %v6105 = vpow.pop %v6104
    %v6106 = vmul.f32 %v5976, 1.442695
    %v6107 = vpow.pop %v6106
    %v6108 = vmul.f32 %v5977, 1.442695
    %v6109 = vpow.pop %v6108
    %v6110 = vmul.f32 %v5978, 1.442695
    %v6111 = vpow.pop %v6110
    %v6112 = vmul.f32 %v5979, 1.442695
    %v6113 = vpow.pop %v6112
    %v6114 = vmul.f32 %v5980, 1.442695
    %v6115 = vpow.pop %v6114
    %v6116 = vmul.f32 %v5981, 1.442695
    %v6117 = vpow.pop %v6116
    %v6118 = vmul.f32 %v5982, 1.442695
    %v6119 = vpow.pop %v6118
    %v6120 = vmul.f32 %v5983, 1.442695
    %v6121 = vpow.pop %v6120
    %v6122 = vmul.f32 %v5984, 1.442695
    %v6123 = vpow.pop %v6122
    %v6124 = vmul.f32 %v5985, 1.442695
    %v6125 = vpow.pop %v6124
    %v6126 = vmul.f32 %v5986, 1.442695
    %v6127 = vpow.pop %v6126
    %v6128 = vmul.f32 %v5987, 1.442695
    %v6129 = vpow.pop %v6128
    %v6130 = vmul.f32 %v5988, 1.442695
    %v6131 = vpow.pop %v6130
    %v6132 = vmul.f32 %v5989, 1.442695
    %v6133 = vpow.pop %v6132
    %v6134 = vmul.f32 %v5990, 1.442695
    %v6135 = vpow.pop %v6134
    %v6136 = vmul.f32 %v5991, 1.442695
    %v6137 = vpow.pop %v6136
    %v6138 = vmul.f32 %v5992, 1.442695
    %v6139 = vpow.pop %v6138
    %v6140 = vmul.f32 %v5993, 1.442695
    %v6141 = vpow.pop %v6140
    %v6142 = vmul.f32 %v5994, 1.442695
    %v6143 = vpow.pop %v6142
    %v6144 = vmul.f32 %v5995, 1.442695
    %v6145 = vpow.pop %v6144
    %v6146 = vmul.f32 %v5996, 1.442695
    %v6147 = vpow.pop %v6146
    %v6148 = vmul.f32 %v5997, 1.442695
    %v6149 = vpow.pop %v6148
    %v6150 = vmul.f32 %v5998, 1.442695
    %v6151 = vpow.pop %v6150
    %v6152 = vmul.f32 %v5999, 1.442695
    %v6153 = vpow.pop %v6152
    %v6154 = vmul.f32 %v6000, 1.442695
    %v6155 = vpow.pop %v6154
    %v6156 = vmul.f32 %v6001, 1.442695
    %v6157 = vpow.pop %v6156
    %v6158 = vmul.f32 %v6002, 1.442695
    %v6159 = vpow.pop %v6158
    %v6160 = vmul.f32 %v6003, 1.442695
    %v6161 = vpow.pop %v6160
    %v6162 = vmul.f32 %v6004, 1.442695
    %v6163 = vpow.pop %v6162
    %v6164 = vmul.f32 %v6005, 1.442695
    %v6165 = vpow.pop %v6164
    %v6166 = vmul.f32 %v6006, 1.442695
    %v6167 = vpow.pop %v6166
    %v6168 = vmul.f32 %v6007, 1.442695
    %v6169 = vpow.pop %v6168
    %v6170 = vmul.f32 %v6008, 1.442695
    %v6171 = vpow.pop %v6170
    %v6172 = vmul.f32 %v6009, 1.442695
    %v6173 = vpow.pop %v6172
    %v6174 = vmul.f32 %v6010, 1.442695
    %v6175 = vpow.pop %v6174
    %v6176 = vmul.f32 %v6011, 1.442695
    %v6177 = vpow.pop %v6176
    %v6178 = vmul.f32 %v6012, 1.442695
    %v6179 = vpow.pop %v6178
    %v6180 = vmul.f32 %v6013, 1.442695
    %v6181 = vpow.pop %v6180
    %v6182 = vmul.f32 %v6014, 1.442695
    %v6183 = vpow.pop %v6182
    %v6184 = vmul.f32 %v6015, 1.442695
    %v6185 = vpow.pop %v6184
    %v6186 = vmul.f32 %v6016, 1.442695
    %v6187 = vpow.pop %v6186
    %v6188 = vmul.f32 %v6017, 1.442695
    %v6189 = vpow.pop %v6188
    %v6190 = vmul.f32 %v6018, 1.442695
    %v6191 = vpow.pop %v6190
    %v6192 = vmul.f32 %v6019, 1.442695
    %v6193 = vpow.pop %v6192
    %v6194 = vmul.f32 %v6020, 1.442695
    %v6195 = vpow.pop %v6194
    %v6196 = vmul.f32 %v6021, 1.442695
    %v6197 = vpow.pop %v6196
    %v6198 = vmul.f32 %v6022, 1.442695
    %v6199 = vpow.pop %v6198
    %v6200 = vmul.f32 %v6023, 1.442695
    %v6201 = vpow.pop %v6200
    %v6202 = vmul.f32 %v6024, 1.442695
    %v6203 = vpow.pop %v6202
    %v6204 = vmul.f32 %v6025, 1.442695
    %v6205 = vpow.pop %v6204
    %v6206 = vmul.f32 %v6026, 1.442695
    %v6207 = vpow.pop %v6206
    %v6208 = vmul.f32 %v6027, 1.442695
    %v6209 = vpow.pop %v6208
    %v6210 = vmul.f32 %v6028, 1.442695
    %v6211 = vpow.pop %v6210
    %v6212 = vmul.f32 %v6029, 1.442695
    %v6213 = vpow.pop %v6212
    %v6214 = vmul.f32 %v6030, 1.442695
    %v6215 = vpow.pop %v6214
    %v6216 = vmul.f32 %v6031, 1.442695
    %v6217 = vpow.pop %v6216
    %v6218 = vmul.f32 %v6032, 1.442695
    %v6219 = vpow.pop %v6218
    %v6220 = vmul.f32 %v6033, 1.442695
    %v6221 = vpow.pop %v6220
    %v6222 = vmul.f32 %v6034, 1.442695
    %v6223 = vpow.pop %v6222
    %v6224 = vmul.f32 %v6035, 1.442695
    %v6225 = vpow.pop %v6224
    %v6226 = vmul.f32 %v6036, 1.442695
    %v6227 = vpow.pop %v6226
    %v6228 = vmul.f32 %v6037, 1.442695
    %v6229 = vpow.pop %v6228
    %v6230 = vmul.f32 %v6038, 1.442695
    %v6231 = vpow.pop %v6230
    %v6232 = vmul.f32 %v6039, 1.442695
    %v6233 = vpow.pop %v6232
    %v6234 = vmul.f32 %v6040, 1.442695
    %v6235 = vpow.pop %v6234
    %v6236 = vmul.f32 %v6041, 1.442695
    %v6237 = vpow.pop %v6236
    %v6238 = vmul.f32 %v6042, 1.442695
    %v6239 = vpow.pop %v6238
    %v6240 = vmul.f32 %v6043, 1.442695
    %v6241 = vpow.pop %v6240
    %v6242 = vmul.f32 %v6044, 1.442695
    %v6243 = vpow.pop %v6242
    %v6244 = vmul.f32 %v6045, 1.442695
    %v6245 = vpow.pop %v6244
    %v6246 = vmul.f32 %v6046, 1.442695
    %v6247 = vpow.pop %v6246
    %v6248 = vmul.f32 %v6047, 1.442695
    %v6249 = vpow.pop %v6248
    %v6250 = vmul.f32 %v6048, 1.442695
    %v6251 = vpow.pop %v6250
    %v6252 = vmul.f32 %v6049, 1.442695
    %v6253 = vpow.pop %v6252
    %v6254 = vmul.f32 %v6050, 1.442695
    %v6255 = vpow.pop %v6254
    %v6256 = vmul.f32 %v6051, 1.442695
    %v6257 = vpow.pop %v6256
    %v6258 = vmul.f32 %v6052, 1.442695
    %v6259 = vpow.pop %v6258
    %v6260 = vmul.f32 %v6053, 1.442695
    %v6261 = vpow.pop %v6260
    %v6262 = vmul.f32 %v6054, 1.442695
    %v6263 = vpow.pop %v6262
    %v6264 = vmul.f32 %v6055, 1.442695
    %v6265 = vpow.pop %v6264
    %v6266 = vmul.f32 %v6056, 1.442695
    %v6267 = vpow.pop %v6266
    %v6268 = vmul.f32 %v6057, 1.442695
    %v6269 = vpow.pop %v6268
    %v6270 = vmul.f32 %v6058, 1.442695
    %v6271 = vpow.pop %v6270
    %v6272 = vmul.f32 %v6059, 1.442695
    %v6273 = vpow.pop %v6272
    %v6274 = vmul.f32 %v6060, 1.442695
    %v6275 = vpow.pop %v6274
    %v6276 = vmul.f32 %v6061, 1.442695
    %v6277 = vpow.pop %v6276
    %v6278 = vmul.f32 %v6062, 1.442695
    %v6279 = vpow.pop %v6278
    %v6280 = vmul.f32 %v6063, 1.442695
    %v6281 = vpow.pop %v6280
    %v6282 = vmul.f32 %v6064, 1.442695
    %v6283 = vpow.pop %v6282
    %v6284 = vmul.f32 %v6065, 1.442695
    %v6285 = vpow.pop %v6284
    %v6286 = vmul.f32 %v6066, 1.442695
    %v6287 = vpow.pop %v6286
    %v6288 = vmul.f32 %v6067, 1.442695
    %v6289 = vpow.pop %v6288
    %v6290 = vmul.f32 %v6068, 1.442695
    %v6291 = vpow.pop %v6290
    %v6292 = vmul.f32 %v6069, 1.442695
    %v6293 = vpow.pop %v6292
    %v6294 = vmul.f32 %v6070, 1.442695
    %v6295 = vpow.pop %v6294
    %v6296 = vmul.f32 %v6071, 1.442695
    %v6297 = vpow.pop %v6296
    %v6298 = vmul.f32 %v6072, 1.442695
    %v6299 = vpow.pop %v6298
    %v6300 = vmul.f32 %v6073, 1.442695
    %v6301 = vpow.pop %v6300
    %v6302 = vmul.f32 %v6074, 1.442695
    %v6303 = vpow.pop %v6302
    %v6304 = vmul.f32 %v6075, 1.442695
    %v6305 = vpow.pop %v6304
    %v6306 = vmul.f32 %v6076, 1.442695
    %v6307 = vpow.pop %v6306
    %v6308 = vmul.f32 %v6077, 1.442695
    %v6309 = vpow.pop %v6308
    %v6310 = vmul.f32 %v6078, 1.442695
    %v6311 = vpow.pop %v6310
    %v6312 = vmul.f32 %v6079, 1.442695
    %v6313 = vpow.pop %v6312
    %v6314 = vmul.f32 %v6080, 1.442695
    %v6315 = vpow.pop %v6314
    %v6316 = vmul.f32 %v6081, 1.442695
    %v6317 = vpow.pop %v6316
    %v6318 = vmul.f32 %v6082, 1.442695
    %v6319 = vpow.pop %v6318
    %v6320 = vmul.f32 %v6083, 1.442695
    %v6321 = vpow.pop %v6320
    %v6322 = vmul.f32 %v6084, 1.442695
    %v6323 = vpow.pop %v6322
    %v6324 = vmul.f32 %v6085, 1.442695
    %v6325 = vpow.pop %v6324
    %v6326 = vmul.f32 %v6086, 1.442695
    %v6327 = vpow.pop %v6326
    %v6328 = vmul.f32 %v6087, 1.442695
    %v6329 = vpow.pop %v6328
    %v6330 = vmul.f32 %v6088, 1.442695
    %v6331 = vpow.pop %v6330
    %v6332 = vmul.f32 %v6089, 1.442695
    %v6333 = vpow.pop %v6332
    %v6334 = vmul.f32 %v6090, 1.442695
    %v6335 = vpow.pop %v6334
    %v6336 = vmul.f32 %v6091, 1.442695
    %v6337 = vpow.pop %v6336
    %v6338 = vmul.f32 %v6092, 1.442695
    %v6339 = vpow.pop %v6338
    %v6340 = vmul.f32 %v6093, 1.442695
    %v6341 = vpow.pop %v6340
    %v6342 = vmul.f32 %v6094, 1.442695
    %v6343 = vpow.pop %v6342
    %v6344 = vmul.f32 %v6095, 1.442695
    %v6345 = vpow.pop %v6344
    %v6346 = vmul.f32 %v6096, 1.442695
    %v6347 = vpow.pop %v6346
    %v6348 = vmul.f32 %v6097, 1.442695
    %v6349 = vpow.pop %v6348
    %v6350 = vmul.f32 %v6098, 1.442695
    %v6351 = vpow.pop %v6350
    %v6352 = vmul.f32 %v6099, 1.442695
    %v6353 = vpow.pop %v6352
    %v6354 = vmul.f32 %v6100, 1.442695
    %v6355 = vpow.pop %v6354
    %v6356 = vmul.f32 %v6101, 1.442695
    %v6357 = vpow.pop %v6356
    %6486 = vset.pattern.permute.xlu0 0
    %6487 = vperm.xlu0 %6486, %v6103
    %v6488 = vpop.permute.xlu0 %6487
    %6489 = vset.pattern.permute.xlu0 0
    %6490 = vperm.xlu0 %6489, %v6105
    %v6491 = vpop.permute.xlu0 %6490
    %6492 = vset.pattern.permute.xlu0 0
    %6493 = vperm.xlu0 %6492, %v6107
    %v6494 = vpop.permute.xlu0 %6493
    %6495 = vset.pattern.permute.xlu0 0
    %6496 = vperm.xlu0 %6495, %v6109
    %v6497 = vpop.permute.xlu0 %6496
    %6498 = vset.pattern.permute.xlu0 0
    %6499 = vperm.xlu0 %6498, %v6111
    %v6500 = vpop.permute.xlu0 %6499
    %6501 = vset.pattern.permute.xlu0 0
    %6502 = vperm.xlu0 %6501, %v6113
    %v6503 = vpop.permute.xlu0 %6502
    %6504 = vset.pattern.permute.xlu0 0
    %6505 = vperm.xlu0 %6504, %v6115
    %v6506 = vpop.permute.xlu0 %6505
    %6507 = vset.pattern.permute.xlu0 0
    %6508 = vperm.xlu0 %6507, %v6117
    %v6509 = vpop.permute.xlu0 %6508
    %6510 = vset.pattern.permute.xlu0 0
    %6511 = vperm.xlu0 %6510, %v6119
    %v6512 = vpop.permute.xlu0 %6511
    %6513 = vset.pattern.permute.xlu0 0
    %6514 = vperm.xlu0 %6513, %v6121
    %v6515 = vpop.permute.xlu0 %6514
    %6516 = vset.pattern.permute.xlu0 0
    %6517 = vperm.xlu0 %6516, %v6123
    %v6518 = vpop.permute.xlu0 %6517
    %6519 = vset.pattern.permute.xlu0 0
    %6520 = vperm.xlu0 %6519, %v6125
    %v6521 = vpop.permute.xlu0 %6520
    %6522 = vset.pattern.permute.xlu0 0
    %6523 = vperm.xlu0 %6522, %v6127
    %v6524 = vpop.permute.xlu0 %6523
    %6525 = vset.pattern.permute.xlu0 0
    %6526 = vperm.xlu0 %6525, %v6129
    %v6527 = vpop.permute.xlu0 %6526
    %6528 = vset.pattern.permute.xlu0 0
    %6529 = vperm.xlu0 %6528, %v6131
    %v6530 = vpop.permute.xlu0 %6529
    %6531 = vset.pattern.permute.xlu0 0
    %6532 = vperm.xlu0 %6531, %v6133
    %v6533 = vpop.permute.xlu0 %6532
    %6534 = vset.pattern.permute.xlu0 0
    %6535 = vperm.xlu0 %6534, %v6135
    %v6536 = vpop.permute.xlu0 %6535
    %6537 = vset.pattern.permute.xlu0 0
    %6538 = vperm.xlu0 %6537, %v6137
    %v6539 = vpop.permute.xlu0 %6538
    %6540 = vset.pattern.permute.xlu0 0
    %6541 = vperm.xlu0 %6540, %v6139
    %v6542 = vpop.permute.xlu0 %6541
    %6543 = vset.pattern.permute.xlu0 0
    %6544 = vperm.xlu0 %6543, %v6141
    %v6545 = vpop.permute.xlu0 %6544
    %6546 = vset.pattern.permute.xlu0 0
    %6547 = vperm.xlu0 %6546, %v6143
    %v6548 = vpop.permute.xlu0 %6547
    %6549 = vset.pattern.permute.xlu0 0
    %6550 = vperm.xlu0 %6549, %v6145
    %v6551 = vpop.permute.xlu0 %6550
    %6552 = vset.pattern.permute.xlu0 0
    %6553 = vperm.xlu0 %6552, %v6147
    %v6554 = vpop.permute.xlu0 %6553
    %6555 = vset.pattern.permute.xlu0 0
    %6556 = vperm.xlu0 %6555, %v6149
    %v6557 = vpop.permute.xlu0 %6556
    %6558 = vset.pattern.permute.xlu0 0
    %6559 = vperm.xlu0 %6558, %v6151
    %v6560 = vpop.permute.xlu0 %6559
    %6561 = vset.pattern.permute.xlu0 0
    %6562 = vperm.xlu0 %6561, %v6153
    %v6563 = vpop.permute.xlu0 %6562
    %6564 = vset.pattern.permute.xlu0 0
    %6565 = vperm.xlu0 %6564, %v6155
    %v6566 = vpop.permute.xlu0 %6565
    %6567 = vset.pattern.permute.xlu0 0
    %6568 = vperm.xlu0 %6567, %v6157
    %v6569 = vpop.permute.xlu0 %6568
    %6570 = vset.pattern.permute.xlu0 0
    %6571 = vperm.xlu0 %6570, %v6159
    %v6572 = vpop.permute.xlu0 %6571
    %6573 = vset.pattern.permute.xlu0 0
    %6574 = vperm.xlu0 %6573, %v6161
    %v6575 = vpop.permute.xlu0 %6574
    %6576 = vset.pattern.permute.xlu0 0
    %6577 = vperm.xlu0 %6576, %v6163
    %v6578 = vpop.permute.xlu0 %6577
    %6579 = vset.pattern.permute.xlu0 0
    %6580 = vperm.xlu0 %6579, %v6165
    %v6581 = vpop.permute.xlu0 %6580
    %6582 = vset.pattern.permute.xlu0 0
    %6583 = vperm.xlu0 %6582, %v6167
    %v6584 = vpop.permute.xlu0 %6583
    %6585 = vset.pattern.permute.xlu0 0
    %6586 = vperm.xlu0 %6585, %v6169
    %v6587 = vpop.permute.xlu0 %6586
    %6588 = vset.pattern.permute.xlu0 0
    %6589 = vperm.xlu0 %6588, %v6171
    %v6590 = vpop.permute.xlu0 %6589
    %6591 = vset.pattern.permute.xlu0 0
    %6592 = vperm.xlu0 %6591, %v6173
    %v6593 = vpop.permute.xlu0 %6592
    %6594 = vset.pattern.permute.xlu0 0
    %6595 = vperm.xlu0 %6594, %v6175
    %v6596 = vpop.permute.xlu0 %6595
    %6597 = vset.pattern.permute.xlu0 0
    %6598 = vperm.xlu0 %6597, %v6177
    %v6599 = vpop.permute.xlu0 %6598
    %6600 = vset.pattern.permute.xlu0 0
    %6601 = vperm.xlu0 %6600, %v6179
    %v6602 = vpop.permute.xlu0 %6601
    %6603 = vset.pattern.permute.xlu0 0
    %6604 = vperm.xlu0 %6603, %v6181
    %v6605 = vpop.permute.xlu0 %6604
    %6606 = vset.pattern.permute.xlu0 0
    %6607 = vperm.xlu0 %6606, %v6183
    %v6608 = vpop.permute.xlu0 %6607
    %6609 = vset.pattern.permute.xlu0 0
    %6610 = vperm.xlu0 %6609, %v6185
    %v6611 = vpop.permute.xlu0 %6610
    %6612 = vset.pattern.permute.xlu0 0
    %6613 = vperm.xlu0 %6612, %v6187
    %v6614 = vpop.permute.xlu0 %6613
    %6615 = vset.pattern.permute.xlu0 0
    %6616 = vperm.xlu0 %6615, %v6189
    %v6617 = vpop.permute.xlu0 %6616
    %6618 = vset.pattern.permute.xlu0 0
    %6619 = vperm.xlu0 %6618, %v6191
    %v6620 = vpop.permute.xlu0 %6619
    %6621 = vset.pattern.permute.xlu0 0
    %6622 = vperm.xlu0 %6621, %v6193
    %v6623 = vpop.permute.xlu0 %6622
    %6624 = vset.pattern.permute.xlu0 0
    %6625 = vperm.xlu0 %6624, %v6195
    %v6626 = vpop.permute.xlu0 %6625
    %6627 = vset.pattern.permute.xlu0 0
    %6628 = vperm.xlu0 %6627, %v6197
    %v6629 = vpop.permute.xlu0 %6628
    %6630 = vset.pattern.permute.xlu0 0
    %6631 = vperm.xlu0 %6630, %v6199
    %v6632 = vpop.permute.xlu0 %6631
    %6633 = vset.pattern.permute.xlu0 0
    %6634 = vperm.xlu0 %6633, %v6201
    %v6635 = vpop.permute.xlu0 %6634
    %6636 = vset.pattern.permute.xlu0 0
    %6637 = vperm.xlu0 %6636, %v6203
    %v6638 = vpop.permute.xlu0 %6637
    %6639 = vset.pattern.permute.xlu0 0
    %6640 = vperm.xlu0 %6639, %v6205
    %v6641 = vpop.permute.xlu0 %6640
    %6642 = vset.pattern.permute.xlu0 0
    %6643 = vperm.xlu0 %6642, %v6207
    %v6644 = vpop.permute.xlu0 %6643
    %6645 = vset.pattern.permute.xlu0 0
    %6646 = vperm.xlu0 %6645, %v6209
    %v6647 = vpop.permute.xlu0 %6646
    %6648 = vset.pattern.permute.xlu0 0
    %6649 = vperm.xlu0 %6648, %v6211
    %v6650 = vpop.permute.xlu0 %6649
    %6651 = vset.pattern.permute.xlu0 0
    %6652 = vperm.xlu0 %6651, %v6213
    %v6653 = vpop.permute.xlu0 %6652
    %6654 = vset.pattern.permute.xlu0 0
    %6655 = vperm.xlu0 %6654, %v6215
    %v6656 = vpop.permute.xlu0 %6655
    %6657 = vset.pattern.permute.xlu0 0
    %6658 = vperm.xlu0 %6657, %v6217
    %v6659 = vpop.permute.xlu0 %6658
    %6660 = vset.pattern.permute.xlu0 0
    %6661 = vperm.xlu0 %6660, %v6219
    %v6662 = vpop.permute.xlu0 %6661
    %6663 = vset.pattern.permute.xlu0 0
    %6664 = vperm.xlu0 %6663, %v6221
    %v6665 = vpop.permute.xlu0 %6664
    %6666 = vset.pattern.permute.xlu0 0
    %6667 = vperm.xlu0 %6666, %v6223
    %v6668 = vpop.permute.xlu0 %6667
    %6669 = vset.pattern.permute.xlu0 0
    %6670 = vperm.xlu0 %6669, %v6225
    %v6671 = vpop.permute.xlu0 %6670
    %6672 = vset.pattern.permute.xlu0 0
    %6673 = vperm.xlu0 %6672, %v6227
    %v6674 = vpop.permute.xlu0 %6673
    %6675 = vset.pattern.permute.xlu0 0
    %6676 = vperm.xlu0 %6675, %v6229
    %v6677 = vpop.permute.xlu0 %6676
    %6678 = vset.pattern.permute.xlu0 0
    %6679 = vperm.xlu0 %6678, %v6231
    %v6680 = vpop.permute.xlu0 %6679
    %6681 = vset.pattern.permute.xlu0 0
    %6682 = vperm.xlu0 %6681, %v6233
    %v6683 = vpop.permute.xlu0 %6682
    %6684 = vset.pattern.permute.xlu0 0
    %6685 = vperm.xlu0 %6684, %v6235
    %v6686 = vpop.permute.xlu0 %6685
    %6687 = vset.pattern.permute.xlu0 0
    %6688 = vperm.xlu0 %6687, %v6237
    %v6689 = vpop.permute.xlu0 %6688
    %6690 = vset.pattern.permute.xlu0 0
    %6691 = vperm.xlu0 %6690, %v6239
    %v6692 = vpop.permute.xlu0 %6691
    %6693 = vset.pattern.permute.xlu0 0
    %6694 = vperm.xlu0 %6693, %v6241
    %v6695 = vpop.permute.xlu0 %6694
    %6696 = vset.pattern.permute.xlu0 0
    %6697 = vperm.xlu0 %6696, %v6243
    %v6698 = vpop.permute.xlu0 %6697
    %6699 = vset.pattern.permute.xlu0 0
    %6700 = vperm.xlu0 %6699, %v6245
    %v6701 = vpop.permute.xlu0 %6700
    %6702 = vset.pattern.permute.xlu0 0
    %6703 = vperm.xlu0 %6702, %v6247
    %v6704 = vpop.permute.xlu0 %6703
    %6705 = vset.pattern.permute.xlu0 0
    %6706 = vperm.xlu0 %6705, %v6249
    %v6707 = vpop.permute.xlu0 %6706
    %6708 = vset.pattern.permute.xlu0 0
    %6709 = vperm.xlu0 %6708, %v6251
    %v6710 = vpop.permute.xlu0 %6709
    %6711 = vset.pattern.permute.xlu0 0
    %6712 = vperm.xlu0 %6711, %v6253
    %v6713 = vpop.permute.xlu0 %6712
    %6714 = vset.pattern.permute.xlu0 0
    %6715 = vperm.xlu0 %6714, %v6255
    %v6716 = vpop.permute.xlu0 %6715
    %6717 = vset.pattern.permute.xlu0 0
    %6718 = vperm.xlu0 %6717, %v6257
    %v6719 = vpop.permute.xlu0 %6718
    %6720 = vset.pattern.permute.xlu0 0
    %6721 = vperm.xlu0 %6720, %v6259
    %v6722 = vpop.permute.xlu0 %6721
    %6723 = vset.pattern.permute.xlu0 0
    %6724 = vperm.xlu0 %6723, %v6261
    %v6725 = vpop.permute.xlu0 %6724
    %6726 = vset.pattern.permute.xlu0 0
    %6727 = vperm.xlu0 %6726, %v6263
    %v6728 = vpop.permute.xlu0 %6727
    %6729 = vset.pattern.permute.xlu0 0
    %6730 = vperm.xlu0 %6729, %v6265
    %v6731 = vpop.permute.xlu0 %6730
    %6732 = vset.pattern.permute.xlu0 0
    %6733 = vperm.xlu0 %6732, %v6267
    %v6734 = vpop.permute.xlu0 %6733
    %6735 = vset.pattern.permute.xlu0 0
    %6736 = vperm.xlu0 %6735, %v6269
    %v6737 = vpop.permute.xlu0 %6736
    %6738 = vset.pattern.permute.xlu0 0
    %6739 = vperm.xlu0 %6738, %v6271
    %v6740 = vpop.permute.xlu0 %6739
    %6741 = vset.pattern.permute.xlu0 0
    %6742 = vperm.xlu0 %6741, %v6273
    %v6743 = vpop.permute.xlu0 %6742
    %6744 = vset.pattern.permute.xlu0 0
    %6745 = vperm.xlu0 %6744, %v6275
    %v6746 = vpop.permute.xlu0 %6745
    %6747 = vset.pattern.permute.xlu0 0
    %6748 = vperm.xlu0 %6747, %v6277
    %v6749 = vpop.permute.xlu0 %6748
    %6750 = vset.pattern.permute.xlu0 0
    %6751 = vperm.xlu0 %6750, %v6279
    %v6752 = vpop.permute.xlu0 %6751
    %6753 = vset.pattern.permute.xlu0 0
    %6754 = vperm.xlu0 %6753, %v6281
    %v6755 = vpop.permute.xlu0 %6754
    %6756 = vset.pattern.permute.xlu0 0
    %6757 = vperm.xlu0 %6756, %v6283
    %v6758 = vpop.permute.xlu0 %6757
    %6759 = vset.pattern.permute.xlu0 0
    %6760 = vperm.xlu0 %6759, %v6285
    %v6761 = vpop.permute.xlu0 %6760
    %6762 = vset.pattern.permute.xlu0 0
    %6763 = vperm.xlu0 %6762, %v6287
    %v6764 = vpop.permute.xlu0 %6763
    %6765 = vset.pattern.permute.xlu0 0
    %6766 = vperm.xlu0 %6765, %v6289
    %v6767 = vpop.permute.xlu0 %6766
    %6768 = vset.pattern.permute.xlu0 0
    %6769 = vperm.xlu0 %6768, %v6291
    %v6770 = vpop.permute.xlu0 %6769
    %6771 = vset.pattern.permute.xlu0 0
    %6772 = vperm.xlu0 %6771, %v6293
    %v6773 = vpop.permute.xlu0 %6772
    %6774 = vset.pattern.permute.xlu0 0
    %6775 = vperm.xlu0 %6774, %v6295
    %v6776 = vpop.permute.xlu0 %6775
    %6777 = vset.pattern.permute.xlu0 0
    %6778 = vperm.xlu0 %6777, %v6297
    %v6779 = vpop.permute.xlu0 %6778
    %6780 = vset.pattern.permute.xlu0 0
    %6781 = vperm.xlu0 %6780, %v6299
    %v6782 = vpop.permute.xlu0 %6781
    %6783 = vset.pattern.permute.xlu0 0
    %6784 = vperm.xlu0 %6783, %v6301
    %v6785 = vpop.permute.xlu0 %6784
    %6786 = vset.pattern.permute.xlu0 0
    %6787 = vperm.xlu0 %6786, %v6303
    %v6788 = vpop.permute.xlu0 %6787
    %6789 = vset.pattern.permute.xlu0 0
    %6790 = vperm.xlu0 %6789, %v6305
    %v6791 = vpop.permute.xlu0 %6790
    %6792 = vset.pattern.permute.xlu0 0
    %6793 = vperm.xlu0 %6792, %v6307
    %v6794 = vpop.permute.xlu0 %6793
    %6795 = vset.pattern.permute.xlu0 0
    %6796 = vperm.xlu0 %6795, %v6309
    %v6797 = vpop.permute.xlu0 %6796
    %6798 = vset.pattern.permute.xlu0 0
    %6799 = vperm.xlu0 %6798, %v6311
    %v6800 = vpop.permute.xlu0 %6799
    %6801 = vset.pattern.permute.xlu0 0
    %6802 = vperm.xlu0 %6801, %v6313
    %v6803 = vpop.permute.xlu0 %6802
    %6804 = vset.pattern.permute.xlu0 0
    %6805 = vperm.xlu0 %6804, %v6315
    %v6806 = vpop.permute.xlu0 %6805
    %6807 = vset.pattern.permute.xlu0 0
    %6808 = vperm.xlu0 %6807, %v6317
    %v6809 = vpop.permute.xlu0 %6808
    %6810 = vset.pattern.permute.xlu0 0
    %6811 = vperm.xlu0 %6810, %v6319
    %v6812 = vpop.permute.xlu0 %6811
    %6813 = vset.pattern.permute.xlu0 0
    %6814 = vperm.xlu0 %6813, %v6321
    %v6815 = vpop.permute.xlu0 %6814
    %6816 = vset.pattern.permute.xlu0 0
    %6817 = vperm.xlu0 %6816, %v6323
    %v6818 = vpop.permute.xlu0 %6817
    %6819 = vset.pattern.permute.xlu0 0
    %6820 = vperm.xlu0 %6819, %v6325
    %v6821 = vpop.permute.xlu0 %6820
    %6822 = vset.pattern.permute.xlu0 0
    %6823 = vperm.xlu0 %6822, %v6327
    %v6824 = vpop.permute.xlu0 %6823
    %6825 = vset.pattern.permute.xlu0 0
    %6826 = vperm.xlu0 %6825, %v6329
    %v6827 = vpop.permute.xlu0 %6826
    %6828 = vset.pattern.permute.xlu0 0
    %6829 = vperm.xlu0 %6828, %v6331
    %v6830 = vpop.permute.xlu0 %6829
    %6831 = vset.pattern.permute.xlu0 0
    %6832 = vperm.xlu0 %6831, %v6333
    %v6833 = vpop.permute.xlu0 %6832
    %6834 = vset.pattern.permute.xlu0 0
    %6835 = vperm.xlu0 %6834, %v6335
    %v6836 = vpop.permute.xlu0 %6835
    %6837 = vset.pattern.permute.xlu0 0
    %6838 = vperm.xlu0 %6837, %v6337
    %v6839 = vpop.permute.xlu0 %6838
    %6840 = vset.pattern.permute.xlu0 0
    %6841 = vperm.xlu0 %6840, %v6339
    %v6842 = vpop.permute.xlu0 %6841
    %6843 = vset.pattern.permute.xlu0 0
    %6844 = vperm.xlu0 %6843, %v6341
    %v6845 = vpop.permute.xlu0 %6844
    %6846 = vset.pattern.permute.xlu0 0
    %6847 = vperm.xlu0 %6846, %v6343
    %v6848 = vpop.permute.xlu0 %6847
    %6849 = vset.pattern.permute.xlu0 0
    %6850 = vperm.xlu0 %6849, %v6345
    %v6851 = vpop.permute.xlu0 %6850
    %6852 = vset.pattern.permute.xlu0 0
    %6853 = vperm.xlu0 %6852, %v6347
    %v6854 = vpop.permute.xlu0 %6853
    %6855 = vset.pattern.permute.xlu0 0
    %6856 = vperm.xlu0 %6855, %v6349
    %v6857 = vpop.permute.xlu0 %6856
    %6858 = vset.pattern.permute.xlu0 0
    %6859 = vperm.xlu0 %6858, %v6351
    %v6860 = vpop.permute.xlu0 %6859
    %6861 = vset.pattern.permute.xlu0 0
    %6862 = vperm.xlu0 %6861, %v6353
    %v6863 = vpop.permute.xlu0 %6862
    %6864 = vset.pattern.permute.xlu0 0
    %6865 = vperm.xlu0 %6864, %v6355
    %v6866 = vpop.permute.xlu0 %6865
    %6867 = vset.pattern.permute.xlu0 0
    %6868 = vperm.xlu0 %6867, %v6357
    %v6869 = vpop.permute.xlu0 %6868
    %v6870 = vperm.slane %v6488, %v5661
    %v6871 = vperm.slane %v6491, %v5663
    %v6872 = vsel %vm5665, %v6871, %v6870
    %v6873 = vperm.slane %v6494, %v5667
    %v6874 = vsel %vm5669, %v6873, %v6872
    %v6875 = vperm.slane %v6497, %v5671
    %v6876 = vsel %vm5673, %v6875, %v6874
    %v6877 = vperm.slane %v6500, %v5675
    %v6878 = vsel %vm5677, %v6877, %v6876
    %v6879 = vperm.slane %v6503, %v5679
    %v6880 = vsel %vm5681, %v6879, %v6878
    %v6881 = vperm.slane %v6506, %v5683
    %v6882 = vsel %vm5685, %v6881, %v6880
    %v6883 = vperm.slane %v6509, %v5687
    %v6884 = vsel %vm5689, %v6883, %v6882
    %v6885 = vperm.slane %v6512, %v5691
    %v6886 = vsel %vm5693, %v6885, %v6884
    %v6887 = vperm.slane %v6515, %v5695
    %v6888 = vsel %vm5697, %v6887, %v6886
    %v6889 = vperm.slane %v6518, %v5699
    %v6890 = vsel %vm5701, %v6889, %v6888
    %v6891 = vperm.slane %v6521, %v5703
    %v6892 = vsel %vm5705, %v6891, %v6890
    %v6893 = vperm.slane %v6524, %v5707
    %v6894 = vsel %vm5709, %v6893, %v6892
    %v6895 = vperm.slane %v6527, %v5711
    %v6896 = vsel %vm5713, %v6895, %v6894
    %v6897 = vperm.slane %v6530, %v5715
    %v6898 = vsel %vm5717, %v6897, %v6896
    %v6899 = vperm.slane %v6533, %v5719
    %v6900 = vsel %vm5721, %v6899, %v6898
    %v6901 = vperm.slane %v6536, %v5661
    %v6902 = vperm.slane %v6539, %v5663
    %v6903 = vsel %vm5665, %v6902, %v6901
    %v6904 = vperm.slane %v6542, %v5667
    %v6905 = vsel %vm5669, %v6904, %v6903
    %v6906 = vperm.slane %v6545, %v5671
    %v6907 = vsel %vm5673, %v6906, %v6905
    %v6908 = vperm.slane %v6548, %v5675
    %v6909 = vsel %vm5677, %v6908, %v6907
    %v6910 = vperm.slane %v6551, %v5679
    %v6911 = vsel %vm5681, %v6910, %v6909
    %v6912 = vperm.slane %v6554, %v5683
    %v6913 = vsel %vm5685, %v6912, %v6911
    %v6914 = vperm.slane %v6557, %v5687
    %v6915 = vsel %vm5689, %v6914, %v6913
    %v6916 = vperm.slane %v6560, %v5691
    %v6917 = vsel %vm5693, %v6916, %v6915
    %v6918 = vperm.slane %v6563, %v5695
    %v6919 = vsel %vm5697, %v6918, %v6917
    %v6920 = vperm.slane %v6566, %v5699
    %v6921 = vsel %vm5701, %v6920, %v6919
    %v6922 = vperm.slane %v6569, %v5703
    %v6923 = vsel %vm5705, %v6922, %v6921
    %v6924 = vperm.slane %v6572, %v5707
    %v6925 = vsel %vm5709, %v6924, %v6923
    %v6926 = vperm.slane %v6575, %v5711
    %v6927 = vsel %vm5713, %v6926, %v6925
    %v6928 = vperm.slane %v6578, %v5715
    %v6929 = vsel %vm5717, %v6928, %v6927
    %v6930 = vperm.slane %v6581, %v5719
    %v6931 = vsel %vm5721, %v6930, %v6929
    %v6932 = vperm.slane %v6584, %v5661
    %v6933 = vperm.slane %v6587, %v5663
    %v6934 = vsel %vm5665, %v6933, %v6932
    %v6935 = vperm.slane %v6590, %v5667
    %v6936 = vsel %vm5669, %v6935, %v6934
    %v6937 = vperm.slane %v6593, %v5671
    %v6938 = vsel %vm5673, %v6937, %v6936
    %v6939 = vperm.slane %v6596, %v5675
    %v6940 = vsel %vm5677, %v6939, %v6938
    %v6941 = vperm.slane %v6599, %v5679
    %v6942 = vsel %vm5681, %v6941, %v6940
    %v6943 = vperm.slane %v6602, %v5683
    %v6944 = vsel %vm5685, %v6943, %v6942
    %v6945 = vperm.slane %v6605, %v5687
    %v6946 = vsel %vm5689, %v6945, %v6944
    %v6947 = vperm.slane %v6608, %v5691
    %v6948 = vsel %vm5693, %v6947, %v6946
    %v6949 = vperm.slane %v6611, %v5695
    %v6950 = vsel %vm5697, %v6949, %v6948
    %v6951 = vperm.slane %v6614, %v5699
    %v6952 = vsel %vm5701, %v6951, %v6950
    %v6953 = vperm.slane %v6617, %v5703
    %v6954 = vsel %vm5705, %v6953, %v6952
    %v6955 = vperm.slane %v6620, %v5707
    %v6956 = vsel %vm5709, %v6955, %v6954
    %v6957 = vperm.slane %v6623, %v5711
    %v6958 = vsel %vm5713, %v6957, %v6956
    %v6959 = vperm.slane %v6626, %v5715
    %v6960 = vsel %vm5717, %v6959, %v6958
    %v6961 = vperm.slane %v6629, %v5719
    %v6962 = vsel %vm5721, %v6961, %v6960
    %v6963 = vperm.slane %v6632, %v5661
    %v6964 = vperm.slane %v6635, %v5663
    %v6965 = vsel %vm5665, %v6964, %v6963
    %v6966 = vperm.slane %v6638, %v5667
    %v6967 = vsel %vm5669, %v6966, %v6965
    %v6968 = vperm.slane %v6641, %v5671
    %v6969 = vsel %vm5673, %v6968, %v6967
    %v6970 = vperm.slane %v6644, %v5675
    %v6971 = vsel %vm5677, %v6970, %v6969
    %v6972 = vperm.slane %v6647, %v5679
    %v6973 = vsel %vm5681, %v6972, %v6971
    %v6974 = vperm.slane %v6650, %v5683
    %v6975 = vsel %vm5685, %v6974, %v6973
    %v6976 = vperm.slane %v6653, %v5687
    %v6977 = vsel %vm5689, %v6976, %v6975
    %v6978 = vperm.slane %v6656, %v5691
    %v6979 = vsel %vm5693, %v6978, %v6977
    %v6980 = vperm.slane %v6659, %v5695
    %v6981 = vsel %vm5697, %v6980, %v6979
    %v6982 = vperm.slane %v6662, %v5699
    %v6983 = vsel %vm5701, %v6982, %v6981
    %v6984 = vperm.slane %v6665, %v5703
    %v6985 = vsel %vm5705, %v6984, %v6983
    %v6986 = vperm.slane %v6668, %v5707
    %v6987 = vsel %vm5709, %v6986, %v6985
    %v6988 = vperm.slane %v6671, %v5711
    %v6989 = vsel %vm5713, %v6988, %v6987
    %v6990 = vperm.slane %v6674, %v5715
    %v6991 = vsel %vm5717, %v6990, %v6989
    %v6992 = vperm.slane %v6677, %v5719
    %v6993 = vsel %vm5721, %v6992, %v6991
    %v6994 = vperm.slane %v6680, %v5661
    %v6995 = vperm.slane %v6683, %v5663
    %v6996 = vsel %vm5665, %v6995, %v6994
    %v6997 = vperm.slane %v6686, %v5667
    %v6998 = vsel %vm5669, %v6997, %v6996
    %v6999 = vperm.slane %v6689, %v5671
    %v7000 = vsel %vm5673, %v6999, %v6998
    %v7001 = vperm.slane %v6692, %v5675
    %v7002 = vsel %vm5677, %v7001, %v7000
    %v7003 = vperm.slane %v6695, %v5679
    %v7004 = vsel %vm5681, %v7003, %v7002
    %v7005 = vperm.slane %v6698, %v5683
    %v7006 = vsel %vm5685, %v7005, %v7004
    %v7007 = vperm.slane %v6701, %v5687
    %v7008 = vsel %vm5689, %v7007, %v7006
    %v7009 = vperm.slane %v6704, %v5691
    %v7010 = vsel %vm5693, %v7009, %v7008
    %v7011 = vperm.slane %v6707, %v5695
    %v7012 = vsel %vm5697, %v7011, %v7010
    %v7013 = vperm.slane %v6710, %v5699
    %v7014 = vsel %vm5701, %v7013, %v7012
    %v7015 = vperm.slane %v6713, %v5703
    %v7016 = vsel %vm5705, %v7015, %v7014
    %v7017 = vperm.slane %v6716, %v5707
    %v7018 = vsel %vm5709, %v7017, %v7016
    %v7019 = vperm.slane %v6719, %v5711
    %v7020 = vsel %vm5713, %v7019, %v7018
    %v7021 = vperm.slane %v6722, %v5715
    %v7022 = vsel %vm5717, %v7021, %v7020
    %v7023 = vperm.slane %v6725, %v5719
    %v7024 = vsel %vm5721, %v7023, %v7022
    %v7025 = vperm.slane %v6728, %v5661
    %v7026 = vperm.slane %v6731, %v5663
    %v7027 = vsel %vm5665, %v7026, %v7025
    %v7028 = vperm.slane %v6734, %v5667
    %v7029 = vsel %vm5669, %v7028, %v7027
    %v7030 = vperm.slane %v6737, %v5671
    %v7031 = vsel %vm5673, %v7030, %v7029
    %v7032 = vperm.slane %v6740, %v5675
    %v7033 = vsel %vm5677, %v7032, %v7031
    %v7034 = vperm.slane %v6743, %v5679
    %v7035 = vsel %vm5681, %v7034, %v7033
    %v7036 = vperm.slane %v6746, %v5683
    %v7037 = vsel %vm5685, %v7036, %v7035
    %v7038 = vperm.slane %v6749, %v5687
    %v7039 = vsel %vm5689, %v7038, %v7037
    %v7040 = vperm.slane %v6752, %v5691
    %v7041 = vsel %vm5693, %v7040, %v7039
    %v7042 = vperm.slane %v6755, %v5695
    %v7043 = vsel %vm5697, %v7042, %v7041
    %v7044 = vperm.slane %v6758, %v5699
    %v7045 = vsel %vm5701, %v7044, %v7043
    %v7046 = vperm.slane %v6761, %v5703
    %v7047 = vsel %vm5705, %v7046, %v7045
    %v7048 = vperm.slane %v6764, %v5707
    %v7049 = vsel %vm5709, %v7048, %v7047
    %v7050 = vperm.slane %v6767, %v5711
    %v7051 = vsel %vm5713, %v7050, %v7049
    %v7052 = vperm.slane %v6770, %v5715
    %v7053 = vsel %vm5717, %v7052, %v7051
    %v7054 = vperm.slane %v6773, %v5719
    %v7055 = vsel %vm5721, %v7054, %v7053
    %v7056 = vperm.slane %v6776, %v5661
    %v7057 = vperm.slane %v6779, %v5663
    %v7058 = vsel %vm5665, %v7057, %v7056
    %v7059 = vperm.slane %v6782, %v5667
    %v7060 = vsel %vm5669, %v7059, %v7058
    %v7061 = vperm.slane %v6785, %v5671
    %v7062 = vsel %vm5673, %v7061, %v7060
    %v7063 = vperm.slane %v6788, %v5675
    %v7064 = vsel %vm5677, %v7063, %v7062
    %v7065 = vperm.slane %v6791, %v5679
    %v7066 = vsel %vm5681, %v7065, %v7064
    %v7067 = vperm.slane %v6794, %v5683
    %v7068 = vsel %vm5685, %v7067, %v7066
    %v7069 = vperm.slane %v6797, %v5687
    %v7070 = vsel %vm5689, %v7069, %v7068
    %v7071 = vperm.slane %v6800, %v5691
    %v7072 = vsel %vm5693, %v7071, %v7070
    %v7073 = vperm.slane %v6803, %v5695
    %v7074 = vsel %vm5697, %v7073, %v7072
    %v7075 = vperm.slane %v6806, %v5699
    %v7076 = vsel %vm5701, %v7075, %v7074
    %v7077 = vperm.slane %v6809, %v5703
    %v7078 = vsel %vm5705, %v7077, %v7076
    %v7079 = vperm.slane %v6812, %v5707
    %v7080 = vsel %vm5709, %v7079, %v7078
    %v7081 = vperm.slane %v6815, %v5711
    %v7082 = vsel %vm5713, %v7081, %v7080
    %v7083 = vperm.slane %v6818, %v5715
    %v7084 = vsel %vm5717, %v7083, %v7082
    %v7085 = vperm.slane %v6821, %v5719
    %v7086 = vsel %vm5721, %v7085, %v7084
    %v7087 = vperm.slane %v6824, %v5661
    %v7088 = vperm.slane %v6827, %v5663
    %v7089 = vsel %vm5665, %v7088, %v7087
    %v7090 = vperm.slane %v6830, %v5667
    %v7091 = vsel %vm5669, %v7090, %v7089
    %v7092 = vperm.slane %v6833, %v5671
    %v7093 = vsel %vm5673, %v7092, %v7091
    %v7094 = vperm.slane %v6836, %v5675
    %v7095 = vsel %vm5677, %v7094, %v7093
    %v7096 = vperm.slane %v6839, %v5679
    %v7097 = vsel %vm5681, %v7096, %v7095
    %v7098 = vperm.slane %v6842, %v5683
    %v7099 = vsel %vm5685, %v7098, %v7097
    %v7100 = vperm.slane %v6845, %v5687
    %v7101 = vsel %vm5689, %v7100, %v7099
    %v7102 = vperm.slane %v6848, %v5691
    %v7103 = vsel %vm5693, %v7102, %v7101
    %v7104 = vperm.slane %v6851, %v5695
    %v7105 = vsel %vm5697, %v7104, %v7103
    %v7106 = vperm.slane %v6854, %v5699
    %v7107 = vsel %vm5701, %v7106, %v7105
    %v7108 = vperm.slane %v6857, %v5703
    %v7109 = vsel %vm5705, %v7108, %v7107
    %v7110 = vperm.slane %v6860, %v5707
    %v7111 = vsel %vm5709, %v7110, %v7109
    %v7112 = vperm.slane %v6863, %v5711
    %v7113 = vsel %vm5713, %v7112, %v7111
    %v7114 = vperm.slane %v6866, %v5715
    %v7115 = vsel %vm5717, %v7114, %v7113
    %v7116 = vperm.slane %v6869, %v5719
    %v7117 = vsel %vm5721, %v7116, %v7115
    %v7118 = vsel %vm5940, %v6931, %v6900
    %v7119 = vsel %vm5942, %v6962, %v7118
    %v7120 = vsel %vm5944, %v6993, %v7119
    %v7121 = vsel %vm5946, %v7024, %v7120
    %v7122 = vsel %vm5948, %v7055, %v7121
    %v7123 = vsel %vm5950, %v7086, %v7122
    %v7124 = vsel %vm5952, %v7117, %v7123
    %7126 = vadd.xlane.f32.xlu0 %v7124
    %v7127 = vpop.xlane.xlu0 %7126
    %v7128 = vrcp.pop %v7127
    %v7129 = vmul.f32 %v7127, %v7128
    %v7130 = vsub.f32 1.0, %v7129
    %v7131 = vmul.f32 %v7128, %v7130
    %v7132 = vadd.f32 %v7128, %v7131
    %vm7133 = vweird.f32 %v7127
    %vm7134 = vweird.f32 %v7128
    %vm7135 = vmor %vm7133, %vm7134
    %v7136 = vsel %vm7135, %v7128, %v7132
    %v7137 = vand.u32 2147483647, %v7127
    %vm7138 = vcmp.eq.f32.partialorder %v7137, 8.507059e+37
    %v7139 = vand.u32 %v7127, 2147483648
    %v7140 = vor.u32 1.1754944e-38, %v7139
    %v7141 = vsel %vm7138, %v7140, %v7136
    %v7143 = vperm.slane %v7141, 0
    %v7144 = vperm.slane %v7141, 1
    %v7145 = vperm.slane %v7141, 2
    %v7146 = vperm.slane %v7141, 3
    %v7147 = vperm.slane %v7141, 4
    %v7148 = vperm.slane %v7141, 5
    %v7149 = vperm.slane %v7141, 6
    %v7150 = vperm.slane %v7141, 7
    %v7159 = vmul.f32 %v6103, %v7143
    %v7160 = vmul.f32 %v6105, %v7143
    %v7161 = vmul.f32 %v6107, %v7143
    %v7162 = vmul.f32 %v6109, %v7143
    %v7163 = vmul.f32 %v6111, %v7143
    %v7164 = vmul.f32 %v6113, %v7143
    %v7165 = vmul.f32 %v6115, %v7143
    %v7166 = vmul.f32 %v6117, %v7143
    %v7167 = vmul.f32 %v6119, %v7143
    %v7168 = vmul.f32 %v6121, %v7143
    %v7169 = vmul.f32 %v6123, %v7143
    %v7170 = vmul.f32 %v6125, %v7143
    %v7171 = vmul.f32 %v6127, %v7143
    %v7172 = vmul.f32 %v6129, %v7143
    %v7173 = vmul.f32 %v6131, %v7143
    %v7174 = vmul.f32 %v6133, %v7143
    %v7175 = vmul.f32 %v6135, %v7144
    %v7176 = vmul.f32 %v6137, %v7144
    %v7177 = vmul.f32 %v6139, %v7144
    %v7178 = vmul.f32 %v6141, %v7144
    %v7179 = vmul.f32 %v6143, %v7144
    %v7180 = vmul.f32 %v6145, %v7144
    %v7181 = vmul.f32 %v6147, %v7144
    %v7182 = vmul.f32 %v6149, %v7144
    %v7183 = vmul.f32 %v6151, %v7144
    %v7184 = vmul.f32 %v6153, %v7144
    %v7185 = vmul.f32 %v6155, %v7144
    %v7186 = vmul.f32 %v6157, %v7144
    %v7187 = vmul.f32 %v6159, %v7144
    %v7188 = vmul.f32 %v6161, %v7144
    %v7189 = vmul.f32 %v6163, %v7144
    %v7190 = vmul.f32 %v6165, %v7144
    %v7191 = vmul.f32 %v6167, %v7145
    %v7192 = vmul.f32 %v6169, %v7145
    %v7193 = vmul.f32 %v6171, %v7145
    %v7194 = vmul.f32 %v6173, %v7145
    %v7195 = vmul.f32 %v6175, %v7145
    %v7196 = vmul.f32 %v6177, %v7145
    %v7197 = vmul.f32 %v6179, %v7145
    %v7198 = vmul.f32 %v6181, %v7145
    %v7199 = vmul.f32 %v6183, %v7145
    %v7200 = vmul.f32 %v6185, %v7145
    %v7201 = vmul.f32 %v6187, %v7145
    %v7202 = vmul.f32 %v6189, %v7145
    %v7203 = vmul.f32 %v6191, %v7145
    %v7204 = vmul.f32 %v6193, %v7145
    %v7205 = vmul.f32 %v6195, %v7145
    %v7206 = vmul.f32 %v6197, %v7145
    %v7207 = vmul.f32 %v6199, %v7146
    %v7208 = vmul.f32 %v6201, %v7146
    %v7209 = vmul.f32 %v6203, %v7146
    %v7210 = vmul.f32 %v6205, %v7146
    %v7211 = vmul.f32 %v6207, %v7146
    %v7212 = vmul.f32 %v6209, %v7146
    %v7213 = vmul.f32 %v6211, %v7146
    %v7214 = vmul.f32 %v6213, %v7146
    %v7215 = vmul.f32 %v6215, %v7146
    %v7216 = vmul.f32 %v6217, %v7146
    %v7217 = vmul.f32 %v6219, %v7146
    %v7218 = vmul.f32 %v6221, %v7146
    %v7219 = vmul.f32 %v6223, %v7146
    %v7220 = vmul.f32 %v6225, %v7146
    %v7221 = vmul.f32 %v6227, %v7146
    %v7222 = vmul.f32 %v6229, %v7146
    %v7223 = vmul.f32 %v6231, %v7147
    %v7224 = vmul.f32 %v6233, %v7147
    %v7225 = vmul.f32 %v6235, %v7147
    %v7226 = vmul.f32 %v6237, %v7147
    %v7227 = vmul.f32 %v6239, %v7147
    %v7228 = vmul.f32 %v6241, %v7147
    %v7229 = vmul.f32 %v6243, %v7147
    %v7230 = vmul.f32 %v6245, %v7147
    %v7231 = vmul.f32 %v6247, %v7147
    %v7232 = vmul.f32 %v6249, %v7147
    %v7233 = vmul.f32 %v6251, %v7147
    %v7234 = vmul.f32 %v6253, %v7147
    %v7235 = vmul.f32 %v6255, %v7147
    %v7236 = vmul.f32 %v6257, %v7147
    %v7237 = vmul.f32 %v6259, %v7147
    %v7238 = vmul.f32 %v6261, %v7147
    %v7239 = vmul.f32 %v6263, %v7148
    %v7240 = vmul.f32 %v6265, %v7148
    %v7241 = vmul.f32 %v6267, %v7148
    %v7242 = vmul.f32 %v6269, %v7148
    %v7243 = vmul.f32 %v6271, %v7148
    %v7244 = vmul.f32 %v6273, %v7148
    %v7245 = vmul.f32 %v6275, %v7148
    %v7246 = vmul.f32 %v6277, %v7148
    %v7247 = vmul.f32 %v6279, %v7148
    %v7248 = vmul.f32 %v6281, %v7148
    %v7249 = vmul.f32 %v6283, %v7148
    %v7250 = vmul.f32 %v6285, %v7148
    %v7251 = vmul.f32 %v6287, %v7148
    %v7252 = vmul.f32 %v6289, %v7148
    %v7253 = vmul.f32 %v6291, %v7148
    %v7254 = vmul.f32 %v6293, %v7148
    %v7255 = vmul.f32 %v6295, %v7149
    %v7256 = vmul.f32 %v6297, %v7149
    %v7257 = vmul.f32 %v6299, %v7149
    %v7258 = vmul.f32 %v6301, %v7149
    %v7259 = vmul.f32 %v6303, %v7149
    %v7260 = vmul.f32 %v6305, %v7149
    %v7261 = vmul.f32 %v6307, %v7149
    %v7262 = vmul.f32 %v6309, %v7149
    %v7263 = vmul.f32 %v6311, %v7149
    %v7264 = vmul.f32 %v6313, %v7149
    %v7265 = vmul.f32 %v6315, %v7149
    %v7266 = vmul.f32 %v6317, %v7149
    %v7267 = vmul.f32 %v6319, %v7149
    %v7268 = vmul.f32 %v6321, %v7149
    %v7269 = vmul.f32 %v6323, %v7149
    %v7270 = vmul.f32 %v6325, %v7149
    %v7271 = vmul.f32 %v6327, %v7150
    %v7272 = vmul.f32 %v6329, %v7150
    %v7273 = vmul.f32 %v6331, %v7150
    %v7274 = vmul.f32 %v6333, %v7150
    %v7275 = vmul.f32 %v6335, %v7150
    %v7276 = vmul.f32 %v6337, %v7150
    %v7277 = vmul.f32 %v6339, %v7150
    %v7278 = vmul.f32 %v6341, %v7150
    %v7279 = vmul.f32 %v6343, %v7150
    %v7280 = vmul.f32 %v6345, %v7150
    %v7281 = vmul.f32 %v6347, %v7150
    %v7282 = vmul.f32 %v6349, %v7150
    %v7283 = vmul.f32 %v6351, %v7150
    %v7284 = vmul.f32 %v6353, %v7150
    %v7285 = vmul.f32 %v6355, %v7150
    %v7286 = vmul.f32 %v6357, %v7150
    %7415 = vset.pattern.permute.xlu0 0
    %7416 = vperm.xlu0 %7415, %v7159
    %v7417 = vpop.permute.xlu0 %7416
    %7418 = vset.pattern.permute.xlu0 0
    %7419 = vperm.xlu0 %7418, %v7160
    %v7420 = vpop.permute.xlu0 %7419
    %7421 = vset.pattern.permute.xlu0 0
    %7422 = vperm.xlu0 %7421, %v7161
    %v7423 = vpop.permute.xlu0 %7422
    %7424 = vset.pattern.permute.xlu0 0
    %7425 = vperm.xlu0 %7424, %v7162
    %v7426 = vpop.permute.xlu0 %7425
    %7427 = vset.pattern.permute.xlu0 0
    %7428 = vperm.xlu0 %7427, %v7163
    %v7429 = vpop.permute.xlu0 %7428
    %7430 = vset.pattern.permute.xlu0 0
    %7431 = vperm.xlu0 %7430, %v7164
    %v7432 = vpop.permute.xlu0 %7431
    %7433 = vset.pattern.permute.xlu0 0
    %7434 = vperm.xlu0 %7433, %v7165
    %v7435 = vpop.permute.xlu0 %7434
    %7436 = vset.pattern.permute.xlu0 0
    %7437 = vperm.xlu0 %7436, %v7166
    %v7438 = vpop.permute.xlu0 %7437
    %7439 = vset.pattern.permute.xlu0 0
    %7440 = vperm.xlu0 %7439, %v7167
    %v7441 = vpop.permute.xlu0 %7440
    %7442 = vset.pattern.permute.xlu0 0
    %7443 = vperm.xlu0 %7442, %v7168
    %v7444 = vpop.permute.xlu0 %7443
    %7445 = vset.pattern.permute.xlu0 0
    %7446 = vperm.xlu0 %7445, %v7169
    %v7447 = vpop.permute.xlu0 %7446
    %7448 = vset.pattern.permute.xlu0 0
    %7449 = vperm.xlu0 %7448, %v7170
    %v7450 = vpop.permute.xlu0 %7449
    %7451 = vset.pattern.permute.xlu0 0
    %7452 = vperm.xlu0 %7451, %v7171
    %v7453 = vpop.permute.xlu0 %7452
    %7454 = vset.pattern.permute.xlu0 0
    %7455 = vperm.xlu0 %7454, %v7172
    %v7456 = vpop.permute.xlu0 %7455
    %7457 = vset.pattern.permute.xlu0 0
    %7458 = vperm.xlu0 %7457, %v7173
    %v7459 = vpop.permute.xlu0 %7458
    %7460 = vset.pattern.permute.xlu0 0
    %7461 = vperm.xlu0 %7460, %v7174
    %v7462 = vpop.permute.xlu0 %7461
    %7463 = vset.pattern.permute.xlu0 0
    %7464 = vperm.xlu0 %7463, %v7175
    %v7465 = vpop.permute.xlu0 %7464
    %7466 = vset.pattern.permute.xlu0 0
    %7467 = vperm.xlu0 %7466, %v7176
    %v7468 = vpop.permute.xlu0 %7467
    %7469 = vset.pattern.permute.xlu0 0
    %7470 = vperm.xlu0 %7469, %v7177
    %v7471 = vpop.permute.xlu0 %7470
    %7472 = vset.pattern.permute.xlu0 0
    %7473 = vperm.xlu0 %7472, %v7178
    %v7474 = vpop.permute.xlu0 %7473
    %7475 = vset.pattern.permute.xlu0 0
    %7476 = vperm.xlu0 %7475, %v7179
    %v7477 = vpop.permute.xlu0 %7476
    %7478 = vset.pattern.permute.xlu0 0
    %7479 = vperm.xlu0 %7478, %v7180
    %v7480 = vpop.permute.xlu0 %7479
    %7481 = vset.pattern.permute.xlu0 0
    %7482 = vperm.xlu0 %7481, %v7181
    %v7483 = vpop.permute.xlu0 %7482
    %7484 = vset.pattern.permute.xlu0 0
    %7485 = vperm.xlu0 %7484, %v7182
    %v7486 = vpop.permute.xlu0 %7485
    %7487 = vset.pattern.permute.xlu0 0
    %7488 = vperm.xlu0 %7487, %v7183
    %v7489 = vpop.permute.xlu0 %7488
    %7490 = vset.pattern.permute.xlu0 0
    %7491 = vperm.xlu0 %7490, %v7184
    %v7492 = vpop.permute.xlu0 %7491
    %7493 = vset.pattern.permute.xlu0 0
    %7494 = vperm.xlu0 %7493, %v7185
    %v7495 = vpop.permute.xlu0 %7494
    %7496 = vset.pattern.permute.xlu0 0
    %7497 = vperm.xlu0 %7496, %v7186
    %v7498 = vpop.permute.xlu0 %7497
    %7499 = vset.pattern.permute.xlu0 0
    %7500 = vperm.xlu0 %7499, %v7187
    %v7501 = vpop.permute.xlu0 %7500
    %7502 = vset.pattern.permute.xlu0 0
    %7503 = vperm.xlu0 %7502, %v7188
    %v7504 = vpop.permute.xlu0 %7503
    %7505 = vset.pattern.permute.xlu0 0
    %7506 = vperm.xlu0 %7505, %v7189
    %v7507 = vpop.permute.xlu0 %7506
    %7508 = vset.pattern.permute.xlu0 0
    %7509 = vperm.xlu0 %7508, %v7190
    %v7510 = vpop.permute.xlu0 %7509
    %7511 = vset.pattern.permute.xlu0 0
    %7512 = vperm.xlu0 %7511, %v7191
    %v7513 = vpop.permute.xlu0 %7512
    %7514 = vset.pattern.permute.xlu0 0
    %7515 = vperm.xlu0 %7514, %v7192
    %v7516 = vpop.permute.xlu0 %7515
    %7517 = vset.pattern.permute.xlu0 0
    %7518 = vperm.xlu0 %7517, %v7193
    %v7519 = vpop.permute.xlu0 %7518
    %7520 = vset.pattern.permute.xlu0 0
    %7521 = vperm.xlu0 %7520, %v7194
    %v7522 = vpop.permute.xlu0 %7521
    %7523 = vset.pattern.permute.xlu0 0
    %7524 = vperm.xlu0 %7523, %v7195
    %v7525 = vpop.permute.xlu0 %7524
    %7526 = vset.pattern.permute.xlu0 0
    %7527 = vperm.xlu0 %7526, %v7196
    %v7528 = vpop.permute.xlu0 %7527
    %7529 = vset.pattern.permute.xlu0 0
    %7530 = vperm.xlu0 %7529, %v7197
    %v7531 = vpop.permute.xlu0 %7530
    %7532 = vset.pattern.permute.xlu0 0
    %7533 = vperm.xlu0 %7532, %v7198
    %v7534 = vpop.permute.xlu0 %7533
    %7535 = vset.pattern.permute.xlu0 0
    %7536 = vperm.xlu0 %7535, %v7199
    %v7537 = vpop.permute.xlu0 %7536
    %7538 = vset.pattern.permute.xlu0 0
    %7539 = vperm.xlu0 %7538, %v7200
    %v7540 = vpop.permute.xlu0 %7539
    %7541 = vset.pattern.permute.xlu0 0
    %7542 = vperm.xlu0 %7541, %v7201
    %v7543 = vpop.permute.xlu0 %7542
    %7544 = vset.pattern.permute.xlu0 0
    %7545 = vperm.xlu0 %7544, %v7202
    %v7546 = vpop.permute.xlu0 %7545
    %7547 = vset.pattern.permute.xlu0 0
    %7548 = vperm.xlu0 %7547, %v7203
    %v7549 = vpop.permute.xlu0 %7548
    %7550 = vset.pattern.permute.xlu0 0
    %7551 = vperm.xlu0 %7550, %v7204
    %v7552 = vpop.permute.xlu0 %7551
    %7553 = vset.pattern.permute.xlu0 0
    %7554 = vperm.xlu0 %7553, %v7205
    %v7555 = vpop.permute.xlu0 %7554
    %7556 = vset.pattern.permute.xlu0 0
    %7557 = vperm.xlu0 %7556, %v7206
    %v7558 = vpop.permute.xlu0 %7557
    %7559 = vset.pattern.permute.xlu0 0
    %7560 = vperm.xlu0 %7559, %v7207
    %v7561 = vpop.permute.xlu0 %7560
    %7562 = vset.pattern.permute.xlu0 0
    %7563 = vperm.xlu0 %7562, %v7208
    %v7564 = vpop.permute.xlu0 %7563
    %7565 = vset.pattern.permute.xlu0 0
    %7566 = vperm.xlu0 %7565, %v7209
    %v7567 = vpop.permute.xlu0 %7566
    %7568 = vset.pattern.permute.xlu0 0
    %7569 = vperm.xlu0 %7568, %v7210
    %v7570 = vpop.permute.xlu0 %7569
    %7571 = vset.pattern.permute.xlu0 0
    %7572 = vperm.xlu0 %7571, %v7211
    %v7573 = vpop.permute.xlu0 %7572
    %7574 = vset.pattern.permute.xlu0 0
    %7575 = vperm.xlu0 %7574, %v7212
    %v7576 = vpop.permute.xlu0 %7575
    %7577 = vset.pattern.permute.xlu0 0
    %7578 = vperm.xlu0 %7577, %v7213
    %v7579 = vpop.permute.xlu0 %7578
    %7580 = vset.pattern.permute.xlu0 0
    %7581 = vperm.xlu0 %7580, %v7214
    %v7582 = vpop.permute.xlu0 %7581
    %7583 = vset.pattern.permute.xlu0 0
    %7584 = vperm.xlu0 %7583, %v7215
    %v7585 = vpop.permute.xlu0 %7584
    %7586 = vset.pattern.permute.xlu0 0
    %7587 = vperm.xlu0 %7586, %v7216
    %v7588 = vpop.permute.xlu0 %7587
    %7589 = vset.pattern.permute.xlu0 0
    %7590 = vperm.xlu0 %7589, %v7217
    %v7591 = vpop.permute.xlu0 %7590
    %7592 = vset.pattern.permute.xlu0 0
    %7593 = vperm.xlu0 %7592, %v7218
    %v7594 = vpop.permute.xlu0 %7593
    %7595 = vset.pattern.permute.xlu0 0
    %7596 = vperm.xlu0 %7595, %v7219
    %v7597 = vpop.permute.xlu0 %7596
    %7598 = vset.pattern.permute.xlu0 0
    %7599 = vperm.xlu0 %7598, %v7220
    %v7600 = vpop.permute.xlu0 %7599
    %7601 = vset.pattern.permute.xlu0 0
    %7602 = vperm.xlu0 %7601, %v7221
    %v7603 = vpop.permute.xlu0 %7602
    %7604 = vset.pattern.permute.xlu0 0
    %7605 = vperm.xlu0 %7604, %v7222
    %v7606 = vpop.permute.xlu0 %7605
    %7607 = vset.pattern.permute.xlu0 0
    %7608 = vperm.xlu0 %7607, %v7223
    %v7609 = vpop.permute.xlu0 %7608
    %7610 = vset.pattern.permute.xlu0 0
    %7611 = vperm.xlu0 %7610, %v7224
    %v7612 = vpop.permute.xlu0 %7611
    %7613 = vset.pattern.permute.xlu0 0
    %7614 = vperm.xlu0 %7613, %v7225
    %v7615 = vpop.permute.xlu0 %7614
    %7616 = vset.pattern.permute.xlu0 0
    %7617 = vperm.xlu0 %7616, %v7226
    %v7618 = vpop.permute.xlu0 %7617
    %7619 = vset.pattern.permute.xlu0 0
    %7620 = vperm.xlu0 %7619, %v7227
    %v7621 = vpop.permute.xlu0 %7620
    %7622 = vset.pattern.permute.xlu0 0
    %7623 = vperm.xlu0 %7622, %v7228
    %v7624 = vpop.permute.xlu0 %7623
    %7625 = vset.pattern.permute.xlu0 0
    %7626 = vperm.xlu0 %7625, %v7229
    %v7627 = vpop.permute.xlu0 %7626
    %7628 = vset.pattern.permute.xlu0 0
    %7629 = vperm.xlu0 %7628, %v7230
    %v7630 = vpop.permute.xlu0 %7629
    %7631 = vset.pattern.permute.xlu0 0
    %7632 = vperm.xlu0 %7631, %v7231
    %v7633 = vpop.permute.xlu0 %7632
    %7634 = vset.pattern.permute.xlu0 0
    %7635 = vperm.xlu0 %7634, %v7232
    %v7636 = vpop.permute.xlu0 %7635
    %7637 = vset.pattern.permute.xlu0 0
    %7638 = vperm.xlu0 %7637, %v7233
    %v7639 = vpop.permute.xlu0 %7638
    %7640 = vset.pattern.permute.xlu0 0
    %7641 = vperm.xlu0 %7640, %v7234
    %v7642 = vpop.permute.xlu0 %7641
    %7643 = vset.pattern.permute.xlu0 0
    %7644 = vperm.xlu0 %7643, %v7235
    %v7645 = vpop.permute.xlu0 %7644
    %7646 = vset.pattern.permute.xlu0 0
    %7647 = vperm.xlu0 %7646, %v7236
    %v7648 = vpop.permute.xlu0 %7647
    %7649 = vset.pattern.permute.xlu0 0
    %7650 = vperm.xlu0 %7649, %v7237
    %v7651 = vpop.permute.xlu0 %7650
    %7652 = vset.pattern.permute.xlu0 0
    %7653 = vperm.xlu0 %7652, %v7238
    %v7654 = vpop.permute.xlu0 %7653
    %7655 = vset.pattern.permute.xlu0 0
    %7656 = vperm.xlu0 %7655, %v7239
    %v7657 = vpop.permute.xlu0 %7656
    %7658 = vset.pattern.permute.xlu0 0
    %7659 = vperm.xlu0 %7658, %v7240
    %v7660 = vpop.permute.xlu0 %7659
    %7661 = vset.pattern.permute.xlu0 0
    %7662 = vperm.xlu0 %7661, %v7241
    %v7663 = vpop.permute.xlu0 %7662
    %7664 = vset.pattern.permute.xlu0 0
    %7665 = vperm.xlu0 %7664, %v7242
    %v7666 = vpop.permute.xlu0 %7665
    %7667 = vset.pattern.permute.xlu0 0
    %7668 = vperm.xlu0 %7667, %v7243
    %v7669 = vpop.permute.xlu0 %7668
    %7670 = vset.pattern.permute.xlu0 0
    %7671 = vperm.xlu0 %7670, %v7244
    %v7672 = vpop.permute.xlu0 %7671
    %7673 = vset.pattern.permute.xlu0 0
    %7674 = vperm.xlu0 %7673, %v7245
    %v7675 = vpop.permute.xlu0 %7674
    %7676 = vset.pattern.permute.xlu0 0
    %7677 = vperm.xlu0 %7676, %v7246
    %v7678 = vpop.permute.xlu0 %7677
    %7679 = vset.pattern.permute.xlu0 0
    %7680 = vperm.xlu0 %7679, %v7247
    %v7681 = vpop.permute.xlu0 %7680
    %7682 = vset.pattern.permute.xlu0 0
    %7683 = vperm.xlu0 %7682, %v7248
    %v7684 = vpop.permute.xlu0 %7683
    %7685 = vset.pattern.permute.xlu0 0
    %7686 = vperm.xlu0 %7685, %v7249
    %v7687 = vpop.permute.xlu0 %7686
    %7688 = vset.pattern.permute.xlu0 0
    %7689 = vperm.xlu0 %7688, %v7250
    %v7690 = vpop.permute.xlu0 %7689
    %7691 = vset.pattern.permute.xlu0 0
    %7692 = vperm.xlu0 %7691, %v7251
    %v7693 = vpop.permute.xlu0 %7692
    %7694 = vset.pattern.permute.xlu0 0
    %7695 = vperm.xlu0 %7694, %v7252
    %v7696 = vpop.permute.xlu0 %7695
    %7697 = vset.pattern.permute.xlu0 0
    %7698 = vperm.xlu0 %7697, %v7253
    %v7699 = vpop.permute.xlu0 %7698
    %7700 = vset.pattern.permute.xlu0 0
    %7701 = vperm.xlu0 %7700, %v7254
    %v7702 = vpop.permute.xlu0 %7701
    %7703 = vset.pattern.permute.xlu0 0
    %7704 = vperm.xlu0 %7703, %v7255
    %v7705 = vpop.permute.xlu0 %7704
    %7706 = vset.pattern.permute.xlu0 0
    %7707 = vperm.xlu0 %7706, %v7256
    %v7708 = vpop.permute.xlu0 %7707
    %7709 = vset.pattern.permute.xlu0 0
    %7710 = vperm.xlu0 %7709, %v7257
    %v7711 = vpop.permute.xlu0 %7710
    %7712 = vset.pattern.permute.xlu0 0
    %7713 = vperm.xlu0 %7712, %v7258
    %v7714 = vpop.permute.xlu0 %7713
    %7715 = vset.pattern.permute.xlu0 0
    %7716 = vperm.xlu0 %7715, %v7259
    %v7717 = vpop.permute.xlu0 %7716
    %7718 = vset.pattern.permute.xlu0 0
    %7719 = vperm.xlu0 %7718, %v7260
    %v7720 = vpop.permute.xlu0 %7719
    %7721 = vset.pattern.permute.xlu0 0
    %7722 = vperm.xlu0 %7721, %v7261
    %v7723 = vpop.permute.xlu0 %7722
    %7724 = vset.pattern.permute.xlu0 0
    %7725 = vperm.xlu0 %7724, %v7262
    %v7726 = vpop.permute.xlu0 %7725
    %7727 = vset.pattern.permute.xlu0 0
    %7728 = vperm.xlu0 %7727, %v7263
    %v7729 = vpop.permute.xlu0 %7728
    %7730 = vset.pattern.permute.xlu0 0
    %7731 = vperm.xlu0 %7730, %v7264
    %v7732 = vpop.permute.xlu0 %7731
    %7733 = vset.pattern.permute.xlu0 0
    %7734 = vperm.xlu0 %7733, %v7265
    %v7735 = vpop.permute.xlu0 %7734
    %7736 = vset.pattern.permute.xlu0 0
    %7737 = vperm.xlu0 %7736, %v7266
    %v7738 = vpop.permute.xlu0 %7737
    %7739 = vset.pattern.permute.xlu0 0
    %7740 = vperm.xlu0 %7739, %v7267
    %v7741 = vpop.permute.xlu0 %7740
    %7742 = vset.pattern.permute.xlu0 0
    %7743 = vperm.xlu0 %7742, %v7268
    %v7744 = vpop.permute.xlu0 %7743
    %7745 = vset.pattern.permute.xlu0 0
    %7746 = vperm.xlu0 %7745, %v7269
    %v7747 = vpop.permute.xlu0 %7746
    %7748 = vset.pattern.permute.xlu0 0
    %7749 = vperm.xlu0 %7748, %v7270
    %v7750 = vpop.permute.xlu0 %7749
    %7751 = vset.pattern.permute.xlu0 0
    %7752 = vperm.xlu0 %7751, %v7271
    %v7753 = vpop.permute.xlu0 %7752
    %7754 = vset.pattern.permute.xlu0 0
    %7755 = vperm.xlu0 %7754, %v7272
    %v7756 = vpop.permute.xlu0 %7755
    %7757 = vset.pattern.permute.xlu0 0
    %7758 = vperm.xlu0 %7757, %v7273
    %v7759 = vpop.permute.xlu0 %7758
    %7760 = vset.pattern.permute.xlu0 0
    %7761 = vperm.xlu0 %7760, %v7274
    %v7762 = vpop.permute.xlu0 %7761
    %7763 = vset.pattern.permute.xlu0 0
    %7764 = vperm.xlu0 %7763, %v7275
    %v7765 = vpop.permute.xlu0 %7764
    %7766 = vset.pattern.permute.xlu0 0
    %7767 = vperm.xlu0 %7766, %v7276
    %v7768 = vpop.permute.xlu0 %7767
    %7769 = vset.pattern.permute.xlu0 0
    %7770 = vperm.xlu0 %7769, %v7277
    %v7771 = vpop.permute.xlu0 %7770
    %7772 = vset.pattern.permute.xlu0 0
    %7773 = vperm.xlu0 %7772, %v7278
    %v7774 = vpop.permute.xlu0 %7773
    %7775 = vset.pattern.permute.xlu0 0
    %7776 = vperm.xlu0 %7775, %v7279
    %v7777 = vpop.permute.xlu0 %7776
    %7778 = vset.pattern.permute.xlu0 0
    %7779 = vperm.xlu0 %7778, %v7280
    %v7780 = vpop.permute.xlu0 %7779
    %7781 = vset.pattern.permute.xlu0 0
    %7782 = vperm.xlu0 %7781, %v7281
    %v7783 = vpop.permute.xlu0 %7782
    %7784 = vset.pattern.permute.xlu0 0
    %7785 = vperm.xlu0 %7784, %v7282
    %v7786 = vpop.permute.xlu0 %7785
    %7787 = vset.pattern.permute.xlu0 0
    %7788 = vperm.xlu0 %7787, %v7283
    %v7789 = vpop.permute.xlu0 %7788
    %7790 = vset.pattern.permute.xlu0 0
    %7791 = vperm.xlu0 %7790, %v7284
    %v7792 = vpop.permute.xlu0 %7791
    %7793 = vset.pattern.permute.xlu0 0
    %7794 = vperm.xlu0 %7793, %v7285
    %v7795 = vpop.permute.xlu0 %7794
    %7796 = vset.pattern.permute.xlu0 0
    %7797 = vperm.xlu0 %7796, %v7286
    %v7798 = vpop.permute.xlu0 %7797
    %v7799 = vperm.slane %v7417, %v5661
    %v7800 = vperm.slane %v7420, %v5663
    %v7801 = vsel %vm5665, %v7800, %v7799
    %v7802 = vperm.slane %v7423, %v5667
    %v7803 = vsel %vm5669, %v7802, %v7801
    %v7804 = vperm.slane %v7426, %v5671
    %v7805 = vsel %vm5673, %v7804, %v7803
    %v7806 = vperm.slane %v7429, %v5675
    %v7807 = vsel %vm5677, %v7806, %v7805
    %v7808 = vperm.slane %v7432, %v5679
    %v7809 = vsel %vm5681, %v7808, %v7807
    %v7810 = vperm.slane %v7435, %v5683
    %v7811 = vsel %vm5685, %v7810, %v7809
    %v7812 = vperm.slane %v7438, %v5687
    %v7813 = vsel %vm5689, %v7812, %v7811
    %v7814 = vperm.slane %v7441, %v5691
    %v7815 = vsel %vm5693, %v7814, %v7813
    %v7816 = vperm.slane %v7444, %v5695
    %v7817 = vsel %vm5697, %v7816, %v7815
    %v7818 = vperm.slane %v7447, %v5699
    %v7819 = vsel %vm5701, %v7818, %v7817
    %v7820 = vperm.slane %v7450, %v5703
    %v7821 = vsel %vm5705, %v7820, %v7819
    %v7822 = vperm.slane %v7453, %v5707
    %v7823 = vsel %vm5709, %v7822, %v7821
    %v7824 = vperm.slane %v7456, %v5711
    %v7825 = vsel %vm5713, %v7824, %v7823
    %v7826 = vperm.slane %v7459, %v5715
    %v7827 = vsel %vm5717, %v7826, %v7825
    %v7828 = vperm.slane %v7462, %v5719
    %v7829 = vsel %vm5721, %v7828, %v7827
    %v7830 = vperm.slane %v7465, %v5661
    %v7831 = vperm.slane %v7468, %v5663
    %v7832 = vsel %vm5665, %v7831, %v7830
    %v7833 = vperm.slane %v7471, %v5667
    %v7834 = vsel %vm5669, %v7833, %v7832
    %v7835 = vperm.slane %v7474, %v5671
    %v7836 = vsel %vm5673, %v7835, %v7834
    %v7837 = vperm.slane %v7477, %v5675
    %v7838 = vsel %vm5677, %v7837, %v7836
    %v7839 = vperm.slane %v7480, %v5679
    %v7840 = vsel %vm5681, %v7839, %v7838
    %v7841 = vperm.slane %v7483, %v5683
    %v7842 = vsel %vm5685, %v7841, %v7840
    %v7843 = vperm.slane %v7486, %v5687
    %v7844 = vsel %vm5689, %v7843, %v7842
    %v7845 = vperm.slane %v7489, %v5691
    %v7846 = vsel %vm5693, %v7845, %v7844
    %v7847 = vperm.slane %v7492, %v5695
    %v7848 = vsel %vm5697, %v7847, %v7846
    %v7849 = vperm.slane %v7495, %v5699
    %v7850 = vsel %vm5701, %v7849, %v7848
    %v7851 = vperm.slane %v7498, %v5703
    %v7852 = vsel %vm5705, %v7851, %v7850
    %v7853 = vperm.slane %v7501, %v5707
    %v7854 = vsel %vm5709, %v7853, %v7852
    %v7855 = vperm.slane %v7504, %v5711
    %v7856 = vsel %vm5713, %v7855, %v7854
    %v7857 = vperm.slane %v7507, %v5715
    %v7858 = vsel %vm5717, %v7857, %v7856
    %v7859 = vperm.slane %v7510, %v5719
    %v7860 = vsel %vm5721, %v7859, %v7858
    %v7861 = vperm.slane %v7513, %v5661
    %v7862 = vperm.slane %v7516, %v5663
    %v7863 = vsel %vm5665, %v7862, %v7861
    %v7864 = vperm.slane %v7519, %v5667
    %v7865 = vsel %vm5669, %v7864, %v7863
    %v7866 = vperm.slane %v7522, %v5671
    %v7867 = vsel %vm5673, %v7866, %v7865
    %v7868 = vperm.slane %v7525, %v5675
    %v7869 = vsel %vm5677, %v7868, %v7867
    %v7870 = vperm.slane %v7528, %v5679
    %v7871 = vsel %vm5681, %v7870, %v7869
    %v7872 = vperm.slane %v7531, %v5683
    %v7873 = vsel %vm5685, %v7872, %v7871
    %v7874 = vperm.slane %v7534, %v5687
    %v7875 = vsel %vm5689, %v7874, %v7873
    %v7876 = vperm.slane %v7537, %v5691
    %v7877 = vsel %vm5693, %v7876, %v7875
    %v7878 = vperm.slane %v7540, %v5695
    %v7879 = vsel %vm5697, %v7878, %v7877
    %v7880 = vperm.slane %v7543, %v5699
    %v7881 = vsel %vm5701, %v7880, %v7879
    %v7882 = vperm.slane %v7546, %v5703
    %v7883 = vsel %vm5705, %v7882, %v7881
    %v7884 = vperm.slane %v7549, %v5707
    %v7885 = vsel %vm5709, %v7884, %v7883
    %v7886 = vperm.slane %v7552, %v5711
    %v7887 = vsel %vm5713, %v7886, %v7885
    %v7888 = vperm.slane %v7555, %v5715
    %v7889 = vsel %vm5717, %v7888, %v7887
    %v7890 = vperm.slane %v7558, %v5719
    %v7891 = vsel %vm5721, %v7890, %v7889
    %v7892 = vperm.slane %v7561, %v5661
    %v7893 = vperm.slane %v7564, %v5663
    %v7894 = vsel %vm5665, %v7893, %v7892
    %v7895 = vperm.slane %v7567, %v5667
    %v7896 = vsel %vm5669, %v7895, %v7894
    %v7897 = vperm.slane %v7570, %v5671
    %v7898 = vsel %vm5673, %v7897, %v7896
    %v7899 = vperm.slane %v7573, %v5675
    %v7900 = vsel %vm5677, %v7899, %v7898
    %v7901 = vperm.slane %v7576, %v5679
    %v7902 = vsel %vm5681, %v7901, %v7900
    %v7903 = vperm.slane %v7579, %v5683
    %v7904 = vsel %vm5685, %v7903, %v7902
    %v7905 = vperm.slane %v7582, %v5687
    %v7906 = vsel %vm5689, %v7905, %v7904
    %v7907 = vperm.slane %v7585, %v5691
    %v7908 = vsel %vm5693, %v7907, %v7906
    %v7909 = vperm.slane %v7588, %v5695
    %v7910 = vsel %vm5697, %v7909, %v7908
    %v7911 = vperm.slane %v7591, %v5699
    %v7912 = vsel %vm5701, %v7911, %v7910
    %v7913 = vperm.slane %v7594, %v5703
    %v7914 = vsel %vm5705, %v7913, %v7912
    %v7915 = vperm.slane %v7597, %v5707
    %v7916 = vsel %vm5709, %v7915, %v7914
    %v7917 = vperm.slane %v7600, %v5711
    %v7918 = vsel %vm5713, %v7917, %v7916
    %v7919 = vperm.slane %v7603, %v5715
    %v7920 = vsel %vm5717, %v7919, %v7918
    %v7921 = vperm.slane %v7606, %v5719
    %v7922 = vsel %vm5721, %v7921, %v7920
    %v7923 = vperm.slane %v7609, %v5661
    %v7924 = vperm.slane %v7612, %v5663
    %v7925 = vsel %vm5665, %v7924, %v7923
    %v7926 = vperm.slane %v7615, %v5667
    %v7927 = vsel %vm5669, %v7926, %v7925
    %v7928 = vperm.slane %v7618, %v5671
    %v7929 = vsel %vm5673, %v7928, %v7927
    %v7930 = vperm.slane %v7621, %v5675
    %v7931 = vsel %vm5677, %v7930, %v7929
    %v7932 = vperm.slane %v7624, %v5679
    %v7933 = vsel %vm5681, %v7932, %v7931
    %v7934 = vperm.slane %v7627, %v5683
    %v7935 = vsel %vm5685, %v7934, %v7933
    %v7936 = vperm.slane %v7630, %v5687
    %v7937 = vsel %vm5689, %v7936, %v7935
    %v7938 = vperm.slane %v7633, %v5691
    %v7939 = vsel %vm5693, %v7938, %v7937
    %v7940 = vperm.slane %v7636, %v5695
    %v7941 = vsel %vm5697, %v7940, %v7939
    %v7942 = vperm.slane %v7639, %v5699
    %v7943 = vsel %vm5701, %v7942, %v7941
    %v7944 = vperm.slane %v7642, %v5703
    %v7945 = vsel %vm5705, %v7944, %v7943
    %v7946 = vperm.slane %v7645, %v5707
    %v7947 = vsel %vm5709, %v7946, %v7945
    %v7948 = vperm.slane %v7648, %v5711
    %v7949 = vsel %vm5713, %v7948, %v7947
    %v7950 = vperm.slane %v7651, %v5715
    %v7951 = vsel %vm5717, %v7950, %v7949
    %v7952 = vperm.slane %v7654, %v5719
    %v7953 = vsel %vm5721, %v7952, %v7951
    %v7954 = vperm.slane %v7657, %v5661
    %v7955 = vperm.slane %v7660, %v5663
    %v7956 = vsel %vm5665, %v7955, %v7954
    %v7957 = vperm.slane %v7663, %v5667
    %v7958 = vsel %vm5669, %v7957, %v7956
    %v7959 = vperm.slane %v7666, %v5671
    %v7960 = vsel %vm5673, %v7959, %v7958
    %v7961 = vperm.slane %v7669, %v5675
    %v7962 = vsel %vm5677, %v7961, %v7960
    %v7963 = vperm.slane %v7672, %v5679
    %v7964 = vsel %vm5681, %v7963, %v7962
    %v7965 = vperm.slane %v7675, %v5683
    %v7966 = vsel %vm5685, %v7965, %v7964
    %v7967 = vperm.slane %v7678, %v5687
    %v7968 = vsel %vm5689, %v7967, %v7966
    %v7969 = vperm.slane %v7681, %v5691
    %v7970 = vsel %vm5693, %v7969, %v7968
    %v7971 = vperm.slane %v7684, %v5695
    %v7972 = vsel %vm5697, %v7971, %v7970
    %v7973 = vperm.slane %v7687, %v5699
    %v7974 = vsel %vm5701, %v7973, %v7972
    %v7975 = vperm.slane %v7690, %v5703
    %v7976 = vsel %vm5705, %v7975, %v7974
    %v7977 = vperm.slane %v7693, %v5707
    %v7978 = vsel %vm5709, %v7977, %v7976
    %v7979 = vperm.slane %v7696, %v5711
    %v7980 = vsel %vm5713, %v7979, %v7978
    %v7981 = vperm.slane %v7699, %v5715
    %v7982 = vsel %vm5717, %v7981, %v7980
    %v7983 = vperm.slane %v7702, %v5719
    %v7984 = vsel %vm5721, %v7983, %v7982
    %v7985 = vperm.slane %v7705, %v5661
    %v7986 = vperm.slane %v7708, %v5663
    %v7987 = vsel %vm5665, %v7986, %v7985
    %v7988 = vperm.slane %v7711, %v5667
    %v7989 = vsel %vm5669, %v7988, %v7987
    %v7990 = vperm.slane %v7714, %v5671
    %v7991 = vsel %vm5673, %v7990, %v7989
    %v7992 = vperm.slane %v7717, %v5675
    %v7993 = vsel %vm5677, %v7992, %v7991
    %v7994 = vperm.slane %v7720, %v5679
    %v7995 = vsel %vm5681, %v7994, %v7993
    %v7996 = vperm.slane %v7723, %v5683
    %v7997 = vsel %vm5685, %v7996, %v7995
    %v7998 = vperm.slane %v7726, %v5687
    %v7999 = vsel %vm5689, %v7998, %v7997
    %v8000 = vperm.slane %v7729, %v5691
    %v8001 = vsel %vm5693, %v8000, %v7999
    %v8002 = vperm.slane %v7732, %v5695
    %v8003 = vsel %vm5697, %v8002, %v8001
    %v8004 = vperm.slane %v7735, %v5699
    %v8005 = vsel %vm5701, %v8004, %v8003
    %v8006 = vperm.slane %v7738, %v5703
    %v8007 = vsel %vm5705, %v8006, %v8005
    %v8008 = vperm.slane %v7741, %v5707
    %v8009 = vsel %vm5709, %v8008, %v8007
    %v8010 = vperm.slane %v7744, %v5711
    %v8011 = vsel %vm5713, %v8010, %v8009
    %v8012 = vperm.slane %v7747, %v5715
    %v8013 = vsel %vm5717, %v8012, %v8011
    %v8014 = vperm.slane %v7750, %v5719
    %v8015 = vsel %vm5721, %v8014, %v8013
    %v8016 = vperm.slane %v7753, %v5661
    %v8017 = vperm.slane %v7756, %v5663
    %v8018 = vsel %vm5665, %v8017, %v8016
    %v8019 = vperm.slane %v7759, %v5667
    %v8020 = vsel %vm5669, %v8019, %v8018
    %v8021 = vperm.slane %v7762, %v5671
    %v8022 = vsel %vm5673, %v8021, %v8020
    %v8023 = vperm.slane %v7765, %v5675
    %v8024 = vsel %vm5677, %v8023, %v8022
    %v8025 = vperm.slane %v7768, %v5679
    %v8026 = vsel %vm5681, %v8025, %v8024
    %v8027 = vperm.slane %v7771, %v5683
    %v8028 = vsel %vm5685, %v8027, %v8026
    %v8029 = vperm.slane %v7774, %v5687
    %v8030 = vsel %vm5689, %v8029, %v8028
    %v8031 = vperm.slane %v7777, %v5691
    %v8032 = vsel %vm5693, %v8031, %v8030
    %v8033 = vperm.slane %v7780, %v5695
    %v8034 = vsel %vm5697, %v8033, %v8032
    %v8035 = vperm.slane %v7783, %v5699
    %v8036 = vsel %vm5701, %v8035, %v8034
    %v8037 = vperm.slane %v7786, %v5703
    %v8038 = vsel %vm5705, %v8037, %v8036
    %v8039 = vperm.slane %v7789, %v5707
    %v8040 = vsel %vm5709, %v8039, %v8038
    %v8041 = vperm.slane %v7792, %v5711
    %v8042 = vsel %vm5713, %v8041, %v8040
    %v8043 = vperm.slane %v7795, %v5715
    %v8044 = vsel %vm5717, %v8043, %v8042
    %v8045 = vperm.slane %v7798, %v5719
    %v8046 = vsel %vm5721, %v8045, %v8044
    %v8047 = vsel %vm5940, %v7860, %v7829
    %v8048 = vsel %vm5942, %v7891, %v8047
    %v8049 = vsel %vm5944, %v7922, %v8048
    %v8050 = vsel %vm5946, %v7953, %v8049
    %v8051 = vsel %vm5948, %v7984, %v8050
    %v8052 = vsel %vm5950, %v8015, %v8051
    %v8053 = vsel %vm5952, %v8046, %v8052
    %8055 = vst [vmem:[#allocation10] sm:$0xff] %v8053
    %v8184 = vmul.f32 %v7417, %v85
    %v8185 = vmul.f32 %v7420, %v86
    %v8186 = vmul.f32 %v7423, %v87
    %v8187 = vmul.f32 %v7426, %v88
    %v8188 = vmul.f32 %v7429, %v89
    %v8189 = vmul.f32 %v7432, %v90
    %v8190 = vmul.f32 %v7435, %v91
    %v8191 = vmul.f32 %v7438, %v92
    %v8192 = vmul.f32 %v7441, %v93
    %v8193 = vmul.f32 %v7444, %v94
    %v8194 = vmul.f32 %v7447, %v95
    %v8195 = vmul.f32 %v7450, %v96
    %v8196 = vmul.f32 %v7453, %v97
    %v8197 = vmul.f32 %v7456, %v98
    %v8198 = vmul.f32 %v7459, %v99
    %v8199 = vmul.f32 %v7462, %v100
    %v8200 = vmul.f32 %v7465, %v101
    %v8201 = vmul.f32 %v7468, %v102
    %v8202 = vmul.f32 %v7471, %v103
    %v8203 = vmul.f32 %v7474, %v104
    %v8204 = vmul.f32 %v7477, %v105
    %v8205 = vmul.f32 %v7480, %v106
    %v8206 = vmul.f32 %v7483, %v107
    %v8207 = vmul.f32 %v7486, %v108
    %v8208 = vmul.f32 %v7489, %v109
    %v8209 = vmul.f32 %v7492, %v110
    %v8210 = vmul.f32 %v7495, %v111
    %v8211 = vmul.f32 %v7498, %v112
    %v8212 = vmul.f32 %v7501, %v113
    %v8213 = vmul.f32 %v7504, %v114
    %v8214 = vmul.f32 %v7507, %v115
    %v8215 = vmul.f32 %v7510, %v116
    %v8216 = vmul.f32 %v7513, %v117
    %v8217 = vmul.f32 %v7516, %v118
    %v8218 = vmul.f32 %v7519, %v119
    %v8219 = vmul.f32 %v7522, %v120
    %v8220 = vmul.f32 %v7525, %v121
    %v8221 = vmul.f32 %v7528, %v122
    %v8222 = vmul.f32 %v7531, %v123
    %v8223 = vmul.f32 %v7534, %v124
    %v8224 = vmul.f32 %v7537, %v125
    %v8225 = vmul.f32 %v7540, %v126
    %v8226 = vmul.f32 %v7543, %v127
    %v8227 = vmul.f32 %v7546, %v128
    %v8228 = vmul.f32 %v7549, %v129
    %v8229 = vmul.f32 %v7552, %v130
    %v8230 = vmul.f32 %v7555, %v131
    %v8231 = vmul.f32 %v7558, %v132
    %v8232 = vmul.f32 %v7561, %v133
    %v8233 = vmul.f32 %v7564, %v134
    %v8234 = vmul.f32 %v7567, %v135
    %v8235 = vmul.f32 %v7570, %v136
    %v8236 = vmul.f32 %v7573, %v137
    %v8237 = vmul.f32 %v7576, %v138
    %v8238 = vmul.f32 %v7579, %v139
    %v8239 = vmul.f32 %v7582, %v140
    %v8240 = vmul.f32 %v7585, %v141
    %v8241 = vmul.f32 %v7588, %v142
    %v8242 = vmul.f32 %v7591, %v143
    %v8243 = vmul.f32 %v7594, %v144
    %v8244 = vmul.f32 %v7597, %v145
    %v8245 = vmul.f32 %v7600, %v146
    %v8246 = vmul.f32 %v7603, %v147
    %v8247 = vmul.f32 %v7606, %v148
    %v8248 = vmul.f32 %v7609, %v149
    %v8249 = vmul.f32 %v7612, %v150
    %v8250 = vmul.f32 %v7615, %v151
    %v8251 = vmul.f32 %v7618, %v152
    %v8252 = vmul.f32 %v7621, %v153
    %v8253 = vmul.f32 %v7624, %v154
    %v8254 = vmul.f32 %v7627, %v155
    %v8255 = vmul.f32 %v7630, %v156
    %v8256 = vmul.f32 %v7633, %v157
    %v8257 = vmul.f32 %v7636, %v158
    %v8258 = vmul.f32 %v7639, %v159
    %v8259 = vmul.f32 %v7642, %v160
    %v8260 = vmul.f32 %v7645, %v161
    %v8261 = vmul.f32 %v7648, %v162
    %v8262 = vmul.f32 %v7651, %v163
    %v8263 = vmul.f32 %v7654, %v164
    %v8264 = vmul.f32 %v7657, %v165
    %v8265 = vmul.f32 %v7660, %v166
    %v8266 = vmul.f32 %v7663, %v167
    %v8267 = vmul.f32 %v7666, %v168
    %v8268 = vmul.f32 %v7669, %v169
    %v8269 = vmul.f32 %v7672, %v170
    %v8270 = vmul.f32 %v7675, %v171
    %v8271 = vmul.f32 %v7678, %v172
    %v8272 = vmul.f32 %v7681, %v173
    %v8273 = vmul.f32 %v7684, %v174
    %v8274 = vmul.f32 %v7687, %v175
    %v8275 = vmul.f32 %v7690, %v176
    %v8276 = vmul.f32 %v7693, %v177
    %v8277 = vmul.f32 %v7696, %v178
    %v8278 = vmul.f32 %v7699, %v179
    %v8279 = vmul.f32 %v7702, %v180
    %v8280 = vmul.f32 %v7705, %v181
    %v8281 = vmul.f32 %v7708, %v182
    %v8282 = vmul.f32 %v7711, %v183
    %v8283 = vmul.f32 %v7714, %v184
    %v8284 = vmul.f32 %v7717, %v185
    %v8285 = vmul.f32 %v7720, %v186
    %v8286 = vmul.f32 %v7723, %v187
    %v8287 = vmul.f32 %v7726, %v188
    %v8288 = vmul.f32 %v7729, %v189
    %v8289 = vmul.f32 %v7732, %v190
    %v8290 = vmul.f32 %v7735, %v191
    %v8291 = vmul.f32 %v7738, %v192
    %v8292 = vmul.f32 %v7741, %v193
    %v8293 = vmul.f32 %v7744, %v194
    %v8294 = vmul.f32 %v7747, %v195
    %v8295 = vmul.f32 %v7750, %v196
    %v8296 = vmul.f32 %v7753, %v197
    %v8297 = vmul.f32 %v7756, %v198
    %v8298 = vmul.f32 %v7759, %v199
    %v8299 = vmul.f32 %v7762, %v200
    %v8300 = vmul.f32 %v7765, %v201
    %v8301 = vmul.f32 %v7768, %v202
    %v8302 = vmul.f32 %v7771, %v203
    %v8303 = vmul.f32 %v7774, %v204
    %v8304 = vmul.f32 %v7777, %v205
    %v8305 = vmul.f32 %v7780, %v206
    %v8306 = vmul.f32 %v7783, %v207
    %v8307 = vmul.f32 %v7786, %v208
    %v8308 = vmul.f32 %v7789, %v209
    %v8309 = vmul.f32 %v7792, %v210
    %v8310 = vmul.f32 %v7795, %v211
    %v8311 = vmul.f32 %v7798, %v212
    %v8312 = vadd.f32 %v8184, %v8185
    %v8313 = vadd.f32 %v8312, %v8186
    %v8314 = vadd.f32 %v8313, %v8187
    %v8315 = vadd.f32 %v8314, %v8188
    %v8316 = vadd.f32 %v8315, %v8189
    %v8317 = vadd.f32 %v8316, %v8190
    %v8318 = vadd.f32 %v8317, %v8191
    %v8319 = vadd.f32 %v8318, %v8192
    %v8320 = vadd.f32 %v8319, %v8193
    %v8321 = vadd.f32 %v8320, %v8194
    %v8322 = vadd.f32 %v8321, %v8195
    %v8323 = vadd.f32 %v8322, %v8196
    %v8324 = vadd.f32 %v8323, %v8197
    %v8325 = vadd.f32 %v8324, %v8198
    %v8326 = vadd.f32 %v8325, %v8199
    %v8327 = vrot.slane %v8326, 4
    %v8328 = vadd.f32 %v8326, %v8327
    %v8329 = vrot.slane %v8328, 2
    %v8330 = vadd.f32 %v8328, %v8329
    %v8331 = vrot.slane %v8330, 1
    %v8332 = vadd.f32 %v8330, %v8331
    %v8333 = vadd.f32 %v8200, %v8201
    %v8334 = vadd.f32 %v8333, %v8202
    %v8335 = vadd.f32 %v8334, %v8203
    %v8336 = vadd.f32 %v8335, %v8204
    %v8337 = vadd.f32 %v8336, %v8205
    %v8338 = vadd.f32 %v8337, %v8206
    %v8339 = vadd.f32 %v8338, %v8207
    %v8340 = vadd.f32 %v8339, %v8208
    %v8341 = vadd.f32 %v8340, %v8209
    %v8342 = vadd.f32 %v8341, %v8210
    %v8343 = vadd.f32 %v8342, %v8211
    %v8344 = vadd.f32 %v8343, %v8212
    %v8345 = vadd.f32 %v8344, %v8213
    %v8346 = vadd.f32 %v8345, %v8214
    %v8347 = vadd.f32 %v8346, %v8215
    %v8348 = vrot.slane %v8347, 4
    %v8349 = vadd.f32 %v8347, %v8348
    %v8350 = vrot.slane %v8349, 2
    %v8351 = vadd.f32 %v8349, %v8350
    %v8352 = vrot.slane %v8351, 1
    %v8353 = vadd.f32 %v8351, %v8352
    %v8354 = vadd.f32 %v8216, %v8217
    %v8355 = vadd.f32 %v8354, %v8218
    %v8356 = vadd.f32 %v8355, %v8219
    %v8357 = vadd.f32 %v8356, %v8220
    %v8358 = vadd.f32 %v8357, %v8221
    %v8359 = vadd.f32 %v8358, %v8222
    %v8360 = vadd.f32 %v8359, %v8223
    %v8361 = vadd.f32 %v8360, %v8224
    %v8362 = vadd.f32 %v8361, %v8225
    %v8363 = vadd.f32 %v8362, %v8226
    %v8364 = vadd.f32 %v8363, %v8227
    %v8365 = vadd.f32 %v8364, %v8228
    %v8366 = vadd.f32 %v8365, %v8229
    %v8367 = vadd.f32 %v8366, %v8230
    %v8368 = vadd.f32 %v8367, %v8231
    %v8369 = vrot.slane %v8368, 4
    %v8370 = vadd.f32 %v8368, %v8369
    %v8371 = vrot.slane %v8370, 2
    %v8372 = vadd.f32 %v8370, %v8371
    %v8373 = vrot.slane %v8372, 1
    %v8374 = vadd.f32 %v8372, %v8373
    %v8375 = vadd.f32 %v8232, %v8233
    %v8376 = vadd.f32 %v8375, %v8234
    %v8377 = vadd.f32 %v8376, %v8235
    %v8378 = vadd.f32 %v8377, %v8236
    %v8379 = vadd.f32 %v8378, %v8237
    %v8380 = vadd.f32 %v8379, %v8238
    %v8381 = vadd.f32 %v8380, %v8239
    %v8382 = vadd.f32 %v8381, %v8240
    %v8383 = vadd.f32 %v8382, %v8241
    %v8384 = vadd.f32 %v8383, %v8242
    %v8385 = vadd.f32 %v8384, %v8243
    %v8386 = vadd.f32 %v8385, %v8244
    %v8387 = vadd.f32 %v8386, %v8245
    %v8388 = vadd.f32 %v8387, %v8246
    %v8389 = vadd.f32 %v8388, %v8247
    %v8390 = vrot.slane %v8389, 4
    %v8391 = vadd.f32 %v8389, %v8390
    %v8392 = vrot.slane %v8391, 2
    %v8393 = vadd.f32 %v8391, %v8392
    %v8394 = vrot.slane %v8393, 1
    %v8395 = vadd.f32 %v8393, %v8394
    %v8396 = vadd.f32 %v8248, %v8249
    %v8397 = vadd.f32 %v8396, %v8250
    %v8398 = vadd.f32 %v8397, %v8251
    %v8399 = vadd.f32 %v8398, %v8252
    %v8400 = vadd.f32 %v8399, %v8253
    %v8401 = vadd.f32 %v8400, %v8254
    %v8402 = vadd.f32 %v8401, %v8255
    %v8403 = vadd.f32 %v8402, %v8256
    %v8404 = vadd.f32 %v8403, %v8257
    %v8405 = vadd.f32 %v8404, %v8258
    %v8406 = vadd.f32 %v8405, %v8259
    %v8407 = vadd.f32 %v8406, %v8260
    %v8408 = vadd.f32 %v8407, %v8261
    %v8409 = vadd.f32 %v8408, %v8262
    %v8410 = vadd.f32 %v8409, %v8263
    %v8411 = vrot.slane %v8410, 4
    %v8412 = vadd.f32 %v8410, %v8411
    %v8413 = vrot.slane %v8412, 2
    %v8414 = vadd.f32 %v8412, %v8413
    %v8415 = vrot.slane %v8414, 1
    %v8416 = vadd.f32 %v8414, %v8415
    %v8417 = vadd.f32 %v8264, %v8265
    %v8418 = vadd.f32 %v8417, %v8266
    %v8419 = vadd.f32 %v8418, %v8267
    %v8420 = vadd.f32 %v8419, %v8268
    %v8421 = vadd.f32 %v8420, %v8269
    %v8422 = vadd.f32 %v8421, %v8270
    %v8423 = vadd.f32 %v8422, %v8271
    %v8424 = vadd.f32 %v8423, %v8272
    %v8425 = vadd.f32 %v8424, %v8273
    %v8426 = vadd.f32 %v8425, %v8274
    %v8427 = vadd.f32 %v8426, %v8275
    %v8428 = vadd.f32 %v8427, %v8276
    %v8429 = vadd.f32 %v8428, %v8277
    %v8430 = vadd.f32 %v8429, %v8278
    %v8431 = vadd.f32 %v8430, %v8279
    %v8432 = vrot.slane %v8431, 4
    %v8433 = vadd.f32 %v8431, %v8432
    %v8434 = vrot.slane %v8433, 2
    %v8435 = vadd.f32 %v8433, %v8434
    %v8436 = vrot.slane %v8435, 1
    %v8437 = vadd.f32 %v8435, %v8436
    %v8438 = vadd.f32 %v8280, %v8281
    %v8439 = vadd.f32 %v8438, %v8282
    %v8440 = vadd.f32 %v8439, %v8283
    %v8441 = vadd.f32 %v8440, %v8284
    %v8442 = vadd.f32 %v8441, %v8285
    %v8443 = vadd.f32 %v8442, %v8286
    %v8444 = vadd.f32 %v8443, %v8287
    %v8445 = vadd.f32 %v8444, %v8288
    %v8446 = vadd.f32 %v8445, %v8289
    %v8447 = vadd.f32 %v8446, %v8290
    %v8448 = vadd.f32 %v8447, %v8291
    %v8449 = vadd.f32 %v8448, %v8292
    %v8450 = vadd.f32 %v8449, %v8293
    %v8451 = vadd.f32 %v8450, %v8294
    %v8452 = vadd.f32 %v8451, %v8295
    %v8453 = vrot.slane %v8452, 4
    %v8454 = vadd.f32 %v8452, %v8453
    %v8455 = vrot.slane %v8454, 2
    %v8456 = vadd.f32 %v8454, %v8455
    %v8457 = vrot.slane %v8456, 1
    %v8458 = vadd.f32 %v8456, %v8457
    %v8459 = vadd.f32 %v8296, %v8297
    %v8460 = vadd.f32 %v8459, %v8298
    %v8461 = vadd.f32 %v8460, %v8299
    %v8462 = vadd.f32 %v8461, %v8300
    %v8463 = vadd.f32 %v8462, %v8301
    %v8464 = vadd.f32 %v8463, %v8302
    %v8465 = vadd.f32 %v8464, %v8303
    %v8466 = vadd.f32 %v8465, %v8304
    %v8467 = vadd.f32 %v8466, %v8305
    %v8468 = vadd.f32 %v8467, %v8306
    %v8469 = vadd.f32 %v8468, %v8307
    %v8470 = vadd.f32 %v8469, %v8308
    %v8471 = vadd.f32 %v8470, %v8309
    %v8472 = vadd.f32 %v8471, %v8310
    %v8473 = vadd.f32 %v8472, %v8311
    %v8474 = vrot.slane %v8473, 4
    %v8475 = vadd.f32 %v8473, %v8474
    %v8476 = vrot.slane %v8475, 2
    %v8477 = vadd.f32 %v8475, %v8476
    %v8478 = vrot.slane %v8477, 1
    %v8479 = vadd.f32 %v8477, %v8478
    %v8488 = vsel %vm5940, %v8353, %v8332
    %v8489 = vsel %vm5942, %v8374, %v8488
    %v8490 = vsel %vm5944, %v8395, %v8489
    %v8491 = vsel %vm5946, %v8416, %v8490
    %v8492 = vsel %vm5948, %v8437, %v8491
    %v8493 = vsel %vm5950, %v8458, %v8492
    %v8494 = vsel %vm5952, %v8479, %v8493
    %8496 = vst [vmem:[%s5] sm:$0xff] %v8494
    // Predicated region
    $region38: #{_bahdanau_attention_jit.1} parent=1 // pred_check
      _
    $region39: #{_bahdanau_attention_jit.1} parent=1 // pred_check_branch
      %8498 = sbr.rel (0) target = $region41
    $region40: #{_bahdanau_attention_jit.1} parent=1 // pred_region
      _
    $region41: #{_bahdanau_attention_jit.1} parent=1 // pred_fallthru
      _
    // Predicated region
    $region42: #{_bahdanau_attention_jit.1} parent=1 // pred_check
      _
    $region43: #{_bahdanau_attention_jit.1} parent=1 // pred_check_branch
      %8500 = sbr.rel (0) target = $region45
    $region44: #{_bahdanau_attention_jit.1} parent=1 // pred_region
      %8502 = vsyncadd [#allocation4], 0
      %s8504 = sshll.u32 [#allocation10], 4
      %s8505 = int_to_ptr.vmem [resolvable:$true] %s8504
      %s8506 = sshll.u32 %s6, 4
      %s8507 = int_to_ptr.hbm [resolvable:$true] %s8506
      %8509 = dma.vmem_to_hbm [thread:$0]  %s8505, 128, %s8507, [#allocation4]
    $region45: #{_bahdanau_attention_jit.1} parent=1 // pred_fallthru
      _
    // Predicated region
    $region46: #{_bahdanau_attention_jit.1} parent=1 // pred_check
      _
    $region47: #{_bahdanau_attention_jit.1} parent=1 // pred_check_branch
      %8511 = sbr.rel (0) target = $region49
    $region48: #{_bahdanau_attention_jit.1} parent=1 // pred_region
      _
    $region49: #{_bahdanau_attention_jit.1} parent=1 // pred_fallthru
      _
    // Predicated region
    $region50: #{_bahdanau_attention_jit.1} parent=1 // pred_check
      _
    $region51: #{_bahdanau_attention_jit.1} parent=1 // pred_check_branch
      %8513 = sbr.rel (0) target = $region53
    $region52: #{_bahdanau_attention_jit.1} parent=1 // pred_region
      %8515 = dma.done [#allocation4], 128
    $region53: #{_bahdanau_attention_jit.1} parent=1 // pred_fallthru
      _
    %8516 = vsyncpa [#allocation3], 1
    %8517 = vsyncpa [#allocation6], 1
    %8518 = vsyncpa [#allocation9], 1
    %8519 = vsyncpa [#allocation4], 1

</llo_original>
